<compile_context>
chip_gen: v5e
topology: v5e:2x2
jax: 0.10.0
libtpu: 0.0.40
codegen_flags: <defaults>
</compile_context>

<pallas_src>
import jax
import jax.numpy as jnp
from jax import lax
from jax.experimental import pallas as pl
from jax.experimental.pallas import tpu as pltpu


# ----------------------------------------------------------------------------
# In-kernel building blocks
# ----------------------------------------------------------------------------
def _conv3x3_relu(x, w_ref, b_ref):
    """3x3 'same' conv + ReLU over a batched NHWC value as ONE MXU matmul.

    x:     (B, H, W, C) f32 value
    w_ref: (9*C, Cout)  bf16 ref, rows ordered (dy, dx, cin)
    b_ref: (1, Cout)    f32 ref
    """
    B, H, W, C = x.shape
    Cout = w_ref.shape[1]

    # Halo-only zero padding (no full-block zero fill).
    zrow = jnp.zeros((B, 1, W, C), x.dtype)
    zcol = jnp.zeros((B, H + 2, 1, C), x.dtype)
    xp = jnp.concatenate([zrow, x, zrow], axis=1)       # (B, H+2, W,   C)
    xp = jnp.concatenate([zcol, xp, zcol], axis=2)      # (B, H+2, W+2, C)

    # im2col as a value: 9 shifted views concatenated along lanes.
    taps = []
    for dy in range(3):
        for dx in range(3):
            taps.append(xp[:, dy:dy + H, dx:dx + W, :])
    patches = jnp.concatenate(taps, axis=-1).reshape(B * H * W, 9 * C)

    acc = jnp.dot(patches.astype(jnp.bfloat16), w_ref[...],
                  preferred_element_type=jnp.float32)   # K = 9*C, M = B*H*W
    acc = jnp.maximum(acc + b_ref[...], 0.0)
    return acc.reshape(B, H, W, Cout)


def _maxpool2x2(x):
    """2x2 / stride-2 max pool.  H-pool is a free leading-dim regroup; the
    W-pool costs one sublane regroup (tiny at these activation sizes)."""
    B, H, W, C = x.shape
    x = x.reshape(B, H // 2, 2, W, C)
    x = jnp.maximum(x[:, :, 0], x[:, :, 1])             # (B, H//2, W, C)
    x = x.reshape(B, H // 2, W // 2, 2, C)
    x = jnp.maximum(x[:, :, :, 0], x[:, :, :, 1])       # (B, H//2, W//2, C)
    return x


def _lstm_gates(gates, c_prev, Hh):
    """PyTorch LSTM cell, gate order i, f, g, o.  gates: (B, 4*Hh) f32."""
    i_g = jax.nn.sigmoid(gates[:, 0 * Hh:1 * Hh])
    f_g = jax.nn.sigmoid(gates[:, 1 * Hh:2 * Hh])
    g_g = jnp.tanh(gates[:, 2 * Hh:3 * Hh])
    o_g = jax.nn.sigmoid(gates[:, 3 * Hh:4 * Hh])
    c_new = f_g * c_prev + i_g * g_g
    h_new = o_g * jnp.tanh(c_new)
    return h_new, c_new


# ----------------------------------------------------------------------------
# Fused kernel: CNN -> sequence -> biLSTM -> FC
# ----------------------------------------------------------------------------
def crnn_kernel(x_ref,
                w1, b1, w2, b2, w3, b3, w4, b4, w5, b5, w6, b6,
                wih_ref, whh_ref, bias_ref, fcw_ref, fcb_ref,
                out_ref,
                gx_ref, hsf_ref, hsb_ref):
    # ------------------------- CNN stack (batched over B) -------------------
    x = x_ref[...].astype(jnp.float32)
    x = _conv3x3_relu(x, w1, b1)
    x = _conv3x3_relu(x, w2, b2)
    x = _maxpool2x2(x)
    x = _conv3x3_relu(x, w3, b3)
    x = _conv3x3_relu(x, w4, b4)
    x = _maxpool2x2(x)
    x = _conv3x3_relu(x, w5, b5)
    x = _conv3x3_relu(x, w6, b6)                        # (B, Hf, T, Cf)

    B, Hf, T, Cf = x.shape
    D = Hf * Cf

    # -------- (B, Hf, T, Cf) -> (T*B, D), feature order (h, c) --------------
    # wih rows are permuted host-side to match this ordering, so this replaces
    # PyTorch's permute(0,3,1,2).view(b, w, c*h) without an extra transpose.
    rows = []
    for b in range(B):
        rows.append(jnp.concatenate([x[b, h] for h in range(Hf)],
                                    axis=-1)[:, None, :])       # (T, 1, D)
    seq2d = jnp.concatenate(rows, axis=1).reshape(T * B, D)     # row = t*B + b

    # ------------- Hoisted input projection for BOTH directions -------------
    # NOTE: kept f32; for production-size T*B*8H store bf16 or T-chunk instead.
    gx_ref[...] = jnp.dot(seq2d.astype(jnp.bfloat16), wih_ref[...],
                          preferred_element_type=jnp.float32) + bias_ref[...]

    Hh = hsf_ref.shape[1]
    G = 4 * Hh
    whh = whh_ref[...]                                  # (2H, 8H) block-diag

    def step(t, carry):
        h_prev, cf_prev, cb_prev = carry
        tb = T - 1 - t
        gh = jnp.dot(h_prev.astype(jnp.bfloat16), whh,
                     preferred_element_type=jnp.float32)        # (B, 8H)
        gxf = gx_ref[pl.ds(t * B, B), :]
        gxb = gx_ref[pl.ds(tb * B, B), :]
        h_f, c_f = _lstm_gates(gxf[:, :G] + gh[:, :G], cf_prev, Hh)
        h_b, c_b = _lstm_gates(gxb[:, G:] + gh[:, G:], cb_prev, Hh)
        hsf_ref[pl.ds(t * B, B), :] = h_f               # dense (B, H) stores
        hsb_ref[pl.ds(tb * B, B), :] = h_b
        return jnp.concatenate([h_f, h_b], axis=-1), c_f, c_b

    h0 = jnp.zeros((B, 2 * Hh), jnp.float32)
    c0 = jnp.zeros((B, Hh), jnp.float32)
    lax.fori_loop(0, T, step, (h0, c0, c0), unroll=min(T, 8))

    # ------------------------------ FC epilogue -----------------------------
    logits = (
        jnp.dot(hsf_ref[...].astype(jnp.bfloat16), fcw_ref[0:Hh, :],
                preferred_element_type=jnp.float32)
        + jnp.dot(hsb_ref[...].astype(jnp.bfloat16), fcw_ref[Hh:2 * Hh, :],
                  preferred_element_type=jnp.float32)
        + fcb_ref[...])
    out_ref[...] = logits                               # (T*B, NC) single store


# ----------------------------------------------------------------------------
# Host-side wrapper
# ----------------------------------------------------------------------------
def crnn_forward(packed, x_nchw):
    B, C, H, W = x_nchw.shape
    if C == 1:
        x = x_nchw.reshape(B, H, W, 1).astype(jnp.float32)     # pure reshape
    else:
        x = jnp.transpose(x_nchw, (0, 2, 3, 1)).astype(jnp.float32)

    T = W // 4
    n_h = packed["whh_blk"].shape[0] // 2
    g8 = packed["whh_blk"].shape[1]
    nc = packed["fc_w"].shape[1]

    args = [x]
    for i in range(1, 7):
        args += [packed[f"conv{i}_w"], packed[f"conv{i}_b"]]
    args += [packed["wih_fb"], packed["whh_blk"], packed["bias_fb"],
             packed["fc_w"], packed["fc_b"]]

    out2d = pl.pallas_call(
        crnn_kernel,
        out_shape=jax.ShapeDtypeStruct((T * B, nc), jnp.float32),
        scratch_shapes=[
            pltpu.VMEM((T * B, g8), jnp.float32),    # hoisted gate pre-acts
            pltpu.VMEM((T * B, n_h), jnp.float32),   # forward hidden states
            pltpu.VMEM((T * B, n_h), jnp.float32),   # backward hidden states
        ],
        compiler_params=pltpu.CompilerParams(
            vmem_limit_bytes=32 * 1024 * 1024),
    )(*args)
    return out2d.reshape(T, B, nc)                      # (T, B, n_classes)


# ----------------------------------------------------------------------------
# Host-side weight packing (done once, outside the jitted forward)
# ----------------------------------------------------------------------------
def prepare_params(params):
    C6 = params["conv6_w"].shape[-1]
    D = params["wih_f"].shape[0]
    Hf = D // C6
    n_h = params["whh_f"].shape[0]
    n_classes = params["fc_w"].shape[1]

    p = {}
    for i in range(1, 7):
        w = params[f"conv{i}_w"]                         # (3, 3, Cin, Cout)
        kh, kw, ci, co = w.shape
        p[f"conv{i}_w"] = w.reshape(kh * kw * ci, co).astype(jnp.bfloat16)
        p[f"conv{i}_b"] = params[f"conv{i}_b"].reshape(1, co).astype(jnp.float32)

    # Permute wih rows from PyTorch feature order (c*Hf + h) to the kernel's
    # sequence layout (h*C6 + c); pack both directions along the output dim.
    j = jnp.arange(D)
    perm = (j % C6) * Hf + (j // C6)
    wih_fb = jnp.concatenate(
        [params["wih_f"][perm, :], params["wih_b"][perm, :]], axis=1)
    p["wih_fb"] = wih_fb.astype(jnp.bfloat16)                       # (D, 8H)
    p["bias_fb"] = jnp.concatenate(
        [params["b_f"], params["b_b"]]).reshape(1, 8 * n_h).astype(jnp.float32)

    whh = jnp.zeros((2 * n_h, 8 * n_h), jnp.float32)                # block diag
    whh = whh.at[:n_h, :4 * n_h].set(params["whh_f"])
    whh = whh.at[n_h:, 4 * n_h:].set(params["whh_b"])
    p["whh_blk"] = whh.astype(jnp.bfloat16)

    p["fc_w"] = params["fc_w"].astype(jnp.bfloat16)                 # (2H, NC)
    p["fc_b"] = params["fc_b"].reshape(1, n_classes).astype(jnp.float32)
    return p


# ----------------------------------------------------------------------------
# Deterministic parameter init (shapes follow the PyTorch module __init__)
# ----------------------------------------------------------------------------
def init_params(key, num_channels, out_channels, img_height, n_h, n_classes):
    oc = out_channels
    D = 4 * oc * (img_height // 4)       # lstm_input_size
    keys = iter(jax.random.split(key, 32))

    def conv_p(cin, cout):
        w = jax.random.normal(next(keys), (3, 3, cin, cout), jnp.float32)
        w = w * (1.0 / jnp.sqrt(9.0 * cin))
        b = jax.random.normal(next(keys), (cout,), jnp.float32) * 0.01
        return w, b

    def lstm_p():
        wih = jax.random.normal(next(keys), (D, 4 * n_h), jnp.float32) / jnp.sqrt(1.0 * D)
        whh = jax.random.normal(next(keys), (n_h, 4 * n_h), jnp.float32) / jnp.sqrt(1.0 * n_h)
        b = jax.random.normal(next(keys), (4 * n_h,), jnp.float32) * 0.01
        return wih, whh, b

    p = {}
    p["conv1_w"], p["conv1_b"] = conv_p(num_channels, oc)
    p["conv2_w"], p["conv2_b"] = conv_p(oc, oc)
    p["conv3_w"], p["conv3_b"] = conv_p(oc, 2 * oc)
    p["conv4_w"], p["conv4_b"] = conv_p(2 * oc, 2 * oc)
    p["conv5_w"], p["conv5_b"] = conv_p(2 * oc, 4 * oc)
    p["conv6_w"], p["conv6_b"] = conv_p(4 * oc, 4 * oc)
    p["wih_f"], p["whh_f"], p["b_f"] = lstm_p()
    p["wih_b"], p["whh_b"], p["b_b"] = lstm_p()
    p["fc_w"] = jax.random.normal(next(keys), (2 * n_h, n_classes),
                                  jnp.float32) / jnp.sqrt(2.0 * n_h)
    p["fc_b"] = jax.random.normal(next(keys), (n_classes,), jnp.float32) * 0.01
    return p


if __name__ == "__main__":
    # Small config: batch=2, grayscale 16x16 images, out_channels=8, n_h=32.
    batch, num_channels, img_height, img_width = 2, 1, 16, 16
    out_channels, n_h, n_classes = 8, 32, 16

    key = jax.random.PRNGKey(0)
    k_x, k_p = jax.random.split(key)
    x = jax.random.normal(k_x, (batch, num_channels, img_height, img_width),
                          jnp.float32)
    params = init_params(k_p, num_channels, out_channels, img_height, n_h,
                         n_classes)
    packed = prepare_params(params)

    fwd = jax.jit(crnn_forward)
    out = jax.block_until_ready(fwd(packed, x))

    T = img_width // 4
    assert out.shape == (T, batch, n_classes), out.shape
    assert bool(jnp.all(jnp.isfinite(out)))
    print("KERNEL_OK")
</pallas_src>

<mosaic_0001>
module attributes {stable_mosaic.version = 11 : i64} {
  func.func @crnn_kernel(%arg0: memref<2x16x16x1xf32, #tpu.memory_space<vmem>>, %arg1: memref<9x8xbf16, #tpu.memory_space<vmem>>, %arg2: memref<1x8xf32, #tpu.memory_space<vmem>>, %arg3: memref<72x8xbf16, #tpu.memory_space<vmem>>, %arg4: memref<1x8xf32, #tpu.memory_space<vmem>>, %arg5: memref<72x16xbf16, #tpu.memory_space<vmem>>, %arg6: memref<1x16xf32, #tpu.memory_space<vmem>>, %arg7: memref<144x16xbf16, #tpu.memory_space<vmem>>, %arg8: memref<1x16xf32, #tpu.memory_space<vmem>>, %arg9: memref<144x32xbf16, #tpu.memory_space<vmem>>, %arg10: memref<1x32xf32, #tpu.memory_space<vmem>>, %arg11: memref<288x32xbf16, #tpu.memory_space<vmem>>, %arg12: memref<1x32xf32, #tpu.memory_space<vmem>>, %arg13: memref<128x256xbf16, #tpu.memory_space<vmem>>, %arg14: memref<64x256xbf16, #tpu.memory_space<vmem>>, %arg15: memref<1x256xf32, #tpu.memory_space<vmem>>, %arg16: memref<64x16xbf16, #tpu.memory_space<vmem>>, %arg17: memref<1x16xf32, #tpu.memory_space<vmem>>, %arg18: memref<8x16xf32, #tpu.memory_space<vmem>>, %arg19: memref<8x256xf32, #tpu.memory_space<vmem>>, %arg20: memref<8x32xf32, #tpu.memory_space<vmem>>, %arg21: memref<8x32xf32, #tpu.memory_space<vmem>>) attributes {dimension_semantics = [], scalar_prefetch = 0 : i64, scratch_operands = 3 : i64, tpu.core_type = #tpu.core_type<tc>} {
    %c0 = arith.constant 0 : index
    %c0_0 = arith.constant 0 : index
    %c0_1 = arith.constant 0 : index
    %c0_2 = arith.constant 0 : index
    %0 = vector.load %arg0[%c0, %c0_0, %c0_1, %c0_2] : memref<2x16x16x1xf32, #tpu.memory_space<vmem>>, vector<2x16x16x1xf32>
    %cst = arith.constant 0.000000e+00 : f32
    %1 = vector.broadcast %cst : f32 to vector<2x1x16x1xf32>
    %cst_3 = arith.constant 0.000000e+00 : f32
    %2 = vector.broadcast %cst_3 : f32 to vector<2x18x1x1xf32>
    %3 = tpu.concatenate %1, %0, %1 in 1 : vector<2x1x16x1xf32>, vector<2x16x16x1xf32>, vector<2x1x16x1xf32> -> vector<2x18x16x1xf32>
    %4 = tpu.concatenate %2, %3, %2 in 2 : vector<2x18x1x1xf32>, vector<2x18x16x1xf32>, vector<2x18x1x1xf32> -> vector<2x18x18x1xf32>
    %5 = vector.extract_strided_slice %4 {offsets = [0, 0, 0, 0], sizes = [2, 16, 16, 1], strides = [1, 1, 1, 1]} : vector<2x18x18x1xf32> to vector<2x16x16x1xf32>
    %6 = vector.extract_strided_slice %4 {offsets = [0, 0, 1, 0], sizes = [2, 16, 16, 1], strides = [1, 1, 1, 1]} : vector<2x18x18x1xf32> to vector<2x16x16x1xf32>
    %7 = vector.extract_strided_slice %4 {offsets = [0, 0, 2, 0], sizes = [2, 16, 16, 1], strides = [1, 1, 1, 1]} : vector<2x18x18x1xf32> to vector<2x16x16x1xf32>
    %8 = vector.extract_strided_slice %4 {offsets = [0, 1, 0, 0], sizes = [2, 16, 16, 1], strides = [1, 1, 1, 1]} : vector<2x18x18x1xf32> to vector<2x16x16x1xf32>
    %9 = vector.extract_strided_slice %4 {offsets = [0, 1, 1, 0], sizes = [2, 16, 16, 1], strides = [1, 1, 1, 1]} : vector<2x18x18x1xf32> to vector<2x16x16x1xf32>
    %10 = vector.extract_strided_slice %4 {offsets = [0, 1, 2, 0], sizes = [2, 16, 16, 1], strides = [1, 1, 1, 1]} : vector<2x18x18x1xf32> to vector<2x16x16x1xf32>
    %11 = vector.extract_strided_slice %4 {offsets = [0, 2, 0, 0], sizes = [2, 16, 16, 1], strides = [1, 1, 1, 1]} : vector<2x18x18x1xf32> to vector<2x16x16x1xf32>
    %12 = vector.extract_strided_slice %4 {offsets = [0, 2, 1, 0], sizes = [2, 16, 16, 1], strides = [1, 1, 1, 1]} : vector<2x18x18x1xf32> to vector<2x16x16x1xf32>
    %13 = vector.extract_strided_slice %4 {offsets = [0, 2, 2, 0], sizes = [2, 16, 16, 1], strides = [1, 1, 1, 1]} : vector<2x18x18x1xf32> to vector<2x16x16x1xf32>
    %14 = tpu.concatenate %5, %6, %7, %8, %9, %10, %11, %12, %13 in 3 : vector<2x16x16x1xf32>, vector<2x16x16x1xf32>, vector<2x16x16x1xf32>, vector<2x16x16x1xf32>, vector<2x16x16x1xf32>, vector<2x16x16x1xf32>, vector<2x16x16x1xf32>, vector<2x16x16x1xf32>, vector<2x16x16x1xf32> -> vector<2x16x16x9xf32>
    %15 = vector.shape_cast %14 : vector<2x16x16x9xf32> to vector<512x9xf32>
    %16 = arith.truncf %15 : vector<512x9xf32> to vector<512x9xbf16>
    %c0_4 = arith.constant 0 : index
    %c0_5 = arith.constant 0 : index
    %17 = vector.load %arg1[%c0_4, %c0_5] : memref<9x8xbf16, #tpu.memory_space<vmem>>, vector<9x8xbf16>
    %cst_6 = arith.constant dense<0.000000e+00> : vector<512x8xf32>
    %18 = tpu.matmul %16, %17, %cst_6 {dimension_numbers = #tpu.dot_dimension_numbers<[1], [0], [0], [1], [0, 0, 1, 1], [], []>} : vector<512x9xbf16>, vector<9x8xbf16>, vector<512x8xf32> -> vector<512x8xf32>
    %c0_7 = arith.constant 0 : index
    %c0_8 = arith.constant 0 : index
    %19 = vector.load %arg2[%c0_7, %c0_8] : memref<1x8xf32, #tpu.memory_space<vmem>>, vector<1x8xf32>
    %20 = vector.broadcast %19 : vector<1x8xf32> to vector<512x8xf32>
    %21 = arith.addf %18, %20 : vector<512x8xf32>
    %cst_9 = arith.constant 0.000000e+00 : f32
    %22 = vector.broadcast %cst_9 : f32 to vector<512x8xf32>
    %23 = arith.maximumf %21, %22 : vector<512x8xf32>
    %24 = vector.shape_cast %23 : vector<512x8xf32> to vector<2x16x16x8xf32>
    %cst_10 = arith.constant 0.000000e+00 : f32
    %25 = vector.broadcast %cst_10 : f32 to vector<2x1x16x8xf32>
    %cst_11 = arith.constant 0.000000e+00 : f32
    %26 = vector.broadcast %cst_11 : f32 to vector<2x18x1x8xf32>
    %27 = tpu.concatenate %25, %24, %25 in 1 : vector<2x1x16x8xf32>, vector<2x16x16x8xf32>, vector<2x1x16x8xf32> -> vector<2x18x16x8xf32>
    %28 = tpu.concatenate %26, %27, %26 in 2 : vector<2x18x1x8xf32>, vector<2x18x16x8xf32>, vector<2x18x1x8xf32> -> vector<2x18x18x8xf32>
    %29 = vector.extract_strided_slice %28 {offsets = [0, 0, 0, 0], sizes = [2, 16, 16, 8], strides = [1, 1, 1, 1]} : vector<2x18x18x8xf32> to vector<2x16x16x8xf32>
    %30 = vector.extract_strided_slice %28 {offsets = [0, 0, 1, 0], sizes = [2, 16, 16, 8], strides = [1, 1, 1, 1]} : vector<2x18x18x8xf32> to vector<2x16x16x8xf32>
    %31 = vector.extract_strided_slice %28 {offsets = [0, 0, 2, 0], sizes = [2, 16, 16, 8], strides = [1, 1, 1, 1]} : vector<2x18x18x8xf32> to vector<2x16x16x8xf32>
    %32 = vector.extract_strided_slice %28 {offsets = [0, 1, 0, 0], sizes = [2, 16, 16, 8], strides = [1, 1, 1, 1]} : vector<2x18x18x8xf32> to vector<2x16x16x8xf32>
    %33 = vector.extract_strided_slice %28 {offsets = [0, 1, 1, 0], sizes = [2, 16, 16, 8], strides = [1, 1, 1, 1]} : vector<2x18x18x8xf32> to vector<2x16x16x8xf32>
    %34 = vector.extract_strided_slice %28 {offsets = [0, 1, 2, 0], sizes = [2, 16, 16, 8], strides = [1, 1, 1, 1]} : vector<2x18x18x8xf32> to vector<2x16x16x8xf32>
    %35 = vector.extract_strided_slice %28 {offsets = [0, 2, 0, 0], sizes = [2, 16, 16, 8], strides = [1, 1, 1, 1]} : vector<2x18x18x8xf32> to vector<2x16x16x8xf32>
    %36 = vector.extract_strided_slice %28 {offsets = [0, 2, 1, 0], sizes = [2, 16, 16, 8], strides = [1, 1, 1, 1]} : vector<2x18x18x8xf32> to vector<2x16x16x8xf32>
    %37 = vector.extract_strided_slice %28 {offsets = [0, 2, 2, 0], sizes = [2, 16, 16, 8], strides = [1, 1, 1, 1]} : vector<2x18x18x8xf32> to vector<2x16x16x8xf32>
    %38 = tpu.concatenate %29, %30, %31, %32, %33, %34, %35, %36, %37 in 3 : vector<2x16x16x8xf32>, vector<2x16x16x8xf32>, vector<2x16x16x8xf32>, vector<2x16x16x8xf32>, vector<2x16x16x8xf32>, vector<2x16x16x8xf32>, vector<2x16x16x8xf32>, vector<2x16x16x8xf32>, vector<2x16x16x8xf32> -> vector<2x16x16x72xf32>
    %39 = vector.shape_cast %38 : vector<2x16x16x72xf32> to vector<512x72xf32>
    %40 = arith.truncf %39 : vector<512x72xf32> to vector<512x72xbf16>
    %c0_12 = arith.constant 0 : index
    %c0_13 = arith.constant 0 : index
    %41 = vector.load %arg3[%c0_12, %c0_13] : memref<72x8xbf16, #tpu.memory_space<vmem>>, vector<72x8xbf16>
    %cst_14 = arith.constant dense<0.000000e+00> : vector<512x8xf32>
    %42 = tpu.matmul %40, %41, %cst_14 {dimension_numbers = #tpu.dot_dimension_numbers<[1], [0], [0], [1], [0, 0, 1, 1], [], []>} : vector<512x72xbf16>, vector<72x8xbf16>, vector<512x8xf32> -> vector<512x8xf32>
    %c0_15 = arith.constant 0 : index
    %c0_16 = arith.constant 0 : index
    %43 = vector.load %arg4[%c0_15, %c0_16] : memref<1x8xf32, #tpu.memory_space<vmem>>, vector<1x8xf32>
    %44 = vector.broadcast %43 : vector<1x8xf32> to vector<512x8xf32>
    %45 = arith.addf %42, %44 : vector<512x8xf32>
    %cst_17 = arith.constant 0.000000e+00 : f32
    %46 = vector.broadcast %cst_17 : f32 to vector<512x8xf32>
    %47 = arith.maximumf %45, %46 : vector<512x8xf32>
    %48 = vector.shape_cast %47 : vector<512x8xf32> to vector<2x16x16x8xf32>
    %49 = vector.shape_cast %48 : vector<2x16x16x8xf32> to vector<2x8x2x16x8xf32>
    %50 = vector.extract_strided_slice %49 {offsets = [0, 0, 0, 0, 0], sizes = [2, 8, 1, 16, 8], strides = [1, 1, 1, 1, 1]} : vector<2x8x2x16x8xf32> to vector<2x8x1x16x8xf32>
    %51 = vector.shape_cast %50 : vector<2x8x1x16x8xf32> to vector<2x8x16x8xf32>
    %52 = vector.extract_strided_slice %49 {offsets = [0, 0, 1, 0, 0], sizes = [2, 8, 1, 16, 8], strides = [1, 1, 1, 1, 1]} : vector<2x8x2x16x8xf32> to vector<2x8x1x16x8xf32>
    %53 = vector.shape_cast %52 : vector<2x8x1x16x8xf32> to vector<2x8x16x8xf32>
    %54 = arith.maximumf %51, %53 : vector<2x8x16x8xf32>
    %55 = vector.shape_cast %54 : vector<2x8x16x8xf32> to vector<2x8x8x2x8xf32>
    %56 = vector.extract_strided_slice %55 {offsets = [0, 0, 0, 0, 0], sizes = [2, 8, 8, 1, 8], strides = [1, 1, 1, 1, 1]} : vector<2x8x8x2x8xf32> to vector<2x8x8x1x8xf32>
    %57 = vector.shape_cast %56 : vector<2x8x8x1x8xf32> to vector<2x8x8x8xf32>
    %58 = vector.extract_strided_slice %55 {offsets = [0, 0, 0, 1, 0], sizes = [2, 8, 8, 1, 8], strides = [1, 1, 1, 1, 1]} : vector<2x8x8x2x8xf32> to vector<2x8x8x1x8xf32>
    %59 = vector.shape_cast %58 : vector<2x8x8x1x8xf32> to vector<2x8x8x8xf32>
    %60 = arith.maximumf %57, %59 : vector<2x8x8x8xf32>
    %cst_18 = arith.constant 0.000000e+00 : f32
    %61 = vector.broadcast %cst_18 : f32 to vector<2x1x8x8xf32>
    %cst_19 = arith.constant 0.000000e+00 : f32
    %62 = vector.broadcast %cst_19 : f32 to vector<2x10x1x8xf32>
    %63 = tpu.concatenate %61, %60, %61 in 1 : vector<2x1x8x8xf32>, vector<2x8x8x8xf32>, vector<2x1x8x8xf32> -> vector<2x10x8x8xf32>
    %64 = tpu.concatenate %62, %63, %62 in 2 : vector<2x10x1x8xf32>, vector<2x10x8x8xf32>, vector<2x10x1x8xf32> -> vector<2x10x10x8xf32>
    %65 = vector.extract_strided_slice %64 {offsets = [0, 0, 0, 0], sizes = [2, 8, 8, 8], strides = [1, 1, 1, 1]} : vector<2x10x10x8xf32> to vector<2x8x8x8xf32>
    %66 = vector.extract_strided_slice %64 {offsets = [0, 0, 1, 0], sizes = [2, 8, 8, 8], strides = [1, 1, 1, 1]} : vector<2x10x10x8xf32> to vector<2x8x8x8xf32>
    %67 = vector.extract_strided_slice %64 {offsets = [0, 0, 2, 0], sizes = [2, 8, 8, 8], strides = [1, 1, 1, 1]} : vector<2x10x10x8xf32> to vector<2x8x8x8xf32>
    %68 = vector.extract_strided_slice %64 {offsets = [0, 1, 0, 0], sizes = [2, 8, 8, 8], strides = [1, 1, 1, 1]} : vector<2x10x10x8xf32> to vector<2x8x8x8xf32>
    %69 = vector.extract_strided_slice %64 {offsets = [0, 1, 1, 0], sizes = [2, 8, 8, 8], strides = [1, 1, 1, 1]} : vector<2x10x10x8xf32> to vector<2x8x8x8xf32>
    %70 = vector.extract_strided_slice %64 {offsets = [0, 1, 2, 0], sizes = [2, 8, 8, 8], strides = [1, 1, 1, 1]} : vector<2x10x10x8xf32> to vector<2x8x8x8xf32>
    %71 = vector.extract_strided_slice %64 {offsets = [0, 2, 0, 0], sizes = [2, 8, 8, 8], strides = [1, 1, 1, 1]} : vector<2x10x10x8xf32> to vector<2x8x8x8xf32>
    %72 = vector.extract_strided_slice %64 {offsets = [0, 2, 1, 0], sizes = [2, 8, 8, 8], strides = [1, 1, 1, 1]} : vector<2x10x10x8xf32> to vector<2x8x8x8xf32>
    %73 = vector.extract_strided_slice %64 {offsets = [0, 2, 2, 0], sizes = [2, 8, 8, 8], strides = [1, 1, 1, 1]} : vector<2x10x10x8xf32> to vector<2x8x8x8xf32>
    %74 = tpu.concatenate %65, %66, %67, %68, %69, %70, %71, %72, %73 in 3 : vector<2x8x8x8xf32>, vector<2x8x8x8xf32>, vector<2x8x8x8xf32>, vector<2x8x8x8xf32>, vector<2x8x8x8xf32>, vector<2x8x8x8xf32>, vector<2x8x8x8xf32>, vector<2x8x8x8xf32>, vector<2x8x8x8xf32> -> vector<2x8x8x72xf32>
    %75 = vector.shape_cast %74 : vector<2x8x8x72xf32> to vector<128x72xf32>
    %76 = arith.truncf %75 : vector<128x72xf32> to vector<128x72xbf16>
    %c0_20 = arith.constant 0 : index
    %c0_21 = arith.constant 0 : index
    %77 = vector.load %arg5[%c0_20, %c0_21] : memref<72x16xbf16, #tpu.memory_space<vmem>>, vector<72x16xbf16>
    %cst_22 = arith.constant dense<0.000000e+00> : vector<128x16xf32>
    %78 = tpu.matmul %76, %77, %cst_22 {dimension_numbers = #tpu.dot_dimension_numbers<[1], [0], [0], [1], [0, 0, 1, 1], [], []>} : vector<128x72xbf16>, vector<72x16xbf16>, vector<128x16xf32> -> vector<128x16xf32>
    %c0_23 = arith.constant 0 : index
    %c0_24 = arith.constant 0 : index
    %79 = vector.load %arg6[%c0_23, %c0_24] : memref<1x16xf32, #tpu.memory_space<vmem>>, vector<1x16xf32>
    %80 = vector.broadcast %79 : vector<1x16xf32> to vector<128x16xf32>
    %81 = arith.addf %78, %80 : vector<128x16xf32>
    %cst_25 = arith.constant 0.000000e+00 : f32
    %82 = vector.broadcast %cst_25 : f32 to vector<128x16xf32>
    %83 = arith.maximumf %81, %82 : vector<128x16xf32>
    %84 = vector.shape_cast %83 : vector<128x16xf32> to vector<2x8x8x16xf32>
    %cst_26 = arith.constant 0.000000e+00 : f32
    %85 = vector.broadcast %cst_26 : f32 to vector<2x1x8x16xf32>
    %cst_27 = arith.constant 0.000000e+00 : f32
    %86 = vector.broadcast %cst_27 : f32 to vector<2x10x1x16xf32>
    %87 = tpu.concatenate %85, %84, %85 in 1 : vector<2x1x8x16xf32>, vector<2x8x8x16xf32>, vector<2x1x8x16xf32> -> vector<2x10x8x16xf32>
    %88 = tpu.concatenate %86, %87, %86 in 2 : vector<2x10x1x16xf32>, vector<2x10x8x16xf32>, vector<2x10x1x16xf32> -> vector<2x10x10x16xf32>
    %89 = vector.extract_strided_slice %88 {offsets = [0, 0, 0, 0], sizes = [2, 8, 8, 16], strides = [1, 1, 1, 1]} : vector<2x10x10x16xf32> to vector<2x8x8x16xf32>
    %90 = vector.extract_strided_slice %88 {offsets = [0, 0, 1, 0], sizes = [2, 8, 8, 16], strides = [1, 1, 1, 1]} : vector<2x10x10x16xf32> to vector<2x8x8x16xf32>
    %91 = vector.extract_strided_slice %88 {offsets = [0, 0, 2, 0], sizes = [2, 8, 8, 16], strides = [1, 1, 1, 1]} : vector<2x10x10x16xf32> to vector<2x8x8x16xf32>
    %92 = vector.extract_strided_slice %88 {offsets = [0, 1, 0, 0], sizes = [2, 8, 8, 16], strides = [1, 1, 1, 1]} : vector<2x10x10x16xf32> to vector<2x8x8x16xf32>
    %93 = vector.extract_strided_slice %88 {offsets = [0, 1, 1, 0], sizes = [2, 8, 8, 16], strides = [1, 1, 1, 1]} : vector<2x10x10x16xf32> to vector<2x8x8x16xf32>
    %94 = vector.extract_strided_slice %88 {offsets = [0, 1, 2, 0], sizes = [2, 8, 8, 16], strides = [1, 1, 1, 1]} : vector<2x10x10x16xf32> to vector<2x8x8x16xf32>
    %95 = vector.extract_strided_slice %88 {offsets = [0, 2, 0, 0], sizes = [2, 8, 8, 16], strides = [1, 1, 1, 1]} : vector<2x10x10x16xf32> to vector<2x8x8x16xf32>
    %96 = vector.extract_strided_slice %88 {offsets = [0, 2, 1, 0], sizes = [2, 8, 8, 16], strides = [1, 1, 1, 1]} : vector<2x10x10x16xf32> to vector<2x8x8x16xf32>
    %97 = vector.extract_strided_slice %88 {offsets = [0, 2, 2, 0], sizes = [2, 8, 8, 16], strides = [1, 1, 1, 1]} : vector<2x10x10x16xf32> to vector<2x8x8x16xf32>
    %98 = tpu.concatenate %89, %90, %91, %92, %93, %94, %95, %96, %97 in 3 : vector<2x8x8x16xf32>, vector<2x8x8x16xf32>, vector<2x8x8x16xf32>, vector<2x8x8x16xf32>, vector<2x8x8x16xf32>, vector<2x8x8x16xf32>, vector<2x8x8x16xf32>, vector<2x8x8x16xf32>, vector<2x8x8x16xf32> -> vector<2x8x8x144xf32>
    %99 = vector.shape_cast %98 : vector<2x8x8x144xf32> to vector<128x144xf32>
    %100 = arith.truncf %99 : vector<128x144xf32> to vector<128x144xbf16>
    %c0_28 = arith.constant 0 : index
    %c0_29 = arith.constant 0 : index
    %101 = vector.load %arg7[%c0_28, %c0_29] : memref<144x16xbf16, #tpu.memory_space<vmem>>, vector<144x16xbf16>
    %cst_30 = arith.constant dense<0.000000e+00> : vector<128x16xf32>
    %102 = tpu.matmul %100, %101, %cst_30 {dimension_numbers = #tpu.dot_dimension_numbers<[1], [0], [0], [1], [0, 0, 1, 1], [], []>} : vector<128x144xbf16>, vector<144x16xbf16>, vector<128x16xf32> -> vector<128x16xf32>
    %c0_31 = arith.constant 0 : index
    %c0_32 = arith.constant 0 : index
    %103 = vector.load %arg8[%c0_31, %c0_32] : memref<1x16xf32, #tpu.memory_space<vmem>>, vector<1x16xf32>
    %104 = vector.broadcast %103 : vector<1x16xf32> to vector<128x16xf32>
    %105 = arith.addf %102, %104 : vector<128x16xf32>
    %cst_33 = arith.constant 0.000000e+00 : f32
    %106 = vector.broadcast %cst_33 : f32 to vector<128x16xf32>
    %107 = arith.maximumf %105, %106 : vector<128x16xf32>
    %108 = vector.shape_cast %107 : vector<128x16xf32> to vector<2x8x8x16xf32>
    %109 = vector.shape_cast %108 : vector<2x8x8x16xf32> to vector<2x4x2x8x16xf32>
    %110 = vector.extract_strided_slice %109 {offsets = [0, 0, 0, 0, 0], sizes = [2, 4, 1, 8, 16], strides = [1, 1, 1, 1, 1]} : vector<2x4x2x8x16xf32> to vector<2x4x1x8x16xf32>
    %111 = vector.shape_cast %110 : vector<2x4x1x8x16xf32> to vector<2x4x8x16xf32>
    %112 = vector.extract_strided_slice %109 {offsets = [0, 0, 1, 0, 0], sizes = [2, 4, 1, 8, 16], strides = [1, 1, 1, 1, 1]} : vector<2x4x2x8x16xf32> to vector<2x4x1x8x16xf32>
    %113 = vector.shape_cast %112 : vector<2x4x1x8x16xf32> to vector<2x4x8x16xf32>
    %114 = arith.maximumf %111, %113 : vector<2x4x8x16xf32>
    %115 = vector.shape_cast %114 : vector<2x4x8x16xf32> to vector<2x4x4x2x16xf32>
    %116 = vector.extract_strided_slice %115 {offsets = [0, 0, 0, 0, 0], sizes = [2, 4, 4, 1, 16], strides = [1, 1, 1, 1, 1]} : vector<2x4x4x2x16xf32> to vector<2x4x4x1x16xf32>
    %117 = vector.shape_cast %116 : vector<2x4x4x1x16xf32> to vector<2x4x4x16xf32>
    %118 = vector.extract_strided_slice %115 {offsets = [0, 0, 0, 1, 0], sizes = [2, 4, 4, 1, 16], strides = [1, 1, 1, 1, 1]} : vector<2x4x4x2x16xf32> to vector<2x4x4x1x16xf32>
    %119 = vector.shape_cast %118 : vector<2x4x4x1x16xf32> to vector<2x4x4x16xf32>
    %120 = arith.maximumf %117, %119 : vector<2x4x4x16xf32>
    %cst_34 = arith.constant 0.000000e+00 : f32
    %121 = vector.broadcast %cst_34 : f32 to vector<2x1x4x16xf32>
    %cst_35 = arith.constant 0.000000e+00 : f32
    %122 = vector.broadcast %cst_35 : f32 to vector<2x6x1x16xf32>
    %123 = tpu.concatenate %121, %120, %121 in 1 : vector<2x1x4x16xf32>, vector<2x4x4x16xf32>, vector<2x1x4x16xf32> -> vector<2x6x4x16xf32>
    %124 = tpu.concatenate %122, %123, %122 in 2 : vector<2x6x1x16xf32>, vector<2x6x4x16xf32>, vector<2x6x1x16xf32> -> vector<2x6x6x16xf32>
    %125 = vector.extract_strided_slice %124 {offsets = [0, 0, 0, 0], sizes = [2, 4, 4, 16], strides = [1, 1, 1, 1]} : vector<2x6x6x16xf32> to vector<2x4x4x16xf32>
    %126 = vector.extract_strided_slice %124 {offsets = [0, 0, 1, 0], sizes = [2, 4, 4, 16], strides = [1, 1, 1, 1]} : vector<2x6x6x16xf32> to vector<2x4x4x16xf32>
    %127 = vector.extract_strided_slice %124 {offsets = [0, 0, 2, 0], sizes = [2, 4, 4, 16], strides = [1, 1, 1, 1]} : vector<2x6x6x16xf32> to vector<2x4x4x16xf32>
    %128 = vector.extract_strided_slice %124 {offsets = [0, 1, 0, 0], sizes = [2, 4, 4, 16], strides = [1, 1, 1, 1]} : vector<2x6x6x16xf32> to vector<2x4x4x16xf32>
    %129 = vector.extract_strided_slice %124 {offsets = [0, 1, 1, 0], sizes = [2, 4, 4, 16], strides = [1, 1, 1, 1]} : vector<2x6x6x16xf32> to vector<2x4x4x16xf32>
    %130 = vector.extract_strided_slice %124 {offsets = [0, 1, 2, 0], sizes = [2, 4, 4, 16], strides = [1, 1, 1, 1]} : vector<2x6x6x16xf32> to vector<2x4x4x16xf32>
    %131 = vector.extract_strided_slice %124 {offsets = [0, 2, 0, 0], sizes = [2, 4, 4, 16], strides = [1, 1, 1, 1]} : vector<2x6x6x16xf32> to vector<2x4x4x16xf32>
    %132 = vector.extract_strided_slice %124 {offsets = [0, 2, 1, 0], sizes = [2, 4, 4, 16], strides = [1, 1, 1, 1]} : vector<2x6x6x16xf32> to vector<2x4x4x16xf32>
    %133 = vector.extract_strided_slice %124 {offsets = [0, 2, 2, 0], sizes = [2, 4, 4, 16], strides = [1, 1, 1, 1]} : vector<2x6x6x16xf32> to vector<2x4x4x16xf32>
    %134 = tpu.concatenate %125, %126, %127, %128, %129, %130, %131, %132, %133 in 3 : vector<2x4x4x16xf32>, vector<2x4x4x16xf32>, vector<2x4x4x16xf32>, vector<2x4x4x16xf32>, vector<2x4x4x16xf32>, vector<2x4x4x16xf32>, vector<2x4x4x16xf32>, vector<2x4x4x16xf32>, vector<2x4x4x16xf32> -> vector<2x4x4x144xf32>
    %135 = vector.shape_cast %134 : vector<2x4x4x144xf32> to vector<32x144xf32>
    %136 = arith.truncf %135 : vector<32x144xf32> to vector<32x144xbf16>
    %c0_36 = arith.constant 0 : index
    %c0_37 = arith.constant 0 : index
    %137 = vector.load %arg9[%c0_36, %c0_37] : memref<144x32xbf16, #tpu.memory_space<vmem>>, vector<144x32xbf16>
    %cst_38 = arith.constant dense<0.000000e+00> : vector<32x32xf32>
    %138 = tpu.matmul %136, %137, %cst_38 {dimension_numbers = #tpu.dot_dimension_numbers<[1], [0], [0], [1], [0, 0, 1, 1], [], []>} : vector<32x144xbf16>, vector<144x32xbf16>, vector<32x32xf32> -> vector<32x32xf32>
    %c0_39 = arith.constant 0 : index
    %c0_40 = arith.constant 0 : index
    %139 = vector.load %arg10[%c0_39, %c0_40] : memref<1x32xf32, #tpu.memory_space<vmem>>, vector<1x32xf32>
    %140 = vector.broadcast %139 : vector<1x32xf32> to vector<32x32xf32>
    %141 = arith.addf %138, %140 : vector<32x32xf32>
    %cst_41 = arith.constant 0.000000e+00 : f32
    %142 = vector.broadcast %cst_41 : f32 to vector<32x32xf32>
    %143 = arith.maximumf %141, %142 : vector<32x32xf32>
    %144 = vector.shape_cast %143 : vector<32x32xf32> to vector<2x4x4x32xf32>
    %cst_42 = arith.constant 0.000000e+00 : f32
    %145 = vector.broadcast %cst_42 : f32 to vector<2x1x4x32xf32>
    %cst_43 = arith.constant 0.000000e+00 : f32
    %146 = vector.broadcast %cst_43 : f32 to vector<2x6x1x32xf32>
    %147 = tpu.concatenate %145, %144, %145 in 1 : vector<2x1x4x32xf32>, vector<2x4x4x32xf32>, vector<2x1x4x32xf32> -> vector<2x6x4x32xf32>
    %148 = tpu.concatenate %146, %147, %146 in 2 : vector<2x6x1x32xf32>, vector<2x6x4x32xf32>, vector<2x6x1x32xf32> -> vector<2x6x6x32xf32>
    %149 = vector.extract_strided_slice %148 {offsets = [0, 0, 0, 0], sizes = [2, 4, 4, 32], strides = [1, 1, 1, 1]} : vector<2x6x6x32xf32> to vector<2x4x4x32xf32>
    %150 = vector.extract_strided_slice %148 {offsets = [0, 0, 1, 0], sizes = [2, 4, 4, 32], strides = [1, 1, 1, 1]} : vector<2x6x6x32xf32> to vector<2x4x4x32xf32>
    %151 = vector.extract_strided_slice %148 {offsets = [0, 0, 2, 0], sizes = [2, 4, 4, 32], strides = [1, 1, 1, 1]} : vector<2x6x6x32xf32> to vector<2x4x4x32xf32>
    %152 = vector.extract_strided_slice %148 {offsets = [0, 1, 0, 0], sizes = [2, 4, 4, 32], strides = [1, 1, 1, 1]} : vector<2x6x6x32xf32> to vector<2x4x4x32xf32>
    %153 = vector.extract_strided_slice %148 {offsets = [0, 1, 1, 0], sizes = [2, 4, 4, 32], strides = [1, 1, 1, 1]} : vector<2x6x6x32xf32> to vector<2x4x4x32xf32>
    %154 = vector.extract_strided_slice %148 {offsets = [0, 1, 2, 0], sizes = [2, 4, 4, 32], strides = [1, 1, 1, 1]} : vector<2x6x6x32xf32> to vector<2x4x4x32xf32>
    %155 = vector.extract_strided_slice %148 {offsets = [0, 2, 0, 0], sizes = [2, 4, 4, 32], strides = [1, 1, 1, 1]} : vector<2x6x6x32xf32> to vector<2x4x4x32xf32>
    %156 = vector.extract_strided_slice %148 {offsets = [0, 2, 1, 0], sizes = [2, 4, 4, 32], strides = [1, 1, 1, 1]} : vector<2x6x6x32xf32> to vector<2x4x4x32xf32>
    %157 = vector.extract_strided_slice %148 {offsets = [0, 2, 2, 0], sizes = [2, 4, 4, 32], strides = [1, 1, 1, 1]} : vector<2x6x6x32xf32> to vector<2x4x4x32xf32>
    %158 = tpu.concatenate %149, %150, %151, %152, %153, %154, %155, %156, %157 in 3 : vector<2x4x4x32xf32>, vector<2x4x4x32xf32>, vector<2x4x4x32xf32>, vector<2x4x4x32xf32>, vector<2x4x4x32xf32>, vector<2x4x4x32xf32>, vector<2x4x4x32xf32>, vector<2x4x4x32xf32>, vector<2x4x4x32xf32> -> vector<2x4x4x288xf32>
    %159 = vector.shape_cast %158 : vector<2x4x4x288xf32> to vector<32x288xf32>
    %160 = arith.truncf %159 : vector<32x288xf32> to vector<32x288xbf16>
    %c0_44 = arith.constant 0 : index
    %c0_45 = arith.constant 0 : index
    %161 = vector.load %arg11[%c0_44, %c0_45] : memref<288x32xbf16, #tpu.memory_space<vmem>>, vector<288x32xbf16>
    %cst_46 = arith.constant dense<0.000000e+00> : vector<32x32xf32>
    %162 = tpu.matmul %160, %161, %cst_46 {dimension_numbers = #tpu.dot_dimension_numbers<[1], [0], [0], [1], [0, 0, 1, 1], [], []>} : vector<32x288xbf16>, vector<288x32xbf16>, vector<32x32xf32> -> vector<32x32xf32>
    %c0_47 = arith.constant 0 : index
    %c0_48 = arith.constant 0 : index
    %163 = vector.load %arg12[%c0_47, %c0_48] : memref<1x32xf32, #tpu.memory_space<vmem>>, vector<1x32xf32>
    %164 = vector.broadcast %163 : vector<1x32xf32> to vector<32x32xf32>
    %165 = arith.addf %162, %164 : vector<32x32xf32>
    %cst_49 = arith.constant 0.000000e+00 : f32
    %166 = vector.broadcast %cst_49 : f32 to vector<32x32xf32>
    %167 = arith.maximumf %165, %166 : vector<32x32xf32>
    %168 = vector.shape_cast %167 : vector<32x32xf32> to vector<2x4x4x32xf32>
    %169 = vector.extract_strided_slice %168 {offsets = [0, 0, 0, 0], sizes = [1, 1, 4, 32], strides = [1, 1, 1, 1]} : vector<2x4x4x32xf32> to vector<1x1x4x32xf32>
    %170 = vector.shape_cast %169 : vector<1x1x4x32xf32> to vector<4x32xf32>
    %171 = vector.extract_strided_slice %168 {offsets = [0, 1, 0, 0], sizes = [1, 1, 4, 32], strides = [1, 1, 1, 1]} : vector<2x4x4x32xf32> to vector<1x1x4x32xf32>
    %172 = vector.shape_cast %171 : vector<1x1x4x32xf32> to vector<4x32xf32>
    %173 = vector.extract_strided_slice %168 {offsets = [0, 2, 0, 0], sizes = [1, 1, 4, 32], strides = [1, 1, 1, 1]} : vector<2x4x4x32xf32> to vector<1x1x4x32xf32>
    %174 = vector.shape_cast %173 : vector<1x1x4x32xf32> to vector<4x32xf32>
    %175 = vector.extract_strided_slice %168 {offsets = [0, 3, 0, 0], sizes = [1, 1, 4, 32], strides = [1, 1, 1, 1]} : vector<2x4x4x32xf32> to vector<1x1x4x32xf32>
    %176 = vector.shape_cast %175 : vector<1x1x4x32xf32> to vector<4x32xf32>
    %177 = tpu.concatenate %170, %172, %174, %176 in 1 : vector<4x32xf32>, vector<4x32xf32>, vector<4x32xf32>, vector<4x32xf32> -> vector<4x128xf32>
    %178 = vector.shape_cast %177 : vector<4x128xf32> to vector<4x1x128xf32>
    %179 = vector.extract_strided_slice %168 {offsets = [1, 0, 0, 0], sizes = [1, 1, 4, 32], strides = [1, 1, 1, 1]} : vector<2x4x4x32xf32> to vector<1x1x4x32xf32>
    %180 = vector.shape_cast %179 : vector<1x1x4x32xf32> to vector<4x32xf32>
    %181 = vector.extract_strided_slice %168 {offsets = [1, 1, 0, 0], sizes = [1, 1, 4, 32], strides = [1, 1, 1, 1]} : vector<2x4x4x32xf32> to vector<1x1x4x32xf32>
    %182 = vector.shape_cast %181 : vector<1x1x4x32xf32> to vector<4x32xf32>
    %183 = vector.extract_strided_slice %168 {offsets = [1, 2, 0, 0], sizes = [1, 1, 4, 32], strides = [1, 1, 1, 1]} : vector<2x4x4x32xf32> to vector<1x1x4x32xf32>
    %184 = vector.shape_cast %183 : vector<1x1x4x32xf32> to vector<4x32xf32>
    %185 = vector.extract_strided_slice %168 {offsets = [1, 3, 0, 0], sizes = [1, 1, 4, 32], strides = [1, 1, 1, 1]} : vector<2x4x4x32xf32> to vector<1x1x4x32xf32>
    %186 = vector.shape_cast %185 : vector<1x1x4x32xf32> to vector<4x32xf32>
    %187 = tpu.concatenate %180, %182, %184, %186 in 1 : vector<4x32xf32>, vector<4x32xf32>, vector<4x32xf32>, vector<4x32xf32> -> vector<4x128xf32>
    %188 = vector.shape_cast %187 : vector<4x128xf32> to vector<4x1x128xf32>
    %189 = tpu.concatenate %178, %188 in 1 : vector<4x1x128xf32>, vector<4x1x128xf32> -> vector<4x2x128xf32>
    %190 = vector.shape_cast %189 : vector<4x2x128xf32> to vector<8x128xf32>
    %191 = arith.truncf %190 : vector<8x128xf32> to vector<8x128xbf16>
    %c0_50 = arith.constant 0 : index
    %c0_51 = arith.constant 0 : index
    %192 = vector.load %arg13[%c0_50, %c0_51] : memref<128x256xbf16, #tpu.memory_space<vmem>>, vector<128x256xbf16>
    %cst_52 = arith.constant dense<0.000000e+00> : vector<8x256xf32>
    %193 = tpu.matmul %191, %192, %cst_52 {dimension_numbers = #tpu.dot_dimension_numbers<[1], [0], [0], [1], [0, 0, 1, 1], [], []>} : vector<8x128xbf16>, vector<128x256xbf16>, vector<8x256xf32> -> vector<8x256xf32>
    %c0_53 = arith.constant 0 : index
    %c0_54 = arith.constant 0 : index
    %194 = vector.load %arg15[%c0_53, %c0_54] : memref<1x256xf32, #tpu.memory_space<vmem>>, vector<1x256xf32>
    %195 = vector.broadcast %194 : vector<1x256xf32> to vector<8x256xf32>
    %196 = arith.addf %193, %195 : vector<8x256xf32>
    %c0_55 = arith.constant 0 : index
    %c0_56 = arith.constant 0 : index
    %197 = vector.load %arg19[%c0_55, %c0_56] : memref<8x256xf32, #tpu.memory_space<vmem>>, vector<8x256xf32>
    tpu.vector_store %arg19[%c0_55, %c0_56], %196 {strides = array<i32>} : memref<8x256xf32, #tpu.memory_space<vmem>>, vector<8x256xf32>,
    %c0_57 = arith.constant 0 : index
    %c0_58 = arith.constant 0 : index
    %198 = vector.load %arg14[%c0_57, %c0_58] : memref<64x256xbf16, #tpu.memory_space<vmem>>, vector<64x256xbf16>
    %cst_59 = arith.constant 0.000000e+00 : f32
    %199 = vector.broadcast %cst_59 : f32 to vector<2x64xf32>
    %cst_60 = arith.constant 0.000000e+00 : f32
    %200 = vector.broadcast %cst_60 : f32 to vector<2x32xf32>
    %c0_i32 = arith.constant 0 : i32
    %c3_i32 = arith.constant 3 : i32
    %201 = arith.subi %c3_i32, %c0_i32 : i32
    %202 = arith.truncf %199 : vector<2x64xf32> to vector<2x64xbf16>
    %cst_61 = arith.constant dense<0.000000e+00> : vector<2x256xf32>
    %203 = tpu.matmul %202, %198, %cst_61 {dimension_numbers = #tpu.dot_dimension_numbers<[1], [0], [0], [1], [0, 0, 1, 1], [], []>} : vector<2x64xbf16>, vector<64x256xbf16>, vector<2x256xf32> -> vector<2x256xf32>
    %c2_i32 = arith.constant 2 : i32
    %204 = arith.muli %c0_i32, %c2_i32 : i32
    %205 = arith.index_cast %204 : i32 to index
    %c0_62 = arith.constant 0 : index
    %206 = vector.load %arg19[%205, %c0_62] : memref<8x256xf32, #tpu.memory_space<vmem>>, vector<2x256xf32>
    %c2_i32_63 = arith.constant 2 : i32
    %207 = arith.muli %201, %c2_i32_63 : i32
    %208 = arith.index_cast %207 : i32 to index
    %c0_64 = arith.constant 0 : index
    %209 = vector.load %arg19[%208, %c0_64] : memref<8x256xf32, #tpu.memory_space<vmem>>, vector<2x256xf32>
    %210 = vector.extract_strided_slice %206 {offsets = [0, 0], sizes = [2, 128], strides = [1, 1]} : vector<2x256xf32> to vector<2x128xf32>
    %211 = vector.extract_strided_slice %203 {offsets = [0, 0], sizes = [2, 128], strides = [1, 1]} : vector<2x256xf32> to vector<2x128xf32>
    %212 = arith.addf %210, %211 : vector<2x128xf32>
    %213 = vector.extract_strided_slice %212 {offsets = [0, 0], sizes = [2, 32], strides = [1, 1]} : vector<2x128xf32> to vector<2x32xf32>
    %214 = arith.negf %213 : vector<2x32xf32>
    %215 = math.exp %214 : vector<2x32xf32>
    %cst_65 = arith.constant 1.000000e+00 : f32
    %216 = vector.broadcast %cst_65 : f32 to vector<2x32xf32>
    %217 = arith.addf %216, %215 : vector<2x32xf32>
    %218 = arith.divf %216, %217 : vector<2x32xf32>
    %219 = vector.extract_strided_slice %212 {offsets = [0, 32], sizes = [2, 32], strides = [1, 1]} : vector<2x128xf32> to vector<2x32xf32>
    %220 = arith.negf %219 : vector<2x32xf32>
    %221 = math.exp %220 : vector<2x32xf32>
    %cst_66 = arith.constant 1.000000e+00 : f32
    %222 = vector.broadcast %cst_66 : f32 to vector<2x32xf32>
    %223 = arith.addf %222, %221 : vector<2x32xf32>
    %224 = arith.divf %222, %223 : vector<2x32xf32>
    %225 = vector.extract_strided_slice %212 {offsets = [0, 64], sizes = [2, 32], strides = [1, 1]} : vector<2x128xf32> to vector<2x32xf32>
    %226 = math.tanh %225 : vector<2x32xf32>
    %227 = vector.extract_strided_slice %212 {offsets = [0, 96], sizes = [2, 32], strides = [1, 1]} : vector<2x128xf32> to vector<2x32xf32>
    %228 = arith.negf %227 : vector<2x32xf32>
    %229 = math.exp %228 : vector<2x32xf32>
    %cst_67 = arith.constant 1.000000e+00 : f32
    %230 = vector.broadcast %cst_67 : f32 to vector<2x32xf32>
    %231 = arith.addf %230, %229 : vector<2x32xf32>
    %232 = arith.divf %230, %231 : vector<2x32xf32>
    %233 = arith.mulf %224, %200 : vector<2x32xf32>
    %234 = arith.mulf %218, %226 : vector<2x32xf32>
    %235 = arith.addf %233, %234 : vector<2x32xf32>
    %236 = math.tanh %235 : vector<2x32xf32>
    %237 = arith.mulf %232, %236 : vector<2x32xf32>
    %238 = vector.extract_strided_slice %209 {offsets = [0, 128], sizes = [2, 128], strides = [1, 1]} : vector<2x256xf32> to vector<2x128xf32>
    %239 = vector.extract_strided_slice %203 {offsets = [0, 128], sizes = [2, 128], strides = [1, 1]} : vector<2x256xf32> to vector<2x128xf32>
    %240 = arith.addf %238, %239 : vector<2x128xf32>
    %241 = vector.extract_strided_slice %240 {offsets = [0, 0], sizes = [2, 32], strides = [1, 1]} : vector<2x128xf32> to vector<2x32xf32>
    %242 = arith.negf %241 : vector<2x32xf32>
    %243 = math.exp %242 : vector<2x32xf32>
    %cst_68 = arith.constant 1.000000e+00 : f32
    %244 = vector.broadcast %cst_68 : f32 to vector<2x32xf32>
    %245 = arith.addf %244, %243 : vector<2x32xf32>
    %246 = arith.divf %244, %245 : vector<2x32xf32>
    %247 = vector.extract_strided_slice %240 {offsets = [0, 32], sizes = [2, 32], strides = [1, 1]} : vector<2x128xf32> to vector<2x32xf32>
    %248 = arith.negf %247 : vector<2x32xf32>
    %249 = math.exp %248 : vector<2x32xf32>
    %cst_69 = arith.constant 1.000000e+00 : f32
    %250 = vector.broadcast %cst_69 : f32 to vector<2x32xf32>
    %251 = arith.addf %250, %249 : vector<2x32xf32>
    %252 = arith.divf %250, %251 : vector<2x32xf32>
    %253 = vector.extract_strided_slice %240 {offsets = [0, 64], sizes = [2, 32], strides = [1, 1]} : vector<2x128xf32> to vector<2x32xf32>
    %254 = math.tanh %253 : vector<2x32xf32>
    %255 = vector.extract_strided_slice %240 {offsets = [0, 96], sizes = [2, 32], strides = [1, 1]} : vector<2x128xf32> to vector<2x32xf32>
    %256 = arith.negf %255 : vector<2x32xf32>
    %257 = math.exp %256 : vector<2x32xf32>
    %cst_70 = arith.constant 1.000000e+00 : f32
    %258 = vector.broadcast %cst_70 : f32 to vector<2x32xf32>
    %259 = arith.addf %258, %257 : vector<2x32xf32>
    %260 = arith.divf %258, %259 : vector<2x32xf32>
    %261 = arith.mulf %252, %200 : vector<2x32xf32>
    %262 = arith.mulf %246, %254 : vector<2x32xf32>
    %263 = arith.addf %261, %262 : vector<2x32xf32>
    %264 = math.tanh %263 : vector<2x32xf32>
    %265 = arith.mulf %260, %264 : vector<2x32xf32>
    %c2_i32_71 = arith.constant 2 : i32
    %266 = arith.muli %c0_i32, %c2_i32_71 : i32
    %267 = arith.index_cast %266 : i32 to index
    %c0_72 = arith.constant 0 : index
    %268 = vector.load %arg20[%267, %c0_72] : memref<8x32xf32, #tpu.memory_space<vmem>>, vector<2x32xf32>
    tpu.vector_store %arg20[%267, %c0_72], %237 {strides = array<i32>} : memref<8x32xf32, #tpu.memory_space<vmem>>, vector<2x32xf32>,
    %c2_i32_73 = arith.constant 2 : i32
    %269 = arith.muli %201, %c2_i32_73 : i32
    %270 = arith.index_cast %269 : i32 to index
    %c0_74 = arith.constant 0 : index
    %271 = vector.load %arg21[%270, %c0_74] : memref<8x32xf32, #tpu.memory_space<vmem>>, vector<2x32xf32>
    tpu.vector_store %arg21[%270, %c0_74], %265 {strides = array<i32>} : memref<8x32xf32, #tpu.memory_space<vmem>>, vector<2x32xf32>,
    %272 = tpu.concatenate %237, %265 in 1 : vector<2x32xf32>, vector<2x32xf32> -> vector<2x64xf32>
    %c1_i32 = arith.constant 1 : i32
    %c3_i32_75 = arith.constant 3 : i32
    %273 = arith.subi %c3_i32_75, %c1_i32 : i32
    %274 = arith.truncf %272 : vector<2x64xf32> to vector<2x64xbf16>
    %cst_76 = arith.constant dense<0.000000e+00> : vector<2x256xf32>
    %275 = tpu.matmul %274, %198, %cst_76 {dimension_numbers = #tpu.dot_dimension_numbers<[1], [0], [0], [1], [0, 0, 1, 1], [], []>} : vector<2x64xbf16>, vector<64x256xbf16>, vector<2x256xf32> -> vector<2x256xf32>
    %c2_i32_77 = arith.constant 2 : i32
    %276 = arith.muli %c1_i32, %c2_i32_77 : i32
    %277 = arith.index_cast %276 : i32 to index
    %c0_78 = arith.constant 0 : index
    %278 = vector.load %arg19[%277, %c0_78] : memref<8x256xf32, #tpu.memory_space<vmem>>, vector<2x256xf32>
    %c2_i32_79 = arith.constant 2 : i32
    %279 = arith.muli %273, %c2_i32_79 : i32
    %280 = arith.index_cast %279 : i32 to index
    %c0_80 = arith.constant 0 : index
    %281 = vector.load %arg19[%280, %c0_80] : memref<8x256xf32, #tpu.memory_space<vmem>>, vector<2x256xf32>
    %282 = vector.extract_strided_slice %278 {offsets = [0, 0], sizes = [2, 128], strides = [1, 1]} : vector<2x256xf32> to vector<2x128xf32>
    %283 = vector.extract_strided_slice %275 {offsets = [0, 0], sizes = [2, 128], strides = [1, 1]} : vector<2x256xf32> to vector<2x128xf32>
    %284 = arith.addf %282, %283 : vector<2x128xf32>
    %285 = vector.extract_strided_slice %284 {offsets = [0, 0], sizes = [2, 32], strides = [1, 1]} : vector<2x128xf32> to vector<2x32xf32>
    %286 = arith.negf %285 : vector<2x32xf32>
    %287 = math.exp %286 : vector<2x32xf32>
    %cst_81 = arith.constant 1.000000e+00 : f32
    %288 = vector.broadcast %cst_81 : f32 to vector<2x32xf32>
    %289 = arith.addf %288, %287 : vector<2x32xf32>
    %290 = arith.divf %288, %289 : vector<2x32xf32>
    %291 = vector.extract_strided_slice %284 {offsets = [0, 32], sizes = [2, 32], strides = [1, 1]} : vector<2x128xf32> to vector<2x32xf32>
    %292 = arith.negf %291 : vector<2x32xf32>
    %293 = math.exp %292 : vector<2x32xf32>
    %cst_82 = arith.constant 1.000000e+00 : f32
    %294 = vector.broadcast %cst_82 : f32 to vector<2x32xf32>
    %295 = arith.addf %294, %293 : vector<2x32xf32>
    %296 = arith.divf %294, %295 : vector<2x32xf32>
    %297 = vector.extract_strided_slice %284 {offsets = [0, 64], sizes = [2, 32], strides = [1, 1]} : vector<2x128xf32> to vector<2x32xf32>
    %298 = math.tanh %297 : vector<2x32xf32>
    %299 = vector.extract_strided_slice %284 {offsets = [0, 96], sizes = [2, 32], strides = [1, 1]} : vector<2x128xf32> to vector<2x32xf32>
    %300 = arith.negf %299 : vector<2x32xf32>
    %301 = math.exp %300 : vector<2x32xf32>
    %cst_83 = arith.constant 1.000000e+00 : f32
    %302 = vector.broadcast %cst_83 : f32 to vector<2x32xf32>
    %303 = arith.addf %302, %301 : vector<2x32xf32>
    %304 = arith.divf %302, %303 : vector<2x32xf32>
    %305 = arith.mulf %296, %235 : vector<2x32xf32>
    %306 = arith.mulf %290, %298 : vector<2x32xf32>
    %307 = arith.addf %305, %306 : vector<2x32xf32>
    %308 = math.tanh %307 : vector<2x32xf32>
    %309 = arith.mulf %304, %308 : vector<2x32xf32>
    %310 = vector.extract_strided_slice %281 {offsets = [0, 128], sizes = [2, 128], strides = [1, 1]} : vector<2x256xf32> to vector<2x128xf32>
    %311 = vector.extract_strided_slice %275 {offsets = [0, 128], sizes = [2, 128], strides = [1, 1]} : vector<2x256xf32> to vector<2x128xf32>
    %312 = arith.addf %310, %311 : vector<2x128xf32>
    %313 = vector.extract_strided_slice %312 {offsets = [0, 0], sizes = [2, 32], strides = [1, 1]} : vector<2x128xf32> to vector<2x32xf32>
    %314 = arith.negf %313 : vector<2x32xf32>
    %315 = math.exp %314 : vector<2x32xf32>
    %cst_84 = arith.constant 1.000000e+00 : f32
    %316 = vector.broadcast %cst_84 : f32 to vector<2x32xf32>
    %317 = arith.addf %316, %315 : vector<2x32xf32>
    %318 = arith.divf %316, %317 : vector<2x32xf32>
    %319 = vector.extract_strided_slice %312 {offsets = [0, 32], sizes = [2, 32], strides = [1, 1]} : vector<2x128xf32> to vector<2x32xf32>
    %320 = arith.negf %319 : vector<2x32xf32>
    %321 = math.exp %320 : vector<2x32xf32>
    %cst_85 = arith.constant 1.000000e+00 : f32
    %322 = vector.broadcast %cst_85 : f32 to vector<2x32xf32>
    %323 = arith.addf %322, %321 : vector<2x32xf32>
    %324 = arith.divf %322, %323 : vector<2x32xf32>
    %325 = vector.extract_strided_slice %312 {offsets = [0, 64], sizes = [2, 32], strides = [1, 1]} : vector<2x128xf32> to vector<2x32xf32>
    %326 = math.tanh %325 : vector<2x32xf32>
    %327 = vector.extract_strided_slice %312 {offsets = [0, 96], sizes = [2, 32], strides = [1, 1]} : vector<2x128xf32> to vector<2x32xf32>
    %328 = arith.negf %327 : vector<2x32xf32>
    %329 = math.exp %328 : vector<2x32xf32>
    %cst_86 = arith.constant 1.000000e+00 : f32
    %330 = vector.broadcast %cst_86 : f32 to vector<2x32xf32>
    %331 = arith.addf %330, %329 : vector<2x32xf32>
    %332 = arith.divf %330, %331 : vector<2x32xf32>
    %333 = arith.mulf %324, %263 : vector<2x32xf32>
    %334 = arith.mulf %318, %326 : vector<2x32xf32>
    %335 = arith.addf %333, %334 : vector<2x32xf32>
    %336 = math.tanh %335 : vector<2x32xf32>
    %337 = arith.mulf %332, %336 : vector<2x32xf32>
    %c2_i32_87 = arith.constant 2 : i32
    %338 = arith.muli %c1_i32, %c2_i32_87 : i32
    %339 = arith.index_cast %338 : i32 to index
    %c0_88 = arith.constant 0 : index
    %340 = vector.load %arg20[%339, %c0_88] : memref<8x32xf32, #tpu.memory_space<vmem>>, vector<2x32xf32>
    tpu.vector_store %arg20[%339, %c0_88], %309 {strides = array<i32>} : memref<8x32xf32, #tpu.memory_space<vmem>>, vector<2x32xf32>,
    %c2_i32_89 = arith.constant 2 : i32
    %341 = arith.muli %273, %c2_i32_89 : i32
    %342 = arith.index_cast %341 : i32 to index
    %c0_90 = arith.constant 0 : index
    %343 = vector.load %arg21[%342, %c0_90] : memref<8x32xf32, #tpu.memory_space<vmem>>, vector<2x32xf32>
    tpu.vector_store %arg21[%342, %c0_90], %337 {strides = array<i32>} : memref<8x32xf32, #tpu.memory_space<vmem>>, vector<2x32xf32>,
    %344 = tpu.concatenate %309, %337 in 1 : vector<2x32xf32>, vector<2x32xf32> -> vector<2x64xf32>
    %c2_i32_91 = arith.constant 2 : i32
    %c3_i32_92 = arith.constant 3 : i32
    %345 = arith.subi %c3_i32_92, %c2_i32_91 : i32
    %346 = arith.truncf %344 : vector<2x64xf32> to vector<2x64xbf16>
    %cst_93 = arith.constant dense<0.000000e+00> : vector<2x256xf32>
    %347 = tpu.matmul %346, %198, %cst_93 {dimension_numbers = #tpu.dot_dimension_numbers<[1], [0], [0], [1], [0, 0, 1, 1], [], []>} : vector<2x64xbf16>, vector<64x256xbf16>, vector<2x256xf32> -> vector<2x256xf32>
    %c2_i32_94 = arith.constant 2 : i32
    %348 = arith.muli %c2_i32_91, %c2_i32_94 : i32
    %349 = arith.index_cast %348 : i32 to index
    %c0_95 = arith.constant 0 : index
    %350 = vector.load %arg19[%349, %c0_95] : memref<8x256xf32, #tpu.memory_space<vmem>>, vector<2x256xf32>
    %c2_i32_96 = arith.constant 2 : i32
    %351 = arith.muli %345, %c2_i32_96 : i32
    %352 = arith.index_cast %351 : i32 to index
    %c0_97 = arith.constant 0 : index
    %353 = vector.load %arg19[%352, %c0_97] : memref<8x256xf32, #tpu.memory_space<vmem>>, vector<2x256xf32>
    %354 = vector.extract_strided_slice %350 {offsets = [0, 0], sizes = [2, 128], strides = [1, 1]} : vector<2x256xf32> to vector<2x128xf32>
    %355 = vector.extract_strided_slice %347 {offsets = [0, 0], sizes = [2, 128], strides = [1, 1]} : vector<2x256xf32> to vector<2x128xf32>
    %356 = arith.addf %354, %355 : vector<2x128xf32>
    %357 = vector.extract_strided_slice %356 {offsets = [0, 0], sizes = [2, 32], strides = [1, 1]} : vector<2x128xf32> to vector<2x32xf32>
    %358 = arith.negf %357 : vector<2x32xf32>
    %359 = math.exp %358 : vector<2x32xf32>
    %cst_98 = arith.constant 1.000000e+00 : f32
    %360 = vector.broadcast %cst_98 : f32 to vector<2x32xf32>
    %361 = arith.addf %360, %359 : vector<2x32xf32>
    %362 = arith.divf %360, %361 : vector<2x32xf32>
    %363 = vector.extract_strided_slice %356 {offsets = [0, 32], sizes = [2, 32], strides = [1, 1]} : vector<2x128xf32> to vector<2x32xf32>
    %364 = arith.negf %363 : vector<2x32xf32>
    %365 = math.exp %364 : vector<2x32xf32>
    %cst_99 = arith.constant 1.000000e+00 : f32
    %366 = vector.broadcast %cst_99 : f32 to vector<2x32xf32>
    %367 = arith.addf %366, %365 : vector<2x32xf32>
    %368 = arith.divf %366, %367 : vector<2x32xf32>
    %369 = vector.extract_strided_slice %356 {offsets = [0, 64], sizes = [2, 32], strides = [1, 1]} : vector<2x128xf32> to vector<2x32xf32>
    %370 = math.tanh %369 : vector<2x32xf32>
    %371 = vector.extract_strided_slice %356 {offsets = [0, 96], sizes = [2, 32], strides = [1, 1]} : vector<2x128xf32> to vector<2x32xf32>
    %372 = arith.negf %371 : vector<2x32xf32>
    %373 = math.exp %372 : vector<2x32xf32>
    %cst_100 = arith.constant 1.000000e+00 : f32
    %374 = vector.broadcast %cst_100 : f32 to vector<2x32xf32>
    %375 = arith.addf %374, %373 : vector<2x32xf32>
    %376 = arith.divf %374, %375 : vector<2x32xf32>
    %377 = arith.mulf %368, %307 : vector<2x32xf32>
    %378 = arith.mulf %362, %370 : vector<2x32xf32>
    %379 = arith.addf %377, %378 : vector<2x32xf32>
    %380 = math.tanh %379 : vector<2x32xf32>
    %381 = arith.mulf %376, %380 : vector<2x32xf32>
    %382 = vector.extract_strided_slice %353 {offsets = [0, 128], sizes = [2, 128], strides = [1, 1]} : vector<2x256xf32> to vector<2x128xf32>
    %383 = vector.extract_strided_slice %347 {offsets = [0, 128], sizes = [2, 128], strides = [1, 1]} : vector<2x256xf32> to vector<2x128xf32>
    %384 = arith.addf %382, %383 : vector<2x128xf32>
    %385 = vector.extract_strided_slice %384 {offsets = [0, 0], sizes = [2, 32], strides = [1, 1]} : vector<2x128xf32> to vector<2x32xf32>
    %386 = arith.negf %385 : vector<2x32xf32>
    %387 = math.exp %386 : vector<2x32xf32>
    %cst_101 = arith.constant 1.000000e+00 : f32
    %388 = vector.broadcast %cst_101 : f32 to vector<2x32xf32>
    %389 = arith.addf %388, %387 : vector<2x32xf32>
    %390 = arith.divf %388, %389 : vector<2x32xf32>
    %391 = vector.extract_strided_slice %384 {offsets = [0, 32], sizes = [2, 32], strides = [1, 1]} : vector<2x128xf32> to vector<2x32xf32>
    %392 = arith.negf %391 : vector<2x32xf32>
    %393 = math.exp %392 : vector<2x32xf32>
    %cst_102 = arith.constant 1.000000e+00 : f32
    %394 = vector.broadcast %cst_102 : f32 to vector<2x32xf32>
    %395 = arith.addf %394, %393 : vector<2x32xf32>
    %396 = arith.divf %394, %395 : vector<2x32xf32>
    %397 = vector.extract_strided_slice %384 {offsets = [0, 64], sizes = [2, 32], strides = [1, 1]} : vector<2x128xf32> to vector<2x32xf32>
    %398 = math.tanh %397 : vector<2x32xf32>
    %399 = vector.extract_strided_slice %384 {offsets = [0, 96], sizes = [2, 32], strides = [1, 1]} : vector<2x128xf32> to vector<2x32xf32>
    %400 = arith.negf %399 : vector<2x32xf32>
    %401 = math.exp %400 : vector<2x32xf32>
    %cst_103 = arith.constant 1.000000e+00 : f32
    %402 = vector.broadcast %cst_103 : f32 to vector<2x32xf32>
    %403 = arith.addf %402, %401 : vector<2x32xf32>
    %404 = arith.divf %402, %403 : vector<2x32xf32>
    %405 = arith.mulf %396, %335 : vector<2x32xf32>
    %406 = arith.mulf %390, %398 : vector<2x32xf32>
    %407 = arith.addf %405, %406 : vector<2x32xf32>
    %408 = math.tanh %407 : vector<2x32xf32>
    %409 = arith.mulf %404, %408 : vector<2x32xf32>
    %c2_i32_104 = arith.constant 2 : i32
    %410 = arith.muli %c2_i32_91, %c2_i32_104 : i32
    %411 = arith.index_cast %410 : i32 to index
    %c0_105 = arith.constant 0 : index
    %412 = vector.load %arg20[%411, %c0_105] : memref<8x32xf32, #tpu.memory_space<vmem>>, vector<2x32xf32>
    tpu.vector_store %arg20[%411, %c0_105], %381 {strides = array<i32>} : memref<8x32xf32, #tpu.memory_space<vmem>>, vector<2x32xf32>,
    %c2_i32_106 = arith.constant 2 : i32
    %413 = arith.muli %345, %c2_i32_106 : i32
    %414 = arith.index_cast %413 : i32 to index
    %c0_107 = arith.constant 0 : index
    %415 = vector.load %arg21[%414, %c0_107] : memref<8x32xf32, #tpu.memory_space<vmem>>, vector<2x32xf32>
    tpu.vector_store %arg21[%414, %c0_107], %409 {strides = array<i32>} : memref<8x32xf32, #tpu.memory_space<vmem>>, vector<2x32xf32>,
    %416 = tpu.concatenate %381, %409 in 1 : vector<2x32xf32>, vector<2x32xf32> -> vector<2x64xf32>
    %c3_i32_108 = arith.constant 3 : i32
    %c3_i32_109 = arith.constant 3 : i32
    %417 = arith.subi %c3_i32_109, %c3_i32_108 : i32
    %418 = arith.truncf %416 : vector<2x64xf32> to vector<2x64xbf16>
    %cst_110 = arith.constant dense<0.000000e+00> : vector<2x256xf32>
    %419 = tpu.matmul %418, %198, %cst_110 {dimension_numbers = #tpu.dot_dimension_numbers<[1], [0], [0], [1], [0, 0, 1, 1], [], []>} : vector<2x64xbf16>, vector<64x256xbf16>, vector<2x256xf32> -> vector<2x256xf32>
    %c2_i32_111 = arith.constant 2 : i32
    %420 = arith.muli %c3_i32_108, %c2_i32_111 : i32
    %421 = arith.index_cast %420 : i32 to index
    %c0_112 = arith.constant 0 : index
    %422 = vector.load %arg19[%421, %c0_112] : memref<8x256xf32, #tpu.memory_space<vmem>>, vector<2x256xf32>
    %c2_i32_113 = arith.constant 2 : i32
    %423 = arith.muli %417, %c2_i32_113 : i32
    %424 = arith.index_cast %423 : i32 to index
    %c0_114 = arith.constant 0 : index
    %425 = vector.load %arg19[%424, %c0_114] : memref<8x256xf32, #tpu.memory_space<vmem>>, vector<2x256xf32>
    %426 = vector.extract_strided_slice %422 {offsets = [0, 0], sizes = [2, 128], strides = [1, 1]} : vector<2x256xf32> to vector<2x128xf32>
    %427 = vector.extract_strided_slice %419 {offsets = [0, 0], sizes = [2, 128], strides = [1, 1]} : vector<2x256xf32> to vector<2x128xf32>
    %428 = arith.addf %426, %427 : vector<2x128xf32>
    %429 = vector.extract_strided_slice %428 {offsets = [0, 0], sizes = [2, 32], strides = [1, 1]} : vector<2x128xf32> to vector<2x32xf32>
    %430 = arith.negf %429 : vector<2x32xf32>
    %431 = math.exp %430 : vector<2x32xf32>
    %cst_115 = arith.constant 1.000000e+00 : f32
    %432 = vector.broadcast %cst_115 : f32 to vector<2x32xf32>
    %433 = arith.addf %432, %431 : vector<2x32xf32>
    %434 = arith.divf %432, %433 : vector<2x32xf32>
    %435 = vector.extract_strided_slice %428 {offsets = [0, 32], sizes = [2, 32], strides = [1, 1]} : vector<2x128xf32> to vector<2x32xf32>
    %436 = arith.negf %435 : vector<2x32xf32>
    %437 = math.exp %436 : vector<2x32xf32>
    %cst_116 = arith.constant 1.000000e+00 : f32
    %438 = vector.broadcast %cst_116 : f32 to vector<2x32xf32>
    %439 = arith.addf %438, %437 : vector<2x32xf32>
    %440 = arith.divf %438, %439 : vector<2x32xf32>
    %441 = vector.extract_strided_slice %428 {offsets = [0, 64], sizes = [2, 32], strides = [1, 1]} : vector<2x128xf32> to vector<2x32xf32>
    %442 = math.tanh %441 : vector<2x32xf32>
    %443 = vector.extract_strided_slice %428 {offsets = [0, 96], sizes = [2, 32], strides = [1, 1]} : vector<2x128xf32> to vector<2x32xf32>
    %444 = arith.negf %443 : vector<2x32xf32>
    %445 = math.exp %444 : vector<2x32xf32>
    %cst_117 = arith.constant 1.000000e+00 : f32
    %446 = vector.broadcast %cst_117 : f32 to vector<2x32xf32>
    %447 = arith.addf %446, %445 : vector<2x32xf32>
    %448 = arith.divf %446, %447 : vector<2x32xf32>
    %449 = arith.mulf %440, %379 : vector<2x32xf32>
    %450 = arith.mulf %434, %442 : vector<2x32xf32>
    %451 = arith.addf %449, %450 : vector<2x32xf32>
    %452 = math.tanh %451 : vector<2x32xf32>
    %453 = arith.mulf %448, %452 : vector<2x32xf32>
    %454 = vector.extract_strided_slice %425 {offsets = [0, 128], sizes = [2, 128], strides = [1, 1]} : vector<2x256xf32> to vector<2x128xf32>
    %455 = vector.extract_strided_slice %419 {offsets = [0, 128], sizes = [2, 128], strides = [1, 1]} : vector<2x256xf32> to vector<2x128xf32>
    %456 = arith.addf %454, %455 : vector<2x128xf32>
    %457 = vector.extract_strided_slice %456 {offsets = [0, 0], sizes = [2, 32], strides = [1, 1]} : vector<2x128xf32> to vector<2x32xf32>
    %458 = arith.negf %457 : vector<2x32xf32>
    %459 = math.exp %458 : vector<2x32xf32>
    %cst_118 = arith.constant 1.000000e+00 : f32
    %460 = vector.broadcast %cst_118 : f32 to vector<2x32xf32>
    %461 = arith.addf %460, %459 : vector<2x32xf32>
    %462 = arith.divf %460, %461 : vector<2x32xf32>
    %463 = vector.extract_strided_slice %456 {offsets = [0, 32], sizes = [2, 32], strides = [1, 1]} : vector<2x128xf32> to vector<2x32xf32>
    %464 = arith.negf %463 : vector<2x32xf32>
    %465 = math.exp %464 : vector<2x32xf32>
    %cst_119 = arith.constant 1.000000e+00 : f32
    %466 = vector.broadcast %cst_119 : f32 to vector<2x32xf32>
    %467 = arith.addf %466, %465 : vector<2x32xf32>
    %468 = arith.divf %466, %467 : vector<2x32xf32>
    %469 = vector.extract_strided_slice %456 {offsets = [0, 64], sizes = [2, 32], strides = [1, 1]} : vector<2x128xf32> to vector<2x32xf32>
    %470 = math.tanh %469 : vector<2x32xf32>
    %471 = vector.extract_strided_slice %456 {offsets = [0, 96], sizes = [2, 32], strides = [1, 1]} : vector<2x128xf32> to vector<2x32xf32>
    %472 = arith.negf %471 : vector<2x32xf32>
    %473 = math.exp %472 : vector<2x32xf32>
    %cst_120 = arith.constant 1.000000e+00 : f32
    %474 = vector.broadcast %cst_120 : f32 to vector<2x32xf32>
    %475 = arith.addf %474, %473 : vector<2x32xf32>
    %476 = arith.divf %474, %475 : vector<2x32xf32>
    %477 = arith.mulf %468, %407 : vector<2x32xf32>
    %478 = arith.mulf %462, %470 : vector<2x32xf32>
    %479 = arith.addf %477, %478 : vector<2x32xf32>
    %480 = math.tanh %479 : vector<2x32xf32>
    %481 = arith.mulf %476, %480 : vector<2x32xf32>
    %c2_i32_121 = arith.constant 2 : i32
    %482 = arith.muli %c3_i32_108, %c2_i32_121 : i32
    %483 = arith.index_cast %482 : i32 to index
    %c0_122 = arith.constant 0 : index
    %484 = vector.load %arg20[%483, %c0_122] : memref<8x32xf32, #tpu.memory_space<vmem>>, vector<2x32xf32>
    tpu.vector_store %arg20[%483, %c0_122], %453 {strides = array<i32>} : memref<8x32xf32, #tpu.memory_space<vmem>>, vector<2x32xf32>,
    %c2_i32_123 = arith.constant 2 : i32
    %485 = arith.muli %417, %c2_i32_123 : i32
    %486 = arith.index_cast %485 : i32 to index
    %c0_124 = arith.constant 0 : index
    %487 = vector.load %arg21[%486, %c0_124] : memref<8x32xf32, #tpu.memory_space<vmem>>, vector<2x32xf32>
    tpu.vector_store %arg21[%486, %c0_124], %481 {strides = array<i32>} : memref<8x32xf32, #tpu.memory_space<vmem>>, vector<2x32xf32>,
    %488 = tpu.concatenate %453, %481 in 1 : vector<2x32xf32>, vector<2x32xf32> -> vector<2x64xf32>
    %c4_i32 = arith.constant 4 : i32
    %c0_125 = arith.constant 0 : index
    %c0_126 = arith.constant 0 : index
    %489 = vector.load %arg20[%c0_125, %c0_126] : memref<8x32xf32, #tpu.memory_space<vmem>>, vector<8x32xf32>
    %490 = arith.truncf %489 : vector<8x32xf32> to vector<8x32xbf16>
    %c0_127 = arith.constant 0 : index
    %c0_128 = arith.constant 0 : index
    %491 = vector.load %arg16[%c0_127, %c0_128] : memref<64x16xbf16, #tpu.memory_space<vmem>>, vector<32x16xbf16>
    %cst_129 = arith.constant dense<0.000000e+00> : vector<8x16xf32>
    %492 = tpu.matmul %490, %491, %cst_129 {dimension_numbers = #tpu.dot_dimension_numbers<[1], [0], [0], [1], [0, 0, 1, 1], [], []>} : vector<8x32xbf16>, vector<32x16xbf16>, vector<8x16xf32> -> vector<8x16xf32>
    %c0_130 = arith.constant 0 : index
    %c0_131 = arith.constant 0 : index
    %493 = vector.load %arg21[%c0_130, %c0_131] : memref<8x32xf32, #tpu.memory_space<vmem>>, vector<8x32xf32>
    %494 = arith.truncf %493 : vector<8x32xf32> to vector<8x32xbf16>
    %c32 = arith.constant 32 : index
    %c0_132 = arith.constant 0 : index
    %495 = vector.load %arg16[%c32, %c0_132] : memref<64x16xbf16, #tpu.memory_space<vmem>>, vector<32x16xbf16>
    %cst_133 = arith.constant dense<0.000000e+00> : vector<8x16xf32>
    %496 = tpu.matmul %494, %495, %cst_133 {dimension_numbers = #tpu.dot_dimension_numbers<[1], [0], [0], [1], [0, 0, 1, 1], [], []>} : vector<8x32xbf16>, vector<32x16xbf16>, vector<8x16xf32> -> vector<8x16xf32>
    %497 = arith.addf %492, %496 : vector<8x16xf32>
    %c0_134 = arith.constant 0 : index
    %c0_135 = arith.constant 0 : index
    %498 = vector.load %arg17[%c0_134, %c0_135] : memref<1x16xf32, #tpu.memory_space<vmem>>, vector<1x16xf32>
    %499 = vector.broadcast %498 : vector<1x16xf32> to vector<8x16xf32>
    %500 = arith.addf %497, %499 : vector<8x16xf32>
    %c0_136 = arith.constant 0 : index
    %c0_137 = arith.constant 0 : index
    %501 = vector.load %arg18[%c0_136, %c0_137] : memref<8x16xf32, #tpu.memory_space<vmem>>, vector<8x16xf32>
    tpu.vector_store %arg18[%c0_136, %c0_137], %500 {strides = array<i32>} : memref<8x16xf32, #tpu.memory_space<vmem>>, vector<8x16xf32>,
    return
  }
}

</mosaic_0001>

<llo_original>
// kernel: crnn_forward.1
$region0: #{crnn_forward.1}
  #allocation0 [shape = 'u32[]', space=smem, size = 0x4, offset = 0x4, fixed_abs, tag = 'smem constant byte address 0x4 - core index']
  #allocation1 [shape = 'u32[72,128]{1,0:T(1,128)}', space=vmem, size = 0x9000, scoped, tag = 'internal scratch']
  #allocation2 [shape = 'f32[8,256]{1,0:T(8,128)}', space=vmem, size = 0x2000, scoped, tag = 'scratch operand']
  #allocation3 [shape = 'f32[8,32]{1,0:T(8,128)}', space=vmem, size = 0x1000, scoped, tag = 'scratch operand']
  #allocation4 [shape = 'f32[8,32]{1,0:T(8,128)}', space=vmem, size = 0x1000, scoped, tag = 'scratch operand']
  %s0 = inlined_call_operand.vmem [shape: f32[2,16,16,1], index: 0, kind: input, shape index: {}]
  %s1 = inlined_call_operand.vmem [shape: bf16[9,8], index: 1, kind: input, shape index: {}]
  %s2 = inlined_call_operand.vmem [shape: f32[1,8], index: 2, kind: input, shape index: {}]
  %s3 = inlined_call_operand.vmem [shape: bf16[72,8], index: 3, kind: input, shape index: {}]
  %s4 = inlined_call_operand.vmem [shape: f32[1,8], index: 4, kind: input, shape index: {}]
  %s5 = inlined_call_operand.vmem [shape: bf16[72,16], index: 5, kind: input, shape index: {}]
  %s6 = inlined_call_operand.vmem [shape: f32[1,16], index: 6, kind: input, shape index: {}]
  %s7 = inlined_call_operand.vmem [shape: bf16[144,16], index: 7, kind: input, shape index: {}]
  %s8 = inlined_call_operand.vmem [shape: f32[1,16], index: 8, kind: input, shape index: {}]
  %s9 = inlined_call_operand.vmem [shape: bf16[144,32], index: 9, kind: input, shape index: {}]
  %s10 = inlined_call_operand.vmem [shape: f32[1,32], index: 10, kind: input, shape index: {}]
  %s11 = inlined_call_operand.vmem [shape: bf16[288,32], index: 11, kind: input, shape index: {}]
  %s12 = inlined_call_operand.vmem [shape: f32[1,32], index: 12, kind: input, shape index: {}]
  %s13 = inlined_call_operand.vmem [shape: bf16[128,256], index: 13, kind: input, shape index: {}]
  %s14 = inlined_call_operand.vmem [shape: bf16[64,256], index: 14, kind: input, shape index: {}]
  %s15 = inlined_call_operand.vmem [shape: f32[1,256], index: 15, kind: input, shape index: {}]
  %s16 = inlined_call_operand.vmem [shape: bf16[64,16], index: 16, kind: input, shape index: {}]
  %s17 = inlined_call_operand.vmem [shape: f32[1,16], index: 17, kind: input, shape index: {}]
  %s18 = inlined_call_operand.hbm [shape: f32[8,16], index: 18, kind: output, shape index: {}]
  %s19 = sld [smem:[#allocation0]]
  $region82: #{crnn_forward.1} parent=0
    _
  %s21 = ssub.s32 1, %s19
  %s22 = scalar_select 0, %s21, %s19
  $region1: #{crnn_forward.1} parent=0
    #allocation5 [shape = 'u8[4096]{0}', space=vmem, size = 0x1000, scoped, tag = 'output window, operand 0, single buffered']
    #allocation6 [shape = 's32[1]{0}', space=sflag, size = 0x4, scoped, tag = 'scoped memory for crnn_forward.1']
    %23 = vsyncpa [#allocation6], 0
    // Predicated region
    $region2: #{crnn_forward.1} parent=1 // pred_check
      _
    $region3: #{crnn_forward.1} parent=1 // pred_check_branch
      %25 = sbr.rel (0) target = $region5
    $region4: #{crnn_forward.1} parent=1 // pred_region
      _
    $region5: #{crnn_forward.1} parent=1 // pred_fallthru
      _
    // Predicated region
    $region6: #{crnn_forward.1} parent=1 // pred_check
      _
    $region7: #{crnn_forward.1} parent=1 // pred_check_branch
      %27 = sbr.rel (0) target = $region9
    $region8: #{crnn_forward.1} parent=1 // pred_region
      _
    $region9: #{crnn_forward.1} parent=1 // pred_fallthru
      _
    // Predicated region
    $region10: #{crnn_forward.1} parent=1 // pred_check
      _
    $region11: #{crnn_forward.1} parent=1 // pred_check_branch
      %29 = sbr.rel (0) target = $region13
    $region12: #{crnn_forward.1} parent=1 // pred_region
      _
    $region13: #{crnn_forward.1} parent=1 // pred_fallthru
      _
    // Predicated region
    $region14: #{crnn_forward.1} parent=1 // pred_check
      _
    $region15: #{crnn_forward.1} parent=1 // pred_check_branch
      %31 = sbr.rel (0) target = $region17
    $region16: #{crnn_forward.1} parent=1 // pred_region
      _
    $region17: #{crnn_forward.1} parent=1 // pred_fallthru
      _
    // Predicated region
    $region18: #{crnn_forward.1} parent=1 // pred_check
      _
    $region19: #{crnn_forward.1} parent=1 // pred_check_branch
      %33 = sbr.rel (0) target = $region21
    $region20: #{crnn_forward.1} parent=1 // pred_region
      _
    $region21: #{crnn_forward.1} parent=1 // pred_fallthru
      _
    // Predicated region
    $region22: #{crnn_forward.1} parent=1 // pred_check
      _
    $region23: #{crnn_forward.1} parent=1 // pred_check_branch
      %35 = sbr.rel (0) target = $region25
    $region24: #{crnn_forward.1} parent=1 // pred_region
      _
    $region25: #{crnn_forward.1} parent=1 // pred_fallthru
      _
    // Predicated region
    $region26: #{crnn_forward.1} parent=1 // pred_check
      _
    $region27: #{crnn_forward.1} parent=1 // pred_check_branch
      %37 = sbr.rel (0) target = $region29
    $region28: #{crnn_forward.1} parent=1 // pred_region
      _
    $region29: #{crnn_forward.1} parent=1 // pred_fallthru
      _
    // Predicated region
    $region30: #{crnn_forward.1} parent=1 // pred_check
      _
    $region31: #{crnn_forward.1} parent=1 // pred_check_branch
      %39 = sbr.rel (0) target = $region33
    $region32: #{crnn_forward.1} parent=1 // pred_region
      _
    $region33: #{crnn_forward.1} parent=1 // pred_fallthru
      _
    // Predicated region
    $region34: #{crnn_forward.1} parent=1 // pred_check
      _
    $region35: #{crnn_forward.1} parent=1 // pred_check_branch
      %41 = sbr.rel (0) target = $region37
    $region36: #{crnn_forward.1} parent=1 // pred_region
      _
    $region37: #{crnn_forward.1} parent=1 // pred_fallthru
      _
    // Predicated region
    $region38: #{crnn_forward.1} parent=1 // pred_check
      _
    $region39: #{crnn_forward.1} parent=1 // pred_check_branch
      %43 = sbr.rel (0) target = $region41
    $region40: #{crnn_forward.1} parent=1 // pred_region
      _
    $region41: #{crnn_forward.1} parent=1 // pred_fallthru
      _
    // Predicated region
    $region42: #{crnn_forward.1} parent=1 // pred_check
      _
    $region43: #{crnn_forward.1} parent=1 // pred_check_branch
      %45 = sbr.rel (0) target = $region45
    $region44: #{crnn_forward.1} parent=1 // pred_region
      _
    $region45: #{crnn_forward.1} parent=1 // pred_fallthru
      _
    // Predicated region
    $region46: #{crnn_forward.1} parent=1 // pred_check
      _
    $region47: #{crnn_forward.1} parent=1 // pred_check_branch
      %47 = sbr.rel (0) target = $region49
    $region48: #{crnn_forward.1} parent=1 // pred_region
      _
    $region49: #{crnn_forward.1} parent=1 // pred_fallthru
      _
    // Predicated region
    $region50: #{crnn_forward.1} parent=1 // pred_check
      _
    $region51: #{crnn_forward.1} parent=1 // pred_check_branch
      %49 = sbr.rel (0) target = $region53
    $region52: #{crnn_forward.1} parent=1 // pred_region
      _
    $region53: #{crnn_forward.1} parent=1 // pred_fallthru
      _
    // Predicated region
    $region54: #{crnn_forward.1} parent=1 // pred_check
      _
    $region55: #{crnn_forward.1} parent=1 // pred_check_branch
      %51 = sbr.rel (0) target = $region57
    $region56: #{crnn_forward.1} parent=1 // pred_region
      _
    $region57: #{crnn_forward.1} parent=1 // pred_fallthru
      _
    // Predicated region
    $region58: #{crnn_forward.1} parent=1 // pred_check
      _
    $region59: #{crnn_forward.1} parent=1 // pred_check_branch
      %53 = sbr.rel (0) target = $region61
    $region60: #{crnn_forward.1} parent=1 // pred_region
      _
    $region61: #{crnn_forward.1} parent=1 // pred_fallthru
      _
    // Predicated region
    $region62: #{crnn_forward.1} parent=1 // pred_check
      _
    $region63: #{crnn_forward.1} parent=1 // pred_check_branch
      %55 = sbr.rel (0) target = $region65
    $region64: #{crnn_forward.1} parent=1 // pred_region
      _
    $region65: #{crnn_forward.1} parent=1 // pred_fallthru
      _
    // Predicated region
    $region66: #{crnn_forward.1} parent=1 // pred_check
      _
    $region67: #{crnn_forward.1} parent=1 // pred_check_branch
      %57 = sbr.rel (0) target = $region69
    $region68: #{crnn_forward.1} parent=1 // pred_region
      _
    $region69: #{crnn_forward.1} parent=1 // pred_fallthru
      _
    // Predicated region
    $region70: #{crnn_forward.1} parent=1 // pred_check
      _
    $region71: #{crnn_forward.1} parent=1 // pred_check_branch
      %59 = sbr.rel (0) target = $region73
    $region72: #{crnn_forward.1} parent=1 // pred_region
      _
    $region73: #{crnn_forward.1} parent=1 // pred_fallthru
      _
    %v61 = vld [vmem:[%s0] sm:$0xff]
    %v62 = vld [vmem:[%s0 + $0x8] sm:$0xff]
    %v63 = vld [vmem:[%s0 + $0x10] sm:$0xff]
    %v64 = vld [vmem:[%s0 + $0x18] sm:$0xff]
    %v65 = vld [vmem:[%s0 + $0x20] sm:$0xff]
    %v66 = vld [vmem:[%s0 + $0x28] sm:$0xff]
    %v67 = vld [vmem:[%s0 + $0x30] sm:$0xff]
    %v68 = vld [vmem:[%s0 + $0x38] sm:$0xff]
    %v69 = vld [vmem:[%s0 + $0x40] sm:$0xff]
    %v70 = vld [vmem:[%s0 + $0x48] sm:$0xff]
    %v71 = vld [vmem:[%s0 + $0x50] sm:$0xff]
    %v72 = vld [vmem:[%s0 + $0x58] sm:$0xff]
    %v73 = vld [vmem:[%s0 + $0x60] sm:$0xff]
    %v74 = vld [vmem:[%s0 + $0x68] sm:$0xff]
    %v75 = vld [vmem:[%s0 + $0x70] sm:$0xff]
    %v76 = vld [vmem:[%s0 + $0x78] sm:$0xff]
    %v77 = vld [vmem:[%s0 + $0x80] sm:$0xff]
    %v78 = vld [vmem:[%s0 + $0x88] sm:$0xff]
    %v79 = vld [vmem:[%s0 + $0x90] sm:$0xff]
    %v80 = vld [vmem:[%s0 + $0x98] sm:$0xff]
    %v81 = vld [vmem:[%s0 + $0xa0] sm:$0xff]
    %v82 = vld [vmem:[%s0 + $0xa8] sm:$0xff]
    %v83 = vld [vmem:[%s0 + $0xb0] sm:$0xff]
    %v84 = vld [vmem:[%s0 + $0xb8] sm:$0xff]
    %v85 = vld [vmem:[%s0 + $0xc0] sm:$0xff]
    %v86 = vld [vmem:[%s0 + $0xc8] sm:$0xff]
    %v87 = vld [vmem:[%s0 + $0xd0] sm:$0xff]
    %v88 = vld [vmem:[%s0 + $0xd8] sm:$0xff]
    %v89 = vld [vmem:[%s0 + $0xe0] sm:$0xff]
    %v90 = vld [vmem:[%s0 + $0xe8] sm:$0xff]
    %v91 = vld [vmem:[%s0 + $0xf0] sm:$0xff]
    %v92 = vld [vmem:[%s0 + $0xf8] sm:$0xff]
    %v93 = vld [vmem:[%s0 + $0x100] sm:$0xff]
    %v94 = vld [vmem:[%s0 + $0x108] sm:$0xff]
    %v95 = vld [vmem:[%s0 + $0x110] sm:$0xff]
    %v96 = vld [vmem:[%s0 + $0x118] sm:$0xff]
    %v97 = vld [vmem:[%s0 + $0x120] sm:$0xff]
    %v98 = vld [vmem:[%s0 + $0x128] sm:$0xff]
    %v99 = vld [vmem:[%s0 + $0x130] sm:$0xff]
    %v100 = vld [vmem:[%s0 + $0x138] sm:$0xff]
    %v101 = vld [vmem:[%s0 + $0x140] sm:$0xff]
    %v102 = vld [vmem:[%s0 + $0x148] sm:$0xff]
    %v103 = vld [vmem:[%s0 + $0x150] sm:$0xff]
    %v104 = vld [vmem:[%s0 + $0x158] sm:$0xff]
    %v105 = vld [vmem:[%s0 + $0x160] sm:$0xff]
    %v106 = vld [vmem:[%s0 + $0x168] sm:$0xff]
    %v107 = vld [vmem:[%s0 + $0x170] sm:$0xff]
    %v108 = vld [vmem:[%s0 + $0x178] sm:$0xff]
    %v109 = vld [vmem:[%s0 + $0x180] sm:$0xff]
    %v110 = vld [vmem:[%s0 + $0x188] sm:$0xff]
    %v111 = vld [vmem:[%s0 + $0x190] sm:$0xff]
    %v112 = vld [vmem:[%s0 + $0x198] sm:$0xff]
    %v113 = vld [vmem:[%s0 + $0x1a0] sm:$0xff]
    %v114 = vld [vmem:[%s0 + $0x1a8] sm:$0xff]
    %v115 = vld [vmem:[%s0 + $0x1b0] sm:$0xff]
    %v116 = vld [vmem:[%s0 + $0x1b8] sm:$0xff]
    %v117 = vld [vmem:[%s0 + $0x1c0] sm:$0xff]
    %v118 = vld [vmem:[%s0 + $0x1c8] sm:$0xff]
    %v119 = vld [vmem:[%s0 + $0x1d0] sm:$0xff]
    %v120 = vld [vmem:[%s0 + $0x1d8] sm:$0xff]
    %v121 = vld [vmem:[%s0 + $0x1e0] sm:$0xff]
    %v122 = vld [vmem:[%s0 + $0x1e8] sm:$0xff]
    %v123 = vld [vmem:[%s0 + $0x1f0] sm:$0xff]
    %v124 = vld [vmem:[%s0 + $0x1f8] sm:$0xff]
    %vm190 = vcmask 1040384
    %v191 = vrot.slane 0.0, 7
    %v192 = vsel %vm190, %v191, %v191
    %v193 = vrot.slane %v61, 7
    %v194 = vrot.slane %v62, 7
    %v195 = vsel %vm190, %v193, %v194
    %v196 = vrot.slane %v63, 7
    %v197 = vrot.slane %v64, 7
    %v198 = vsel %vm190, %v196, %v197
    %v199 = vrot.slane %v65, 7
    %v200 = vrot.slane %v66, 7
    %v201 = vsel %vm190, %v199, %v200
    %v202 = vrot.slane %v67, 7
    %v203 = vrot.slane %v68, 7
    %v204 = vsel %vm190, %v202, %v203
    %v205 = vrot.slane %v69, 7
    %v206 = vrot.slane %v70, 7
    %v207 = vsel %vm190, %v205, %v206
    %v208 = vrot.slane %v71, 7
    %v209 = vrot.slane %v72, 7
    %v210 = vsel %vm190, %v208, %v209
    %v211 = vrot.slane %v73, 7
    %v212 = vrot.slane %v74, 7
    %v213 = vsel %vm190, %v211, %v212
    %v214 = vrot.slane %v75, 7
    %v215 = vrot.slane %v76, 7
    %v216 = vsel %vm190, %v214, %v215
    %v217 = vrot.slane %v77, 7
    %v218 = vrot.slane %v78, 7
    %v219 = vsel %vm190, %v217, %v218
    %v220 = vrot.slane %v79, 7
    %v221 = vrot.slane %v80, 7
    %v222 = vsel %vm190, %v220, %v221
    %v223 = vrot.slane %v81, 7
    %v224 = vrot.slane %v82, 7
    %v225 = vsel %vm190, %v223, %v224
    %v226 = vrot.slane %v83, 7
    %v227 = vrot.slane %v84, 7
    %v228 = vsel %vm190, %v226, %v227
    %v229 = vrot.slane %v85, 7
    %v230 = vrot.slane %v86, 7
    %v231 = vsel %vm190, %v229, %v230
    %v232 = vrot.slane %v87, 7
    %v233 = vrot.slane %v88, 7
    %v234 = vsel %vm190, %v232, %v233
    %v235 = vrot.slane %v89, 7
    %v236 = vrot.slane %v90, 7
    %v237 = vsel %vm190, %v235, %v236
    %v238 = vrot.slane %v91, 7
    %v239 = vrot.slane %v92, 7
    %v240 = vsel %vm190, %v238, %v239
    %v241 = vrot.slane %v93, 7
    %v242 = vrot.slane %v94, 7
    %v243 = vsel %vm190, %v241, %v242
    %v244 = vrot.slane %v95, 7
    %v245 = vrot.slane %v96, 7
    %v246 = vsel %vm190, %v244, %v245
    %v247 = vrot.slane %v97, 7
    %v248 = vrot.slane %v98, 7
    %v249 = vsel %vm190, %v247, %v248
    %v250 = vrot.slane %v99, 7
    %v251 = vrot.slane %v100, 7
    %v252 = vsel %vm190, %v250, %v251
    %v253 = vrot.slane %v101, 7
    %v254 = vrot.slane %v102, 7
    %v255 = vsel %vm190, %v253, %v254
    %v256 = vrot.slane %v103, 7
    %v257 = vrot.slane %v104, 7
    %v258 = vsel %vm190, %v256, %v257
    %v259 = vrot.slane %v105, 7
    %v260 = vrot.slane %v106, 7
    %v261 = vsel %vm190, %v259, %v260
    %v262 = vrot.slane %v107, 7
    %v263 = vrot.slane %v108, 7
    %v264 = vsel %vm190, %v262, %v263
    %v265 = vrot.slane %v109, 7
    %v266 = vrot.slane %v110, 7
    %v267 = vsel %vm190, %v265, %v266
    %v268 = vrot.slane %v111, 7
    %v269 = vrot.slane %v112, 7
    %v270 = vsel %vm190, %v268, %v269
    %v271 = vrot.slane %v113, 7
    %v272 = vrot.slane %v114, 7
    %v273 = vsel %vm190, %v271, %v272
    %v274 = vrot.slane %v115, 7
    %v275 = vrot.slane %v116, 7
    %v276 = vsel %vm190, %v274, %v275
    %v277 = vrot.slane %v117, 7
    %v278 = vrot.slane %v118, 7
    %v279 = vsel %vm190, %v277, %v278
    %v280 = vrot.slane %v119, 7
    %v281 = vrot.slane %v120, 7
    %v282 = vsel %vm190, %v280, %v281
    %v283 = vrot.slane %v121, 7
    %v284 = vrot.slane %v122, 7
    %v285 = vsel %vm190, %v283, %v284
    %v286 = vrot.slane %v123, 7
    %v287 = vrot.slane %v124, 7
    %v288 = vsel %vm190, %v286, %v287
    %v385 = vsel %vm190, 0.0, %v191
    %v386 = vsel %vm190, 0.0, %v193
    %v387 = vsel %vm190, 0.0, %v196
    %v388 = vsel %vm190, 0.0, %v199
    %v389 = vsel %vm190, 0.0, %v202
    %v390 = vsel %vm190, 0.0, %v205
    %v391 = vsel %vm190, 0.0, %v208
    %v392 = vsel %vm190, 0.0, %v211
    %v393 = vsel %vm190, 0.0, %v214
    %v394 = vsel %vm190, 0.0, %v217
    %v395 = vsel %vm190, 0.0, %v220
    %v396 = vsel %vm190, 0.0, %v223
    %v397 = vsel %vm190, 0.0, %v226
    %v398 = vsel %vm190, 0.0, %v229
    %v399 = vsel %vm190, 0.0, %v232
    %v400 = vsel %vm190, 0.0, %v235
    %v401 = vsel %vm190, 0.0, %v238
    %v402 = vsel %vm190, 0.0, %v241
    %v403 = vsel %vm190, 0.0, %v244
    %v404 = vsel %vm190, 0.0, %v247
    %v405 = vsel %vm190, 0.0, %v250
    %v406 = vsel %vm190, 0.0, %v253
    %v407 = vsel %vm190, 0.0, %v256
    %v408 = vsel %vm190, 0.0, %v259
    %v409 = vsel %vm190, 0.0, %v262
    %v410 = vsel %vm190, 0.0, %v265
    %v411 = vsel %vm190, 0.0, %v268
    %v412 = vsel %vm190, 0.0, %v271
    %v413 = vsel %vm190, 0.0, %v274
    %v414 = vsel %vm190, 0.0, %v277
    %v415 = vsel %vm190, 0.0, %v280
    %v416 = vsel %vm190, 0.0, %v283
    %v417 = vsel %vm190, 0.0, %v286
    %v418 = vsel %vm190, %v191, 0.0
    %v419 = vsel %vm190, %v194, 0.0
    %v420 = vsel %vm190, %v197, 0.0
    %v421 = vsel %vm190, %v200, 0.0
    %v422 = vsel %vm190, %v203, 0.0
    %v423 = vsel %vm190, %v206, 0.0
    %v424 = vsel %vm190, %v209, 0.0
    %v425 = vsel %vm190, %v212, 0.0
    %v426 = vsel %vm190, %v215, 0.0
    %v427 = vsel %vm190, %v218, 0.0
    %v428 = vsel %vm190, %v221, 0.0
    %v429 = vsel %vm190, %v224, 0.0
    %v430 = vsel %vm190, %v227, 0.0
    %v431 = vsel %vm190, %v230, 0.0
    %v432 = vsel %vm190, %v233, 0.0
    %v433 = vsel %vm190, %v236, 0.0
    %v434 = vsel %vm190, %v239, 0.0
    %v435 = vsel %vm190, %v242, 0.0
    %v436 = vsel %vm190, %v245, 0.0
    %v437 = vsel %vm190, %v248, 0.0
    %v438 = vsel %vm190, %v251, 0.0
    %v439 = vsel %vm190, %v254, 0.0
    %v440 = vsel %vm190, %v257, 0.0
    %v441 = vsel %vm190, %v260, 0.0
    %v442 = vsel %vm190, %v263, 0.0
    %v443 = vsel %vm190, %v266, 0.0
    %v444 = vsel %vm190, %v269, 0.0
    %v445 = vsel %vm190, %v272, 0.0
    %v446 = vsel %vm190, %v275, 0.0
    %v447 = vsel %vm190, %v278, 0.0
    %v448 = vsel %vm190, %v281, 0.0
    %v449 = vsel %vm190, %v284, 0.0
    %v450 = vsel %vm190, %v287, 0.0
    %vm513 = vcmask 1046528
    %v514 = vrot.slane %v385, 1
    %v515 = vrot.slane %v192, 1
    %v516 = vsel %vm513, %v514, %v515
    %v517 = vrot.slane %v418, 1
    %v518 = vsel %vm513, %v515, %v517
    %v519 = vrot.slane %v386, 1
    %v520 = vrot.slane %v195, 1
    %v521 = vsel %vm513, %v519, %v520
    %v522 = vrot.slane %v419, 1
    %v523 = vsel %vm513, %v520, %v522
    %v524 = vrot.slane %v387, 1
    %v525 = vrot.slane %v198, 1
    %v526 = vsel %vm513, %v524, %v525
    %v527 = vrot.slane %v420, 1
    %v528 = vsel %vm513, %v525, %v527
    %v529 = vrot.slane %v388, 1
    %v530 = vrot.slane %v201, 1
    %v531 = vsel %vm513, %v529, %v530
    %v532 = vrot.slane %v421, 1
    %v533 = vsel %vm513, %v530, %v532
    %v534 = vrot.slane %v389, 1
    %v535 = vrot.slane %v204, 1
    %v536 = vsel %vm513, %v534, %v535
    %v537 = vrot.slane %v422, 1
    %v538 = vsel %vm513, %v535, %v537
    %v539 = vrot.slane %v390, 1
    %v540 = vrot.slane %v207, 1
    %v541 = vsel %vm513, %v539, %v540
    %v542 = vrot.slane %v423, 1
    %v543 = vsel %vm513, %v540, %v542
    %v544 = vrot.slane %v391, 1
    %v545 = vrot.slane %v210, 1
    %v546 = vsel %vm513, %v544, %v545
    %v547 = vrot.slane %v424, 1
    %v548 = vsel %vm513, %v545, %v547
    %v549 = vrot.slane %v392, 1
    %v550 = vrot.slane %v213, 1
    %v551 = vsel %vm513, %v549, %v550
    %v552 = vrot.slane %v425, 1
    %v553 = vsel %vm513, %v550, %v552
    %v554 = vrot.slane %v393, 1
    %v555 = vrot.slane %v216, 1
    %v556 = vsel %vm513, %v554, %v555
    %v557 = vrot.slane %v426, 1
    %v558 = vsel %vm513, %v555, %v557
    %v559 = vrot.slane %v394, 1
    %v560 = vrot.slane %v219, 1
    %v561 = vsel %vm513, %v559, %v560
    %v562 = vrot.slane %v427, 1
    %v563 = vsel %vm513, %v560, %v562
    %v564 = vrot.slane %v395, 1
    %v565 = vrot.slane %v222, 1
    %v566 = vsel %vm513, %v564, %v565
    %v567 = vrot.slane %v428, 1
    %v568 = vsel %vm513, %v565, %v567
    %v569 = vrot.slane %v396, 1
    %v570 = vrot.slane %v225, 1
    %v571 = vsel %vm513, %v569, %v570
    %v572 = vrot.slane %v429, 1
    %v573 = vsel %vm513, %v570, %v572
    %v574 = vrot.slane %v397, 1
    %v575 = vrot.slane %v228, 1
    %v576 = vsel %vm513, %v574, %v575
    %v577 = vrot.slane %v430, 1
    %v578 = vsel %vm513, %v575, %v577
    %v579 = vrot.slane %v398, 1
    %v580 = vrot.slane %v231, 1
    %v581 = vsel %vm513, %v579, %v580
    %v582 = vrot.slane %v431, 1
    %v583 = vsel %vm513, %v580, %v582
    %v584 = vrot.slane %v399, 1
    %v585 = vrot.slane %v234, 1
    %v586 = vsel %vm513, %v584, %v585
    %v587 = vrot.slane %v432, 1
    %v588 = vsel %vm513, %v585, %v587
    %v589 = vrot.slane %v400, 1
    %v590 = vrot.slane %v237, 1
    %v591 = vsel %vm513, %v589, %v590
    %v592 = vrot.slane %v433, 1
    %v593 = vsel %vm513, %v590, %v592
    %v594 = vrot.slane %v402, 1
    %v595 = vrot.slane %v243, 1
    %v596 = vsel %vm513, %v594, %v595
    %v597 = vrot.slane %v435, 1
    %v598 = vsel %vm513, %v595, %v597
    %v599 = vrot.slane %v403, 1
    %v600 = vrot.slane %v246, 1
    %v601 = vsel %vm513, %v599, %v600
    %v602 = vrot.slane %v436, 1
    %v603 = vsel %vm513, %v600, %v602
    %v604 = vrot.slane %v404, 1
    %v605 = vrot.slane %v249, 1
    %v606 = vsel %vm513, %v604, %v605
    %v607 = vrot.slane %v437, 1
    %v608 = vsel %vm513, %v605, %v607
    %v609 = vrot.slane %v405, 1
    %v610 = vrot.slane %v252, 1
    %v611 = vsel %vm513, %v609, %v610
    %v612 = vrot.slane %v438, 1
    %v613 = vsel %vm513, %v610, %v612
    %v614 = vrot.slane %v406, 1
    %v615 = vrot.slane %v255, 1
    %v616 = vsel %vm513, %v614, %v615
    %v617 = vrot.slane %v439, 1
    %v618 = vsel %vm513, %v615, %v617
    %v619 = vrot.slane %v407, 1
    %v620 = vrot.slane %v258, 1
    %v621 = vsel %vm513, %v619, %v620
    %v622 = vrot.slane %v440, 1
    %v623 = vsel %vm513, %v620, %v622
    %v624 = vrot.slane %v408, 1
    %v625 = vrot.slane %v261, 1
    %v626 = vsel %vm513, %v624, %v625
    %v627 = vrot.slane %v441, 1
    %v628 = vsel %vm513, %v625, %v627
    %v629 = vrot.slane %v409, 1
    %v630 = vrot.slane %v264, 1
    %v631 = vsel %vm513, %v629, %v630
    %v632 = vrot.slane %v442, 1
    %v633 = vsel %vm513, %v630, %v632
    %v634 = vrot.slane %v410, 1
    %v635 = vrot.slane %v267, 1
    %v636 = vsel %vm513, %v634, %v635
    %v637 = vrot.slane %v443, 1
    %v638 = vsel %vm513, %v635, %v637
    %v639 = vrot.slane %v411, 1
    %v640 = vrot.slane %v270, 1
    %v641 = vsel %vm513, %v639, %v640
    %v642 = vrot.slane %v444, 1
    %v643 = vsel %vm513, %v640, %v642
    %v644 = vrot.slane %v412, 1
    %v645 = vrot.slane %v273, 1
    %v646 = vsel %vm513, %v644, %v645
    %v647 = vrot.slane %v445, 1
    %v648 = vsel %vm513, %v645, %v647
    %v649 = vrot.slane %v413, 1
    %v650 = vrot.slane %v276, 1
    %v651 = vsel %vm513, %v649, %v650
    %v652 = vrot.slane %v446, 1
    %v653 = vsel %vm513, %v650, %v652
    %v654 = vrot.slane %v414, 1
    %v655 = vrot.slane %v279, 1
    %v656 = vsel %vm513, %v654, %v655
    %v657 = vrot.slane %v447, 1
    %v658 = vsel %vm513, %v655, %v657
    %v659 = vrot.slane %v415, 1
    %v660 = vrot.slane %v282, 1
    %v661 = vsel %vm513, %v659, %v660
    %v662 = vrot.slane %v448, 1
    %v663 = vsel %vm513, %v660, %v662
    %v664 = vrot.slane %v416, 1
    %v665 = vrot.slane %v285, 1
    %v666 = vsel %vm513, %v664, %v665
    %v667 = vrot.slane %v449, 1
    %v668 = vsel %vm513, %v665, %v667
    %669 = vrot.lane.b32.xlu0 %v516, 1
    %v670 = vpop.permute.xlu0 %669
    %671 = vrot.lane.b32.xlu0 %v518, 1
    %v672 = vpop.permute.xlu0 %671
    %673 = vrot.lane.b32.xlu0 %v521, 1
    %v674 = vpop.permute.xlu0 %673
    %675 = vrot.lane.b32.xlu0 %v523, 1
    %v676 = vpop.permute.xlu0 %675
    %677 = vrot.lane.b32.xlu0 %v526, 1
    %v678 = vpop.permute.xlu0 %677
    %679 = vrot.lane.b32.xlu0 %v528, 1
    %v680 = vpop.permute.xlu0 %679
    %681 = vrot.lane.b32.xlu0 %v531, 1
    %v682 = vpop.permute.xlu0 %681
    %683 = vrot.lane.b32.xlu0 %v533, 1
    %v684 = vpop.permute.xlu0 %683
    %685 = vrot.lane.b32.xlu0 %v536, 1
    %v686 = vpop.permute.xlu0 %685
    %687 = vrot.lane.b32.xlu0 %v538, 1
    %v688 = vpop.permute.xlu0 %687
    %689 = vrot.lane.b32.xlu0 %v541, 1
    %v690 = vpop.permute.xlu0 %689
    %691 = vrot.lane.b32.xlu0 %v543, 1
    %v692 = vpop.permute.xlu0 %691
    %693 = vrot.lane.b32.xlu0 %v546, 1
    %v694 = vpop.permute.xlu0 %693
    %695 = vrot.lane.b32.xlu0 %v548, 1
    %v696 = vpop.permute.xlu0 %695
    %697 = vrot.lane.b32.xlu0 %v551, 1
    %v698 = vpop.permute.xlu0 %697
    %699 = vrot.lane.b32.xlu0 %v553, 1
    %v700 = vpop.permute.xlu0 %699
    %701 = vrot.lane.b32.xlu0 %v556, 1
    %v702 = vpop.permute.xlu0 %701
    %703 = vrot.lane.b32.xlu0 %v558, 1
    %v704 = vpop.permute.xlu0 %703
    %705 = vrot.lane.b32.xlu0 %v561, 1
    %v706 = vpop.permute.xlu0 %705
    %707 = vrot.lane.b32.xlu0 %v563, 1
    %v708 = vpop.permute.xlu0 %707
    %709 = vrot.lane.b32.xlu0 %v566, 1
    %v710 = vpop.permute.xlu0 %709
    %711 = vrot.lane.b32.xlu0 %v568, 1
    %v712 = vpop.permute.xlu0 %711
    %713 = vrot.lane.b32.xlu0 %v571, 1
    %v714 = vpop.permute.xlu0 %713
    %715 = vrot.lane.b32.xlu0 %v573, 1
    %v716 = vpop.permute.xlu0 %715
    %717 = vrot.lane.b32.xlu0 %v576, 1
    %v718 = vpop.permute.xlu0 %717
    %719 = vrot.lane.b32.xlu0 %v578, 1
    %v720 = vpop.permute.xlu0 %719
    %721 = vrot.lane.b32.xlu0 %v581, 1
    %v722 = vpop.permute.xlu0 %721
    %723 = vrot.lane.b32.xlu0 %v583, 1
    %v724 = vpop.permute.xlu0 %723
    %725 = vrot.lane.b32.xlu0 %v586, 1
    %v726 = vpop.permute.xlu0 %725
    %727 = vrot.lane.b32.xlu0 %v588, 1
    %v728 = vpop.permute.xlu0 %727
    %729 = vrot.lane.b32.xlu0 %v591, 1
    %v730 = vpop.permute.xlu0 %729
    %731 = vrot.lane.b32.xlu0 %v593, 1
    %v732 = vpop.permute.xlu0 %731
    %733 = vrot.lane.b32.xlu0 %v596, 1
    %v734 = vpop.permute.xlu0 %733
    %735 = vrot.lane.b32.xlu0 %v598, 1
    %v736 = vpop.permute.xlu0 %735
    %737 = vrot.lane.b32.xlu0 %v601, 1
    %v738 = vpop.permute.xlu0 %737
    %739 = vrot.lane.b32.xlu0 %v603, 1
    %v740 = vpop.permute.xlu0 %739
    %741 = vrot.lane.b32.xlu0 %v606, 1
    %v742 = vpop.permute.xlu0 %741
    %743 = vrot.lane.b32.xlu0 %v608, 1
    %v744 = vpop.permute.xlu0 %743
    %745 = vrot.lane.b32.xlu0 %v611, 1
    %v746 = vpop.permute.xlu0 %745
    %747 = vrot.lane.b32.xlu0 %v613, 1
    %v748 = vpop.permute.xlu0 %747
    %749 = vrot.lane.b32.xlu0 %v616, 1
    %v750 = vpop.permute.xlu0 %749
    %751 = vrot.lane.b32.xlu0 %v618, 1
    %v752 = vpop.permute.xlu0 %751
    %753 = vrot.lane.b32.xlu0 %v621, 1
    %v754 = vpop.permute.xlu0 %753
    %755 = vrot.lane.b32.xlu0 %v623, 1
    %v756 = vpop.permute.xlu0 %755
    %757 = vrot.lane.b32.xlu0 %v626, 1
    %v758 = vpop.permute.xlu0 %757
    %759 = vrot.lane.b32.xlu0 %v628, 1
    %v760 = vpop.permute.xlu0 %759
    %761 = vrot.lane.b32.xlu0 %v631, 1
    %v762 = vpop.permute.xlu0 %761
    %763 = vrot.lane.b32.xlu0 %v633, 1
    %v764 = vpop.permute.xlu0 %763
    %765 = vrot.lane.b32.xlu0 %v636, 1
    %v766 = vpop.permute.xlu0 %765
    %767 = vrot.lane.b32.xlu0 %v638, 1
    %v768 = vpop.permute.xlu0 %767
    %769 = vrot.lane.b32.xlu0 %v641, 1
    %v770 = vpop.permute.xlu0 %769
    %771 = vrot.lane.b32.xlu0 %v643, 1
    %v772 = vpop.permute.xlu0 %771
    %773 = vrot.lane.b32.xlu0 %v646, 1
    %v774 = vpop.permute.xlu0 %773
    %775 = vrot.lane.b32.xlu0 %v648, 1
    %v776 = vpop.permute.xlu0 %775
    %777 = vrot.lane.b32.xlu0 %v651, 1
    %v778 = vpop.permute.xlu0 %777
    %779 = vrot.lane.b32.xlu0 %v653, 1
    %v780 = vpop.permute.xlu0 %779
    %781 = vrot.lane.b32.xlu0 %v656, 1
    %v782 = vpop.permute.xlu0 %781
    %783 = vrot.lane.b32.xlu0 %v658, 1
    %v784 = vpop.permute.xlu0 %783
    %785 = vrot.lane.b32.xlu0 %v661, 1
    %v786 = vpop.permute.xlu0 %785
    %787 = vrot.lane.b32.xlu0 %v663, 1
    %v788 = vpop.permute.xlu0 %787
    %789 = vrot.lane.b32.xlu0 %v666, 1
    %v790 = vpop.permute.xlu0 %789
    %791 = vrot.lane.b32.xlu0 %v668, 1
    %v792 = vpop.permute.xlu0 %791
    %vm855 = vcmask 1045504
    %v856 = vrot.slane %v385, 2
    %v857 = vrot.slane %v192, 2
    %v858 = vsel %vm855, %v856, %v857
    %v859 = vrot.slane %v418, 2
    %v860 = vsel %vm855, %v857, %v859
    %v861 = vrot.slane %v386, 2
    %v862 = vrot.slane %v195, 2
    %v863 = vsel %vm855, %v861, %v862
    %v864 = vrot.slane %v419, 2
    %v865 = vsel %vm855, %v862, %v864
    %v866 = vrot.slane %v387, 2
    %v867 = vrot.slane %v198, 2
    %v868 = vsel %vm855, %v866, %v867
    %v869 = vrot.slane %v420, 2
    %v870 = vsel %vm855, %v867, %v869
    %v871 = vrot.slane %v388, 2
    %v872 = vrot.slane %v201, 2
    %v873 = vsel %vm855, %v871, %v872
    %v874 = vrot.slane %v421, 2
    %v875 = vsel %vm855, %v872, %v874
    %v876 = vrot.slane %v389, 2
    %v877 = vrot.slane %v204, 2
    %v878 = vsel %vm855, %v876, %v877
    %v879 = vrot.slane %v422, 2
    %v880 = vsel %vm855, %v877, %v879
    %v881 = vrot.slane %v390, 2
    %v882 = vrot.slane %v207, 2
    %v883 = vsel %vm855, %v881, %v882
    %v884 = vrot.slane %v423, 2
    %v885 = vsel %vm855, %v882, %v884
    %v886 = vrot.slane %v391, 2
    %v887 = vrot.slane %v210, 2
    %v888 = vsel %vm855, %v886, %v887
    %v889 = vrot.slane %v424, 2
    %v890 = vsel %vm855, %v887, %v889
    %v891 = vrot.slane %v392, 2
    %v892 = vrot.slane %v213, 2
    %v893 = vsel %vm855, %v891, %v892
    %v894 = vrot.slane %v425, 2
    %v895 = vsel %vm855, %v892, %v894
    %v896 = vrot.slane %v393, 2
    %v897 = vrot.slane %v216, 2
    %v898 = vsel %vm855, %v896, %v897
    %v899 = vrot.slane %v426, 2
    %v900 = vsel %vm855, %v897, %v899
    %v901 = vrot.slane %v394, 2
    %v902 = vrot.slane %v219, 2
    %v903 = vsel %vm855, %v901, %v902
    %v904 = vrot.slane %v427, 2
    %v905 = vsel %vm855, %v902, %v904
    %v906 = vrot.slane %v395, 2
    %v907 = vrot.slane %v222, 2
    %v908 = vsel %vm855, %v906, %v907
    %v909 = vrot.slane %v428, 2
    %v910 = vsel %vm855, %v907, %v909
    %v911 = vrot.slane %v396, 2
    %v912 = vrot.slane %v225, 2
    %v913 = vsel %vm855, %v911, %v912
    %v914 = vrot.slane %v429, 2
    %v915 = vsel %vm855, %v912, %v914
    %v916 = vrot.slane %v397, 2
    %v917 = vrot.slane %v228, 2
    %v918 = vsel %vm855, %v916, %v917
    %v919 = vrot.slane %v430, 2
    %v920 = vsel %vm855, %v917, %v919
    %v921 = vrot.slane %v398, 2
    %v922 = vrot.slane %v231, 2
    %v923 = vsel %vm855, %v921, %v922
    %v924 = vrot.slane %v431, 2
    %v925 = vsel %vm855, %v922, %v924
    %v926 = vrot.slane %v399, 2
    %v927 = vrot.slane %v234, 2
    %v928 = vsel %vm855, %v926, %v927
    %v929 = vrot.slane %v432, 2
    %v930 = vsel %vm855, %v927, %v929
    %v931 = vrot.slane %v400, 2
    %v932 = vrot.slane %v237, 2
    %v933 = vsel %vm855, %v931, %v932
    %v934 = vrot.slane %v433, 2
    %v935 = vsel %vm855, %v932, %v934
    %v936 = vrot.slane %v402, 2
    %v937 = vrot.slane %v243, 2
    %v938 = vsel %vm855, %v936, %v937
    %v939 = vrot.slane %v435, 2
    %v940 = vsel %vm855, %v937, %v939
    %v941 = vrot.slane %v403, 2
    %v942 = vrot.slane %v246, 2
    %v943 = vsel %vm855, %v941, %v942
    %v944 = vrot.slane %v436, 2
    %v945 = vsel %vm855, %v942, %v944
    %v946 = vrot.slane %v404, 2
    %v947 = vrot.slane %v249, 2
    %v948 = vsel %vm855, %v946, %v947
    %v949 = vrot.slane %v437, 2
    %v950 = vsel %vm855, %v947, %v949
    %v951 = vrot.slane %v405, 2
    %v952 = vrot.slane %v252, 2
    %v953 = vsel %vm855, %v951, %v952
    %v954 = vrot.slane %v438, 2
    %v955 = vsel %vm855, %v952, %v954
    %v956 = vrot.slane %v406, 2
    %v957 = vrot.slane %v255, 2
    %v958 = vsel %vm855, %v956, %v957
    %v959 = vrot.slane %v439, 2
    %v960 = vsel %vm855, %v957, %v959
    %v961 = vrot.slane %v407, 2
    %v962 = vrot.slane %v258, 2
    %v963 = vsel %vm855, %v961, %v962
    %v964 = vrot.slane %v440, 2
    %v965 = vsel %vm855, %v962, %v964
    %v966 = vrot.slane %v408, 2
    %v967 = vrot.slane %v261, 2
    %v968 = vsel %vm855, %v966, %v967
    %v969 = vrot.slane %v441, 2
    %v970 = vsel %vm855, %v967, %v969
    %v971 = vrot.slane %v409, 2
    %v972 = vrot.slane %v264, 2
    %v973 = vsel %vm855, %v971, %v972
    %v974 = vrot.slane %v442, 2
    %v975 = vsel %vm855, %v972, %v974
    %v976 = vrot.slane %v410, 2
    %v977 = vrot.slane %v267, 2
    %v978 = vsel %vm855, %v976, %v977
    %v979 = vrot.slane %v443, 2
    %v980 = vsel %vm855, %v977, %v979
    %v981 = vrot.slane %v411, 2
    %v982 = vrot.slane %v270, 2
    %v983 = vsel %vm855, %v981, %v982
    %v984 = vrot.slane %v444, 2
    %v985 = vsel %vm855, %v982, %v984
    %v986 = vrot.slane %v412, 2
    %v987 = vrot.slane %v273, 2
    %v988 = vsel %vm855, %v986, %v987
    %v989 = vrot.slane %v445, 2
    %v990 = vsel %vm855, %v987, %v989
    %v991 = vrot.slane %v413, 2
    %v992 = vrot.slane %v276, 2
    %v993 = vsel %vm855, %v991, %v992
    %v994 = vrot.slane %v446, 2
    %v995 = vsel %vm855, %v992, %v994
    %v996 = vrot.slane %v414, 2
    %v997 = vrot.slane %v279, 2
    %v998 = vsel %vm855, %v996, %v997
    %v999 = vrot.slane %v447, 2
    %v1000 = vsel %vm855, %v997, %v999
    %v1001 = vrot.slane %v415, 2
    %v1002 = vrot.slane %v282, 2
    %v1003 = vsel %vm855, %v1001, %v1002
    %v1004 = vrot.slane %v448, 2
    %v1005 = vsel %vm855, %v1002, %v1004
    %v1006 = vrot.slane %v416, 2
    %v1007 = vrot.slane %v285, 2
    %v1008 = vsel %vm855, %v1006, %v1007
    %v1009 = vrot.slane %v449, 2
    %v1010 = vsel %vm855, %v1007, %v1009
    %1011 = vrot.lane.b32.xlu0 %v858, 2
    %v1012 = vpop.permute.xlu0 %1011
    %1013 = vrot.lane.b32.xlu0 %v860, 2
    %v1014 = vpop.permute.xlu0 %1013
    %1015 = vrot.lane.b32.xlu0 %v863, 2
    %v1016 = vpop.permute.xlu0 %1015
    %1017 = vrot.lane.b32.xlu0 %v865, 2
    %v1018 = vpop.permute.xlu0 %1017
    %1019 = vrot.lane.b32.xlu0 %v868, 2
    %v1020 = vpop.permute.xlu0 %1019
    %1021 = vrot.lane.b32.xlu0 %v870, 2
    %v1022 = vpop.permute.xlu0 %1021
    %1023 = vrot.lane.b32.xlu0 %v873, 2
    %v1024 = vpop.permute.xlu0 %1023
    %1025 = vrot.lane.b32.xlu0 %v875, 2
    %v1026 = vpop.permute.xlu0 %1025
    %1027 = vrot.lane.b32.xlu0 %v878, 2
    %v1028 = vpop.permute.xlu0 %1027
    %1029 = vrot.lane.b32.xlu0 %v880, 2
    %v1030 = vpop.permute.xlu0 %1029
    %1031 = vrot.lane.b32.xlu0 %v883, 2
    %v1032 = vpop.permute.xlu0 %1031
    %1033 = vrot.lane.b32.xlu0 %v885, 2
    %v1034 = vpop.permute.xlu0 %1033
    %1035 = vrot.lane.b32.xlu0 %v888, 2
    %v1036 = vpop.permute.xlu0 %1035
    %1037 = vrot.lane.b32.xlu0 %v890, 2
    %v1038 = vpop.permute.xlu0 %1037
    %1039 = vrot.lane.b32.xlu0 %v893, 2
    %v1040 = vpop.permute.xlu0 %1039
    %1041 = vrot.lane.b32.xlu0 %v895, 2
    %v1042 = vpop.permute.xlu0 %1041
    %1043 = vrot.lane.b32.xlu0 %v898, 2
    %v1044 = vpop.permute.xlu0 %1043
    %1045 = vrot.lane.b32.xlu0 %v900, 2
    %v1046 = vpop.permute.xlu0 %1045
    %1047 = vrot.lane.b32.xlu0 %v903, 2
    %v1048 = vpop.permute.xlu0 %1047
    %1049 = vrot.lane.b32.xlu0 %v905, 2
    %v1050 = vpop.permute.xlu0 %1049
    %1051 = vrot.lane.b32.xlu0 %v908, 2
    %v1052 = vpop.permute.xlu0 %1051
    %1053 = vrot.lane.b32.xlu0 %v910, 2
    %v1054 = vpop.permute.xlu0 %1053
    %1055 = vrot.lane.b32.xlu0 %v913, 2
    %v1056 = vpop.permute.xlu0 %1055
    %1057 = vrot.lane.b32.xlu0 %v915, 2
    %v1058 = vpop.permute.xlu0 %1057
    %1059 = vrot.lane.b32.xlu0 %v918, 2
    %v1060 = vpop.permute.xlu0 %1059
    %1061 = vrot.lane.b32.xlu0 %v920, 2
    %v1062 = vpop.permute.xlu0 %1061
    %1063 = vrot.lane.b32.xlu0 %v923, 2
    %v1064 = vpop.permute.xlu0 %1063
    %1065 = vrot.lane.b32.xlu0 %v925, 2
    %v1066 = vpop.permute.xlu0 %1065
    %1067 = vrot.lane.b32.xlu0 %v928, 2
    %v1068 = vpop.permute.xlu0 %1067
    %1069 = vrot.lane.b32.xlu0 %v930, 2
    %v1070 = vpop.permute.xlu0 %1069
    %1071 = vrot.lane.b32.xlu0 %v933, 2
    %v1072 = vpop.permute.xlu0 %1071
    %1073 = vrot.lane.b32.xlu0 %v935, 2
    %v1074 = vpop.permute.xlu0 %1073
    %1075 = vrot.lane.b32.xlu0 %v938, 2
    %v1076 = vpop.permute.xlu0 %1075
    %1077 = vrot.lane.b32.xlu0 %v940, 2
    %v1078 = vpop.permute.xlu0 %1077
    %1079 = vrot.lane.b32.xlu0 %v943, 2
    %v1080 = vpop.permute.xlu0 %1079
    %1081 = vrot.lane.b32.xlu0 %v945, 2
    %v1082 = vpop.permute.xlu0 %1081
    %1083 = vrot.lane.b32.xlu0 %v948, 2
    %v1084 = vpop.permute.xlu0 %1083
    %1085 = vrot.lane.b32.xlu0 %v950, 2
    %v1086 = vpop.permute.xlu0 %1085
    %1087 = vrot.lane.b32.xlu0 %v953, 2
    %v1088 = vpop.permute.xlu0 %1087
    %1089 = vrot.lane.b32.xlu0 %v955, 2
    %v1090 = vpop.permute.xlu0 %1089
    %1091 = vrot.lane.b32.xlu0 %v958, 2
    %v1092 = vpop.permute.xlu0 %1091
    %1093 = vrot.lane.b32.xlu0 %v960, 2
    %v1094 = vpop.permute.xlu0 %1093
    %1095 = vrot.lane.b32.xlu0 %v963, 2
    %v1096 = vpop.permute.xlu0 %1095
    %1097 = vrot.lane.b32.xlu0 %v965, 2
    %v1098 = vpop.permute.xlu0 %1097
    %1099 = vrot.lane.b32.xlu0 %v968, 2
    %v1100 = vpop.permute.xlu0 %1099
    %1101 = vrot.lane.b32.xlu0 %v970, 2
    %v1102 = vpop.permute.xlu0 %1101
    %1103 = vrot.lane.b32.xlu0 %v973, 2
    %v1104 = vpop.permute.xlu0 %1103
    %1105 = vrot.lane.b32.xlu0 %v975, 2
    %v1106 = vpop.permute.xlu0 %1105
    %1107 = vrot.lane.b32.xlu0 %v978, 2
    %v1108 = vpop.permute.xlu0 %1107
    %1109 = vrot.lane.b32.xlu0 %v980, 2
    %v1110 = vpop.permute.xlu0 %1109
    %1111 = vrot.lane.b32.xlu0 %v983, 2
    %v1112 = vpop.permute.xlu0 %1111
    %1113 = vrot.lane.b32.xlu0 %v985, 2
    %v1114 = vpop.permute.xlu0 %1113
    %1115 = vrot.lane.b32.xlu0 %v988, 2
    %v1116 = vpop.permute.xlu0 %1115
    %1117 = vrot.lane.b32.xlu0 %v990, 2
    %v1118 = vpop.permute.xlu0 %1117
    %1119 = vrot.lane.b32.xlu0 %v993, 2
    %v1120 = vpop.permute.xlu0 %1119
    %1121 = vrot.lane.b32.xlu0 %v995, 2
    %v1122 = vpop.permute.xlu0 %1121
    %1123 = vrot.lane.b32.xlu0 %v998, 2
    %v1124 = vpop.permute.xlu0 %1123
    %1125 = vrot.lane.b32.xlu0 %v1000, 2
    %v1126 = vpop.permute.xlu0 %1125
    %1127 = vrot.lane.b32.xlu0 %v1003, 2
    %v1128 = vpop.permute.xlu0 %1127
    %1129 = vrot.lane.b32.xlu0 %v1005, 2
    %v1130 = vpop.permute.xlu0 %1129
    %1131 = vrot.lane.b32.xlu0 %v1008, 2
    %v1132 = vpop.permute.xlu0 %1131
    %1133 = vrot.lane.b32.xlu0 %v1010, 2
    %v1134 = vpop.permute.xlu0 %1133
    %1199 = vrot.lane.b32.xlu0 %v386, 3
    %v1200 = vpop.permute.xlu0 %1199
    %1201 = vrot.lane.b32.xlu0 %v195, 3
    %v1202 = vpop.permute.xlu0 %1201
    %1203 = vrot.lane.b32.xlu0 %v387, 3
    %v1204 = vpop.permute.xlu0 %1203
    %1205 = vrot.lane.b32.xlu0 %v198, 3
    %v1206 = vpop.permute.xlu0 %1205
    %1207 = vrot.lane.b32.xlu0 %v388, 3
    %v1208 = vpop.permute.xlu0 %1207
    %1209 = vrot.lane.b32.xlu0 %v201, 3
    %v1210 = vpop.permute.xlu0 %1209
    %1211 = vrot.lane.b32.xlu0 %v389, 3
    %v1212 = vpop.permute.xlu0 %1211
    %1213 = vrot.lane.b32.xlu0 %v204, 3
    %v1214 = vpop.permute.xlu0 %1213
    %1215 = vrot.lane.b32.xlu0 %v390, 3
    %v1216 = vpop.permute.xlu0 %1215
    %1217 = vrot.lane.b32.xlu0 %v207, 3
    %v1218 = vpop.permute.xlu0 %1217
    %1219 = vrot.lane.b32.xlu0 %v391, 3
    %v1220 = vpop.permute.xlu0 %1219
    %1221 = vrot.lane.b32.xlu0 %v210, 3
    %v1222 = vpop.permute.xlu0 %1221
    %1223 = vrot.lane.b32.xlu0 %v392, 3
    %v1224 = vpop.permute.xlu0 %1223
    %1225 = vrot.lane.b32.xlu0 %v213, 3
    %v1226 = vpop.permute.xlu0 %1225
    %1227 = vrot.lane.b32.xlu0 %v393, 3
    %v1228 = vpop.permute.xlu0 %1227
    %1229 = vrot.lane.b32.xlu0 %v216, 3
    %v1230 = vpop.permute.xlu0 %1229
    %1231 = vrot.lane.b32.xlu0 %v394, 3
    %v1232 = vpop.permute.xlu0 %1231
    %1233 = vrot.lane.b32.xlu0 %v219, 3
    %v1234 = vpop.permute.xlu0 %1233
    %1235 = vrot.lane.b32.xlu0 %v395, 3
    %v1236 = vpop.permute.xlu0 %1235
    %1237 = vrot.lane.b32.xlu0 %v222, 3
    %v1238 = vpop.permute.xlu0 %1237
    %1239 = vrot.lane.b32.xlu0 %v396, 3
    %v1240 = vpop.permute.xlu0 %1239
    %1241 = vrot.lane.b32.xlu0 %v225, 3
    %v1242 = vpop.permute.xlu0 %1241
    %1243 = vrot.lane.b32.xlu0 %v397, 3
    %v1244 = vpop.permute.xlu0 %1243
    %1245 = vrot.lane.b32.xlu0 %v228, 3
    %v1246 = vpop.permute.xlu0 %1245
    %1247 = vrot.lane.b32.xlu0 %v398, 3
    %v1248 = vpop.permute.xlu0 %1247
    %1249 = vrot.lane.b32.xlu0 %v231, 3
    %v1250 = vpop.permute.xlu0 %1249
    %1251 = vrot.lane.b32.xlu0 %v399, 3
    %v1252 = vpop.permute.xlu0 %1251
    %1253 = vrot.lane.b32.xlu0 %v234, 3
    %v1254 = vpop.permute.xlu0 %1253
    %1255 = vrot.lane.b32.xlu0 %v400, 3
    %v1256 = vpop.permute.xlu0 %1255
    %1257 = vrot.lane.b32.xlu0 %v237, 3
    %v1258 = vpop.permute.xlu0 %1257
    %1259 = vrot.lane.b32.xlu0 %v401, 3
    %v1260 = vpop.permute.xlu0 %1259
    %1261 = vrot.lane.b32.xlu0 %v240, 3
    %v1262 = vpop.permute.xlu0 %1261
    %1263 = vrot.lane.b32.xlu0 %v402, 3
    %v1264 = vpop.permute.xlu0 %1263
    %1265 = vrot.lane.b32.xlu0 %v243, 3
    %v1266 = vpop.permute.xlu0 %1265
    %1267 = vrot.lane.b32.xlu0 %v403, 3
    %v1268 = vpop.permute.xlu0 %1267
    %1269 = vrot.lane.b32.xlu0 %v246, 3
    %v1270 = vpop.permute.xlu0 %1269
    %1271 = vrot.lane.b32.xlu0 %v404, 3
    %v1272 = vpop.permute.xlu0 %1271
    %1273 = vrot.lane.b32.xlu0 %v249, 3
    %v1274 = vpop.permute.xlu0 %1273
    %1275 = vrot.lane.b32.xlu0 %v405, 3
    %v1276 = vpop.permute.xlu0 %1275
    %1277 = vrot.lane.b32.xlu0 %v252, 3
    %v1278 = vpop.permute.xlu0 %1277
    %1279 = vrot.lane.b32.xlu0 %v406, 3
    %v1280 = vpop.permute.xlu0 %1279
    %1281 = vrot.lane.b32.xlu0 %v255, 3
    %v1282 = vpop.permute.xlu0 %1281
    %1283 = vrot.lane.b32.xlu0 %v407, 3
    %v1284 = vpop.permute.xlu0 %1283
    %1285 = vrot.lane.b32.xlu0 %v258, 3
    %v1286 = vpop.permute.xlu0 %1285
    %1287 = vrot.lane.b32.xlu0 %v408, 3
    %v1288 = vpop.permute.xlu0 %1287
    %1289 = vrot.lane.b32.xlu0 %v261, 3
    %v1290 = vpop.permute.xlu0 %1289
    %1291 = vrot.lane.b32.xlu0 %v409, 3
    %v1292 = vpop.permute.xlu0 %1291
    %1293 = vrot.lane.b32.xlu0 %v264, 3
    %v1294 = vpop.permute.xlu0 %1293
    %1295 = vrot.lane.b32.xlu0 %v410, 3
    %v1296 = vpop.permute.xlu0 %1295
    %1297 = vrot.lane.b32.xlu0 %v267, 3
    %v1298 = vpop.permute.xlu0 %1297
    %1299 = vrot.lane.b32.xlu0 %v411, 3
    %v1300 = vpop.permute.xlu0 %1299
    %1301 = vrot.lane.b32.xlu0 %v270, 3
    %v1302 = vpop.permute.xlu0 %1301
    %1303 = vrot.lane.b32.xlu0 %v412, 3
    %v1304 = vpop.permute.xlu0 %1303
    %1305 = vrot.lane.b32.xlu0 %v273, 3
    %v1306 = vpop.permute.xlu0 %1305
    %1307 = vrot.lane.b32.xlu0 %v413, 3
    %v1308 = vpop.permute.xlu0 %1307
    %1309 = vrot.lane.b32.xlu0 %v276, 3
    %v1310 = vpop.permute.xlu0 %1309
    %1311 = vrot.lane.b32.xlu0 %v414, 3
    %v1312 = vpop.permute.xlu0 %1311
    %1313 = vrot.lane.b32.xlu0 %v279, 3
    %v1314 = vpop.permute.xlu0 %1313
    %1315 = vrot.lane.b32.xlu0 %v415, 3
    %v1316 = vpop.permute.xlu0 %1315
    %1317 = vrot.lane.b32.xlu0 %v282, 3
    %v1318 = vpop.permute.xlu0 %1317
    %1319 = vrot.lane.b32.xlu0 %v416, 3
    %v1320 = vpop.permute.xlu0 %1319
    %1321 = vrot.lane.b32.xlu0 %v285, 3
    %v1322 = vpop.permute.xlu0 %1321
    %1323 = vrot.lane.b32.xlu0 %v417, 3
    %v1324 = vpop.permute.xlu0 %1323
    %1325 = vrot.lane.b32.xlu0 %v288, 3
    %v1326 = vpop.permute.xlu0 %1325
    %v1393 = vrot.slane %v401, 1
    %v1394 = vrot.slane %v240, 1
    %v1395 = vsel %vm513, %v1393, %v1394
    %v1396 = vrot.slane %v434, 1
    %v1397 = vsel %vm513, %v1394, %v1396
    %v1398 = vrot.slane %v417, 1
    %v1399 = vrot.slane %v288, 1
    %v1400 = vsel %vm513, %v1398, %v1399
    %v1401 = vrot.slane %v450, 1
    %v1402 = vsel %vm513, %v1399, %v1401
    %1403 = vrot.lane.b32.xlu0 %v521, 4
    %v1404 = vpop.permute.xlu0 %1403
    %1405 = vrot.lane.b32.xlu0 %v523, 4
    %v1406 = vpop.permute.xlu0 %1405
    %1407 = vrot.lane.b32.xlu0 %v526, 4
    %v1408 = vpop.permute.xlu0 %1407
    %1409 = vrot.lane.b32.xlu0 %v528, 4
    %v1410 = vpop.permute.xlu0 %1409
    %1411 = vrot.lane.b32.xlu0 %v531, 4
    %v1412 = vpop.permute.xlu0 %1411
    %1413 = vrot.lane.b32.xlu0 %v533, 4
    %v1414 = vpop.permute.xlu0 %1413
    %1415 = vrot.lane.b32.xlu0 %v536, 4
    %v1416 = vpop.permute.xlu0 %1415
    %1417 = vrot.lane.b32.xlu0 %v538, 4
    %v1418 = vpop.permute.xlu0 %1417
    %1419 = vrot.lane.b32.xlu0 %v541, 4
    %v1420 = vpop.permute.xlu0 %1419
    %1421 = vrot.lane.b32.xlu0 %v543, 4
    %v1422 = vpop.permute.xlu0 %1421
    %1423 = vrot.lane.b32.xlu0 %v546, 4
    %v1424 = vpop.permute.xlu0 %1423
    %1425 = vrot.lane.b32.xlu0 %v548, 4
    %v1426 = vpop.permute.xlu0 %1425
    %1427 = vrot.lane.b32.xlu0 %v551, 4
    %v1428 = vpop.permute.xlu0 %1427
    %1429 = vrot.lane.b32.xlu0 %v553, 4
    %v1430 = vpop.permute.xlu0 %1429
    %1431 = vrot.lane.b32.xlu0 %v556, 4
    %v1432 = vpop.permute.xlu0 %1431
    %1433 = vrot.lane.b32.xlu0 %v558, 4
    %v1434 = vpop.permute.xlu0 %1433
    %1435 = vrot.lane.b32.xlu0 %v561, 4
    %v1436 = vpop.permute.xlu0 %1435
    %1437 = vrot.lane.b32.xlu0 %v563, 4
    %v1438 = vpop.permute.xlu0 %1437
    %1439 = vrot.lane.b32.xlu0 %v566, 4
    %v1440 = vpop.permute.xlu0 %1439
    %1441 = vrot.lane.b32.xlu0 %v568, 4
    %v1442 = vpop.permute.xlu0 %1441
    %1443 = vrot.lane.b32.xlu0 %v571, 4
    %v1444 = vpop.permute.xlu0 %1443
    %1445 = vrot.lane.b32.xlu0 %v573, 4
    %v1446 = vpop.permute.xlu0 %1445
    %1447 = vrot.lane.b32.xlu0 %v576, 4
    %v1448 = vpop.permute.xlu0 %1447
    %1449 = vrot.lane.b32.xlu0 %v578, 4
    %v1450 = vpop.permute.xlu0 %1449
    %1451 = vrot.lane.b32.xlu0 %v581, 4
    %v1452 = vpop.permute.xlu0 %1451
    %1453 = vrot.lane.b32.xlu0 %v583, 4
    %v1454 = vpop.permute.xlu0 %1453
    %1455 = vrot.lane.b32.xlu0 %v586, 4
    %v1456 = vpop.permute.xlu0 %1455
    %1457 = vrot.lane.b32.xlu0 %v588, 4
    %v1458 = vpop.permute.xlu0 %1457
    %1459 = vrot.lane.b32.xlu0 %v591, 4
    %v1460 = vpop.permute.xlu0 %1459
    %1461 = vrot.lane.b32.xlu0 %v593, 4
    %v1462 = vpop.permute.xlu0 %1461
    %1463 = vrot.lane.b32.xlu0 %v1395, 4
    %v1464 = vpop.permute.xlu0 %1463
    %1465 = vrot.lane.b32.xlu0 %v1397, 4
    %v1466 = vpop.permute.xlu0 %1465
    %1467 = vrot.lane.b32.xlu0 %v596, 4
    %v1468 = vpop.permute.xlu0 %1467
    %1469 = vrot.lane.b32.xlu0 %v598, 4
    %v1470 = vpop.permute.xlu0 %1469
    %1471 = vrot.lane.b32.xlu0 %v601, 4
    %v1472 = vpop.permute.xlu0 %1471
    %1473 = vrot.lane.b32.xlu0 %v603, 4
    %v1474 = vpop.permute.xlu0 %1473
    %1475 = vrot.lane.b32.xlu0 %v606, 4
    %v1476 = vpop.permute.xlu0 %1475
    %1477 = vrot.lane.b32.xlu0 %v608, 4
    %v1478 = vpop.permute.xlu0 %1477
    %1479 = vrot.lane.b32.xlu0 %v611, 4
    %v1480 = vpop.permute.xlu0 %1479
    %1481 = vrot.lane.b32.xlu0 %v613, 4
    %v1482 = vpop.permute.xlu0 %1481
    %1483 = vrot.lane.b32.xlu0 %v616, 4
    %v1484 = vpop.permute.xlu0 %1483
    %1485 = vrot.lane.b32.xlu0 %v618, 4
    %v1486 = vpop.permute.xlu0 %1485
    %1487 = vrot.lane.b32.xlu0 %v621, 4
    %v1488 = vpop.permute.xlu0 %1487
    %1489 = vrot.lane.b32.xlu0 %v623, 4
    %v1490 = vpop.permute.xlu0 %1489
    %1491 = vrot.lane.b32.xlu0 %v626, 4
    %v1492 = vpop.permute.xlu0 %1491
    %1493 = vrot.lane.b32.xlu0 %v628, 4
    %v1494 = vpop.permute.xlu0 %1493
    %1495 = vrot.lane.b32.xlu0 %v631, 4
    %v1496 = vpop.permute.xlu0 %1495
    %1497 = vrot.lane.b32.xlu0 %v633, 4
    %v1498 = vpop.permute.xlu0 %1497
    %1499 = vrot.lane.b32.xlu0 %v636, 4
    %v1500 = vpop.permute.xlu0 %1499
    %1501 = vrot.lane.b32.xlu0 %v638, 4
    %v1502 = vpop.permute.xlu0 %1501
    %1503 = vrot.lane.b32.xlu0 %v641, 4
    %v1504 = vpop.permute.xlu0 %1503
    %1505 = vrot.lane.b32.xlu0 %v643, 4
    %v1506 = vpop.permute.xlu0 %1505
    %1507 = vrot.lane.b32.xlu0 %v646, 4
    %v1508 = vpop.permute.xlu0 %1507
    %1509 = vrot.lane.b32.xlu0 %v648, 4
    %v1510 = vpop.permute.xlu0 %1509
    %1511 = vrot.lane.b32.xlu0 %v651, 4
    %v1512 = vpop.permute.xlu0 %1511
    %1513 = vrot.lane.b32.xlu0 %v653, 4
    %v1514 = vpop.permute.xlu0 %1513
    %1515 = vrot.lane.b32.xlu0 %v656, 4
    %v1516 = vpop.permute.xlu0 %1515
    %1517 = vrot.lane.b32.xlu0 %v658, 4
    %v1518 = vpop.permute.xlu0 %1517
    %1519 = vrot.lane.b32.xlu0 %v661, 4
    %v1520 = vpop.permute.xlu0 %1519
    %1521 = vrot.lane.b32.xlu0 %v663, 4
    %v1522 = vpop.permute.xlu0 %1521
    %1523 = vrot.lane.b32.xlu0 %v666, 4
    %v1524 = vpop.permute.xlu0 %1523
    %1525 = vrot.lane.b32.xlu0 %v668, 4
    %v1526 = vpop.permute.xlu0 %1525
    %1527 = vrot.lane.b32.xlu0 %v1400, 4
    %v1528 = vpop.permute.xlu0 %1527
    %1529 = vrot.lane.b32.xlu0 %v1402, 4
    %v1530 = vpop.permute.xlu0 %1529
    %v1595 = vrot.slane %v401, 2
    %v1596 = vrot.slane %v240, 2
    %v1597 = vsel %vm855, %v1595, %v1596
    %v1598 = vrot.slane %v434, 2
    %v1599 = vsel %vm855, %v1596, %v1598
    %v1600 = vrot.slane %v417, 2
    %v1601 = vrot.slane %v288, 2
    %v1602 = vsel %vm855, %v1600, %v1601
    %v1603 = vrot.slane %v450, 2
    %v1604 = vsel %vm855, %v1601, %v1603
    %1605 = vrot.lane.b32.xlu0 %v863, 5
    %v1606 = vpop.permute.xlu0 %1605
    %1607 = vrot.lane.b32.xlu0 %v865, 5
    %v1608 = vpop.permute.xlu0 %1607
    %1609 = vrot.lane.b32.xlu0 %v868, 5
    %v1610 = vpop.permute.xlu0 %1609
    %1611 = vrot.lane.b32.xlu0 %v870, 5
    %v1612 = vpop.permute.xlu0 %1611
    %1613 = vrot.lane.b32.xlu0 %v873, 5
    %v1614 = vpop.permute.xlu0 %1613
    %1615 = vrot.lane.b32.xlu0 %v875, 5
    %v1616 = vpop.permute.xlu0 %1615
    %1617 = vrot.lane.b32.xlu0 %v878, 5
    %v1618 = vpop.permute.xlu0 %1617
    %1619 = vrot.lane.b32.xlu0 %v880, 5
    %v1620 = vpop.permute.xlu0 %1619
    %1621 = vrot.lane.b32.xlu0 %v883, 5
    %v1622 = vpop.permute.xlu0 %1621
    %1623 = vrot.lane.b32.xlu0 %v885, 5
    %v1624 = vpop.permute.xlu0 %1623
    %1625 = vrot.lane.b32.xlu0 %v888, 5
    %v1626 = vpop.permute.xlu0 %1625
    %1627 = vrot.lane.b32.xlu0 %v890, 5
    %v1628 = vpop.permute.xlu0 %1627
    %1629 = vrot.lane.b32.xlu0 %v893, 5
    %v1630 = vpop.permute.xlu0 %1629
    %1631 = vrot.lane.b32.xlu0 %v895, 5
    %v1632 = vpop.permute.xlu0 %1631
    %1633 = vrot.lane.b32.xlu0 %v898, 5
    %v1634 = vpop.permute.xlu0 %1633
    %1635 = vrot.lane.b32.xlu0 %v900, 5
    %v1636 = vpop.permute.xlu0 %1635
    %1637 = vrot.lane.b32.xlu0 %v903, 5
    %v1638 = vpop.permute.xlu0 %1637
    %1639 = vrot.lane.b32.xlu0 %v905, 5
    %v1640 = vpop.permute.xlu0 %1639
    %1641 = vrot.lane.b32.xlu0 %v908, 5
    %v1642 = vpop.permute.xlu0 %1641
    %1643 = vrot.lane.b32.xlu0 %v910, 5
    %v1644 = vpop.permute.xlu0 %1643
    %1645 = vrot.lane.b32.xlu0 %v913, 5
    %v1646 = vpop.permute.xlu0 %1645
    %1647 = vrot.lane.b32.xlu0 %v915, 5
    %v1648 = vpop.permute.xlu0 %1647
    %1649 = vrot.lane.b32.xlu0 %v918, 5
    %v1650 = vpop.permute.xlu0 %1649
    %1651 = vrot.lane.b32.xlu0 %v920, 5
    %v1652 = vpop.permute.xlu0 %1651
    %1653 = vrot.lane.b32.xlu0 %v923, 5
    %v1654 = vpop.permute.xlu0 %1653
    %1655 = vrot.lane.b32.xlu0 %v925, 5
    %v1656 = vpop.permute.xlu0 %1655
    %1657 = vrot.lane.b32.xlu0 %v928, 5
    %v1658 = vpop.permute.xlu0 %1657
    %1659 = vrot.lane.b32.xlu0 %v930, 5
    %v1660 = vpop.permute.xlu0 %1659
    %1661 = vrot.lane.b32.xlu0 %v933, 5
    %v1662 = vpop.permute.xlu0 %1661
    %1663 = vrot.lane.b32.xlu0 %v935, 5
    %v1664 = vpop.permute.xlu0 %1663
    %1665 = vrot.lane.b32.xlu0 %v1597, 5
    %v1666 = vpop.permute.xlu0 %1665
    %1667 = vrot.lane.b32.xlu0 %v1599, 5
    %v1668 = vpop.permute.xlu0 %1667
    %1669 = vrot.lane.b32.xlu0 %v938, 5
    %v1670 = vpop.permute.xlu0 %1669
    %1671 = vrot.lane.b32.xlu0 %v940, 5
    %v1672 = vpop.permute.xlu0 %1671
    %1673 = vrot.lane.b32.xlu0 %v943, 5
    %v1674 = vpop.permute.xlu0 %1673
    %1675 = vrot.lane.b32.xlu0 %v945, 5
    %v1676 = vpop.permute.xlu0 %1675
    %1677 = vrot.lane.b32.xlu0 %v948, 5
    %v1678 = vpop.permute.xlu0 %1677
    %1679 = vrot.lane.b32.xlu0 %v950, 5
    %v1680 = vpop.permute.xlu0 %1679
    %1681 = vrot.lane.b32.xlu0 %v953, 5
    %v1682 = vpop.permute.xlu0 %1681
    %1683 = vrot.lane.b32.xlu0 %v955, 5
    %v1684 = vpop.permute.xlu0 %1683
    %1685 = vrot.lane.b32.xlu0 %v958, 5
    %v1686 = vpop.permute.xlu0 %1685
    %1687 = vrot.lane.b32.xlu0 %v960, 5
    %v1688 = vpop.permute.xlu0 %1687
    %1689 = vrot.lane.b32.xlu0 %v963, 5
    %v1690 = vpop.permute.xlu0 %1689
    %1691 = vrot.lane.b32.xlu0 %v965, 5
    %v1692 = vpop.permute.xlu0 %1691
    %1693 = vrot.lane.b32.xlu0 %v968, 5
    %v1694 = vpop.permute.xlu0 %1693
    %1695 = vrot.lane.b32.xlu0 %v970, 5
    %v1696 = vpop.permute.xlu0 %1695
    %1697 = vrot.lane.b32.xlu0 %v973, 5
    %v1698 = vpop.permute.xlu0 %1697
    %1699 = vrot.lane.b32.xlu0 %v975, 5
    %v1700 = vpop.permute.xlu0 %1699
    %1701 = vrot.lane.b32.xlu0 %v978, 5
    %v1702 = vpop.permute.xlu0 %1701
    %1703 = vrot.lane.b32.xlu0 %v980, 5
    %v1704 = vpop.permute.xlu0 %1703
    %1705 = vrot.lane.b32.xlu0 %v983, 5
    %v1706 = vpop.permute.xlu0 %1705
    %1707 = vrot.lane.b32.xlu0 %v985, 5
    %v1708 = vpop.permute.xlu0 %1707
    %1709 = vrot.lane.b32.xlu0 %v988, 5
    %v1710 = vpop.permute.xlu0 %1709
    %1711 = vrot.lane.b32.xlu0 %v990, 5
    %v1712 = vpop.permute.xlu0 %1711
    %1713 = vrot.lane.b32.xlu0 %v993, 5
    %v1714 = vpop.permute.xlu0 %1713
    %1715 = vrot.lane.b32.xlu0 %v995, 5
    %v1716 = vpop.permute.xlu0 %1715
    %1717 = vrot.lane.b32.xlu0 %v998, 5
    %v1718 = vpop.permute.xlu0 %1717
    %1719 = vrot.lane.b32.xlu0 %v1000, 5
    %v1720 = vpop.permute.xlu0 %1719
    %1721 = vrot.lane.b32.xlu0 %v1003, 5
    %v1722 = vpop.permute.xlu0 %1721
    %1723 = vrot.lane.b32.xlu0 %v1005, 5
    %v1724 = vpop.permute.xlu0 %1723
    %1725 = vrot.lane.b32.xlu0 %v1008, 5
    %v1726 = vpop.permute.xlu0 %1725
    %1727 = vrot.lane.b32.xlu0 %v1010, 5
    %v1728 = vpop.permute.xlu0 %1727
    %1729 = vrot.lane.b32.xlu0 %v1602, 5
    %v1730 = vpop.permute.xlu0 %1729
    %1731 = vrot.lane.b32.xlu0 %v1604, 5
    %v1732 = vpop.permute.xlu0 %1731
    %1797 = vrot.lane.b32.xlu0 %v387, 6
    %v1798 = vpop.permute.xlu0 %1797
    %1799 = vrot.lane.b32.xlu0 %v198, 6
    %v1800 = vpop.permute.xlu0 %1799
    %1801 = vrot.lane.b32.xlu0 %v388, 6
    %v1802 = vpop.permute.xlu0 %1801
    %1803 = vrot.lane.b32.xlu0 %v201, 6
    %v1804 = vpop.permute.xlu0 %1803
    %1805 = vrot.lane.b32.xlu0 %v389, 6
    %v1806 = vpop.permute.xlu0 %1805
    %1807 = vrot.lane.b32.xlu0 %v204, 6
    %v1808 = vpop.permute.xlu0 %1807
    %1809 = vrot.lane.b32.xlu0 %v390, 6
    %v1810 = vpop.permute.xlu0 %1809
    %1811 = vrot.lane.b32.xlu0 %v207, 6
    %v1812 = vpop.permute.xlu0 %1811
    %1813 = vrot.lane.b32.xlu0 %v391, 6
    %v1814 = vpop.permute.xlu0 %1813
    %1815 = vrot.lane.b32.xlu0 %v210, 6
    %v1816 = vpop.permute.xlu0 %1815
    %1817 = vrot.lane.b32.xlu0 %v392, 6
    %v1818 = vpop.permute.xlu0 %1817
    %1819 = vrot.lane.b32.xlu0 %v213, 6
    %v1820 = vpop.permute.xlu0 %1819
    %1821 = vrot.lane.b32.xlu0 %v393, 6
    %v1822 = vpop.permute.xlu0 %1821
    %1823 = vrot.lane.b32.xlu0 %v216, 6
    %v1824 = vpop.permute.xlu0 %1823
    %1825 = vrot.lane.b32.xlu0 %v394, 6
    %v1826 = vpop.permute.xlu0 %1825
    %1827 = vrot.lane.b32.xlu0 %v219, 6
    %v1828 = vpop.permute.xlu0 %1827
    %1829 = vrot.lane.b32.xlu0 %v395, 6
    %v1830 = vpop.permute.xlu0 %1829
    %1831 = vrot.lane.b32.xlu0 %v222, 6
    %v1832 = vpop.permute.xlu0 %1831
    %1833 = vrot.lane.b32.xlu0 %v396, 6
    %v1834 = vpop.permute.xlu0 %1833
    %1835 = vrot.lane.b32.xlu0 %v225, 6
    %v1836 = vpop.permute.xlu0 %1835
    %1837 = vrot.lane.b32.xlu0 %v397, 6
    %v1838 = vpop.permute.xlu0 %1837
    %1839 = vrot.lane.b32.xlu0 %v228, 6
    %v1840 = vpop.permute.xlu0 %1839
    %1841 = vrot.lane.b32.xlu0 %v398, 6
    %v1842 = vpop.permute.xlu0 %1841
    %1843 = vrot.lane.b32.xlu0 %v231, 6
    %v1844 = vpop.permute.xlu0 %1843
    %1845 = vrot.lane.b32.xlu0 %v399, 6
    %v1846 = vpop.permute.xlu0 %1845
    %1847 = vrot.lane.b32.xlu0 %v234, 6
    %v1848 = vpop.permute.xlu0 %1847
    %1849 = vrot.lane.b32.xlu0 %v400, 6
    %v1850 = vpop.permute.xlu0 %1849
    %1851 = vrot.lane.b32.xlu0 %v237, 6
    %v1852 = vpop.permute.xlu0 %1851
    %1853 = vrot.lane.b32.xlu0 %v401, 6
    %v1854 = vpop.permute.xlu0 %1853
    %1855 = vrot.lane.b32.xlu0 %v240, 6
    %v1856 = vpop.permute.xlu0 %1855
    %1857 = vrot.lane.b32.xlu0 %v385, 6
    %v1858 = vpop.permute.xlu0 %1857
    %1859 = vrot.lane.b32.xlu0 %v192, 6
    %v1860 = vpop.permute.xlu0 %1859
    %1861 = vrot.lane.b32.xlu0 %v403, 6
    %v1862 = vpop.permute.xlu0 %1861
    %1863 = vrot.lane.b32.xlu0 %v246, 6
    %v1864 = vpop.permute.xlu0 %1863
    %1865 = vrot.lane.b32.xlu0 %v404, 6
    %v1866 = vpop.permute.xlu0 %1865
    %1867 = vrot.lane.b32.xlu0 %v249, 6
    %v1868 = vpop.permute.xlu0 %1867
    %1869 = vrot.lane.b32.xlu0 %v405, 6
    %v1870 = vpop.permute.xlu0 %1869
    %1871 = vrot.lane.b32.xlu0 %v252, 6
    %v1872 = vpop.permute.xlu0 %1871
    %1873 = vrot.lane.b32.xlu0 %v406, 6
    %v1874 = vpop.permute.xlu0 %1873
    %1875 = vrot.lane.b32.xlu0 %v255, 6
    %v1876 = vpop.permute.xlu0 %1875
    %1877 = vrot.lane.b32.xlu0 %v407, 6
    %v1878 = vpop.permute.xlu0 %1877
    %1879 = vrot.lane.b32.xlu0 %v258, 6
    %v1880 = vpop.permute.xlu0 %1879
    %1881 = vrot.lane.b32.xlu0 %v408, 6
    %v1882 = vpop.permute.xlu0 %1881
    %1883 = vrot.lane.b32.xlu0 %v261, 6
    %v1884 = vpop.permute.xlu0 %1883
    %1885 = vrot.lane.b32.xlu0 %v409, 6
    %v1886 = vpop.permute.xlu0 %1885
    %1887 = vrot.lane.b32.xlu0 %v264, 6
    %v1888 = vpop.permute.xlu0 %1887
    %1889 = vrot.lane.b32.xlu0 %v410, 6
    %v1890 = vpop.permute.xlu0 %1889
    %1891 = vrot.lane.b32.xlu0 %v267, 6
    %v1892 = vpop.permute.xlu0 %1891
    %1893 = vrot.lane.b32.xlu0 %v411, 6
    %v1894 = vpop.permute.xlu0 %1893
    %1895 = vrot.lane.b32.xlu0 %v270, 6
    %v1896 = vpop.permute.xlu0 %1895
    %1897 = vrot.lane.b32.xlu0 %v412, 6
    %v1898 = vpop.permute.xlu0 %1897
    %1899 = vrot.lane.b32.xlu0 %v273, 6
    %v1900 = vpop.permute.xlu0 %1899
    %1901 = vrot.lane.b32.xlu0 %v413, 6
    %v1902 = vpop.permute.xlu0 %1901
    %1903 = vrot.lane.b32.xlu0 %v276, 6
    %v1904 = vpop.permute.xlu0 %1903
    %1905 = vrot.lane.b32.xlu0 %v414, 6
    %v1906 = vpop.permute.xlu0 %1905
    %1907 = vrot.lane.b32.xlu0 %v279, 6
    %v1908 = vpop.permute.xlu0 %1907
    %1909 = vrot.lane.b32.xlu0 %v415, 6
    %v1910 = vpop.permute.xlu0 %1909
    %1911 = vrot.lane.b32.xlu0 %v282, 6
    %v1912 = vpop.permute.xlu0 %1911
    %1913 = vrot.lane.b32.xlu0 %v416, 6
    %v1914 = vpop.permute.xlu0 %1913
    %1915 = vrot.lane.b32.xlu0 %v285, 6
    %v1916 = vpop.permute.xlu0 %1915
    %1917 = vrot.lane.b32.xlu0 %v417, 6
    %v1918 = vpop.permute.xlu0 %1917
    %1919 = vrot.lane.b32.xlu0 %v288, 6
    %v1920 = vpop.permute.xlu0 %1919
    %1983 = vrot.lane.b32.xlu0 %v526, 7
    %v1984 = vpop.permute.xlu0 %1983
    %1985 = vrot.lane.b32.xlu0 %v528, 7
    %v1986 = vpop.permute.xlu0 %1985
    %1987 = vrot.lane.b32.xlu0 %v531, 7
    %v1988 = vpop.permute.xlu0 %1987
    %1989 = vrot.lane.b32.xlu0 %v533, 7
    %v1990 = vpop.permute.xlu0 %1989
    %1991 = vrot.lane.b32.xlu0 %v536, 7
    %v1992 = vpop.permute.xlu0 %1991
    %1993 = vrot.lane.b32.xlu0 %v538, 7
    %v1994 = vpop.permute.xlu0 %1993
    %1995 = vrot.lane.b32.xlu0 %v541, 7
    %v1996 = vpop.permute.xlu0 %1995
    %1997 = vrot.lane.b32.xlu0 %v543, 7
    %v1998 = vpop.permute.xlu0 %1997
    %1999 = vrot.lane.b32.xlu0 %v546, 7
    %v2000 = vpop.permute.xlu0 %1999
    %2001 = vrot.lane.b32.xlu0 %v548, 7
    %v2002 = vpop.permute.xlu0 %2001
    %2003 = vrot.lane.b32.xlu0 %v551, 7
    %v2004 = vpop.permute.xlu0 %2003
    %2005 = vrot.lane.b32.xlu0 %v553, 7
    %v2006 = vpop.permute.xlu0 %2005
    %2007 = vrot.lane.b32.xlu0 %v556, 7
    %v2008 = vpop.permute.xlu0 %2007
    %2009 = vrot.lane.b32.xlu0 %v558, 7
    %v2010 = vpop.permute.xlu0 %2009
    %2011 = vrot.lane.b32.xlu0 %v561, 7
    %v2012 = vpop.permute.xlu0 %2011
    %2013 = vrot.lane.b32.xlu0 %v563, 7
    %v2014 = vpop.permute.xlu0 %2013
    %2015 = vrot.lane.b32.xlu0 %v566, 7
    %v2016 = vpop.permute.xlu0 %2015
    %2017 = vrot.lane.b32.xlu0 %v568, 7
    %v2018 = vpop.permute.xlu0 %2017
    %2019 = vrot.lane.b32.xlu0 %v571, 7
    %v2020 = vpop.permute.xlu0 %2019
    %2021 = vrot.lane.b32.xlu0 %v573, 7
    %v2022 = vpop.permute.xlu0 %2021
    %2023 = vrot.lane.b32.xlu0 %v576, 7
    %v2024 = vpop.permute.xlu0 %2023
    %2025 = vrot.lane.b32.xlu0 %v578, 7
    %v2026 = vpop.permute.xlu0 %2025
    %2027 = vrot.lane.b32.xlu0 %v581, 7
    %v2028 = vpop.permute.xlu0 %2027
    %2029 = vrot.lane.b32.xlu0 %v583, 7
    %v2030 = vpop.permute.xlu0 %2029
    %2031 = vrot.lane.b32.xlu0 %v586, 7
    %v2032 = vpop.permute.xlu0 %2031
    %2033 = vrot.lane.b32.xlu0 %v588, 7
    %v2034 = vpop.permute.xlu0 %2033
    %2035 = vrot.lane.b32.xlu0 %v591, 7
    %v2036 = vpop.permute.xlu0 %2035
    %2037 = vrot.lane.b32.xlu0 %v593, 7
    %v2038 = vpop.permute.xlu0 %2037
    %2039 = vrot.lane.b32.xlu0 %v1395, 7
    %v2040 = vpop.permute.xlu0 %2039
    %2041 = vrot.lane.b32.xlu0 %v1397, 7
    %v2042 = vpop.permute.xlu0 %2041
    %2043 = vrot.lane.b32.xlu0 %v516, 7
    %v2044 = vpop.permute.xlu0 %2043
    %2045 = vrot.lane.b32.xlu0 %v518, 7
    %v2046 = vpop.permute.xlu0 %2045
    %2047 = vrot.lane.b32.xlu0 %v601, 7
    %v2048 = vpop.permute.xlu0 %2047
    %2049 = vrot.lane.b32.xlu0 %v603, 7
    %v2050 = vpop.permute.xlu0 %2049
    %2051 = vrot.lane.b32.xlu0 %v606, 7
    %v2052 = vpop.permute.xlu0 %2051
    %2053 = vrot.lane.b32.xlu0 %v608, 7
    %v2054 = vpop.permute.xlu0 %2053
    %2055 = vrot.lane.b32.xlu0 %v611, 7
    %v2056 = vpop.permute.xlu0 %2055
    %2057 = vrot.lane.b32.xlu0 %v613, 7
    %v2058 = vpop.permute.xlu0 %2057
    %2059 = vrot.lane.b32.xlu0 %v616, 7
    %v2060 = vpop.permute.xlu0 %2059
    %2061 = vrot.lane.b32.xlu0 %v618, 7
    %v2062 = vpop.permute.xlu0 %2061
    %2063 = vrot.lane.b32.xlu0 %v621, 7
    %v2064 = vpop.permute.xlu0 %2063
    %2065 = vrot.lane.b32.xlu0 %v623, 7
    %v2066 = vpop.permute.xlu0 %2065
    %2067 = vrot.lane.b32.xlu0 %v626, 7
    %v2068 = vpop.permute.xlu0 %2067
    %2069 = vrot.lane.b32.xlu0 %v628, 7
    %v2070 = vpop.permute.xlu0 %2069
    %2071 = vrot.lane.b32.xlu0 %v631, 7
    %v2072 = vpop.permute.xlu0 %2071
    %2073 = vrot.lane.b32.xlu0 %v633, 7
    %v2074 = vpop.permute.xlu0 %2073
    %2075 = vrot.lane.b32.xlu0 %v636, 7
    %v2076 = vpop.permute.xlu0 %2075
    %2077 = vrot.lane.b32.xlu0 %v638, 7
    %v2078 = vpop.permute.xlu0 %2077
    %2079 = vrot.lane.b32.xlu0 %v641, 7
    %v2080 = vpop.permute.xlu0 %2079
    %2081 = vrot.lane.b32.xlu0 %v643, 7
    %v2082 = vpop.permute.xlu0 %2081
    %2083 = vrot.lane.b32.xlu0 %v646, 7
    %v2084 = vpop.permute.xlu0 %2083
    %2085 = vrot.lane.b32.xlu0 %v648, 7
    %v2086 = vpop.permute.xlu0 %2085
    %2087 = vrot.lane.b32.xlu0 %v651, 7
    %v2088 = vpop.permute.xlu0 %2087
    %2089 = vrot.lane.b32.xlu0 %v653, 7
    %v2090 = vpop.permute.xlu0 %2089
    %2091 = vrot.lane.b32.xlu0 %v656, 7
    %v2092 = vpop.permute.xlu0 %2091
    %2093 = vrot.lane.b32.xlu0 %v658, 7
    %v2094 = vpop.permute.xlu0 %2093
    %2095 = vrot.lane.b32.xlu0 %v661, 7
    %v2096 = vpop.permute.xlu0 %2095
    %2097 = vrot.lane.b32.xlu0 %v663, 7
    %v2098 = vpop.permute.xlu0 %2097
    %2099 = vrot.lane.b32.xlu0 %v666, 7
    %v2100 = vpop.permute.xlu0 %2099
    %2101 = vrot.lane.b32.xlu0 %v668, 7
    %v2102 = vpop.permute.xlu0 %2101
    %2103 = vrot.lane.b32.xlu0 %v1400, 7
    %v2104 = vpop.permute.xlu0 %2103
    %2105 = vrot.lane.b32.xlu0 %v1402, 7
    %v2106 = vpop.permute.xlu0 %2105
    %2169 = vrot.lane.b32.xlu0 %v868, 8
    %v2170 = vpop.permute.xlu0 %2169
    %2171 = vrot.lane.b32.xlu0 %v870, 8
    %v2172 = vpop.permute.xlu0 %2171
    %2173 = vrot.lane.b32.xlu0 %v873, 8
    %v2174 = vpop.permute.xlu0 %2173
    %2175 = vrot.lane.b32.xlu0 %v875, 8
    %v2176 = vpop.permute.xlu0 %2175
    %2177 = vrot.lane.b32.xlu0 %v878, 8
    %v2178 = vpop.permute.xlu0 %2177
    %2179 = vrot.lane.b32.xlu0 %v880, 8
    %v2180 = vpop.permute.xlu0 %2179
    %2181 = vrot.lane.b32.xlu0 %v883, 8
    %v2182 = vpop.permute.xlu0 %2181
    %2183 = vrot.lane.b32.xlu0 %v885, 8
    %v2184 = vpop.permute.xlu0 %2183
    %2185 = vrot.lane.b32.xlu0 %v888, 8
    %v2186 = vpop.permute.xlu0 %2185
    %2187 = vrot.lane.b32.xlu0 %v890, 8
    %v2188 = vpop.permute.xlu0 %2187
    %2189 = vrot.lane.b32.xlu0 %v893, 8
    %v2190 = vpop.permute.xlu0 %2189
    %2191 = vrot.lane.b32.xlu0 %v895, 8
    %v2192 = vpop.permute.xlu0 %2191
    %2193 = vrot.lane.b32.xlu0 %v898, 8
    %v2194 = vpop.permute.xlu0 %2193
    %2195 = vrot.lane.b32.xlu0 %v900, 8
    %v2196 = vpop.permute.xlu0 %2195
    %2197 = vrot.lane.b32.xlu0 %v903, 8
    %v2198 = vpop.permute.xlu0 %2197
    %2199 = vrot.lane.b32.xlu0 %v905, 8
    %v2200 = vpop.permute.xlu0 %2199
    %2201 = vrot.lane.b32.xlu0 %v908, 8
    %v2202 = vpop.permute.xlu0 %2201
    %2203 = vrot.lane.b32.xlu0 %v910, 8
    %v2204 = vpop.permute.xlu0 %2203
    %2205 = vrot.lane.b32.xlu0 %v913, 8
    %v2206 = vpop.permute.xlu0 %2205
    %2207 = vrot.lane.b32.xlu0 %v915, 8
    %v2208 = vpop.permute.xlu0 %2207
    %2209 = vrot.lane.b32.xlu0 %v918, 8
    %v2210 = vpop.permute.xlu0 %2209
    %2211 = vrot.lane.b32.xlu0 %v920, 8
    %v2212 = vpop.permute.xlu0 %2211
    %2213 = vrot.lane.b32.xlu0 %v923, 8
    %v2214 = vpop.permute.xlu0 %2213
    %2215 = vrot.lane.b32.xlu0 %v925, 8
    %v2216 = vpop.permute.xlu0 %2215
    %2217 = vrot.lane.b32.xlu0 %v928, 8
    %v2218 = vpop.permute.xlu0 %2217
    %2219 = vrot.lane.b32.xlu0 %v930, 8
    %v2220 = vpop.permute.xlu0 %2219
    %2221 = vrot.lane.b32.xlu0 %v933, 8
    %v2222 = vpop.permute.xlu0 %2221
    %2223 = vrot.lane.b32.xlu0 %v935, 8
    %v2224 = vpop.permute.xlu0 %2223
    %2225 = vrot.lane.b32.xlu0 %v1597, 8
    %v2226 = vpop.permute.xlu0 %2225
    %2227 = vrot.lane.b32.xlu0 %v1599, 8
    %v2228 = vpop.permute.xlu0 %2227
    %2229 = vrot.lane.b32.xlu0 %v858, 8
    %v2230 = vpop.permute.xlu0 %2229
    %2231 = vrot.lane.b32.xlu0 %v860, 8
    %v2232 = vpop.permute.xlu0 %2231
    %2233 = vrot.lane.b32.xlu0 %v943, 8
    %v2234 = vpop.permute.xlu0 %2233
    %2235 = vrot.lane.b32.xlu0 %v945, 8
    %v2236 = vpop.permute.xlu0 %2235
    %2237 = vrot.lane.b32.xlu0 %v948, 8
    %v2238 = vpop.permute.xlu0 %2237
    %2239 = vrot.lane.b32.xlu0 %v950, 8
    %v2240 = vpop.permute.xlu0 %2239
    %2241 = vrot.lane.b32.xlu0 %v953, 8
    %v2242 = vpop.permute.xlu0 %2241
    %2243 = vrot.lane.b32.xlu0 %v955, 8
    %v2244 = vpop.permute.xlu0 %2243
    %2245 = vrot.lane.b32.xlu0 %v958, 8
    %v2246 = vpop.permute.xlu0 %2245
    %2247 = vrot.lane.b32.xlu0 %v960, 8
    %v2248 = vpop.permute.xlu0 %2247
    %2249 = vrot.lane.b32.xlu0 %v963, 8
    %v2250 = vpop.permute.xlu0 %2249
    %2251 = vrot.lane.b32.xlu0 %v965, 8
    %v2252 = vpop.permute.xlu0 %2251
    %2253 = vrot.lane.b32.xlu0 %v968, 8
    %v2254 = vpop.permute.xlu0 %2253
    %2255 = vrot.lane.b32.xlu0 %v970, 8
    %v2256 = vpop.permute.xlu0 %2255
    %2257 = vrot.lane.b32.xlu0 %v973, 8
    %v2258 = vpop.permute.xlu0 %2257
    %2259 = vrot.lane.b32.xlu0 %v975, 8
    %v2260 = vpop.permute.xlu0 %2259
    %2261 = vrot.lane.b32.xlu0 %v978, 8
    %v2262 = vpop.permute.xlu0 %2261
    %2263 = vrot.lane.b32.xlu0 %v980, 8
    %v2264 = vpop.permute.xlu0 %2263
    %2265 = vrot.lane.b32.xlu0 %v983, 8
    %v2266 = vpop.permute.xlu0 %2265
    %2267 = vrot.lane.b32.xlu0 %v985, 8
    %v2268 = vpop.permute.xlu0 %2267
    %2269 = vrot.lane.b32.xlu0 %v988, 8
    %v2270 = vpop.permute.xlu0 %2269
    %2271 = vrot.lane.b32.xlu0 %v990, 8
    %v2272 = vpop.permute.xlu0 %2271
    %2273 = vrot.lane.b32.xlu0 %v993, 8
    %v2274 = vpop.permute.xlu0 %2273
    %2275 = vrot.lane.b32.xlu0 %v995, 8
    %v2276 = vpop.permute.xlu0 %2275
    %2277 = vrot.lane.b32.xlu0 %v998, 8
    %v2278 = vpop.permute.xlu0 %2277
    %2279 = vrot.lane.b32.xlu0 %v1000, 8
    %v2280 = vpop.permute.xlu0 %2279
    %2281 = vrot.lane.b32.xlu0 %v1003, 8
    %v2282 = vpop.permute.xlu0 %2281
    %2283 = vrot.lane.b32.xlu0 %v1005, 8
    %v2284 = vpop.permute.xlu0 %2283
    %2285 = vrot.lane.b32.xlu0 %v1008, 8
    %v2286 = vpop.permute.xlu0 %2285
    %2287 = vrot.lane.b32.xlu0 %v1010, 8
    %v2288 = vpop.permute.xlu0 %2287
    %2289 = vrot.lane.b32.xlu0 %v1602, 8
    %v2290 = vpop.permute.xlu0 %2289
    %2291 = vrot.lane.b32.xlu0 %v1604, 8
    %v2292 = vpop.permute.xlu0 %2291
    %vm2355 = vcmask 7168
    %v2356 = vsel %vm2355, %v385, %v670
    %v2357 = vsel %vm2355, %v192, %v672
    %v2358 = vsel %vm2355, %v386, %v674
    %v2359 = vsel %vm2355, %v195, %v676
    %v2360 = vsel %vm2355, %v387, %v678
    %v2361 = vsel %vm2355, %v198, %v680
    %v2362 = vsel %vm2355, %v388, %v682
    %v2363 = vsel %vm2355, %v201, %v684
    %v2364 = vsel %vm2355, %v389, %v686
    %v2365 = vsel %vm2355, %v204, %v688
    %v2366 = vsel %vm2355, %v390, %v690
    %v2367 = vsel %vm2355, %v207, %v692
    %v2368 = vsel %vm2355, %v391, %v694
    %v2369 = vsel %vm2355, %v210, %v696
    %v2370 = vsel %vm2355, %v392, %v698
    %v2371 = vsel %vm2355, %v213, %v700
    %v2372 = vsel %vm2355, %v393, %v702
    %v2373 = vsel %vm2355, %v216, %v704
    %v2374 = vsel %vm2355, %v394, %v706
    %v2375 = vsel %vm2355, %v219, %v708
    %v2376 = vsel %vm2355, %v395, %v710
    %v2377 = vsel %vm2355, %v222, %v712
    %v2378 = vsel %vm2355, %v396, %v714
    %v2379 = vsel %vm2355, %v225, %v716
    %v2380 = vsel %vm2355, %v397, %v718
    %v2381 = vsel %vm2355, %v228, %v720
    %v2382 = vsel %vm2355, %v398, %v722
    %v2383 = vsel %vm2355, %v231, %v724
    %v2384 = vsel %vm2355, %v399, %v726
    %v2385 = vsel %vm2355, %v234, %v728
    %v2386 = vsel %vm2355, %v400, %v730
    %v2387 = vsel %vm2355, %v237, %v732
    %v2388 = vsel %vm2355, %v402, %v734
    %v2389 = vsel %vm2355, %v243, %v736
    %v2390 = vsel %vm2355, %v403, %v738
    %v2391 = vsel %vm2355, %v246, %v740
    %v2392 = vsel %vm2355, %v404, %v742
    %v2393 = vsel %vm2355, %v249, %v744
    %v2394 = vsel %vm2355, %v405, %v746
    %v2395 = vsel %vm2355, %v252, %v748
    %v2396 = vsel %vm2355, %v406, %v750
    %v2397 = vsel %vm2355, %v255, %v752
    %v2398 = vsel %vm2355, %v407, %v754
    %v2399 = vsel %vm2355, %v258, %v756
    %v2400 = vsel %vm2355, %v408, %v758
    %v2401 = vsel %vm2355, %v261, %v760
    %v2402 = vsel %vm2355, %v409, %v762
    %v2403 = vsel %vm2355, %v264, %v764
    %v2404 = vsel %vm2355, %v410, %v766
    %v2405 = vsel %vm2355, %v267, %v768
    %v2406 = vsel %vm2355, %v411, %v770
    %v2407 = vsel %vm2355, %v270, %v772
    %v2408 = vsel %vm2355, %v412, %v774
    %v2409 = vsel %vm2355, %v273, %v776
    %v2410 = vsel %vm2355, %v413, %v778
    %v2411 = vsel %vm2355, %v276, %v780
    %v2412 = vsel %vm2355, %v414, %v782
    %v2413 = vsel %vm2355, %v279, %v784
    %v2414 = vsel %vm2355, %v415, %v786
    %v2415 = vsel %vm2355, %v282, %v788
    %v2416 = vsel %vm2355, %v416, %v790
    %v2417 = vsel %vm2355, %v285, %v792
    %vm2418 = vcmask 15360
    %v2419 = vsel %vm2418, %v2356, %v1012
    %v2420 = vsel %vm2418, %v2357, %v1014
    %v2421 = vsel %vm2418, %v2358, %v1016
    %v2422 = vsel %vm2418, %v2359, %v1018
    %v2423 = vsel %vm2418, %v2360, %v1020
    %v2424 = vsel %vm2418, %v2361, %v1022
    %v2425 = vsel %vm2418, %v2362, %v1024
    %v2426 = vsel %vm2418, %v2363, %v1026
    %v2427 = vsel %vm2418, %v2364, %v1028
    %v2428 = vsel %vm2418, %v2365, %v1030
    %v2429 = vsel %vm2418, %v2366, %v1032
    %v2430 = vsel %vm2418, %v2367, %v1034
    %v2431 = vsel %vm2418, %v2368, %v1036
    %v2432 = vsel %vm2418, %v2369, %v1038
    %v2433 = vsel %vm2418, %v2370, %v1040
    %v2434 = vsel %vm2418, %v2371, %v1042
    %v2435 = vsel %vm2418, %v2372, %v1044
    %v2436 = vsel %vm2418, %v2373, %v1046
    %v2437 = vsel %vm2418, %v2374, %v1048
    %v2438 = vsel %vm2418, %v2375, %v1050
    %v2439 = vsel %vm2418, %v2376, %v1052
    %v2440 = vsel %vm2418, %v2377, %v1054
    %v2441 = vsel %vm2418, %v2378, %v1056
    %v2442 = vsel %vm2418, %v2379, %v1058
    %v2443 = vsel %vm2418, %v2380, %v1060
    %v2444 = vsel %vm2418, %v2381, %v1062
    %v2445 = vsel %vm2418, %v2382, %v1064
    %v2446 = vsel %vm2418, %v2383, %v1066
    %v2447 = vsel %vm2418, %v2384, %v1068
    %v2448 = vsel %vm2418, %v2385, %v1070
    %v2449 = vsel %vm2418, %v2386, %v1072
    %v2450 = vsel %vm2418, %v2387, %v1074
    %v2451 = vsel %vm2418, %v2388, %v1076
    %v2452 = vsel %vm2418, %v2389, %v1078
    %v2453 = vsel %vm2418, %v2390, %v1080
    %v2454 = vsel %vm2418, %v2391, %v1082
    %v2455 = vsel %vm2418, %v2392, %v1084
    %v2456 = vsel %vm2418, %v2393, %v1086
    %v2457 = vsel %vm2418, %v2394, %v1088
    %v2458 = vsel %vm2418, %v2395, %v1090
    %v2459 = vsel %vm2418, %v2396, %v1092
    %v2460 = vsel %vm2418, %v2397, %v1094
    %v2461 = vsel %vm2418, %v2398, %v1096
    %v2462 = vsel %vm2418, %v2399, %v1098
    %v2463 = vsel %vm2418, %v2400, %v1100
    %v2464 = vsel %vm2418, %v2401, %v1102
    %v2465 = vsel %vm2418, %v2402, %v1104
    %v2466 = vsel %vm2418, %v2403, %v1106
    %v2467 = vsel %vm2418, %v2404, %v1108
    %v2468 = vsel %vm2418, %v2405, %v1110
    %v2469 = vsel %vm2418, %v2406, %v1112
    %v2470 = vsel %vm2418, %v2407, %v1114
    %v2471 = vsel %vm2418, %v2408, %v1116
    %v2472 = vsel %vm2418, %v2409, %v1118
    %v2473 = vsel %vm2418, %v2410, %v1120
    %v2474 = vsel %vm2418, %v2411, %v1122
    %v2475 = vsel %vm2418, %v2412, %v1124
    %v2476 = vsel %vm2418, %v2413, %v1126
    %v2477 = vsel %vm2418, %v2414, %v1128
    %v2478 = vsel %vm2418, %v2415, %v1130
    %v2479 = vsel %vm2418, %v2416, %v1132
    %v2480 = vsel %vm2418, %v2417, %v1134
    %vm2481 = vcmask 23552
    %v2482 = vsel %vm2481, %v2419, %v1200
    %v2483 = vsel %vm2481, %v2420, %v1202
    %v2484 = vsel %vm2481, %v2421, %v1204
    %v2485 = vsel %vm2481, %v2422, %v1206
    %v2486 = vsel %vm2481, %v2423, %v1208
    %v2487 = vsel %vm2481, %v2424, %v1210
    %v2488 = vsel %vm2481, %v2425, %v1212
    %v2489 = vsel %vm2481, %v2426, %v1214
    %v2490 = vsel %vm2481, %v2427, %v1216
    %v2491 = vsel %vm2481, %v2428, %v1218
    %v2492 = vsel %vm2481, %v2429, %v1220
    %v2493 = vsel %vm2481, %v2430, %v1222
    %v2494 = vsel %vm2481, %v2431, %v1224
    %v2495 = vsel %vm2481, %v2432, %v1226
    %v2496 = vsel %vm2481, %v2433, %v1228
    %v2497 = vsel %vm2481, %v2434, %v1230
    %v2498 = vsel %vm2481, %v2435, %v1232
    %v2499 = vsel %vm2481, %v2436, %v1234
    %v2500 = vsel %vm2481, %v2437, %v1236
    %v2501 = vsel %vm2481, %v2438, %v1238
    %v2502 = vsel %vm2481, %v2439, %v1240
    %v2503 = vsel %vm2481, %v2440, %v1242
    %v2504 = vsel %vm2481, %v2441, %v1244
    %v2505 = vsel %vm2481, %v2442, %v1246
    %v2506 = vsel %vm2481, %v2443, %v1248
    %v2507 = vsel %vm2481, %v2444, %v1250
    %v2508 = vsel %vm2481, %v2445, %v1252
    %v2509 = vsel %vm2481, %v2446, %v1254
    %v2510 = vsel %vm2481, %v2447, %v1256
    %v2511 = vsel %vm2481, %v2448, %v1258
    %v2512 = vsel %vm2481, %v2449, %v1260
    %v2513 = vsel %vm2481, %v2450, %v1262
    %v2514 = vsel %vm2481, %v2419, %v1264
    %v2515 = vsel %vm2481, %v2420, %v1266
    %v2516 = vsel %vm2481, %v2451, %v1268
    %v2517 = vsel %vm2481, %v2452, %v1270
    %v2518 = vsel %vm2481, %v2453, %v1272
    %v2519 = vsel %vm2481, %v2454, %v1274
    %v2520 = vsel %vm2481, %v2455, %v1276
    %v2521 = vsel %vm2481, %v2456, %v1278
    %v2522 = vsel %vm2481, %v2457, %v1280
    %v2523 = vsel %vm2481, %v2458, %v1282
    %v2524 = vsel %vm2481, %v2459, %v1284
    %v2525 = vsel %vm2481, %v2460, %v1286
    %v2526 = vsel %vm2481, %v2461, %v1288
    %v2527 = vsel %vm2481, %v2462, %v1290
    %v2528 = vsel %vm2481, %v2463, %v1292
    %v2529 = vsel %vm2481, %v2464, %v1294
    %v2530 = vsel %vm2481, %v2465, %v1296
    %v2531 = vsel %vm2481, %v2466, %v1298
    %v2532 = vsel %vm2481, %v2467, %v1300
    %v2533 = vsel %vm2481, %v2468, %v1302
    %v2534 = vsel %vm2481, %v2469, %v1304
    %v2535 = vsel %vm2481, %v2470, %v1306
    %v2536 = vsel %vm2481, %v2471, %v1308
    %v2537 = vsel %vm2481, %v2472, %v1310
    %v2538 = vsel %vm2481, %v2473, %v1312
    %v2539 = vsel %vm2481, %v2474, %v1314
    %v2540 = vsel %vm2481, %v2475, %v1316
    %v2541 = vsel %vm2481, %v2476, %v1318
    %v2542 = vsel %vm2481, %v2477, %v1320
    %v2543 = vsel %vm2481, %v2478, %v1322
    %v2544 = vsel %vm2481, %v2479, %v1324
    %v2545 = vsel %vm2481, %v2480, %v1326
    %vm2546 = vcmask 31744
    %v2547 = vsel %vm2546, %v2482, %v1404
    %v2548 = vsel %vm2546, %v2483, %v1406
    %v2549 = vsel %vm2546, %v2484, %v1408
    %v2550 = vsel %vm2546, %v2485, %v1410
    %v2551 = vsel %vm2546, %v2486, %v1412
    %v2552 = vsel %vm2546, %v2487, %v1414
    %v2553 = vsel %vm2546, %v2488, %v1416
    %v2554 = vsel %vm2546, %v2489, %v1418
    %v2555 = vsel %vm2546, %v2490, %v1420
    %v2556 = vsel %vm2546, %v2491, %v1422
    %v2557 = vsel %vm2546, %v2492, %v1424
    %v2558 = vsel %vm2546, %v2493, %v1426
    %v2559 = vsel %vm2546, %v2494, %v1428
    %v2560 = vsel %vm2546, %v2495, %v1430
    %v2561 = vsel %vm2546, %v2496, %v1432
    %v2562 = vsel %vm2546, %v2497, %v1434
    %v2563 = vsel %vm2546, %v2498, %v1436
    %v2564 = vsel %vm2546, %v2499, %v1438
    %v2565 = vsel %vm2546, %v2500, %v1440
    %v2566 = vsel %vm2546, %v2501, %v1442
    %v2567 = vsel %vm2546, %v2502, %v1444
    %v2568 = vsel %vm2546, %v2503, %v1446
    %v2569 = vsel %vm2546, %v2504, %v1448
    %v2570 = vsel %vm2546, %v2505, %v1450
    %v2571 = vsel %vm2546, %v2506, %v1452
    %v2572 = vsel %vm2546, %v2507, %v1454
    %v2573 = vsel %vm2546, %v2508, %v1456
    %v2574 = vsel %vm2546, %v2509, %v1458
    %v2575 = vsel %vm2546, %v2510, %v1460
    %v2576 = vsel %vm2546, %v2511, %v1462
    %v2577 = vsel %vm2546, %v2512, %v1464
    %v2578 = vsel %vm2546, %v2513, %v1466
    %v2579 = vsel %vm2546, %v2514, %v1468
    %v2580 = vsel %vm2546, %v2515, %v1470
    %v2581 = vsel %vm2546, %v2516, %v1472
    %v2582 = vsel %vm2546, %v2517, %v1474
    %v2583 = vsel %vm2546, %v2518, %v1476
    %v2584 = vsel %vm2546, %v2519, %v1478
    %v2585 = vsel %vm2546, %v2520, %v1480
    %v2586 = vsel %vm2546, %v2521, %v1482
    %v2587 = vsel %vm2546, %v2522, %v1484
    %v2588 = vsel %vm2546, %v2523, %v1486
    %v2589 = vsel %vm2546, %v2524, %v1488
    %v2590 = vsel %vm2546, %v2525, %v1490
    %v2591 = vsel %vm2546, %v2526, %v1492
    %v2592 = vsel %vm2546, %v2527, %v1494
    %v2593 = vsel %vm2546, %v2528, %v1496
    %v2594 = vsel %vm2546, %v2529, %v1498
    %v2595 = vsel %vm2546, %v2530, %v1500
    %v2596 = vsel %vm2546, %v2531, %v1502
    %v2597 = vsel %vm2546, %v2532, %v1504
    %v2598 = vsel %vm2546, %v2533, %v1506
    %v2599 = vsel %vm2546, %v2534, %v1508
    %v2600 = vsel %vm2546, %v2535, %v1510
    %v2601 = vsel %vm2546, %v2536, %v1512
    %v2602 = vsel %vm2546, %v2537, %v1514
    %v2603 = vsel %vm2546, %v2538, %v1516
    %v2604 = vsel %vm2546, %v2539, %v1518
    %v2605 = vsel %vm2546, %v2540, %v1520
    %v2606 = vsel %vm2546, %v2541, %v1522
    %v2607 = vsel %vm2546, %v2542, %v1524
    %v2608 = vsel %vm2546, %v2543, %v1526
    %v2609 = vsel %vm2546, %v2544, %v1528
    %v2610 = vsel %vm2546, %v2545, %v1530
    %vm2611 = vcmask 39936
    %v2612 = vsel %vm2611, %v2547, %v1606
    %v2613 = vsel %vm2611, %v2548, %v1608
    %v2614 = vsel %vm2611, %v2549, %v1610
    %v2615 = vsel %vm2611, %v2550, %v1612
    %v2616 = vsel %vm2611, %v2551, %v1614
    %v2617 = vsel %vm2611, %v2552, %v1616
    %v2618 = vsel %vm2611, %v2553, %v1618
    %v2619 = vsel %vm2611, %v2554, %v1620
    %v2620 = vsel %vm2611, %v2555, %v1622
    %v2621 = vsel %vm2611, %v2556, %v1624
    %v2622 = vsel %vm2611, %v2557, %v1626
    %v2623 = vsel %vm2611, %v2558, %v1628
    %v2624 = vsel %vm2611, %v2559, %v1630
    %v2625 = vsel %vm2611, %v2560, %v1632
    %v2626 = vsel %vm2611, %v2561, %v1634
    %v2627 = vsel %vm2611, %v2562, %v1636
    %v2628 = vsel %vm2611, %v2563, %v1638
    %v2629 = vsel %vm2611, %v2564, %v1640
    %v2630 = vsel %vm2611, %v2565, %v1642
    %v2631 = vsel %vm2611, %v2566, %v1644
    %v2632 = vsel %vm2611, %v2567, %v1646
    %v2633 = vsel %vm2611, %v2568, %v1648
    %v2634 = vsel %vm2611, %v2569, %v1650
    %v2635 = vsel %vm2611, %v2570, %v1652
    %v2636 = vsel %vm2611, %v2571, %v1654
    %v2637 = vsel %vm2611, %v2572, %v1656
    %v2638 = vsel %vm2611, %v2573, %v1658
    %v2639 = vsel %vm2611, %v2574, %v1660
    %v2640 = vsel %vm2611, %v2575, %v1662
    %v2641 = vsel %vm2611, %v2576, %v1664
    %v2642 = vsel %vm2611, %v2577, %v1666
    %v2643 = vsel %vm2611, %v2578, %v1668
    %v2644 = vsel %vm2611, %v2579, %v1670
    %v2645 = vsel %vm2611, %v2580, %v1672
    %v2646 = vsel %vm2611, %v2581, %v1674
    %v2647 = vsel %vm2611, %v2582, %v1676
    %v2648 = vsel %vm2611, %v2583, %v1678
    %v2649 = vsel %vm2611, %v2584, %v1680
    %v2650 = vsel %vm2611, %v2585, %v1682
    %v2651 = vsel %vm2611, %v2586, %v1684
    %v2652 = vsel %vm2611, %v2587, %v1686
    %v2653 = vsel %vm2611, %v2588, %v1688
    %v2654 = vsel %vm2611, %v2589, %v1690
    %v2655 = vsel %vm2611, %v2590, %v1692
    %v2656 = vsel %vm2611, %v2591, %v1694
    %v2657 = vsel %vm2611, %v2592, %v1696
    %v2658 = vsel %vm2611, %v2593, %v1698
    %v2659 = vsel %vm2611, %v2594, %v1700
    %v2660 = vsel %vm2611, %v2595, %v1702
    %v2661 = vsel %vm2611, %v2596, %v1704
    %v2662 = vsel %vm2611, %v2597, %v1706
    %v2663 = vsel %vm2611, %v2598, %v1708
    %v2664 = vsel %vm2611, %v2599, %v1710
    %v2665 = vsel %vm2611, %v2600, %v1712
    %v2666 = vsel %vm2611, %v2601, %v1714
    %v2667 = vsel %vm2611, %v2602, %v1716
    %v2668 = vsel %vm2611, %v2603, %v1718
    %v2669 = vsel %vm2611, %v2604, %v1720
    %v2670 = vsel %vm2611, %v2605, %v1722
    %v2671 = vsel %vm2611, %v2606, %v1724
    %v2672 = vsel %vm2611, %v2607, %v1726
    %v2673 = vsel %vm2611, %v2608, %v1728
    %v2674 = vsel %vm2611, %v2609, %v1730
    %v2675 = vsel %vm2611, %v2610, %v1732
    %vm2676 = vcmask 48128
    %v2677 = vsel %vm2676, %v2612, %v1798
    %v2678 = vsel %vm2676, %v2613, %v1800
    %v2679 = vsel %vm2676, %v2614, %v1802
    %v2680 = vsel %vm2676, %v2615, %v1804
    %v2681 = vsel %vm2676, %v2616, %v1806
    %v2682 = vsel %vm2676, %v2617, %v1808
    %v2683 = vsel %vm2676, %v2618, %v1810
    %v2684 = vsel %vm2676, %v2619, %v1812
    %v2685 = vsel %vm2676, %v2620, %v1814
    %v2686 = vsel %vm2676, %v2621, %v1816
    %v2687 = vsel %vm2676, %v2622, %v1818
    %v2688 = vsel %vm2676, %v2623, %v1820
    %v2689 = vsel %vm2676, %v2624, %v1822
    %v2690 = vsel %vm2676, %v2625, %v1824
    %v2691 = vsel %vm2676, %v2626, %v1826
    %v2692 = vsel %vm2676, %v2627, %v1828
    %v2693 = vsel %vm2676, %v2628, %v1830
    %v2694 = vsel %vm2676, %v2629, %v1832
    %v2695 = vsel %vm2676, %v2630, %v1834
    %v2696 = vsel %vm2676, %v2631, %v1836
    %v2697 = vsel %vm2676, %v2632, %v1838
    %v2698 = vsel %vm2676, %v2633, %v1840
    %v2699 = vsel %vm2676, %v2634, %v1842
    %v2700 = vsel %vm2676, %v2635, %v1844
    %v2701 = vsel %vm2676, %v2636, %v1846
    %v2702 = vsel %vm2676, %v2637, %v1848
    %v2703 = vsel %vm2676, %v2638, %v1850
    %v2704 = vsel %vm2676, %v2639, %v1852
    %v2705 = vsel %vm2676, %v2640, %v1854
    %v2706 = vsel %vm2676, %v2641, %v1856
    %v2707 = vsel %vm2676, %v2642, %v1858
    %v2708 = vsel %vm2676, %v2643, %v1860
    %v2709 = vsel %vm2676, %v2644, %v1862
    %v2710 = vsel %vm2676, %v2645, %v1864
    %v2711 = vsel %vm2676, %v2646, %v1866
    %v2712 = vsel %vm2676, %v2647, %v1868
    %v2713 = vsel %vm2676, %v2648, %v1870
    %v2714 = vsel %vm2676, %v2649, %v1872
    %v2715 = vsel %vm2676, %v2650, %v1874
    %v2716 = vsel %vm2676, %v2651, %v1876
    %v2717 = vsel %vm2676, %v2652, %v1878
    %v2718 = vsel %vm2676, %v2653, %v1880
    %v2719 = vsel %vm2676, %v2654, %v1882
    %v2720 = vsel %vm2676, %v2655, %v1884
    %v2721 = vsel %vm2676, %v2656, %v1886
    %v2722 = vsel %vm2676, %v2657, %v1888
    %v2723 = vsel %vm2676, %v2658, %v1890
    %v2724 = vsel %vm2676, %v2659, %v1892
    %v2725 = vsel %vm2676, %v2660, %v1894
    %v2726 = vsel %vm2676, %v2661, %v1896
    %v2727 = vsel %vm2676, %v2662, %v1898
    %v2728 = vsel %vm2676, %v2663, %v1900
    %v2729 = vsel %vm2676, %v2664, %v1902
    %v2730 = vsel %vm2676, %v2665, %v1904
    %v2731 = vsel %vm2676, %v2666, %v1906
    %v2732 = vsel %vm2676, %v2667, %v1908
    %v2733 = vsel %vm2676, %v2668, %v1910
    %v2734 = vsel %vm2676, %v2669, %v1912
    %v2735 = vsel %vm2676, %v2670, %v1914
    %v2736 = vsel %vm2676, %v2671, %v1916
    %v2737 = vsel %vm2676, %v2672, %v1918
    %v2738 = vsel %vm2676, %v2673, %v1920
    %v2739 = vsel %vm2676, %v2674, %v1858
    %v2740 = vsel %vm2676, %v2675, %v1860
    %vm2741 = vcmask 56320
    %v2742 = vsel %vm2741, %v2677, %v1984
    %v2743 = vsel %vm2741, %v2678, %v1986
    %v2744 = vsel %vm2741, %v2679, %v1988
    %v2745 = vsel %vm2741, %v2680, %v1990
    %v2746 = vsel %vm2741, %v2681, %v1992
    %v2747 = vsel %vm2741, %v2682, %v1994
    %v2748 = vsel %vm2741, %v2683, %v1996
    %v2749 = vsel %vm2741, %v2684, %v1998
    %v2750 = vsel %vm2741, %v2685, %v2000
    %v2751 = vsel %vm2741, %v2686, %v2002
    %v2752 = vsel %vm2741, %v2687, %v2004
    %v2753 = vsel %vm2741, %v2688, %v2006
    %v2754 = vsel %vm2741, %v2689, %v2008
    %v2755 = vsel %vm2741, %v2690, %v2010
    %v2756 = vsel %vm2741, %v2691, %v2012
    %v2757 = vsel %vm2741, %v2692, %v2014
    %v2758 = vsel %vm2741, %v2693, %v2016
    %v2759 = vsel %vm2741, %v2694, %v2018
    %v2760 = vsel %vm2741, %v2695, %v2020
    %v2761 = vsel %vm2741, %v2696, %v2022
    %v2762 = vsel %vm2741, %v2697, %v2024
    %v2763 = vsel %vm2741, %v2698, %v2026
    %v2764 = vsel %vm2741, %v2699, %v2028
    %v2765 = vsel %vm2741, %v2700, %v2030
    %v2766 = vsel %vm2741, %v2701, %v2032
    %v2767 = vsel %vm2741, %v2702, %v2034
    %v2768 = vsel %vm2741, %v2703, %v2036
    %v2769 = vsel %vm2741, %v2704, %v2038
    %v2770 = vsel %vm2741, %v2705, %v2040
    %v2771 = vsel %vm2741, %v2706, %v2042
    %v2772 = vsel %vm2741, %v2707, %v2044
    %v2773 = vsel %vm2741, %v2708, %v2046
    %v2774 = vsel %vm2741, %v2709, %v2048
    %v2775 = vsel %vm2741, %v2710, %v2050
    %v2776 = vsel %vm2741, %v2711, %v2052
    %v2777 = vsel %vm2741, %v2712, %v2054
    %v2778 = vsel %vm2741, %v2713, %v2056
    %v2779 = vsel %vm2741, %v2714, %v2058
    %v2780 = vsel %vm2741, %v2715, %v2060
    %v2781 = vsel %vm2741, %v2716, %v2062
    %v2782 = vsel %vm2741, %v2717, %v2064
    %v2783 = vsel %vm2741, %v2718, %v2066
    %v2784 = vsel %vm2741, %v2719, %v2068
    %v2785 = vsel %vm2741, %v2720, %v2070
    %v2786 = vsel %vm2741, %v2721, %v2072
    %v2787 = vsel %vm2741, %v2722, %v2074
    %v2788 = vsel %vm2741, %v2723, %v2076
    %v2789 = vsel %vm2741, %v2724, %v2078
    %v2790 = vsel %vm2741, %v2725, %v2080
    %v2791 = vsel %vm2741, %v2726, %v2082
    %v2792 = vsel %vm2741, %v2727, %v2084
    %v2793 = vsel %vm2741, %v2728, %v2086
    %v2794 = vsel %vm2741, %v2729, %v2088
    %v2795 = vsel %vm2741, %v2730, %v2090
    %v2796 = vsel %vm2741, %v2731, %v2092
    %v2797 = vsel %vm2741, %v2732, %v2094
    %v2798 = vsel %vm2741, %v2733, %v2096
    %v2799 = vsel %vm2741, %v2734, %v2098
    %v2800 = vsel %vm2741, %v2735, %v2100
    %v2801 = vsel %vm2741, %v2736, %v2102
    %v2802 = vsel %vm2741, %v2737, %v2104
    %v2803 = vsel %vm2741, %v2738, %v2106
    %v2804 = vsel %vm2741, %v2739, %v2044
    %v2805 = vsel %vm2741, %v2740, %v2046
    %vm2806 = vcmask 64512
    %v2807 = vsel %vm2806, %v2742, %v2170
    %v2808 = vsel %vm2806, %v2743, %v2172
    %v2809 = vsel %vm2806, %v2744, %v2174
    %v2810 = vsel %vm2806, %v2745, %v2176
    %v2811 = vsel %vm2806, %v2746, %v2178
    %v2812 = vsel %vm2806, %v2747, %v2180
    %v2813 = vsel %vm2806, %v2748, %v2182
    %v2814 = vsel %vm2806, %v2749, %v2184
    %v2815 = vsel %vm2806, %v2750, %v2186
    %v2816 = vsel %vm2806, %v2751, %v2188
    %v2817 = vsel %vm2806, %v2752, %v2190
    %v2818 = vsel %vm2806, %v2753, %v2192
    %v2819 = vsel %vm2806, %v2754, %v2194
    %v2820 = vsel %vm2806, %v2755, %v2196
    %v2821 = vsel %vm2806, %v2756, %v2198
    %v2822 = vsel %vm2806, %v2757, %v2200
    %v2823 = vsel %vm2806, %v2758, %v2202
    %v2824 = vsel %vm2806, %v2759, %v2204
    %v2825 = vsel %vm2806, %v2760, %v2206
    %v2826 = vsel %vm2806, %v2761, %v2208
    %v2827 = vsel %vm2806, %v2762, %v2210
    %v2828 = vsel %vm2806, %v2763, %v2212
    %v2829 = vsel %vm2806, %v2764, %v2214
    %v2830 = vsel %vm2806, %v2765, %v2216
    %v2831 = vsel %vm2806, %v2766, %v2218
    %v2832 = vsel %vm2806, %v2767, %v2220
    %v2833 = vsel %vm2806, %v2768, %v2222
    %v2834 = vsel %vm2806, %v2769, %v2224
    %v2835 = vsel %vm2806, %v2770, %v2226
    %v2836 = vsel %vm2806, %v2771, %v2228
    %v2837 = vsel %vm2806, %v2772, %v2230
    %v2838 = vsel %vm2806, %v2773, %v2232
    %v2839 = vsel %vm2806, %v2774, %v2234
    %v2840 = vsel %vm2806, %v2775, %v2236
    %v2841 = vsel %vm2806, %v2776, %v2238
    %v2842 = vsel %vm2806, %v2777, %v2240
    %v2843 = vsel %vm2806, %v2778, %v2242
    %v2844 = vsel %vm2806, %v2779, %v2244
    %v2845 = vsel %vm2806, %v2780, %v2246
    %v2846 = vsel %vm2806, %v2781, %v2248
    %v2847 = vsel %vm2806, %v2782, %v2250
    %v2848 = vsel %vm2806, %v2783, %v2252
    %v2849 = vsel %vm2806, %v2784, %v2254
    %v2850 = vsel %vm2806, %v2785, %v2256
    %v2851 = vsel %vm2806, %v2786, %v2258
    %v2852 = vsel %vm2806, %v2787, %v2260
    %v2853 = vsel %vm2806, %v2788, %v2262
    %v2854 = vsel %vm2806, %v2789, %v2264
    %v2855 = vsel %vm2806, %v2790, %v2266
    %v2856 = vsel %vm2806, %v2791, %v2268
    %v2857 = vsel %vm2806, %v2792, %v2270
    %v2858 = vsel %vm2806, %v2793, %v2272
    %v2859 = vsel %vm2806, %v2794, %v2274
    %v2860 = vsel %vm2806, %v2795, %v2276
    %v2861 = vsel %vm2806, %v2796, %v2278
    %v2862 = vsel %vm2806, %v2797, %v2280
    %v2863 = vsel %vm2806, %v2798, %v2282
    %v2864 = vsel %vm2806, %v2799, %v2284
    %v2865 = vsel %vm2806, %v2800, %v2286
    %v2866 = vsel %vm2806, %v2801, %v2288
    %v2867 = vsel %vm2806, %v2802, %v2290
    %v2868 = vsel %vm2806, %v2803, %v2292
    %v2869 = vsel %vm2806, %v2804, %v2230
    %v2870 = vsel %vm2806, %v2805, %v2232
    %v2871 = vpack.c.bf16 %v2808, %v2807
    %v2872 = vpack.c.bf16 %v2810, %v2809
    %v2873 = vpack.c.bf16 %v2812, %v2811
    %v2874 = vpack.c.bf16 %v2814, %v2813
    %v2875 = vpack.c.bf16 %v2816, %v2815
    %v2876 = vpack.c.bf16 %v2818, %v2817
    %v2877 = vpack.c.bf16 %v2820, %v2819
    %v2878 = vpack.c.bf16 %v2822, %v2821
    %v2879 = vpack.c.bf16 %v2824, %v2823
    %v2880 = vpack.c.bf16 %v2826, %v2825
    %v2881 = vpack.c.bf16 %v2828, %v2827
    %v2882 = vpack.c.bf16 %v2830, %v2829
    %v2883 = vpack.c.bf16 %v2832, %v2831
    %v2884 = vpack.c.bf16 %v2834, %v2833
    %v2885 = vpack.c.bf16 %v2836, %v2835
    %v2886 = vpack.c.bf16 %v2838, %v2837
    %v2887 = vpack.c.bf16 %v2840, %v2839
    %v2888 = vpack.c.bf16 %v2842, %v2841
    %v2889 = vpack.c.bf16 %v2844, %v2843
    %v2890 = vpack.c.bf16 %v2846, %v2845
    %v2891 = vpack.c.bf16 %v2848, %v2847
    %v2892 = vpack.c.bf16 %v2850, %v2849
    %v2893 = vpack.c.bf16 %v2852, %v2851
    %v2894 = vpack.c.bf16 %v2854, %v2853
    %v2895 = vpack.c.bf16 %v2856, %v2855
    %v2896 = vpack.c.bf16 %v2858, %v2857
    %v2897 = vpack.c.bf16 %v2860, %v2859
    %v2898 = vpack.c.bf16 %v2862, %v2861
    %v2899 = vpack.c.bf16 %v2864, %v2863
    %v2900 = vpack.c.bf16 %v2866, %v2865
    %v2901 = vpack.c.bf16 %v2868, %v2867
    %v2902 = vpack.c.bf16 %v2870, %v2869
    %v2903 = vld [vmem:[%s1] sm:$0xf]
    %v2904 = vld [vmem:[%s1 + $0x4] sm:$0x1]
    %v2905 = vld [vmem:[%s2] sm:$0x1]
    %v2907 = vperm.slane %v2905, 0
    %v2911 = vunpack.c.l.b16 %v2903
    %v2912 = vunpack.c.l.b16 %v2904
    %v2913 = vpack.c.b16 %v2912, %v2911
    %vm2914 = vcmask 72704
    %v2916 = vsel %vm2914, %v2871, 0
    %v2919 = vsel %vm2914, %v2872, 0
    %v2922 = vsel %vm2914, %v2873, 0
    %v2925 = vsel %vm2914, %v2874, 0
    %v2928 = vsel %vm2914, %v2875, 0
    %v2931 = vsel %vm2914, %v2876, 0
    %v2934 = vsel %vm2914, %v2877, 0
    %v2937 = vsel %vm2914, %v2878, 0
    %v2940 = vsel %vm2914, %v2879, 0
    %v2943 = vsel %vm2914, %v2880, 0
    %v2946 = vsel %vm2914, %v2881, 0
    %v2949 = vsel %vm2914, %v2882, 0
    %v2952 = vsel %vm2914, %v2883, 0
    %v2955 = vsel %vm2914, %v2884, 0
    %v2958 = vsel %vm2914, %v2885, 0
    %v2961 = vsel %vm2914, %v2886, 0
    %v2964 = vsel %vm2914, %v2887, 0
    %v2967 = vsel %vm2914, %v2888, 0
    %v2970 = vsel %vm2914, %v2889, 0
    %v2973 = vsel %vm2914, %v2890, 0
    %v2976 = vsel %vm2914, %v2891, 0
    %v2979 = vsel %vm2914, %v2892, 0
    %v2982 = vsel %vm2914, %v2893, 0
    %v2985 = vsel %vm2914, %v2894, 0
    %v2988 = vsel %vm2914, %v2895, 0
    %v2991 = vsel %vm2914, %v2896, 0
    %v2994 = vsel %vm2914, %v2897, 0
    %v2997 = vsel %vm2914, %v2898, 0
    %v3000 = vsel %vm2914, %v2899, 0
    %v3003 = vsel %vm2914, %v2900, 0
    %v3006 = vsel %vm2914, %v2901, 0
    %v3009 = vsel %vm2914, %v2902, 0
    %vm3011 = vcmask 1043456
    %vm3012 = vcmask 1044480
    %v3013 = vsel %vm3011, 4294967295, 65535
    %v3014 = vsel %vm3012, %v3013, 0
    %v3016 = vand.u32 %v2913, %v3014
    %3018 = vmatpush.bf16.msra.mxu0 0
    %3019 = vmatpush.bf16.msra.mxu0 0
    %3020 = vmatpush.bf16.msra.mxu0 0
    %3021 = vmatpush.bf16.msra.mxu0 0
    %3022 = vmatpush.bf16.msra.mxu0 0
    %3023 = vmatpush.bf16.msra.mxu0 0
    %3024 = vmatpush.bf16.msra.mxu0 0
    %3025 = vmatpush.bf16.msra.mxu0 %v3016
    %3026 = vmatmul.bf16.gmra.mxu0 %v2916
    %v3027 = vpop.f32.mrf.mxu0
    %v3028 = vadd.f32 %v2907, %v3027
    %v3029 = vpop.f32.mrf.mxu0
    %v3030 = vadd.f32 %v2907, %v3029
    %3031 = vmatmul.bf16.gmra.mxu0 %v2919
    %v3032 = vpop.f32.mrf.mxu0
    %v3033 = vadd.f32 %v2907, %v3032
    %v3034 = vpop.f32.mrf.mxu0
    %v3035 = vadd.f32 %v2907, %v3034
    %3036 = vmatmul.bf16.gmra.mxu0 %v2922
    %v3037 = vpop.f32.mrf.mxu0
    %v3038 = vadd.f32 %v2907, %v3037
    %v3039 = vpop.f32.mrf.mxu0
    %v3040 = vadd.f32 %v2907, %v3039
    %3041 = vmatmul.bf16.gmra.mxu0 %v2925
    %v3042 = vpop.f32.mrf.mxu0
    %v3043 = vadd.f32 %v2907, %v3042
    %v3044 = vpop.f32.mrf.mxu0
    %v3045 = vadd.f32 %v2907, %v3044
    %3046 = vmatmul.bf16.gmra.mxu0 %v2928
    %v3047 = vpop.f32.mrf.mxu0
    %v3048 = vadd.f32 %v2907, %v3047
    %v3049 = vpop.f32.mrf.mxu0
    %v3050 = vadd.f32 %v2907, %v3049
    %3051 = vmatmul.bf16.gmra.mxu0 %v2931
    %v3052 = vpop.f32.mrf.mxu0
    %v3053 = vadd.f32 %v2907, %v3052
    %v3054 = vpop.f32.mrf.mxu0
    %v3055 = vadd.f32 %v2907, %v3054
    %3056 = vmatmul.bf16.gmra.mxu0 %v2934
    %v3057 = vpop.f32.mrf.mxu0
    %v3058 = vadd.f32 %v2907, %v3057
    %v3059 = vpop.f32.mrf.mxu0
    %v3060 = vadd.f32 %v2907, %v3059
    %3061 = vmatmul.bf16.gmra.mxu0 %v2937
    %v3062 = vpop.f32.mrf.mxu0
    %v3063 = vadd.f32 %v2907, %v3062
    %v3064 = vpop.f32.mrf.mxu0
    %v3065 = vadd.f32 %v2907, %v3064
    %3066 = vmatmul.bf16.gmra.mxu0 %v2940
    %v3067 = vpop.f32.mrf.mxu0
    %v3068 = vadd.f32 %v2907, %v3067
    %v3069 = vpop.f32.mrf.mxu0
    %v3070 = vadd.f32 %v2907, %v3069
    %3071 = vmatmul.bf16.gmra.mxu0 %v2943
    %v3072 = vpop.f32.mrf.mxu0
    %v3073 = vadd.f32 %v2907, %v3072
    %v3074 = vpop.f32.mrf.mxu0
    %v3075 = vadd.f32 %v2907, %v3074
    %3076 = vmatmul.bf16.gmra.mxu0 %v2946
    %v3077 = vpop.f32.mrf.mxu0
    %v3078 = vadd.f32 %v2907, %v3077
    %v3079 = vpop.f32.mrf.mxu0
    %v3080 = vadd.f32 %v2907, %v3079
    %3081 = vmatmul.bf16.gmra.mxu0 %v2949
    %v3082 = vpop.f32.mrf.mxu0
    %v3083 = vadd.f32 %v2907, %v3082
    %v3084 = vpop.f32.mrf.mxu0
    %v3085 = vadd.f32 %v2907, %v3084
    %3086 = vmatmul.bf16.gmra.mxu0 %v2952
    %v3087 = vpop.f32.mrf.mxu0
    %v3088 = vadd.f32 %v2907, %v3087
    %v3089 = vpop.f32.mrf.mxu0
    %v3090 = vadd.f32 %v2907, %v3089
    %3091 = vmatmul.bf16.gmra.mxu0 %v2955
    %v3092 = vpop.f32.mrf.mxu0
    %v3093 = vadd.f32 %v2907, %v3092
    %v3094 = vpop.f32.mrf.mxu0
    %v3095 = vadd.f32 %v2907, %v3094
    %3096 = vmatmul.bf16.gmra.mxu0 %v2958
    %v3097 = vpop.f32.mrf.mxu0
    %v3098 = vadd.f32 %v2907, %v3097
    %v3099 = vpop.f32.mrf.mxu0
    %v3100 = vadd.f32 %v2907, %v3099
    %3101 = vmatmul.bf16.gmra.mxu0 %v2961
    %v3102 = vpop.f32.mrf.mxu0
    %v3103 = vadd.f32 %v2907, %v3102
    %v3104 = vpop.f32.mrf.mxu0
    %v3105 = vadd.f32 %v2907, %v3104
    %3106 = vmatmul.bf16.gmra.mxu0 %v2964
    %v3107 = vpop.f32.mrf.mxu0
    %v3108 = vadd.f32 %v2907, %v3107
    %v3109 = vpop.f32.mrf.mxu0
    %v3110 = vadd.f32 %v2907, %v3109
    %3111 = vmatmul.bf16.gmra.mxu0 %v2967
    %v3112 = vpop.f32.mrf.mxu0
    %v3113 = vadd.f32 %v2907, %v3112
    %v3114 = vpop.f32.mrf.mxu0
    %v3115 = vadd.f32 %v2907, %v3114
    %3116 = vmatmul.bf16.gmra.mxu0 %v2970
    %v3117 = vpop.f32.mrf.mxu0
    %v3118 = vadd.f32 %v2907, %v3117
    %v3119 = vpop.f32.mrf.mxu0
    %v3120 = vadd.f32 %v2907, %v3119
    %3121 = vmatmul.bf16.gmra.mxu0 %v2973
    %v3122 = vpop.f32.mrf.mxu0
    %v3123 = vadd.f32 %v2907, %v3122
    %v3124 = vpop.f32.mrf.mxu0
    %v3125 = vadd.f32 %v2907, %v3124
    %3126 = vmatmul.bf16.gmra.mxu0 %v2976
    %v3127 = vpop.f32.mrf.mxu0
    %v3128 = vadd.f32 %v2907, %v3127
    %v3129 = vpop.f32.mrf.mxu0
    %v3130 = vadd.f32 %v2907, %v3129
    %3131 = vmatmul.bf16.gmra.mxu0 %v2979
    %v3132 = vpop.f32.mrf.mxu0
    %v3133 = vadd.f32 %v2907, %v3132
    %v3134 = vpop.f32.mrf.mxu0
    %v3135 = vadd.f32 %v2907, %v3134
    %3136 = vmatmul.bf16.gmra.mxu0 %v2982
    %v3137 = vpop.f32.mrf.mxu0
    %v3138 = vadd.f32 %v2907, %v3137
    %v3139 = vpop.f32.mrf.mxu0
    %v3140 = vadd.f32 %v2907, %v3139
    %3141 = vmatmul.bf16.gmra.mxu0 %v2985
    %v3142 = vpop.f32.mrf.mxu0
    %v3143 = vadd.f32 %v2907, %v3142
    %v3144 = vpop.f32.mrf.mxu0
    %v3145 = vadd.f32 %v2907, %v3144
    %3146 = vmatmul.bf16.gmra.mxu0 %v2988
    %v3147 = vpop.f32.mrf.mxu0
    %v3148 = vadd.f32 %v2907, %v3147
    %v3149 = vpop.f32.mrf.mxu0
    %v3150 = vadd.f32 %v2907, %v3149
    %3151 = vmatmul.bf16.gmra.mxu0 %v2991
    %v3152 = vpop.f32.mrf.mxu0
    %v3153 = vadd.f32 %v2907, %v3152
    %v3154 = vpop.f32.mrf.mxu0
    %v3155 = vadd.f32 %v2907, %v3154
    %3156 = vmatmul.bf16.gmra.mxu0 %v2994
    %v3157 = vpop.f32.mrf.mxu0
    %v3158 = vadd.f32 %v2907, %v3157
    %v3159 = vpop.f32.mrf.mxu0
    %v3160 = vadd.f32 %v2907, %v3159
    %3161 = vmatmul.bf16.gmra.mxu0 %v2997
    %v3162 = vpop.f32.mrf.mxu0
    %v3163 = vadd.f32 %v2907, %v3162
    %v3164 = vpop.f32.mrf.mxu0
    %v3165 = vadd.f32 %v2907, %v3164
    %3166 = vmatmul.bf16.gmra.mxu0 %v3000
    %v3167 = vpop.f32.mrf.mxu0
    %v3168 = vadd.f32 %v2907, %v3167
    %v3169 = vpop.f32.mrf.mxu0
    %v3170 = vadd.f32 %v2907, %v3169
    %3171 = vmatmul.bf16.gmra.mxu0 %v3003
    %v3172 = vpop.f32.mrf.mxu0
    %v3173 = vadd.f32 %v2907, %v3172
    %v3174 = vpop.f32.mrf.mxu0
    %v3175 = vadd.f32 %v2907, %v3174
    %3176 = vmatmul.bf16.gmra.mxu0 %v3006
    %v3177 = vpop.f32.mrf.mxu0
    %v3178 = vadd.f32 %v2907, %v3177
    %v3179 = vpop.f32.mrf.mxu0
    %v3180 = vadd.f32 %v2907, %v3179
    %3181 = vmatmul.bf16.gmra.mxu0 %v3009
    %v3182 = vpop.f32.mrf.mxu0
    %v3183 = vadd.f32 %v2907, %v3182
    %v3184 = vpop.f32.mrf.mxu0
    %v3185 = vadd.f32 %v2907, %v3184
    %3186 = vdwg.mxu0
    %v3187 = vmax.f32 %v3028, 0.0
    %v3188 = vmax.f32 %v3030, 0.0
    %v3189 = vmax.f32 %v3033, 0.0
    %v3190 = vmax.f32 %v3035, 0.0
    %v3191 = vmax.f32 %v3038, 0.0
    %v3192 = vmax.f32 %v3040, 0.0
    %v3193 = vmax.f32 %v3043, 0.0
    %v3194 = vmax.f32 %v3045, 0.0
    %v3195 = vmax.f32 %v3048, 0.0
    %v3196 = vmax.f32 %v3050, 0.0
    %v3197 = vmax.f32 %v3053, 0.0
    %v3198 = vmax.f32 %v3055, 0.0
    %v3199 = vmax.f32 %v3058, 0.0
    %v3200 = vmax.f32 %v3060, 0.0
    %v3201 = vmax.f32 %v3063, 0.0
    %v3202 = vmax.f32 %v3065, 0.0
    %v3203 = vmax.f32 %v3068, 0.0
    %v3204 = vmax.f32 %v3070, 0.0
    %v3205 = vmax.f32 %v3073, 0.0
    %v3206 = vmax.f32 %v3075, 0.0
    %v3207 = vmax.f32 %v3078, 0.0
    %v3208 = vmax.f32 %v3080, 0.0
    %v3209 = vmax.f32 %v3083, 0.0
    %v3210 = vmax.f32 %v3085, 0.0
    %v3211 = vmax.f32 %v3088, 0.0
    %v3212 = vmax.f32 %v3090, 0.0
    %v3213 = vmax.f32 %v3093, 0.0
    %v3214 = vmax.f32 %v3095, 0.0
    %v3215 = vmax.f32 %v3098, 0.0
    %v3216 = vmax.f32 %v3100, 0.0
    %v3217 = vmax.f32 %v3103, 0.0
    %v3218 = vmax.f32 %v3105, 0.0
    %v3219 = vmax.f32 %v3108, 0.0
    %v3220 = vmax.f32 %v3110, 0.0
    %v3221 = vmax.f32 %v3113, 0.0
    %v3222 = vmax.f32 %v3115, 0.0
    %v3223 = vmax.f32 %v3118, 0.0
    %v3224 = vmax.f32 %v3120, 0.0
    %v3225 = vmax.f32 %v3123, 0.0
    %v3226 = vmax.f32 %v3125, 0.0
    %v3227 = vmax.f32 %v3128, 0.0
    %v3228 = vmax.f32 %v3130, 0.0
    %v3229 = vmax.f32 %v3133, 0.0
    %v3230 = vmax.f32 %v3135, 0.0
    %v3231 = vmax.f32 %v3138, 0.0
    %v3232 = vmax.f32 %v3140, 0.0
    %v3233 = vmax.f32 %v3143, 0.0
    %v3234 = vmax.f32 %v3145, 0.0
    %v3235 = vmax.f32 %v3148, 0.0
    %v3236 = vmax.f32 %v3150, 0.0
    %v3237 = vmax.f32 %v3153, 0.0
    %v3238 = vmax.f32 %v3155, 0.0
    %v3239 = vmax.f32 %v3158, 0.0
    %v3240 = vmax.f32 %v3160, 0.0
    %v3241 = vmax.f32 %v3163, 0.0
    %v3242 = vmax.f32 %v3165, 0.0
    %v3243 = vmax.f32 %v3168, 0.0
    %v3244 = vmax.f32 %v3170, 0.0
    %v3245 = vmax.f32 %v3173, 0.0
    %v3246 = vmax.f32 %v3175, 0.0
    %v3247 = vmax.f32 %v3178, 0.0
    %v3248 = vmax.f32 %v3180, 0.0
    %v3249 = vmax.f32 %v3183, 0.0
    %v3250 = vmax.f32 %v3185, 0.0
    %v3315 = vrot.slane %v3187, 7
    %v3316 = vrot.slane %v3188, 7
    %v3317 = vsel %vm190, %v3315, %v3316
    %v3318 = vrot.slane %v3189, 7
    %v3319 = vrot.slane %v3190, 7
    %v3320 = vsel %vm190, %v3318, %v3319
    %v3321 = vrot.slane %v3191, 7
    %v3322 = vrot.slane %v3192, 7
    %v3323 = vsel %vm190, %v3321, %v3322
    %v3324 = vrot.slane %v3193, 7
    %v3325 = vrot.slane %v3194, 7
    %v3326 = vsel %vm190, %v3324, %v3325
    %v3327 = vrot.slane %v3195, 7
    %v3328 = vrot.slane %v3196, 7
    %v3329 = vsel %vm190, %v3327, %v3328
    %v3330 = vrot.slane %v3197, 7
    %v3331 = vrot.slane %v3198, 7
    %v3332 = vsel %vm190, %v3330, %v3331
    %v3333 = vrot.slane %v3199, 7
    %v3334 = vrot.slane %v3200, 7
    %v3335 = vsel %vm190, %v3333, %v3334
    %v3336 = vrot.slane %v3201, 7
    %v3337 = vrot.slane %v3202, 7
    %v3338 = vsel %vm190, %v3336, %v3337
    %v3339 = vrot.slane %v3203, 7
    %v3340 = vrot.slane %v3204, 7
    %v3341 = vsel %vm190, %v3339, %v3340
    %v3342 = vrot.slane %v3205, 7
    %v3343 = vrot.slane %v3206, 7
    %v3344 = vsel %vm190, %v3342, %v3343
    %v3345 = vrot.slane %v3207, 7
    %v3346 = vrot.slane %v3208, 7
    %v3347 = vsel %vm190, %v3345, %v3346
    %v3348 = vrot.slane %v3209, 7
    %v3349 = vrot.slane %v3210, 7
    %v3350 = vsel %vm190, %v3348, %v3349
    %v3351 = vrot.slane %v3211, 7
    %v3352 = vrot.slane %v3212, 7
    %v3353 = vsel %vm190, %v3351, %v3352
    %v3354 = vrot.slane %v3213, 7
    %v3355 = vrot.slane %v3214, 7
    %v3356 = vsel %vm190, %v3354, %v3355
    %v3357 = vrot.slane %v3215, 7
    %v3358 = vrot.slane %v3216, 7
    %v3359 = vsel %vm190, %v3357, %v3358
    %v3360 = vrot.slane %v3217, 7
    %v3361 = vrot.slane %v3218, 7
    %v3362 = vsel %vm190, %v3360, %v3361
    %v3363 = vrot.slane %v3219, 7
    %v3364 = vrot.slane %v3220, 7
    %v3365 = vsel %vm190, %v3363, %v3364
    %v3366 = vrot.slane %v3221, 7
    %v3367 = vrot.slane %v3222, 7
    %v3368 = vsel %vm190, %v3366, %v3367
    %v3369 = vrot.slane %v3223, 7
    %v3370 = vrot.slane %v3224, 7
    %v3371 = vsel %vm190, %v3369, %v3370
    %v3372 = vrot.slane %v3225, 7
    %v3373 = vrot.slane %v3226, 7
    %v3374 = vsel %vm190, %v3372, %v3373
    %v3375 = vrot.slane %v3227, 7
    %v3376 = vrot.slane %v3228, 7
    %v3377 = vsel %vm190, %v3375, %v3376
    %v3378 = vrot.slane %v3229, 7
    %v3379 = vrot.slane %v3230, 7
    %v3380 = vsel %vm190, %v3378, %v3379
    %v3381 = vrot.slane %v3231, 7
    %v3382 = vrot.slane %v3232, 7
    %v3383 = vsel %vm190, %v3381, %v3382
    %v3384 = vrot.slane %v3233, 7
    %v3385 = vrot.slane %v3234, 7
    %v3386 = vsel %vm190, %v3384, %v3385
    %v3387 = vrot.slane %v3235, 7
    %v3388 = vrot.slane %v3236, 7
    %v3389 = vsel %vm190, %v3387, %v3388
    %v3390 = vrot.slane %v3237, 7
    %v3391 = vrot.slane %v3238, 7
    %v3392 = vsel %vm190, %v3390, %v3391
    %v3393 = vrot.slane %v3239, 7
    %v3394 = vrot.slane %v3240, 7
    %v3395 = vsel %vm190, %v3393, %v3394
    %v3396 = vrot.slane %v3241, 7
    %v3397 = vrot.slane %v3242, 7
    %v3398 = vsel %vm190, %v3396, %v3397
    %v3399 = vrot.slane %v3243, 7
    %v3400 = vrot.slane %v3244, 7
    %v3401 = vsel %vm190, %v3399, %v3400
    %v3402 = vrot.slane %v3245, 7
    %v3403 = vrot.slane %v3246, 7
    %v3404 = vsel %vm190, %v3402, %v3403
    %v3405 = vrot.slane %v3247, 7
    %v3406 = vrot.slane %v3248, 7
    %v3407 = vsel %vm190, %v3405, %v3406
    %v3408 = vrot.slane %v3249, 7
    %v3409 = vrot.slane %v3250, 7
    %v3410 = vsel %vm190, %v3408, %v3409
    %v3505 = vsel %vm190, 0.0, %v3315
    %v3506 = vsel %vm190, 0.0, %v3318
    %v3507 = vsel %vm190, 0.0, %v3321
    %v3508 = vsel %vm190, 0.0, %v3324
    %v3509 = vsel %vm190, 0.0, %v3327
    %v3510 = vsel %vm190, 0.0, %v3330
    %v3511 = vsel %vm190, 0.0, %v3333
    %v3512 = vsel %vm190, 0.0, %v3336
    %v3513 = vsel %vm190, 0.0, %v3339
    %v3514 = vsel %vm190, 0.0, %v3342
    %v3515 = vsel %vm190, 0.0, %v3345
    %v3516 = vsel %vm190, 0.0, %v3348
    %v3517 = vsel %vm190, 0.0, %v3351
    %v3518 = vsel %vm190, 0.0, %v3354
    %v3519 = vsel %vm190, 0.0, %v3357
    %v3520 = vsel %vm190, 0.0, %v3360
    %v3521 = vsel %vm190, 0.0, %v3363
    %v3522 = vsel %vm190, 0.0, %v3366
    %v3523 = vsel %vm190, 0.0, %v3369
    %v3524 = vsel %vm190, 0.0, %v3372
    %v3525 = vsel %vm190, 0.0, %v3375
    %v3526 = vsel %vm190, 0.0, %v3378
    %v3527 = vsel %vm190, 0.0, %v3381
    %v3528 = vsel %vm190, 0.0, %v3384
    %v3529 = vsel %vm190, 0.0, %v3387
    %v3530 = vsel %vm190, 0.0, %v3390
    %v3531 = vsel %vm190, 0.0, %v3393
    %v3532 = vsel %vm190, 0.0, %v3396
    %v3533 = vsel %vm190, 0.0, %v3399
    %v3534 = vsel %vm190, 0.0, %v3402
    %v3535 = vsel %vm190, 0.0, %v3405
    %v3536 = vsel %vm190, 0.0, %v3408
    %v3537 = vsel %vm190, %v3316, 0.0
    %v3538 = vsel %vm190, %v3319, 0.0
    %v3539 = vsel %vm190, %v3322, 0.0
    %v3540 = vsel %vm190, %v3325, 0.0
    %v3541 = vsel %vm190, %v3328, 0.0
    %v3542 = vsel %vm190, %v3331, 0.0
    %v3543 = vsel %vm190, %v3334, 0.0
    %v3544 = vsel %vm190, %v3337, 0.0
    %v3545 = vsel %vm190, %v3340, 0.0
    %v3546 = vsel %vm190, %v3343, 0.0
    %v3547 = vsel %vm190, %v3346, 0.0
    %v3548 = vsel %vm190, %v3349, 0.0
    %v3549 = vsel %vm190, %v3352, 0.0
    %v3550 = vsel %vm190, %v3355, 0.0
    %v3551 = vsel %vm190, %v3358, 0.0
    %v3552 = vsel %vm190, %v3361, 0.0
    %v3553 = vsel %vm190, %v3364, 0.0
    %v3554 = vsel %vm190, %v3367, 0.0
    %v3555 = vsel %vm190, %v3370, 0.0
    %v3556 = vsel %vm190, %v3373, 0.0
    %v3557 = vsel %vm190, %v3376, 0.0
    %v3558 = vsel %vm190, %v3379, 0.0
    %v3559 = vsel %vm190, %v3382, 0.0
    %v3560 = vsel %vm190, %v3385, 0.0
    %v3561 = vsel %vm190, %v3388, 0.0
    %v3562 = vsel %vm190, %v3391, 0.0
    %v3563 = vsel %vm190, %v3394, 0.0
    %v3564 = vsel %vm190, %v3397, 0.0
    %v3565 = vsel %vm190, %v3400, 0.0
    %v3566 = vsel %vm190, %v3403, 0.0
    %v3567 = vsel %vm190, %v3406, 0.0
    %v3568 = vsel %vm190, %v3409, 0.0
    %v3629 = vrot.slane %v3505, 1
    %v3630 = vrot.slane %v3317, 1
    %v3631 = vsel %vm513, %v3629, %v3630
    %v3632 = vrot.slane %v3537, 1
    %v3633 = vsel %vm513, %v3630, %v3632
    %v3634 = vrot.slane %v3506, 1
    %v3635 = vrot.slane %v3320, 1
    %v3636 = vsel %vm513, %v3634, %v3635
    %v3637 = vrot.slane %v3538, 1
    %v3638 = vsel %vm513, %v3635, %v3637
    %v3639 = vrot.slane %v3507, 1
    %v3640 = vrot.slane %v3323, 1
    %v3641 = vsel %vm513, %v3639, %v3640
    %v3642 = vrot.slane %v3539, 1
    %v3643 = vsel %vm513, %v3640, %v3642
    %v3644 = vrot.slane %v3508, 1
    %v3645 = vrot.slane %v3326, 1
    %v3646 = vsel %vm513, %v3644, %v3645
    %v3647 = vrot.slane %v3540, 1
    %v3648 = vsel %vm513, %v3645, %v3647
    %v3649 = vrot.slane %v3509, 1
    %v3650 = vrot.slane %v3329, 1
    %v3651 = vsel %vm513, %v3649, %v3650
    %v3652 = vrot.slane %v3541, 1
    %v3653 = vsel %vm513, %v3650, %v3652
    %v3654 = vrot.slane %v3510, 1
    %v3655 = vrot.slane %v3332, 1
    %v3656 = vsel %vm513, %v3654, %v3655
    %v3657 = vrot.slane %v3542, 1
    %v3658 = vsel %vm513, %v3655, %v3657
    %v3659 = vrot.slane %v3511, 1
    %v3660 = vrot.slane %v3335, 1
    %v3661 = vsel %vm513, %v3659, %v3660
    %v3662 = vrot.slane %v3543, 1
    %v3663 = vsel %vm513, %v3660, %v3662
    %v3664 = vrot.slane %v3512, 1
    %v3665 = vrot.slane %v3338, 1
    %v3666 = vsel %vm513, %v3664, %v3665
    %v3667 = vrot.slane %v3544, 1
    %v3668 = vsel %vm513, %v3665, %v3667
    %v3669 = vrot.slane %v3513, 1
    %v3670 = vrot.slane %v3341, 1
    %v3671 = vsel %vm513, %v3669, %v3670
    %v3672 = vrot.slane %v3545, 1
    %v3673 = vsel %vm513, %v3670, %v3672
    %v3674 = vrot.slane %v3514, 1
    %v3675 = vrot.slane %v3344, 1
    %v3676 = vsel %vm513, %v3674, %v3675
    %v3677 = vrot.slane %v3546, 1
    %v3678 = vsel %vm513, %v3675, %v3677
    %v3679 = vrot.slane %v3515, 1
    %v3680 = vrot.slane %v3347, 1
    %v3681 = vsel %vm513, %v3679, %v3680
    %v3682 = vrot.slane %v3547, 1
    %v3683 = vsel %vm513, %v3680, %v3682
    %v3684 = vrot.slane %v3516, 1
    %v3685 = vrot.slane %v3350, 1
    %v3686 = vsel %vm513, %v3684, %v3685
    %v3687 = vrot.slane %v3548, 1
    %v3688 = vsel %vm513, %v3685, %v3687
    %v3689 = vrot.slane %v3517, 1
    %v3690 = vrot.slane %v3353, 1
    %v3691 = vsel %vm513, %v3689, %v3690
    %v3692 = vrot.slane %v3549, 1
    %v3693 = vsel %vm513, %v3690, %v3692
    %v3694 = vrot.slane %v3518, 1
    %v3695 = vrot.slane %v3356, 1
    %v3696 = vsel %vm513, %v3694, %v3695
    %v3697 = vrot.slane %v3550, 1
    %v3698 = vsel %vm513, %v3695, %v3697
    %v3699 = vrot.slane %v3519, 1
    %v3700 = vrot.slane %v3359, 1
    %v3701 = vsel %vm513, %v3699, %v3700
    %v3702 = vrot.slane %v3551, 1
    %v3703 = vsel %vm513, %v3700, %v3702
    %v3704 = vrot.slane %v3521, 1
    %v3705 = vrot.slane %v3365, 1
    %v3706 = vsel %vm513, %v3704, %v3705
    %v3707 = vrot.slane %v3553, 1
    %v3708 = vsel %vm513, %v3705, %v3707
    %v3709 = vrot.slane %v3522, 1
    %v3710 = vrot.slane %v3368, 1
    %v3711 = vsel %vm513, %v3709, %v3710
    %v3712 = vrot.slane %v3554, 1
    %v3713 = vsel %vm513, %v3710, %v3712
    %v3714 = vrot.slane %v3523, 1
    %v3715 = vrot.slane %v3371, 1
    %v3716 = vsel %vm513, %v3714, %v3715
    %v3717 = vrot.slane %v3555, 1
    %v3718 = vsel %vm513, %v3715, %v3717
    %v3719 = vrot.slane %v3524, 1
    %v3720 = vrot.slane %v3374, 1
    %v3721 = vsel %vm513, %v3719, %v3720
    %v3722 = vrot.slane %v3556, 1
    %v3723 = vsel %vm513, %v3720, %v3722
    %v3724 = vrot.slane %v3525, 1
    %v3725 = vrot.slane %v3377, 1
    %v3726 = vsel %vm513, %v3724, %v3725
    %v3727 = vrot.slane %v3557, 1
    %v3728 = vsel %vm513, %v3725, %v3727
    %v3729 = vrot.slane %v3526, 1
    %v3730 = vrot.slane %v3380, 1
    %v3731 = vsel %vm513, %v3729, %v3730
    %v3732 = vrot.slane %v3558, 1
    %v3733 = vsel %vm513, %v3730, %v3732
    %v3734 = vrot.slane %v3527, 1
    %v3735 = vrot.slane %v3383, 1
    %v3736 = vsel %vm513, %v3734, %v3735
    %v3737 = vrot.slane %v3559, 1
    %v3738 = vsel %vm513, %v3735, %v3737
    %v3739 = vrot.slane %v3528, 1
    %v3740 = vrot.slane %v3386, 1
    %v3741 = vsel %vm513, %v3739, %v3740
    %v3742 = vrot.slane %v3560, 1
    %v3743 = vsel %vm513, %v3740, %v3742
    %v3744 = vrot.slane %v3529, 1
    %v3745 = vrot.slane %v3389, 1
    %v3746 = vsel %vm513, %v3744, %v3745
    %v3747 = vrot.slane %v3561, 1
    %v3748 = vsel %vm513, %v3745, %v3747
    %v3749 = vrot.slane %v3530, 1
    %v3750 = vrot.slane %v3392, 1
    %v3751 = vsel %vm513, %v3749, %v3750
    %v3752 = vrot.slane %v3562, 1
    %v3753 = vsel %vm513, %v3750, %v3752
    %v3754 = vrot.slane %v3531, 1
    %v3755 = vrot.slane %v3395, 1
    %v3756 = vsel %vm513, %v3754, %v3755
    %v3757 = vrot.slane %v3563, 1
    %v3758 = vsel %vm513, %v3755, %v3757
    %v3759 = vrot.slane %v3532, 1
    %v3760 = vrot.slane %v3398, 1
    %v3761 = vsel %vm513, %v3759, %v3760
    %v3762 = vrot.slane %v3564, 1
    %v3763 = vsel %vm513, %v3760, %v3762
    %v3764 = vrot.slane %v3533, 1
    %v3765 = vrot.slane %v3401, 1
    %v3766 = vsel %vm513, %v3764, %v3765
    %v3767 = vrot.slane %v3565, 1
    %v3768 = vsel %vm513, %v3765, %v3767
    %v3769 = vrot.slane %v3534, 1
    %v3770 = vrot.slane %v3404, 1
    %v3771 = vsel %vm513, %v3769, %v3770
    %v3772 = vrot.slane %v3566, 1
    %v3773 = vsel %vm513, %v3770, %v3772
    %v3774 = vrot.slane %v3535, 1
    %v3775 = vrot.slane %v3407, 1
    %v3776 = vsel %vm513, %v3774, %v3775
    %v3777 = vrot.slane %v3567, 1
    %v3778 = vsel %vm513, %v3775, %v3777
    %3779 = vrot.lane.b32.xlu0 %v516, 8
    %v3780 = vpop.permute.xlu0 %3779
    %3781 = vrot.lane.b32.xlu0 %v518, 8
    %v3782 = vpop.permute.xlu0 %3781
    %3783 = vrot.lane.b32.xlu0 %v3631, 8
    %v3784 = vpop.permute.xlu0 %3783
    %3785 = vrot.lane.b32.xlu0 %v3633, 8
    %v3786 = vpop.permute.xlu0 %3785
    %3787 = vrot.lane.b32.xlu0 %v3636, 8
    %v3788 = vpop.permute.xlu0 %3787
    %3789 = vrot.lane.b32.xlu0 %v3638, 8
    %v3790 = vpop.permute.xlu0 %3789
    %3791 = vrot.lane.b32.xlu0 %v3641, 8
    %v3792 = vpop.permute.xlu0 %3791
    %3793 = vrot.lane.b32.xlu0 %v3643, 8
    %v3794 = vpop.permute.xlu0 %3793
    %3795 = vrot.lane.b32.xlu0 %v3646, 8
    %v3796 = vpop.permute.xlu0 %3795
    %3797 = vrot.lane.b32.xlu0 %v3648, 8
    %v3798 = vpop.permute.xlu0 %3797
    %3799 = vrot.lane.b32.xlu0 %v3651, 8
    %v3800 = vpop.permute.xlu0 %3799
    %3801 = vrot.lane.b32.xlu0 %v3653, 8
    %v3802 = vpop.permute.xlu0 %3801
    %3803 = vrot.lane.b32.xlu0 %v3656, 8
    %v3804 = vpop.permute.xlu0 %3803
    %3805 = vrot.lane.b32.xlu0 %v3658, 8
    %v3806 = vpop.permute.xlu0 %3805
    %3807 = vrot.lane.b32.xlu0 %v3661, 8
    %v3808 = vpop.permute.xlu0 %3807
    %3809 = vrot.lane.b32.xlu0 %v3663, 8
    %v3810 = vpop.permute.xlu0 %3809
    %3811 = vrot.lane.b32.xlu0 %v3666, 8
    %v3812 = vpop.permute.xlu0 %3811
    %3813 = vrot.lane.b32.xlu0 %v3668, 8
    %v3814 = vpop.permute.xlu0 %3813
    %3815 = vrot.lane.b32.xlu0 %v3671, 8
    %v3816 = vpop.permute.xlu0 %3815
    %3817 = vrot.lane.b32.xlu0 %v3673, 8
    %v3818 = vpop.permute.xlu0 %3817
    %3819 = vrot.lane.b32.xlu0 %v3676, 8
    %v3820 = vpop.permute.xlu0 %3819
    %3821 = vrot.lane.b32.xlu0 %v3678, 8
    %v3822 = vpop.permute.xlu0 %3821
    %3823 = vrot.lane.b32.xlu0 %v3681, 8
    %v3824 = vpop.permute.xlu0 %3823
    %3825 = vrot.lane.b32.xlu0 %v3683, 8
    %v3826 = vpop.permute.xlu0 %3825
    %3827 = vrot.lane.b32.xlu0 %v3686, 8
    %v3828 = vpop.permute.xlu0 %3827
    %3829 = vrot.lane.b32.xlu0 %v3688, 8
    %v3830 = vpop.permute.xlu0 %3829
    %3831 = vrot.lane.b32.xlu0 %v3691, 8
    %v3832 = vpop.permute.xlu0 %3831
    %3833 = vrot.lane.b32.xlu0 %v3693, 8
    %v3834 = vpop.permute.xlu0 %3833
    %3835 = vrot.lane.b32.xlu0 %v3696, 8
    %v3836 = vpop.permute.xlu0 %3835
    %3837 = vrot.lane.b32.xlu0 %v3698, 8
    %v3838 = vpop.permute.xlu0 %3837
    %3839 = vrot.lane.b32.xlu0 %v3701, 8
    %v3840 = vpop.permute.xlu0 %3839
    %3841 = vrot.lane.b32.xlu0 %v3703, 8
    %v3842 = vpop.permute.xlu0 %3841
    %3843 = vrot.lane.b32.xlu0 %v3706, 8
    %v3844 = vpop.permute.xlu0 %3843
    %3845 = vrot.lane.b32.xlu0 %v3708, 8
    %v3846 = vpop.permute.xlu0 %3845
    %3847 = vrot.lane.b32.xlu0 %v3711, 8
    %v3848 = vpop.permute.xlu0 %3847
    %3849 = vrot.lane.b32.xlu0 %v3713, 8
    %v3850 = vpop.permute.xlu0 %3849
    %3851 = vrot.lane.b32.xlu0 %v3716, 8
    %v3852 = vpop.permute.xlu0 %3851
    %3853 = vrot.lane.b32.xlu0 %v3718, 8
    %v3854 = vpop.permute.xlu0 %3853
    %3855 = vrot.lane.b32.xlu0 %v3721, 8
    %v3856 = vpop.permute.xlu0 %3855
    %3857 = vrot.lane.b32.xlu0 %v3723, 8
    %v3858 = vpop.permute.xlu0 %3857
    %3859 = vrot.lane.b32.xlu0 %v3726, 8
    %v3860 = vpop.permute.xlu0 %3859
    %3861 = vrot.lane.b32.xlu0 %v3728, 8
    %v3862 = vpop.permute.xlu0 %3861
    %3863 = vrot.lane.b32.xlu0 %v3731, 8
    %v3864 = vpop.permute.xlu0 %3863
    %3865 = vrot.lane.b32.xlu0 %v3733, 8
    %v3866 = vpop.permute.xlu0 %3865
    %3867 = vrot.lane.b32.xlu0 %v3736, 8
    %v3868 = vpop.permute.xlu0 %3867
    %3869 = vrot.lane.b32.xlu0 %v3738, 8
    %v3870 = vpop.permute.xlu0 %3869
    %3871 = vrot.lane.b32.xlu0 %v3741, 8
    %v3872 = vpop.permute.xlu0 %3871
    %3873 = vrot.lane.b32.xlu0 %v3743, 8
    %v3874 = vpop.permute.xlu0 %3873
    %3875 = vrot.lane.b32.xlu0 %v3746, 8
    %v3876 = vpop.permute.xlu0 %3875
    %3877 = vrot.lane.b32.xlu0 %v3748, 8
    %v3878 = vpop.permute.xlu0 %3877
    %3879 = vrot.lane.b32.xlu0 %v3751, 8
    %v3880 = vpop.permute.xlu0 %3879
    %3881 = vrot.lane.b32.xlu0 %v3753, 8
    %v3882 = vpop.permute.xlu0 %3881
    %3883 = vrot.lane.b32.xlu0 %v3756, 8
    %v3884 = vpop.permute.xlu0 %3883
    %3885 = vrot.lane.b32.xlu0 %v3758, 8
    %v3886 = vpop.permute.xlu0 %3885
    %3887 = vrot.lane.b32.xlu0 %v3761, 8
    %v3888 = vpop.permute.xlu0 %3887
    %3889 = vrot.lane.b32.xlu0 %v3763, 8
    %v3890 = vpop.permute.xlu0 %3889
    %3891 = vrot.lane.b32.xlu0 %v3766, 8
    %v3892 = vpop.permute.xlu0 %3891
    %3893 = vrot.lane.b32.xlu0 %v3768, 8
    %v3894 = vpop.permute.xlu0 %3893
    %3895 = vrot.lane.b32.xlu0 %v3771, 8
    %v3896 = vpop.permute.xlu0 %3895
    %3897 = vrot.lane.b32.xlu0 %v3773, 8
    %v3898 = vpop.permute.xlu0 %3897
    %3899 = vrot.lane.b32.xlu0 %v3776, 8
    %v3900 = vpop.permute.xlu0 %3899
    %3901 = vrot.lane.b32.xlu0 %v3778, 8
    %v3902 = vpop.permute.xlu0 %3901
    %v3965 = vrot.slane %v3505, 2
    %v3966 = vrot.slane %v3317, 2
    %v3967 = vsel %vm855, %v3965, %v3966
    %v3968 = vrot.slane %v3537, 2
    %v3969 = vsel %vm855, %v3966, %v3968
    %v3970 = vrot.slane %v3506, 2
    %v3971 = vrot.slane %v3320, 2
    %v3972 = vsel %vm855, %v3970, %v3971
    %v3973 = vrot.slane %v3538, 2
    %v3974 = vsel %vm855, %v3971, %v3973
    %v3975 = vrot.slane %v3507, 2
    %v3976 = vrot.slane %v3323, 2
    %v3977 = vsel %vm855, %v3975, %v3976
    %v3978 = vrot.slane %v3539, 2
    %v3979 = vsel %vm855, %v3976, %v3978
    %v3980 = vrot.slane %v3508, 2
    %v3981 = vrot.slane %v3326, 2
    %v3982 = vsel %vm855, %v3980, %v3981
    %v3983 = vrot.slane %v3540, 2
    %v3984 = vsel %vm855, %v3981, %v3983
    %v3985 = vrot.slane %v3509, 2
    %v3986 = vrot.slane %v3329, 2
    %v3987 = vsel %vm855, %v3985, %v3986
    %v3988 = vrot.slane %v3541, 2
    %v3989 = vsel %vm855, %v3986, %v3988
    %v3990 = vrot.slane %v3510, 2
    %v3991 = vrot.slane %v3332, 2
    %v3992 = vsel %vm855, %v3990, %v3991
    %v3993 = vrot.slane %v3542, 2
    %v3994 = vsel %vm855, %v3991, %v3993
    %v3995 = vrot.slane %v3511, 2
    %v3996 = vrot.slane %v3335, 2
    %v3997 = vsel %vm855, %v3995, %v3996
    %v3998 = vrot.slane %v3543, 2
    %v3999 = vsel %vm855, %v3996, %v3998
    %v4000 = vrot.slane %v3512, 2
    %v4001 = vrot.slane %v3338, 2
    %v4002 = vsel %vm855, %v4000, %v4001
    %v4003 = vrot.slane %v3544, 2
    %v4004 = vsel %vm855, %v4001, %v4003
    %v4005 = vrot.slane %v3513, 2
    %v4006 = vrot.slane %v3341, 2
    %v4007 = vsel %vm855, %v4005, %v4006
    %v4008 = vrot.slane %v3545, 2
    %v4009 = vsel %vm855, %v4006, %v4008
    %v4010 = vrot.slane %v3514, 2
    %v4011 = vrot.slane %v3344, 2
    %v4012 = vsel %vm855, %v4010, %v4011
    %v4013 = vrot.slane %v3546, 2
    %v4014 = vsel %vm855, %v4011, %v4013
    %v4015 = vrot.slane %v3515, 2
    %v4016 = vrot.slane %v3347, 2
    %v4017 = vsel %vm855, %v4015, %v4016
    %v4018 = vrot.slane %v3547, 2
    %v4019 = vsel %vm855, %v4016, %v4018
    %v4020 = vrot.slane %v3516, 2
    %v4021 = vrot.slane %v3350, 2
    %v4022 = vsel %vm855, %v4020, %v4021
    %v4023 = vrot.slane %v3548, 2
    %v4024 = vsel %vm855, %v4021, %v4023
    %v4025 = vrot.slane %v3517, 2
    %v4026 = vrot.slane %v3353, 2
    %v4027 = vsel %vm855, %v4025, %v4026
    %v4028 = vrot.slane %v3549, 2
    %v4029 = vsel %vm855, %v4026, %v4028
    %v4030 = vrot.slane %v3518, 2
    %v4031 = vrot.slane %v3356, 2
    %v4032 = vsel %vm855, %v4030, %v4031
    %v4033 = vrot.slane %v3550, 2
    %v4034 = vsel %vm855, %v4031, %v4033
    %v4035 = vrot.slane %v3519, 2
    %v4036 = vrot.slane %v3359, 2
    %v4037 = vsel %vm855, %v4035, %v4036
    %v4038 = vrot.slane %v3551, 2
    %v4039 = vsel %vm855, %v4036, %v4038
    %v4040 = vrot.slane %v3521, 2
    %v4041 = vrot.slane %v3365, 2
    %v4042 = vsel %vm855, %v4040, %v4041
    %v4043 = vrot.slane %v3553, 2
    %v4044 = vsel %vm855, %v4041, %v4043
    %v4045 = vrot.slane %v3522, 2
    %v4046 = vrot.slane %v3368, 2
    %v4047 = vsel %vm855, %v4045, %v4046
    %v4048 = vrot.slane %v3554, 2
    %v4049 = vsel %vm855, %v4046, %v4048
    %v4050 = vrot.slane %v3523, 2
    %v4051 = vrot.slane %v3371, 2
    %v4052 = vsel %vm855, %v4050, %v4051
    %v4053 = vrot.slane %v3555, 2
    %v4054 = vsel %vm855, %v4051, %v4053
    %v4055 = vrot.slane %v3524, 2
    %v4056 = vrot.slane %v3374, 2
    %v4057 = vsel %vm855, %v4055, %v4056
    %v4058 = vrot.slane %v3556, 2
    %v4059 = vsel %vm855, %v4056, %v4058
    %v4060 = vrot.slane %v3525, 2
    %v4061 = vrot.slane %v3377, 2
    %v4062 = vsel %vm855, %v4060, %v4061
    %v4063 = vrot.slane %v3557, 2
    %v4064 = vsel %vm855, %v4061, %v4063
    %v4065 = vrot.slane %v3526, 2
    %v4066 = vrot.slane %v3380, 2
    %v4067 = vsel %vm855, %v4065, %v4066
    %v4068 = vrot.slane %v3558, 2
    %v4069 = vsel %vm855, %v4066, %v4068
    %v4070 = vrot.slane %v3527, 2
    %v4071 = vrot.slane %v3383, 2
    %v4072 = vsel %vm855, %v4070, %v4071
    %v4073 = vrot.slane %v3559, 2
    %v4074 = vsel %vm855, %v4071, %v4073
    %v4075 = vrot.slane %v3528, 2
    %v4076 = vrot.slane %v3386, 2
    %v4077 = vsel %vm855, %v4075, %v4076
    %v4078 = vrot.slane %v3560, 2
    %v4079 = vsel %vm855, %v4076, %v4078
    %v4080 = vrot.slane %v3529, 2
    %v4081 = vrot.slane %v3389, 2
    %v4082 = vsel %vm855, %v4080, %v4081
    %v4083 = vrot.slane %v3561, 2
    %v4084 = vsel %vm855, %v4081, %v4083
    %v4085 = vrot.slane %v3530, 2
    %v4086 = vrot.slane %v3392, 2
    %v4087 = vsel %vm855, %v4085, %v4086
    %v4088 = vrot.slane %v3562, 2
    %v4089 = vsel %vm855, %v4086, %v4088
    %v4090 = vrot.slane %v3531, 2
    %v4091 = vrot.slane %v3395, 2
    %v4092 = vsel %vm855, %v4090, %v4091
    %v4093 = vrot.slane %v3563, 2
    %v4094 = vsel %vm855, %v4091, %v4093
    %v4095 = vrot.slane %v3532, 2
    %v4096 = vrot.slane %v3398, 2
    %v4097 = vsel %vm855, %v4095, %v4096
    %v4098 = vrot.slane %v3564, 2
    %v4099 = vsel %vm855, %v4096, %v4098
    %v4100 = vrot.slane %v3533, 2
    %v4101 = vrot.slane %v3401, 2
    %v4102 = vsel %vm855, %v4100, %v4101
    %v4103 = vrot.slane %v3565, 2
    %v4104 = vsel %vm855, %v4101, %v4103
    %v4105 = vrot.slane %v3534, 2
    %v4106 = vrot.slane %v3404, 2
    %v4107 = vsel %vm855, %v4105, %v4106
    %v4108 = vrot.slane %v3566, 2
    %v4109 = vsel %vm855, %v4106, %v4108
    %v4110 = vrot.slane %v3535, 2
    %v4111 = vrot.slane %v3407, 2
    %v4112 = vsel %vm855, %v4110, %v4111
    %v4113 = vrot.slane %v3567, 2
    %v4114 = vsel %vm855, %v4111, %v4113
    %4115 = vrot.lane.b32.xlu0 %v858, 16
    %v4116 = vpop.permute.xlu0 %4115
    %4117 = vrot.lane.b32.xlu0 %v860, 16
    %v4118 = vpop.permute.xlu0 %4117
    %4119 = vrot.lane.b32.xlu0 %v3967, 16
    %v4120 = vpop.permute.xlu0 %4119
    %4121 = vrot.lane.b32.xlu0 %v3969, 16
    %v4122 = vpop.permute.xlu0 %4121
    %4123 = vrot.lane.b32.xlu0 %v3972, 16
    %v4124 = vpop.permute.xlu0 %4123
    %4125 = vrot.lane.b32.xlu0 %v3974, 16
    %v4126 = vpop.permute.xlu0 %4125
    %4127 = vrot.lane.b32.xlu0 %v3977, 16
    %v4128 = vpop.permute.xlu0 %4127
    %4129 = vrot.lane.b32.xlu0 %v3979, 16
    %v4130 = vpop.permute.xlu0 %4129
    %4131 = vrot.lane.b32.xlu0 %v3982, 16
    %v4132 = vpop.permute.xlu0 %4131
    %4133 = vrot.lane.b32.xlu0 %v3984, 16
    %v4134 = vpop.permute.xlu0 %4133
    %4135 = vrot.lane.b32.xlu0 %v3987, 16
    %v4136 = vpop.permute.xlu0 %4135
    %4137 = vrot.lane.b32.xlu0 %v3989, 16
    %v4138 = vpop.permute.xlu0 %4137
    %4139 = vrot.lane.b32.xlu0 %v3992, 16
    %v4140 = vpop.permute.xlu0 %4139
    %4141 = vrot.lane.b32.xlu0 %v3994, 16
    %v4142 = vpop.permute.xlu0 %4141
    %4143 = vrot.lane.b32.xlu0 %v3997, 16
    %v4144 = vpop.permute.xlu0 %4143
    %4145 = vrot.lane.b32.xlu0 %v3999, 16
    %v4146 = vpop.permute.xlu0 %4145
    %4147 = vrot.lane.b32.xlu0 %v4002, 16
    %v4148 = vpop.permute.xlu0 %4147
    %4149 = vrot.lane.b32.xlu0 %v4004, 16
    %v4150 = vpop.permute.xlu0 %4149
    %4151 = vrot.lane.b32.xlu0 %v4007, 16
    %v4152 = vpop.permute.xlu0 %4151
    %4153 = vrot.lane.b32.xlu0 %v4009, 16
    %v4154 = vpop.permute.xlu0 %4153
    %4155 = vrot.lane.b32.xlu0 %v4012, 16
    %v4156 = vpop.permute.xlu0 %4155
    %4157 = vrot.lane.b32.xlu0 %v4014, 16
    %v4158 = vpop.permute.xlu0 %4157
    %4159 = vrot.lane.b32.xlu0 %v4017, 16
    %v4160 = vpop.permute.xlu0 %4159
    %4161 = vrot.lane.b32.xlu0 %v4019, 16
    %v4162 = vpop.permute.xlu0 %4161
    %4163 = vrot.lane.b32.xlu0 %v4022, 16
    %v4164 = vpop.permute.xlu0 %4163
    %4165 = vrot.lane.b32.xlu0 %v4024, 16
    %v4166 = vpop.permute.xlu0 %4165
    %4167 = vrot.lane.b32.xlu0 %v4027, 16
    %v4168 = vpop.permute.xlu0 %4167
    %4169 = vrot.lane.b32.xlu0 %v4029, 16
    %v4170 = vpop.permute.xlu0 %4169
    %4171 = vrot.lane.b32.xlu0 %v4032, 16
    %v4172 = vpop.permute.xlu0 %4171
    %4173 = vrot.lane.b32.xlu0 %v4034, 16
    %v4174 = vpop.permute.xlu0 %4173
    %4175 = vrot.lane.b32.xlu0 %v4037, 16
    %v4176 = vpop.permute.xlu0 %4175
    %4177 = vrot.lane.b32.xlu0 %v4039, 16
    %v4178 = vpop.permute.xlu0 %4177
    %4179 = vrot.lane.b32.xlu0 %v4042, 16
    %v4180 = vpop.permute.xlu0 %4179
    %4181 = vrot.lane.b32.xlu0 %v4044, 16
    %v4182 = vpop.permute.xlu0 %4181
    %4183 = vrot.lane.b32.xlu0 %v4047, 16
    %v4184 = vpop.permute.xlu0 %4183
    %4185 = vrot.lane.b32.xlu0 %v4049, 16
    %v4186 = vpop.permute.xlu0 %4185
    %4187 = vrot.lane.b32.xlu0 %v4052, 16
    %v4188 = vpop.permute.xlu0 %4187
    %4189 = vrot.lane.b32.xlu0 %v4054, 16
    %v4190 = vpop.permute.xlu0 %4189
    %4191 = vrot.lane.b32.xlu0 %v4057, 16
    %v4192 = vpop.permute.xlu0 %4191
    %4193 = vrot.lane.b32.xlu0 %v4059, 16
    %v4194 = vpop.permute.xlu0 %4193
    %4195 = vrot.lane.b32.xlu0 %v4062, 16
    %v4196 = vpop.permute.xlu0 %4195
    %4197 = vrot.lane.b32.xlu0 %v4064, 16
    %v4198 = vpop.permute.xlu0 %4197
    %4199 = vrot.lane.b32.xlu0 %v4067, 16
    %v4200 = vpop.permute.xlu0 %4199
    %4201 = vrot.lane.b32.xlu0 %v4069, 16
    %v4202 = vpop.permute.xlu0 %4201
    %4203 = vrot.lane.b32.xlu0 %v4072, 16
    %v4204 = vpop.permute.xlu0 %4203
    %4205 = vrot.lane.b32.xlu0 %v4074, 16
    %v4206 = vpop.permute.xlu0 %4205
    %4207 = vrot.lane.b32.xlu0 %v4077, 16
    %v4208 = vpop.permute.xlu0 %4207
    %4209 = vrot.lane.b32.xlu0 %v4079, 16
    %v4210 = vpop.permute.xlu0 %4209
    %4211 = vrot.lane.b32.xlu0 %v4082, 16
    %v4212 = vpop.permute.xlu0 %4211
    %4213 = vrot.lane.b32.xlu0 %v4084, 16
    %v4214 = vpop.permute.xlu0 %4213
    %4215 = vrot.lane.b32.xlu0 %v4087, 16
    %v4216 = vpop.permute.xlu0 %4215
    %4217 = vrot.lane.b32.xlu0 %v4089, 16
    %v4218 = vpop.permute.xlu0 %4217
    %4219 = vrot.lane.b32.xlu0 %v4092, 16
    %v4220 = vpop.permute.xlu0 %4219
    %4221 = vrot.lane.b32.xlu0 %v4094, 16
    %v4222 = vpop.permute.xlu0 %4221
    %4223 = vrot.lane.b32.xlu0 %v4097, 16
    %v4224 = vpop.permute.xlu0 %4223
    %4225 = vrot.lane.b32.xlu0 %v4099, 16
    %v4226 = vpop.permute.xlu0 %4225
    %4227 = vrot.lane.b32.xlu0 %v4102, 16
    %v4228 = vpop.permute.xlu0 %4227
    %4229 = vrot.lane.b32.xlu0 %v4104, 16
    %v4230 = vpop.permute.xlu0 %4229
    %4231 = vrot.lane.b32.xlu0 %v4107, 16
    %v4232 = vpop.permute.xlu0 %4231
    %4233 = vrot.lane.b32.xlu0 %v4109, 16
    %v4234 = vpop.permute.xlu0 %4233
    %4235 = vrot.lane.b32.xlu0 %v4112, 16
    %v4236 = vpop.permute.xlu0 %4235
    %4237 = vrot.lane.b32.xlu0 %v4114, 16
    %v4238 = vpop.permute.xlu0 %4237
    %4303 = vrot.lane.b32.xlu0 %v3505, 24
    %v4304 = vpop.permute.xlu0 %4303
    %4305 = vrot.lane.b32.xlu0 %v3317, 24
    %v4306 = vpop.permute.xlu0 %4305
    %4307 = vrot.lane.b32.xlu0 %v3506, 24
    %v4308 = vpop.permute.xlu0 %4307
    %4309 = vrot.lane.b32.xlu0 %v3320, 24
    %v4310 = vpop.permute.xlu0 %4309
    %4311 = vrot.lane.b32.xlu0 %v3507, 24
    %v4312 = vpop.permute.xlu0 %4311
    %4313 = vrot.lane.b32.xlu0 %v3323, 24
    %v4314 = vpop.permute.xlu0 %4313
    %4315 = vrot.lane.b32.xlu0 %v3508, 24
    %v4316 = vpop.permute.xlu0 %4315
    %4317 = vrot.lane.b32.xlu0 %v3326, 24
    %v4318 = vpop.permute.xlu0 %4317
    %4319 = vrot.lane.b32.xlu0 %v3509, 24
    %v4320 = vpop.permute.xlu0 %4319
    %4321 = vrot.lane.b32.xlu0 %v3329, 24
    %v4322 = vpop.permute.xlu0 %4321
    %4323 = vrot.lane.b32.xlu0 %v3510, 24
    %v4324 = vpop.permute.xlu0 %4323
    %4325 = vrot.lane.b32.xlu0 %v3332, 24
    %v4326 = vpop.permute.xlu0 %4325
    %4327 = vrot.lane.b32.xlu0 %v3511, 24
    %v4328 = vpop.permute.xlu0 %4327
    %4329 = vrot.lane.b32.xlu0 %v3335, 24
    %v4330 = vpop.permute.xlu0 %4329
    %4331 = vrot.lane.b32.xlu0 %v3512, 24
    %v4332 = vpop.permute.xlu0 %4331
    %4333 = vrot.lane.b32.xlu0 %v3338, 24
    %v4334 = vpop.permute.xlu0 %4333
    %4335 = vrot.lane.b32.xlu0 %v3513, 24
    %v4336 = vpop.permute.xlu0 %4335
    %4337 = vrot.lane.b32.xlu0 %v3341, 24
    %v4338 = vpop.permute.xlu0 %4337
    %4339 = vrot.lane.b32.xlu0 %v3514, 24
    %v4340 = vpop.permute.xlu0 %4339
    %4341 = vrot.lane.b32.xlu0 %v3344, 24
    %v4342 = vpop.permute.xlu0 %4341
    %4343 = vrot.lane.b32.xlu0 %v3515, 24
    %v4344 = vpop.permute.xlu0 %4343
    %4345 = vrot.lane.b32.xlu0 %v3347, 24
    %v4346 = vpop.permute.xlu0 %4345
    %4347 = vrot.lane.b32.xlu0 %v3516, 24
    %v4348 = vpop.permute.xlu0 %4347
    %4349 = vrot.lane.b32.xlu0 %v3350, 24
    %v4350 = vpop.permute.xlu0 %4349
    %4351 = vrot.lane.b32.xlu0 %v3517, 24
    %v4352 = vpop.permute.xlu0 %4351
    %4353 = vrot.lane.b32.xlu0 %v3353, 24
    %v4354 = vpop.permute.xlu0 %4353
    %4355 = vrot.lane.b32.xlu0 %v3518, 24
    %v4356 = vpop.permute.xlu0 %4355
    %4357 = vrot.lane.b32.xlu0 %v3356, 24
    %v4358 = vpop.permute.xlu0 %4357
    %4359 = vrot.lane.b32.xlu0 %v3519, 24
    %v4360 = vpop.permute.xlu0 %4359
    %4361 = vrot.lane.b32.xlu0 %v3359, 24
    %v4362 = vpop.permute.xlu0 %4361
    %4363 = vrot.lane.b32.xlu0 %v3520, 24
    %v4364 = vpop.permute.xlu0 %4363
    %4365 = vrot.lane.b32.xlu0 %v3362, 24
    %v4366 = vpop.permute.xlu0 %4365
    %4367 = vrot.lane.b32.xlu0 %v3521, 24
    %v4368 = vpop.permute.xlu0 %4367
    %4369 = vrot.lane.b32.xlu0 %v3365, 24
    %v4370 = vpop.permute.xlu0 %4369
    %4371 = vrot.lane.b32.xlu0 %v3522, 24
    %v4372 = vpop.permute.xlu0 %4371
    %4373 = vrot.lane.b32.xlu0 %v3368, 24
    %v4374 = vpop.permute.xlu0 %4373
    %4375 = vrot.lane.b32.xlu0 %v3523, 24
    %v4376 = vpop.permute.xlu0 %4375
    %4377 = vrot.lane.b32.xlu0 %v3371, 24
    %v4378 = vpop.permute.xlu0 %4377
    %4379 = vrot.lane.b32.xlu0 %v3524, 24
    %v4380 = vpop.permute.xlu0 %4379
    %4381 = vrot.lane.b32.xlu0 %v3374, 24
    %v4382 = vpop.permute.xlu0 %4381
    %4383 = vrot.lane.b32.xlu0 %v3525, 24
    %v4384 = vpop.permute.xlu0 %4383
    %4385 = vrot.lane.b32.xlu0 %v3377, 24
    %v4386 = vpop.permute.xlu0 %4385
    %4387 = vrot.lane.b32.xlu0 %v3526, 24
    %v4388 = vpop.permute.xlu0 %4387
    %4389 = vrot.lane.b32.xlu0 %v3380, 24
    %v4390 = vpop.permute.xlu0 %4389
    %4391 = vrot.lane.b32.xlu0 %v3527, 24
    %v4392 = vpop.permute.xlu0 %4391
    %4393 = vrot.lane.b32.xlu0 %v3383, 24
    %v4394 = vpop.permute.xlu0 %4393
    %4395 = vrot.lane.b32.xlu0 %v3528, 24
    %v4396 = vpop.permute.xlu0 %4395
    %4397 = vrot.lane.b32.xlu0 %v3386, 24
    %v4398 = vpop.permute.xlu0 %4397
    %4399 = vrot.lane.b32.xlu0 %v3529, 24
    %v4400 = vpop.permute.xlu0 %4399
    %4401 = vrot.lane.b32.xlu0 %v3389, 24
    %v4402 = vpop.permute.xlu0 %4401
    %4403 = vrot.lane.b32.xlu0 %v3530, 24
    %v4404 = vpop.permute.xlu0 %4403
    %4405 = vrot.lane.b32.xlu0 %v3392, 24
    %v4406 = vpop.permute.xlu0 %4405
    %4407 = vrot.lane.b32.xlu0 %v3531, 24
    %v4408 = vpop.permute.xlu0 %4407
    %4409 = vrot.lane.b32.xlu0 %v3395, 24
    %v4410 = vpop.permute.xlu0 %4409
    %4411 = vrot.lane.b32.xlu0 %v3532, 24
    %v4412 = vpop.permute.xlu0 %4411
    %4413 = vrot.lane.b32.xlu0 %v3398, 24
    %v4414 = vpop.permute.xlu0 %4413
    %4415 = vrot.lane.b32.xlu0 %v3533, 24
    %v4416 = vpop.permute.xlu0 %4415
    %4417 = vrot.lane.b32.xlu0 %v3401, 24
    %v4418 = vpop.permute.xlu0 %4417
    %4419 = vrot.lane.b32.xlu0 %v3534, 24
    %v4420 = vpop.permute.xlu0 %4419
    %4421 = vrot.lane.b32.xlu0 %v3404, 24
    %v4422 = vpop.permute.xlu0 %4421
    %4423 = vrot.lane.b32.xlu0 %v3535, 24
    %v4424 = vpop.permute.xlu0 %4423
    %4425 = vrot.lane.b32.xlu0 %v3407, 24
    %v4426 = vpop.permute.xlu0 %4425
    %4427 = vrot.lane.b32.xlu0 %v3536, 24
    %v4428 = vpop.permute.xlu0 %4427
    %4429 = vrot.lane.b32.xlu0 %v3410, 24
    %v4430 = vpop.permute.xlu0 %4429
    %v4497 = vrot.slane %v3520, 1
    %v4498 = vrot.slane %v3362, 1
    %v4499 = vsel %vm513, %v4497, %v4498
    %v4500 = vrot.slane %v3552, 1
    %v4501 = vsel %vm513, %v4498, %v4500
    %v4502 = vrot.slane %v3536, 1
    %v4503 = vrot.slane %v3410, 1
    %v4504 = vsel %vm513, %v4502, %v4503
    %v4505 = vrot.slane %v3568, 1
    %v4506 = vsel %vm513, %v4503, %v4505
    %4507 = vrot.lane.b32.xlu0 %v3631, 32
    %v4508 = vpop.permute.xlu0 %4507
    %4509 = vrot.lane.b32.xlu0 %v3633, 32
    %v4510 = vpop.permute.xlu0 %4509
    %4511 = vrot.lane.b32.xlu0 %v3636, 32
    %v4512 = vpop.permute.xlu0 %4511
    %4513 = vrot.lane.b32.xlu0 %v3638, 32
    %v4514 = vpop.permute.xlu0 %4513
    %4515 = vrot.lane.b32.xlu0 %v3641, 32
    %v4516 = vpop.permute.xlu0 %4515
    %4517 = vrot.lane.b32.xlu0 %v3643, 32
    %v4518 = vpop.permute.xlu0 %4517
    %4519 = vrot.lane.b32.xlu0 %v3646, 32
    %v4520 = vpop.permute.xlu0 %4519
    %4521 = vrot.lane.b32.xlu0 %v3648, 32
    %v4522 = vpop.permute.xlu0 %4521
    %4523 = vrot.lane.b32.xlu0 %v3651, 32
    %v4524 = vpop.permute.xlu0 %4523
    %4525 = vrot.lane.b32.xlu0 %v3653, 32
    %v4526 = vpop.permute.xlu0 %4525
    %4527 = vrot.lane.b32.xlu0 %v3656, 32
    %v4528 = vpop.permute.xlu0 %4527
    %4529 = vrot.lane.b32.xlu0 %v3658, 32
    %v4530 = vpop.permute.xlu0 %4529
    %4531 = vrot.lane.b32.xlu0 %v3661, 32
    %v4532 = vpop.permute.xlu0 %4531
    %4533 = vrot.lane.b32.xlu0 %v3663, 32
    %v4534 = vpop.permute.xlu0 %4533
    %4535 = vrot.lane.b32.xlu0 %v3666, 32
    %v4536 = vpop.permute.xlu0 %4535
    %4537 = vrot.lane.b32.xlu0 %v3668, 32
    %v4538 = vpop.permute.xlu0 %4537
    %4539 = vrot.lane.b32.xlu0 %v3671, 32
    %v4540 = vpop.permute.xlu0 %4539
    %4541 = vrot.lane.b32.xlu0 %v3673, 32
    %v4542 = vpop.permute.xlu0 %4541
    %4543 = vrot.lane.b32.xlu0 %v3676, 32
    %v4544 = vpop.permute.xlu0 %4543
    %4545 = vrot.lane.b32.xlu0 %v3678, 32
    %v4546 = vpop.permute.xlu0 %4545
    %4547 = vrot.lane.b32.xlu0 %v3681, 32
    %v4548 = vpop.permute.xlu0 %4547
    %4549 = vrot.lane.b32.xlu0 %v3683, 32
    %v4550 = vpop.permute.xlu0 %4549
    %4551 = vrot.lane.b32.xlu0 %v3686, 32
    %v4552 = vpop.permute.xlu0 %4551
    %4553 = vrot.lane.b32.xlu0 %v3688, 32
    %v4554 = vpop.permute.xlu0 %4553
    %4555 = vrot.lane.b32.xlu0 %v3691, 32
    %v4556 = vpop.permute.xlu0 %4555
    %4557 = vrot.lane.b32.xlu0 %v3693, 32
    %v4558 = vpop.permute.xlu0 %4557
    %4559 = vrot.lane.b32.xlu0 %v3696, 32
    %v4560 = vpop.permute.xlu0 %4559
    %4561 = vrot.lane.b32.xlu0 %v3698, 32
    %v4562 = vpop.permute.xlu0 %4561
    %4563 = vrot.lane.b32.xlu0 %v3701, 32
    %v4564 = vpop.permute.xlu0 %4563
    %4565 = vrot.lane.b32.xlu0 %v3703, 32
    %v4566 = vpop.permute.xlu0 %4565
    %4567 = vrot.lane.b32.xlu0 %v4499, 32
    %v4568 = vpop.permute.xlu0 %4567
    %4569 = vrot.lane.b32.xlu0 %v4501, 32
    %v4570 = vpop.permute.xlu0 %4569
    %4571 = vrot.lane.b32.xlu0 %v3706, 32
    %v4572 = vpop.permute.xlu0 %4571
    %4573 = vrot.lane.b32.xlu0 %v3708, 32
    %v4574 = vpop.permute.xlu0 %4573
    %4575 = vrot.lane.b32.xlu0 %v3711, 32
    %v4576 = vpop.permute.xlu0 %4575
    %4577 = vrot.lane.b32.xlu0 %v3713, 32
    %v4578 = vpop.permute.xlu0 %4577
    %4579 = vrot.lane.b32.xlu0 %v3716, 32
    %v4580 = vpop.permute.xlu0 %4579
    %4581 = vrot.lane.b32.xlu0 %v3718, 32
    %v4582 = vpop.permute.xlu0 %4581
    %4583 = vrot.lane.b32.xlu0 %v3721, 32
    %v4584 = vpop.permute.xlu0 %4583
    %4585 = vrot.lane.b32.xlu0 %v3723, 32
    %v4586 = vpop.permute.xlu0 %4585
    %4587 = vrot.lane.b32.xlu0 %v3726, 32
    %v4588 = vpop.permute.xlu0 %4587
    %4589 = vrot.lane.b32.xlu0 %v3728, 32
    %v4590 = vpop.permute.xlu0 %4589
    %4591 = vrot.lane.b32.xlu0 %v3731, 32
    %v4592 = vpop.permute.xlu0 %4591
    %4593 = vrot.lane.b32.xlu0 %v3733, 32
    %v4594 = vpop.permute.xlu0 %4593
    %4595 = vrot.lane.b32.xlu0 %v3736, 32
    %v4596 = vpop.permute.xlu0 %4595
    %4597 = vrot.lane.b32.xlu0 %v3738, 32
    %v4598 = vpop.permute.xlu0 %4597
    %4599 = vrot.lane.b32.xlu0 %v3741, 32
    %v4600 = vpop.permute.xlu0 %4599
    %4601 = vrot.lane.b32.xlu0 %v3743, 32
    %v4602 = vpop.permute.xlu0 %4601
    %4603 = vrot.lane.b32.xlu0 %v3746, 32
    %v4604 = vpop.permute.xlu0 %4603
    %4605 = vrot.lane.b32.xlu0 %v3748, 32
    %v4606 = vpop.permute.xlu0 %4605
    %4607 = vrot.lane.b32.xlu0 %v3751, 32
    %v4608 = vpop.permute.xlu0 %4607
    %4609 = vrot.lane.b32.xlu0 %v3753, 32
    %v4610 = vpop.permute.xlu0 %4609
    %4611 = vrot.lane.b32.xlu0 %v3756, 32
    %v4612 = vpop.permute.xlu0 %4611
    %4613 = vrot.lane.b32.xlu0 %v3758, 32
    %v4614 = vpop.permute.xlu0 %4613
    %4615 = vrot.lane.b32.xlu0 %v3761, 32
    %v4616 = vpop.permute.xlu0 %4615
    %4617 = vrot.lane.b32.xlu0 %v3763, 32
    %v4618 = vpop.permute.xlu0 %4617
    %4619 = vrot.lane.b32.xlu0 %v3766, 32
    %v4620 = vpop.permute.xlu0 %4619
    %4621 = vrot.lane.b32.xlu0 %v3768, 32
    %v4622 = vpop.permute.xlu0 %4621
    %4623 = vrot.lane.b32.xlu0 %v3771, 32
    %v4624 = vpop.permute.xlu0 %4623
    %4625 = vrot.lane.b32.xlu0 %v3773, 32
    %v4626 = vpop.permute.xlu0 %4625
    %4627 = vrot.lane.b32.xlu0 %v3776, 32
    %v4628 = vpop.permute.xlu0 %4627
    %4629 = vrot.lane.b32.xlu0 %v3778, 32
    %v4630 = vpop.permute.xlu0 %4629
    %4631 = vrot.lane.b32.xlu0 %v4504, 32
    %v4632 = vpop.permute.xlu0 %4631
    %4633 = vrot.lane.b32.xlu0 %v4506, 32
    %v4634 = vpop.permute.xlu0 %4633
    %v4699 = vrot.slane %v3520, 2
    %v4700 = vrot.slane %v3362, 2
    %v4701 = vsel %vm855, %v4699, %v4700
    %v4702 = vrot.slane %v3552, 2
    %v4703 = vsel %vm855, %v4700, %v4702
    %v4704 = vrot.slane %v3536, 2
    %v4705 = vrot.slane %v3410, 2
    %v4706 = vsel %vm855, %v4704, %v4705
    %v4707 = vrot.slane %v3568, 2
    %v4708 = vsel %vm855, %v4705, %v4707
    %4709 = vrot.lane.b32.xlu0 %v3967, 40
    %v4710 = vpop.permute.xlu0 %4709
    %4711 = vrot.lane.b32.xlu0 %v3969, 40
    %v4712 = vpop.permute.xlu0 %4711
    %4713 = vrot.lane.b32.xlu0 %v3972, 40
    %v4714 = vpop.permute.xlu0 %4713
    %4715 = vrot.lane.b32.xlu0 %v3974, 40
    %v4716 = vpop.permute.xlu0 %4715
    %4717 = vrot.lane.b32.xlu0 %v3977, 40
    %v4718 = vpop.permute.xlu0 %4717
    %4719 = vrot.lane.b32.xlu0 %v3979, 40
    %v4720 = vpop.permute.xlu0 %4719
    %4721 = vrot.lane.b32.xlu0 %v3982, 40
    %v4722 = vpop.permute.xlu0 %4721
    %4723 = vrot.lane.b32.xlu0 %v3984, 40
    %v4724 = vpop.permute.xlu0 %4723
    %4725 = vrot.lane.b32.xlu0 %v3987, 40
    %v4726 = vpop.permute.xlu0 %4725
    %4727 = vrot.lane.b32.xlu0 %v3989, 40
    %v4728 = vpop.permute.xlu0 %4727
    %4729 = vrot.lane.b32.xlu0 %v3992, 40
    %v4730 = vpop.permute.xlu0 %4729
    %4731 = vrot.lane.b32.xlu0 %v3994, 40
    %v4732 = vpop.permute.xlu0 %4731
    %4733 = vrot.lane.b32.xlu0 %v3997, 40
    %v4734 = vpop.permute.xlu0 %4733
    %4735 = vrot.lane.b32.xlu0 %v3999, 40
    %v4736 = vpop.permute.xlu0 %4735
    %4737 = vrot.lane.b32.xlu0 %v4002, 40
    %v4738 = vpop.permute.xlu0 %4737
    %4739 = vrot.lane.b32.xlu0 %v4004, 40
    %v4740 = vpop.permute.xlu0 %4739
    %4741 = vrot.lane.b32.xlu0 %v4007, 40
    %v4742 = vpop.permute.xlu0 %4741
    %4743 = vrot.lane.b32.xlu0 %v4009, 40
    %v4744 = vpop.permute.xlu0 %4743
    %4745 = vrot.lane.b32.xlu0 %v4012, 40
    %v4746 = vpop.permute.xlu0 %4745
    %4747 = vrot.lane.b32.xlu0 %v4014, 40
    %v4748 = vpop.permute.xlu0 %4747
    %4749 = vrot.lane.b32.xlu0 %v4017, 40
    %v4750 = vpop.permute.xlu0 %4749
    %4751 = vrot.lane.b32.xlu0 %v4019, 40
    %v4752 = vpop.permute.xlu0 %4751
    %4753 = vrot.lane.b32.xlu0 %v4022, 40
    %v4754 = vpop.permute.xlu0 %4753
    %4755 = vrot.lane.b32.xlu0 %v4024, 40
    %v4756 = vpop.permute.xlu0 %4755
    %4757 = vrot.lane.b32.xlu0 %v4027, 40
    %v4758 = vpop.permute.xlu0 %4757
    %4759 = vrot.lane.b32.xlu0 %v4029, 40
    %v4760 = vpop.permute.xlu0 %4759
    %4761 = vrot.lane.b32.xlu0 %v4032, 40
    %v4762 = vpop.permute.xlu0 %4761
    %4763 = vrot.lane.b32.xlu0 %v4034, 40
    %v4764 = vpop.permute.xlu0 %4763
    %4765 = vrot.lane.b32.xlu0 %v4037, 40
    %v4766 = vpop.permute.xlu0 %4765
    %4767 = vrot.lane.b32.xlu0 %v4039, 40
    %v4768 = vpop.permute.xlu0 %4767
    %4769 = vrot.lane.b32.xlu0 %v4701, 40
    %v4770 = vpop.permute.xlu0 %4769
    %4771 = vrot.lane.b32.xlu0 %v4703, 40
    %v4772 = vpop.permute.xlu0 %4771
    %4773 = vrot.lane.b32.xlu0 %v4042, 40
    %v4774 = vpop.permute.xlu0 %4773
    %4775 = vrot.lane.b32.xlu0 %v4044, 40
    %v4776 = vpop.permute.xlu0 %4775
    %4777 = vrot.lane.b32.xlu0 %v4047, 40
    %v4778 = vpop.permute.xlu0 %4777
    %4779 = vrot.lane.b32.xlu0 %v4049, 40
    %v4780 = vpop.permute.xlu0 %4779
    %4781 = vrot.lane.b32.xlu0 %v4052, 40
    %v4782 = vpop.permute.xlu0 %4781
    %4783 = vrot.lane.b32.xlu0 %v4054, 40
    %v4784 = vpop.permute.xlu0 %4783
    %4785 = vrot.lane.b32.xlu0 %v4057, 40
    %v4786 = vpop.permute.xlu0 %4785
    %4787 = vrot.lane.b32.xlu0 %v4059, 40
    %v4788 = vpop.permute.xlu0 %4787
    %4789 = vrot.lane.b32.xlu0 %v4062, 40
    %v4790 = vpop.permute.xlu0 %4789
    %4791 = vrot.lane.b32.xlu0 %v4064, 40
    %v4792 = vpop.permute.xlu0 %4791
    %4793 = vrot.lane.b32.xlu0 %v4067, 40
    %v4794 = vpop.permute.xlu0 %4793
    %4795 = vrot.lane.b32.xlu0 %v4069, 40
    %v4796 = vpop.permute.xlu0 %4795
    %4797 = vrot.lane.b32.xlu0 %v4072, 40
    %v4798 = vpop.permute.xlu0 %4797
    %4799 = vrot.lane.b32.xlu0 %v4074, 40
    %v4800 = vpop.permute.xlu0 %4799
    %4801 = vrot.lane.b32.xlu0 %v4077, 40
    %v4802 = vpop.permute.xlu0 %4801
    %4803 = vrot.lane.b32.xlu0 %v4079, 40
    %v4804 = vpop.permute.xlu0 %4803
    %4805 = vrot.lane.b32.xlu0 %v4082, 40
    %v4806 = vpop.permute.xlu0 %4805
    %4807 = vrot.lane.b32.xlu0 %v4084, 40
    %v4808 = vpop.permute.xlu0 %4807
    %4809 = vrot.lane.b32.xlu0 %v4087, 40
    %v4810 = vpop.permute.xlu0 %4809
    %4811 = vrot.lane.b32.xlu0 %v4089, 40
    %v4812 = vpop.permute.xlu0 %4811
    %4813 = vrot.lane.b32.xlu0 %v4092, 40
    %v4814 = vpop.permute.xlu0 %4813
    %4815 = vrot.lane.b32.xlu0 %v4094, 40
    %v4816 = vpop.permute.xlu0 %4815
    %4817 = vrot.lane.b32.xlu0 %v4097, 40
    %v4818 = vpop.permute.xlu0 %4817
    %4819 = vrot.lane.b32.xlu0 %v4099, 40
    %v4820 = vpop.permute.xlu0 %4819
    %4821 = vrot.lane.b32.xlu0 %v4102, 40
    %v4822 = vpop.permute.xlu0 %4821
    %4823 = vrot.lane.b32.xlu0 %v4104, 40
    %v4824 = vpop.permute.xlu0 %4823
    %4825 = vrot.lane.b32.xlu0 %v4107, 40
    %v4826 = vpop.permute.xlu0 %4825
    %4827 = vrot.lane.b32.xlu0 %v4109, 40
    %v4828 = vpop.permute.xlu0 %4827
    %4829 = vrot.lane.b32.xlu0 %v4112, 40
    %v4830 = vpop.permute.xlu0 %4829
    %4831 = vrot.lane.b32.xlu0 %v4114, 40
    %v4832 = vpop.permute.xlu0 %4831
    %4833 = vrot.lane.b32.xlu0 %v4706, 40
    %v4834 = vpop.permute.xlu0 %4833
    %4835 = vrot.lane.b32.xlu0 %v4708, 40
    %v4836 = vpop.permute.xlu0 %4835
    %4901 = vrot.lane.b32.xlu0 %v3506, 48
    %v4902 = vpop.permute.xlu0 %4901
    %4903 = vrot.lane.b32.xlu0 %v3320, 48
    %v4904 = vpop.permute.xlu0 %4903
    %4905 = vrot.lane.b32.xlu0 %v3507, 48
    %v4906 = vpop.permute.xlu0 %4905
    %4907 = vrot.lane.b32.xlu0 %v3323, 48
    %v4908 = vpop.permute.xlu0 %4907
    %4909 = vrot.lane.b32.xlu0 %v3508, 48
    %v4910 = vpop.permute.xlu0 %4909
    %4911 = vrot.lane.b32.xlu0 %v3326, 48
    %v4912 = vpop.permute.xlu0 %4911
    %4913 = vrot.lane.b32.xlu0 %v3509, 48
    %v4914 = vpop.permute.xlu0 %4913
    %4915 = vrot.lane.b32.xlu0 %v3329, 48
    %v4916 = vpop.permute.xlu0 %4915
    %4917 = vrot.lane.b32.xlu0 %v3510, 48
    %v4918 = vpop.permute.xlu0 %4917
    %4919 = vrot.lane.b32.xlu0 %v3332, 48
    %v4920 = vpop.permute.xlu0 %4919
    %4921 = vrot.lane.b32.xlu0 %v3511, 48
    %v4922 = vpop.permute.xlu0 %4921
    %4923 = vrot.lane.b32.xlu0 %v3335, 48
    %v4924 = vpop.permute.xlu0 %4923
    %4925 = vrot.lane.b32.xlu0 %v3512, 48
    %v4926 = vpop.permute.xlu0 %4925
    %4927 = vrot.lane.b32.xlu0 %v3338, 48
    %v4928 = vpop.permute.xlu0 %4927
    %4929 = vrot.lane.b32.xlu0 %v3513, 48
    %v4930 = vpop.permute.xlu0 %4929
    %4931 = vrot.lane.b32.xlu0 %v3341, 48
    %v4932 = vpop.permute.xlu0 %4931
    %4933 = vrot.lane.b32.xlu0 %v3514, 48
    %v4934 = vpop.permute.xlu0 %4933
    %4935 = vrot.lane.b32.xlu0 %v3344, 48
    %v4936 = vpop.permute.xlu0 %4935
    %4937 = vrot.lane.b32.xlu0 %v3515, 48
    %v4938 = vpop.permute.xlu0 %4937
    %4939 = vrot.lane.b32.xlu0 %v3347, 48
    %v4940 = vpop.permute.xlu0 %4939
    %4941 = vrot.lane.b32.xlu0 %v3516, 48
    %v4942 = vpop.permute.xlu0 %4941
    %4943 = vrot.lane.b32.xlu0 %v3350, 48
    %v4944 = vpop.permute.xlu0 %4943
    %4945 = vrot.lane.b32.xlu0 %v3517, 48
    %v4946 = vpop.permute.xlu0 %4945
    %4947 = vrot.lane.b32.xlu0 %v3353, 48
    %v4948 = vpop.permute.xlu0 %4947
    %4949 = vrot.lane.b32.xlu0 %v3518, 48
    %v4950 = vpop.permute.xlu0 %4949
    %4951 = vrot.lane.b32.xlu0 %v3356, 48
    %v4952 = vpop.permute.xlu0 %4951
    %4953 = vrot.lane.b32.xlu0 %v3519, 48
    %v4954 = vpop.permute.xlu0 %4953
    %4955 = vrot.lane.b32.xlu0 %v3359, 48
    %v4956 = vpop.permute.xlu0 %4955
    %4957 = vrot.lane.b32.xlu0 %v3520, 48
    %v4958 = vpop.permute.xlu0 %4957
    %4959 = vrot.lane.b32.xlu0 %v3362, 48
    %v4960 = vpop.permute.xlu0 %4959
    %4961 = vrot.lane.b32.xlu0 %v385, 48
    %v4962 = vpop.permute.xlu0 %4961
    %4963 = vrot.lane.b32.xlu0 %v192, 48
    %v4964 = vpop.permute.xlu0 %4963
    %4965 = vrot.lane.b32.xlu0 %v3522, 48
    %v4966 = vpop.permute.xlu0 %4965
    %4967 = vrot.lane.b32.xlu0 %v3368, 48
    %v4968 = vpop.permute.xlu0 %4967
    %4969 = vrot.lane.b32.xlu0 %v3523, 48
    %v4970 = vpop.permute.xlu0 %4969
    %4971 = vrot.lane.b32.xlu0 %v3371, 48
    %v4972 = vpop.permute.xlu0 %4971
    %4973 = vrot.lane.b32.xlu0 %v3524, 48
    %v4974 = vpop.permute.xlu0 %4973
    %4975 = vrot.lane.b32.xlu0 %v3374, 48
    %v4976 = vpop.permute.xlu0 %4975
    %4977 = vrot.lane.b32.xlu0 %v3525, 48
    %v4978 = vpop.permute.xlu0 %4977
    %4979 = vrot.lane.b32.xlu0 %v3377, 48
    %v4980 = vpop.permute.xlu0 %4979
    %4981 = vrot.lane.b32.xlu0 %v3526, 48
    %v4982 = vpop.permute.xlu0 %4981
    %4983 = vrot.lane.b32.xlu0 %v3380, 48
    %v4984 = vpop.permute.xlu0 %4983
    %4985 = vrot.lane.b32.xlu0 %v3527, 48
    %v4986 = vpop.permute.xlu0 %4985
    %4987 = vrot.lane.b32.xlu0 %v3383, 48
    %v4988 = vpop.permute.xlu0 %4987
    %4989 = vrot.lane.b32.xlu0 %v3528, 48
    %v4990 = vpop.permute.xlu0 %4989
    %4991 = vrot.lane.b32.xlu0 %v3386, 48
    %v4992 = vpop.permute.xlu0 %4991
    %4993 = vrot.lane.b32.xlu0 %v3529, 48
    %v4994 = vpop.permute.xlu0 %4993
    %4995 = vrot.lane.b32.xlu0 %v3389, 48
    %v4996 = vpop.permute.xlu0 %4995
    %4997 = vrot.lane.b32.xlu0 %v3530, 48
    %v4998 = vpop.permute.xlu0 %4997
    %4999 = vrot.lane.b32.xlu0 %v3392, 48
    %v5000 = vpop.permute.xlu0 %4999
    %5001 = vrot.lane.b32.xlu0 %v3531, 48
    %v5002 = vpop.permute.xlu0 %5001
    %5003 = vrot.lane.b32.xlu0 %v3395, 48
    %v5004 = vpop.permute.xlu0 %5003
    %5005 = vrot.lane.b32.xlu0 %v3532, 48
    %v5006 = vpop.permute.xlu0 %5005
    %5007 = vrot.lane.b32.xlu0 %v3398, 48
    %v5008 = vpop.permute.xlu0 %5007
    %5009 = vrot.lane.b32.xlu0 %v3533, 48
    %v5010 = vpop.permute.xlu0 %5009
    %5011 = vrot.lane.b32.xlu0 %v3401, 48
    %v5012 = vpop.permute.xlu0 %5011
    %5013 = vrot.lane.b32.xlu0 %v3534, 48
    %v5014 = vpop.permute.xlu0 %5013
    %5015 = vrot.lane.b32.xlu0 %v3404, 48
    %v5016 = vpop.permute.xlu0 %5015
    %5017 = vrot.lane.b32.xlu0 %v3535, 48
    %v5018 = vpop.permute.xlu0 %5017
    %5019 = vrot.lane.b32.xlu0 %v3407, 48
    %v5020 = vpop.permute.xlu0 %5019
    %5021 = vrot.lane.b32.xlu0 %v3536, 48
    %v5022 = vpop.permute.xlu0 %5021
    %5023 = vrot.lane.b32.xlu0 %v3410, 48
    %v5024 = vpop.permute.xlu0 %5023
    %5087 = vrot.lane.b32.xlu0 %v3636, 56
    %v5088 = vpop.permute.xlu0 %5087
    %5089 = vrot.lane.b32.xlu0 %v3638, 56
    %v5090 = vpop.permute.xlu0 %5089
    %5091 = vrot.lane.b32.xlu0 %v3641, 56
    %v5092 = vpop.permute.xlu0 %5091
    %5093 = vrot.lane.b32.xlu0 %v3643, 56
    %v5094 = vpop.permute.xlu0 %5093
    %5095 = vrot.lane.b32.xlu0 %v3646, 56
    %v5096 = vpop.permute.xlu0 %5095
    %5097 = vrot.lane.b32.xlu0 %v3648, 56
    %v5098 = vpop.permute.xlu0 %5097
    %5099 = vrot.lane.b32.xlu0 %v3651, 56
    %v5100 = vpop.permute.xlu0 %5099
    %5101 = vrot.lane.b32.xlu0 %v3653, 56
    %v5102 = vpop.permute.xlu0 %5101
    %5103 = vrot.lane.b32.xlu0 %v3656, 56
    %v5104 = vpop.permute.xlu0 %5103
    %5105 = vrot.lane.b32.xlu0 %v3658, 56
    %v5106 = vpop.permute.xlu0 %5105
    %5107 = vrot.lane.b32.xlu0 %v3661, 56
    %v5108 = vpop.permute.xlu0 %5107
    %5109 = vrot.lane.b32.xlu0 %v3663, 56
    %v5110 = vpop.permute.xlu0 %5109
    %5111 = vrot.lane.b32.xlu0 %v3666, 56
    %v5112 = vpop.permute.xlu0 %5111
    %5113 = vrot.lane.b32.xlu0 %v3668, 56
    %v5114 = vpop.permute.xlu0 %5113
    %5115 = vrot.lane.b32.xlu0 %v3671, 56
    %v5116 = vpop.permute.xlu0 %5115
    %5117 = vrot.lane.b32.xlu0 %v3673, 56
    %v5118 = vpop.permute.xlu0 %5117
    %5119 = vrot.lane.b32.xlu0 %v3676, 56
    %v5120 = vpop.permute.xlu0 %5119
    %5121 = vrot.lane.b32.xlu0 %v3678, 56
    %v5122 = vpop.permute.xlu0 %5121
    %5123 = vrot.lane.b32.xlu0 %v3681, 56
    %v5124 = vpop.permute.xlu0 %5123
    %5125 = vrot.lane.b32.xlu0 %v3683, 56
    %v5126 = vpop.permute.xlu0 %5125
    %5127 = vrot.lane.b32.xlu0 %v3686, 56
    %v5128 = vpop.permute.xlu0 %5127
    %5129 = vrot.lane.b32.xlu0 %v3688, 56
    %v5130 = vpop.permute.xlu0 %5129
    %5131 = vrot.lane.b32.xlu0 %v3691, 56
    %v5132 = vpop.permute.xlu0 %5131
    %5133 = vrot.lane.b32.xlu0 %v3693, 56
    %v5134 = vpop.permute.xlu0 %5133
    %5135 = vrot.lane.b32.xlu0 %v3696, 56
    %v5136 = vpop.permute.xlu0 %5135
    %5137 = vrot.lane.b32.xlu0 %v3698, 56
    %v5138 = vpop.permute.xlu0 %5137
    %5139 = vrot.lane.b32.xlu0 %v3701, 56
    %v5140 = vpop.permute.xlu0 %5139
    %5141 = vrot.lane.b32.xlu0 %v3703, 56
    %v5142 = vpop.permute.xlu0 %5141
    %5143 = vrot.lane.b32.xlu0 %v4499, 56
    %v5144 = vpop.permute.xlu0 %5143
    %5145 = vrot.lane.b32.xlu0 %v4501, 56
    %v5146 = vpop.permute.xlu0 %5145
    %5147 = vrot.lane.b32.xlu0 %v516, 56
    %v5148 = vpop.permute.xlu0 %5147
    %5149 = vrot.lane.b32.xlu0 %v518, 56
    %v5150 = vpop.permute.xlu0 %5149
    %5151 = vrot.lane.b32.xlu0 %v3711, 56
    %v5152 = vpop.permute.xlu0 %5151
    %5153 = vrot.lane.b32.xlu0 %v3713, 56
    %v5154 = vpop.permute.xlu0 %5153
    %5155 = vrot.lane.b32.xlu0 %v3716, 56
    %v5156 = vpop.permute.xlu0 %5155
    %5157 = vrot.lane.b32.xlu0 %v3718, 56
    %v5158 = vpop.permute.xlu0 %5157
    %5159 = vrot.lane.b32.xlu0 %v3721, 56
    %v5160 = vpop.permute.xlu0 %5159
    %5161 = vrot.lane.b32.xlu0 %v3723, 56
    %v5162 = vpop.permute.xlu0 %5161
    %5163 = vrot.lane.b32.xlu0 %v3726, 56
    %v5164 = vpop.permute.xlu0 %5163
    %5165 = vrot.lane.b32.xlu0 %v3728, 56
    %v5166 = vpop.permute.xlu0 %5165
    %5167 = vrot.lane.b32.xlu0 %v3731, 56
    %v5168 = vpop.permute.xlu0 %5167
    %5169 = vrot.lane.b32.xlu0 %v3733, 56
    %v5170 = vpop.permute.xlu0 %5169
    %5171 = vrot.lane.b32.xlu0 %v3736, 56
    %v5172 = vpop.permute.xlu0 %5171
    %5173 = vrot.lane.b32.xlu0 %v3738, 56
    %v5174 = vpop.permute.xlu0 %5173
    %5175 = vrot.lane.b32.xlu0 %v3741, 56
    %v5176 = vpop.permute.xlu0 %5175
    %5177 = vrot.lane.b32.xlu0 %v3743, 56
    %v5178 = vpop.permute.xlu0 %5177
    %5179 = vrot.lane.b32.xlu0 %v3746, 56
    %v5180 = vpop.permute.xlu0 %5179
    %5181 = vrot.lane.b32.xlu0 %v3748, 56
    %v5182 = vpop.permute.xlu0 %5181
    %5183 = vrot.lane.b32.xlu0 %v3751, 56
    %v5184 = vpop.permute.xlu0 %5183
    %5185 = vrot.lane.b32.xlu0 %v3753, 56
    %v5186 = vpop.permute.xlu0 %5185
    %5187 = vrot.lane.b32.xlu0 %v3756, 56
    %v5188 = vpop.permute.xlu0 %5187
    %5189 = vrot.lane.b32.xlu0 %v3758, 56
    %v5190 = vpop.permute.xlu0 %5189
    %5191 = vrot.lane.b32.xlu0 %v3761, 56
    %v5192 = vpop.permute.xlu0 %5191
    %5193 = vrot.lane.b32.xlu0 %v3763, 56
    %v5194 = vpop.permute.xlu0 %5193
    %5195 = vrot.lane.b32.xlu0 %v3766, 56
    %v5196 = vpop.permute.xlu0 %5195
    %5197 = vrot.lane.b32.xlu0 %v3768, 56
    %v5198 = vpop.permute.xlu0 %5197
    %5199 = vrot.lane.b32.xlu0 %v3771, 56
    %v5200 = vpop.permute.xlu0 %5199
    %5201 = vrot.lane.b32.xlu0 %v3773, 56
    %v5202 = vpop.permute.xlu0 %5201
    %5203 = vrot.lane.b32.xlu0 %v3776, 56
    %v5204 = vpop.permute.xlu0 %5203
    %5205 = vrot.lane.b32.xlu0 %v3778, 56
    %v5206 = vpop.permute.xlu0 %5205
    %5207 = vrot.lane.b32.xlu0 %v4504, 56
    %v5208 = vpop.permute.xlu0 %5207
    %5209 = vrot.lane.b32.xlu0 %v4506, 56
    %v5210 = vpop.permute.xlu0 %5209
    %5273 = vrot.lane.b32.xlu0 %v3972, 64
    %v5274 = vpop.permute.xlu0 %5273
    %5275 = vrot.lane.b32.xlu0 %v3974, 64
    %v5276 = vpop.permute.xlu0 %5275
    %5277 = vrot.lane.b32.xlu0 %v3977, 64
    %v5278 = vpop.permute.xlu0 %5277
    %5279 = vrot.lane.b32.xlu0 %v3979, 64
    %v5280 = vpop.permute.xlu0 %5279
    %5281 = vrot.lane.b32.xlu0 %v3982, 64
    %v5282 = vpop.permute.xlu0 %5281
    %5283 = vrot.lane.b32.xlu0 %v3984, 64
    %v5284 = vpop.permute.xlu0 %5283
    %5285 = vrot.lane.b32.xlu0 %v3987, 64
    %v5286 = vpop.permute.xlu0 %5285
    %5287 = vrot.lane.b32.xlu0 %v3989, 64
    %v5288 = vpop.permute.xlu0 %5287
    %5289 = vrot.lane.b32.xlu0 %v3992, 64
    %v5290 = vpop.permute.xlu0 %5289
    %5291 = vrot.lane.b32.xlu0 %v3994, 64
    %v5292 = vpop.permute.xlu0 %5291
    %5293 = vrot.lane.b32.xlu0 %v3997, 64
    %v5294 = vpop.permute.xlu0 %5293
    %5295 = vrot.lane.b32.xlu0 %v3999, 64
    %v5296 = vpop.permute.xlu0 %5295
    %5297 = vrot.lane.b32.xlu0 %v4002, 64
    %v5298 = vpop.permute.xlu0 %5297
    %5299 = vrot.lane.b32.xlu0 %v4004, 64
    %v5300 = vpop.permute.xlu0 %5299
    %5301 = vrot.lane.b32.xlu0 %v4007, 64
    %v5302 = vpop.permute.xlu0 %5301
    %5303 = vrot.lane.b32.xlu0 %v4009, 64
    %v5304 = vpop.permute.xlu0 %5303
    %5305 = vrot.lane.b32.xlu0 %v4012, 64
    %v5306 = vpop.permute.xlu0 %5305
    %5307 = vrot.lane.b32.xlu0 %v4014, 64
    %v5308 = vpop.permute.xlu0 %5307
    %5309 = vrot.lane.b32.xlu0 %v4017, 64
    %v5310 = vpop.permute.xlu0 %5309
    %5311 = vrot.lane.b32.xlu0 %v4019, 64
    %v5312 = vpop.permute.xlu0 %5311
    %5313 = vrot.lane.b32.xlu0 %v4022, 64
    %v5314 = vpop.permute.xlu0 %5313
    %5315 = vrot.lane.b32.xlu0 %v4024, 64
    %v5316 = vpop.permute.xlu0 %5315
    %5317 = vrot.lane.b32.xlu0 %v4027, 64
    %v5318 = vpop.permute.xlu0 %5317
    %5319 = vrot.lane.b32.xlu0 %v4029, 64
    %v5320 = vpop.permute.xlu0 %5319
    %5321 = vrot.lane.b32.xlu0 %v4032, 64
    %v5322 = vpop.permute.xlu0 %5321
    %5323 = vrot.lane.b32.xlu0 %v4034, 64
    %v5324 = vpop.permute.xlu0 %5323
    %5325 = vrot.lane.b32.xlu0 %v4037, 64
    %v5326 = vpop.permute.xlu0 %5325
    %5327 = vrot.lane.b32.xlu0 %v4039, 64
    %v5328 = vpop.permute.xlu0 %5327
    %5329 = vrot.lane.b32.xlu0 %v4701, 64
    %v5330 = vpop.permute.xlu0 %5329
    %5331 = vrot.lane.b32.xlu0 %v4703, 64
    %v5332 = vpop.permute.xlu0 %5331
    %5333 = vrot.lane.b32.xlu0 %v858, 64
    %v5334 = vpop.permute.xlu0 %5333
    %5335 = vrot.lane.b32.xlu0 %v860, 64
    %v5336 = vpop.permute.xlu0 %5335
    %5337 = vrot.lane.b32.xlu0 %v4047, 64
    %v5338 = vpop.permute.xlu0 %5337
    %5339 = vrot.lane.b32.xlu0 %v4049, 64
    %v5340 = vpop.permute.xlu0 %5339
    %5341 = vrot.lane.b32.xlu0 %v4052, 64
    %v5342 = vpop.permute.xlu0 %5341
    %5343 = vrot.lane.b32.xlu0 %v4054, 64
    %v5344 = vpop.permute.xlu0 %5343
    %5345 = vrot.lane.b32.xlu0 %v4057, 64
    %v5346 = vpop.permute.xlu0 %5345
    %5347 = vrot.lane.b32.xlu0 %v4059, 64
    %v5348 = vpop.permute.xlu0 %5347
    %5349 = vrot.lane.b32.xlu0 %v4062, 64
    %v5350 = vpop.permute.xlu0 %5349
    %5351 = vrot.lane.b32.xlu0 %v4064, 64
    %v5352 = vpop.permute.xlu0 %5351
    %5353 = vrot.lane.b32.xlu0 %v4067, 64
    %v5354 = vpop.permute.xlu0 %5353
    %5355 = vrot.lane.b32.xlu0 %v4069, 64
    %v5356 = vpop.permute.xlu0 %5355
    %5357 = vrot.lane.b32.xlu0 %v4072, 64
    %v5358 = vpop.permute.xlu0 %5357
    %5359 = vrot.lane.b32.xlu0 %v4074, 64
    %v5360 = vpop.permute.xlu0 %5359
    %5361 = vrot.lane.b32.xlu0 %v4077, 64
    %v5362 = vpop.permute.xlu0 %5361
    %5363 = vrot.lane.b32.xlu0 %v4079, 64
    %v5364 = vpop.permute.xlu0 %5363
    %5365 = vrot.lane.b32.xlu0 %v4082, 64
    %v5366 = vpop.permute.xlu0 %5365
    %5367 = vrot.lane.b32.xlu0 %v4084, 64
    %v5368 = vpop.permute.xlu0 %5367
    %5369 = vrot.lane.b32.xlu0 %v4087, 64
    %v5370 = vpop.permute.xlu0 %5369
    %5371 = vrot.lane.b32.xlu0 %v4089, 64
    %v5372 = vpop.permute.xlu0 %5371
    %5373 = vrot.lane.b32.xlu0 %v4092, 64
    %v5374 = vpop.permute.xlu0 %5373
    %5375 = vrot.lane.b32.xlu0 %v4094, 64
    %v5376 = vpop.permute.xlu0 %5375
    %5377 = vrot.lane.b32.xlu0 %v4097, 64
    %v5378 = vpop.permute.xlu0 %5377
    %5379 = vrot.lane.b32.xlu0 %v4099, 64
    %v5380 = vpop.permute.xlu0 %5379
    %5381 = vrot.lane.b32.xlu0 %v4102, 64
    %v5382 = vpop.permute.xlu0 %5381
    %5383 = vrot.lane.b32.xlu0 %v4104, 64
    %v5384 = vpop.permute.xlu0 %5383
    %5385 = vrot.lane.b32.xlu0 %v4107, 64
    %v5386 = vpop.permute.xlu0 %5385
    %5387 = vrot.lane.b32.xlu0 %v4109, 64
    %v5388 = vpop.permute.xlu0 %5387
    %5389 = vrot.lane.b32.xlu0 %v4112, 64
    %v5390 = vpop.permute.xlu0 %5389
    %5391 = vrot.lane.b32.xlu0 %v4114, 64
    %v5392 = vpop.permute.xlu0 %5391
    %5393 = vrot.lane.b32.xlu0 %v4706, 64
    %v5394 = vpop.permute.xlu0 %5393
    %5395 = vrot.lane.b32.xlu0 %v4708, 64
    %v5396 = vpop.permute.xlu0 %5395
    %v5459 = vsel %vm2806, %v385, %v3780
    %v5460 = vsel %vm2806, %v192, %v3782
    %v5461 = vsel %vm2806, %v3505, %v3784
    %v5462 = vsel %vm2806, %v3317, %v3786
    %v5463 = vsel %vm2806, %v3506, %v3788
    %v5464 = vsel %vm2806, %v3320, %v3790
    %v5465 = vsel %vm2806, %v3507, %v3792
    %v5466 = vsel %vm2806, %v3323, %v3794
    %v5467 = vsel %vm2806, %v3508, %v3796
    %v5468 = vsel %vm2806, %v3326, %v3798
    %v5469 = vsel %vm2806, %v3509, %v3800
    %v5470 = vsel %vm2806, %v3329, %v3802
    %v5471 = vsel %vm2806, %v3510, %v3804
    %v5472 = vsel %vm2806, %v3332, %v3806
    %v5473 = vsel %vm2806, %v3511, %v3808
    %v5474 = vsel %vm2806, %v3335, %v3810
    %v5475 = vsel %vm2806, %v3512, %v3812
    %v5476 = vsel %vm2806, %v3338, %v3814
    %v5477 = vsel %vm2806, %v3513, %v3816
    %v5478 = vsel %vm2806, %v3341, %v3818
    %v5479 = vsel %vm2806, %v3514, %v3820
    %v5480 = vsel %vm2806, %v3344, %v3822
    %v5481 = vsel %vm2806, %v3515, %v3824
    %v5482 = vsel %vm2806, %v3347, %v3826
    %v5483 = vsel %vm2806, %v3516, %v3828
    %v5484 = vsel %vm2806, %v3350, %v3830
    %v5485 = vsel %vm2806, %v3517, %v3832
    %v5486 = vsel %vm2806, %v3353, %v3834
    %v5487 = vsel %vm2806, %v3518, %v3836
    %v5488 = vsel %vm2806, %v3356, %v3838
    %v5489 = vsel %vm2806, %v3519, %v3840
    %v5490 = vsel %vm2806, %v3359, %v3842
    %v5491 = vsel %vm2806, %v3521, %v3844
    %v5492 = vsel %vm2806, %v3365, %v3846
    %v5493 = vsel %vm2806, %v3522, %v3848
    %v5494 = vsel %vm2806, %v3368, %v3850
    %v5495 = vsel %vm2806, %v3523, %v3852
    %v5496 = vsel %vm2806, %v3371, %v3854
    %v5497 = vsel %vm2806, %v3524, %v3856
    %v5498 = vsel %vm2806, %v3374, %v3858
    %v5499 = vsel %vm2806, %v3525, %v3860
    %v5500 = vsel %vm2806, %v3377, %v3862
    %v5501 = vsel %vm2806, %v3526, %v3864
    %v5502 = vsel %vm2806, %v3380, %v3866
    %v5503 = vsel %vm2806, %v3527, %v3868
    %v5504 = vsel %vm2806, %v3383, %v3870
    %v5505 = vsel %vm2806, %v3528, %v3872
    %v5506 = vsel %vm2806, %v3386, %v3874
    %v5507 = vsel %vm2806, %v3529, %v3876
    %v5508 = vsel %vm2806, %v3389, %v3878
    %v5509 = vsel %vm2806, %v3530, %v3880
    %v5510 = vsel %vm2806, %v3392, %v3882
    %v5511 = vsel %vm2806, %v3531, %v3884
    %v5512 = vsel %vm2806, %v3395, %v3886
    %v5513 = vsel %vm2806, %v3532, %v3888
    %v5514 = vsel %vm2806, %v3398, %v3890
    %v5515 = vsel %vm2806, %v3533, %v3892
    %v5516 = vsel %vm2806, %v3401, %v3894
    %v5517 = vsel %vm2806, %v3534, %v3896
    %v5518 = vsel %vm2806, %v3404, %v3898
    %v5519 = vsel %vm2806, %v3535, %v3900
    %v5520 = vsel %vm2806, %v3407, %v3902
    %vm5521 = vcmask 130048
    %v5522 = vsel %vm5521, %v5459, %v4116
    %v5523 = vsel %vm5521, %v5460, %v4118
    %v5524 = vsel %vm5521, %v5461, %v4120
    %v5525 = vsel %vm5521, %v5462, %v4122
    %v5526 = vsel %vm5521, %v5463, %v4124
    %v5527 = vsel %vm5521, %v5464, %v4126
    %v5528 = vsel %vm5521, %v5465, %v4128
    %v5529 = vsel %vm5521, %v5466, %v4130
    %v5530 = vsel %vm5521, %v5467, %v4132
    %v5531 = vsel %vm5521, %v5468, %v4134
    %v5532 = vsel %vm5521, %v5469, %v4136
    %v5533 = vsel %vm5521, %v5470, %v4138
    %v5534 = vsel %vm5521, %v5471, %v4140
    %v5535 = vsel %vm5521, %v5472, %v4142
    %v5536 = vsel %vm5521, %v5473, %v4144
    %v5537 = vsel %vm5521, %v5474, %v4146
    %v5538 = vsel %vm5521, %v5475, %v4148
    %v5539 = vsel %vm5521, %v5476, %v4150
    %v5540 = vsel %vm5521, %v5477, %v4152
    %v5541 = vsel %vm5521, %v5478, %v4154
    %v5542 = vsel %vm5521, %v5479, %v4156
    %v5543 = vsel %vm5521, %v5480, %v4158
    %v5544 = vsel %vm5521, %v5481, %v4160
    %v5545 = vsel %vm5521, %v5482, %v4162
    %v5546 = vsel %vm5521, %v5483, %v4164
    %v5547 = vsel %vm5521, %v5484, %v4166
    %v5548 = vsel %vm5521, %v5485, %v4168
    %v5549 = vsel %vm5521, %v5486, %v4170
    %v5550 = vsel %vm5521, %v5487, %v4172
    %v5551 = vsel %vm5521, %v5488, %v4174
    %v5552 = vsel %vm5521, %v5489, %v4176
    %v5553 = vsel %vm5521, %v5490, %v4178
    %v5554 = vsel %vm5521, %v5491, %v4180
    %v5555 = vsel %vm5521, %v5492, %v4182
    %v5556 = vsel %vm5521, %v5493, %v4184
    %v5557 = vsel %vm5521, %v5494, %v4186
    %v5558 = vsel %vm5521, %v5495, %v4188
    %v5559 = vsel %vm5521, %v5496, %v4190
    %v5560 = vsel %vm5521, %v5497, %v4192
    %v5561 = vsel %vm5521, %v5498, %v4194
    %v5562 = vsel %vm5521, %v5499, %v4196
    %v5563 = vsel %vm5521, %v5500, %v4198
    %v5564 = vsel %vm5521, %v5501, %v4200
    %v5565 = vsel %vm5521, %v5502, %v4202
    %v5566 = vsel %vm5521, %v5503, %v4204
    %v5567 = vsel %vm5521, %v5504, %v4206
    %v5568 = vsel %vm5521, %v5505, %v4208
    %v5569 = vsel %vm5521, %v5506, %v4210
    %v5570 = vsel %vm5521, %v5507, %v4212
    %v5571 = vsel %vm5521, %v5508, %v4214
    %v5572 = vsel %vm5521, %v5509, %v4216
    %v5573 = vsel %vm5521, %v5510, %v4218
    %v5574 = vsel %vm5521, %v5511, %v4220
    %v5575 = vsel %vm5521, %v5512, %v4222
    %v5576 = vsel %vm5521, %v5513, %v4224
    %v5577 = vsel %vm5521, %v5514, %v4226
    %v5578 = vsel %vm5521, %v5515, %v4228
    %v5579 = vsel %vm5521, %v5516, %v4230
    %v5580 = vsel %vm5521, %v5517, %v4232
    %v5581 = vsel %vm5521, %v5518, %v4234
    %v5582 = vsel %vm5521, %v5519, %v4236
    %v5583 = vsel %vm5521, %v5520, %v4238
    %vm5584 = vcmask 195584
    %v5585 = vsel %vm5584, %v5522, %v4304
    %v5586 = vsel %vm5584, %v5523, %v4306
    %v5587 = vsel %vm5584, %v5524, %v4308
    %v5588 = vsel %vm5584, %v5525, %v4310
    %v5589 = vsel %vm5584, %v5526, %v4312
    %v5590 = vsel %vm5584, %v5527, %v4314
    %v5591 = vsel %vm5584, %v5528, %v4316
    %v5592 = vsel %vm5584, %v5529, %v4318
    %v5593 = vsel %vm5584, %v5530, %v4320
    %v5594 = vsel %vm5584, %v5531, %v4322
    %v5595 = vsel %vm5584, %v5532, %v4324
    %v5596 = vsel %vm5584, %v5533, %v4326
    %v5597 = vsel %vm5584, %v5534, %v4328
    %v5598 = vsel %vm5584, %v5535, %v4330
    %v5599 = vsel %vm5584, %v5536, %v4332
    %v5600 = vsel %vm5584, %v5537, %v4334
    %v5601 = vsel %vm5584, %v5538, %v4336
    %v5602 = vsel %vm5584, %v5539, %v4338
    %v5603 = vsel %vm5584, %v5540, %v4340
    %v5604 = vsel %vm5584, %v5541, %v4342
    %v5605 = vsel %vm5584, %v5542, %v4344
    %v5606 = vsel %vm5584, %v5543, %v4346
    %v5607 = vsel %vm5584, %v5544, %v4348
    %v5608 = vsel %vm5584, %v5545, %v4350
    %v5609 = vsel %vm5584, %v5546, %v4352
    %v5610 = vsel %vm5584, %v5547, %v4354
    %v5611 = vsel %vm5584, %v5548, %v4356
    %v5612 = vsel %vm5584, %v5549, %v4358
    %v5613 = vsel %vm5584, %v5550, %v4360
    %v5614 = vsel %vm5584, %v5551, %v4362
    %v5615 = vsel %vm5584, %v5552, %v4364
    %v5616 = vsel %vm5584, %v5553, %v4366
    %v5617 = vsel %vm5584, %v5522, %v4368
    %v5618 = vsel %vm5584, %v5523, %v4370
    %v5619 = vsel %vm5584, %v5554, %v4372
    %v5620 = vsel %vm5584, %v5555, %v4374
    %v5621 = vsel %vm5584, %v5556, %v4376
    %v5622 = vsel %vm5584, %v5557, %v4378
    %v5623 = vsel %vm5584, %v5558, %v4380
    %v5624 = vsel %vm5584, %v5559, %v4382
    %v5625 = vsel %vm5584, %v5560, %v4384
    %v5626 = vsel %vm5584, %v5561, %v4386
    %v5627 = vsel %vm5584, %v5562, %v4388
    %v5628 = vsel %vm5584, %v5563, %v4390
    %v5629 = vsel %vm5584, %v5564, %v4392
    %v5630 = vsel %vm5584, %v5565, %v4394
    %v5631 = vsel %vm5584, %v5566, %v4396
    %v5632 = vsel %vm5584, %v5567, %v4398
    %v5633 = vsel %vm5584, %v5568, %v4400
    %v5634 = vsel %vm5584, %v5569, %v4402
    %v5635 = vsel %vm5584, %v5570, %v4404
    %v5636 = vsel %vm5584, %v5571, %v4406
    %v5637 = vsel %vm5584, %v5572, %v4408
    %v5638 = vsel %vm5584, %v5573, %v4410
    %v5639 = vsel %vm5584, %v5574, %v4412
    %v5640 = vsel %vm5584, %v5575, %v4414
    %v5641 = vsel %vm5584, %v5576, %v4416
    %v5642 = vsel %vm5584, %v5577, %v4418
    %v5643 = vsel %vm5584, %v5578, %v4420
    %v5644 = vsel %vm5584, %v5579, %v4422
    %v5645 = vsel %vm5584, %v5580, %v4424
    %v5646 = vsel %vm5584, %v5581, %v4426
    %v5647 = vsel %vm5584, %v5582, %v4428
    %v5648 = vsel %vm5584, %v5583, %v4430
    %vm5649 = vcmask 261120
    %v5650 = vsel %vm5649, %v5585, %v4508
    %v5651 = vsel %vm5649, %v5586, %v4510
    %v5652 = vsel %vm5649, %v5587, %v4512
    %v5653 = vsel %vm5649, %v5588, %v4514
    %v5654 = vsel %vm5649, %v5589, %v4516
    %v5655 = vsel %vm5649, %v5590, %v4518
    %v5656 = vsel %vm5649, %v5591, %v4520
    %v5657 = vsel %vm5649, %v5592, %v4522
    %v5658 = vsel %vm5649, %v5593, %v4524
    %v5659 = vsel %vm5649, %v5594, %v4526
    %v5660 = vsel %vm5649, %v5595, %v4528
    %v5661 = vsel %vm5649, %v5596, %v4530
    %v5662 = vsel %vm5649, %v5597, %v4532
    %v5663 = vsel %vm5649, %v5598, %v4534
    %v5664 = vsel %vm5649, %v5599, %v4536
    %v5665 = vsel %vm5649, %v5600, %v4538
    %v5666 = vsel %vm5649, %v5601, %v4540
    %v5667 = vsel %vm5649, %v5602, %v4542
    %v5668 = vsel %vm5649, %v5603, %v4544
    %v5669 = vsel %vm5649, %v5604, %v4546
    %v5670 = vsel %vm5649, %v5605, %v4548
    %v5671 = vsel %vm5649, %v5606, %v4550
    %v5672 = vsel %vm5649, %v5607, %v4552
    %v5673 = vsel %vm5649, %v5608, %v4554
    %v5674 = vsel %vm5649, %v5609, %v4556
    %v5675 = vsel %vm5649, %v5610, %v4558
    %v5676 = vsel %vm5649, %v5611, %v4560
    %v5677 = vsel %vm5649, %v5612, %v4562
    %v5678 = vsel %vm5649, %v5613, %v4564
    %v5679 = vsel %vm5649, %v5614, %v4566
    %v5680 = vsel %vm5649, %v5615, %v4568
    %v5681 = vsel %vm5649, %v5616, %v4570
    %v5682 = vsel %vm5649, %v5617, %v4572
    %v5683 = vsel %vm5649, %v5618, %v4574
    %v5684 = vsel %vm5649, %v5619, %v4576
    %v5685 = vsel %vm5649, %v5620, %v4578
    %v5686 = vsel %vm5649, %v5621, %v4580
    %v5687 = vsel %vm5649, %v5622, %v4582
    %v5688 = vsel %vm5649, %v5623, %v4584
    %v5689 = vsel %vm5649, %v5624, %v4586
    %v5690 = vsel %vm5649, %v5625, %v4588
    %v5691 = vsel %vm5649, %v5626, %v4590
    %v5692 = vsel %vm5649, %v5627, %v4592
    %v5693 = vsel %vm5649, %v5628, %v4594
    %v5694 = vsel %vm5649, %v5629, %v4596
    %v5695 = vsel %vm5649, %v5630, %v4598
    %v5696 = vsel %vm5649, %v5631, %v4600
    %v5697 = vsel %vm5649, %v5632, %v4602
    %v5698 = vsel %vm5649, %v5633, %v4604
    %v5699 = vsel %vm5649, %v5634, %v4606
    %v5700 = vsel %vm5649, %v5635, %v4608
    %v5701 = vsel %vm5649, %v5636, %v4610
    %v5702 = vsel %vm5649, %v5637, %v4612
    %v5703 = vsel %vm5649, %v5638, %v4614
    %v5704 = vsel %vm5649, %v5639, %v4616
    %v5705 = vsel %vm5649, %v5640, %v4618
    %v5706 = vsel %vm5649, %v5641, %v4620
    %v5707 = vsel %vm5649, %v5642, %v4622
    %v5708 = vsel %vm5649, %v5643, %v4624
    %v5709 = vsel %vm5649, %v5644, %v4626
    %v5710 = vsel %vm5649, %v5645, %v4628
    %v5711 = vsel %vm5649, %v5646, %v4630
    %v5712 = vsel %vm5649, %v5647, %v4632
    %v5713 = vsel %vm5649, %v5648, %v4634
    %vm5714 = vcmask 326656
    %v5715 = vsel %vm5714, %v5650, %v4710
    %v5716 = vsel %vm5714, %v5651, %v4712
    %v5717 = vsel %vm5714, %v5652, %v4714
    %v5718 = vsel %vm5714, %v5653, %v4716
    %v5719 = vsel %vm5714, %v5654, %v4718
    %v5720 = vsel %vm5714, %v5655, %v4720
    %v5721 = vsel %vm5714, %v5656, %v4722
    %v5722 = vsel %vm5714, %v5657, %v4724
    %v5723 = vsel %vm5714, %v5658, %v4726
    %v5724 = vsel %vm5714, %v5659, %v4728
    %v5725 = vsel %vm5714, %v5660, %v4730
    %v5726 = vsel %vm5714, %v5661, %v4732
    %v5727 = vsel %vm5714, %v5662, %v4734
    %v5728 = vsel %vm5714, %v5663, %v4736
    %v5729 = vsel %vm5714, %v5664, %v4738
    %v5730 = vsel %vm5714, %v5665, %v4740
    %v5731 = vsel %vm5714, %v5666, %v4742
    %v5732 = vsel %vm5714, %v5667, %v4744
    %v5733 = vsel %vm5714, %v5668, %v4746
    %v5734 = vsel %vm5714, %v5669, %v4748
    %v5735 = vsel %vm5714, %v5670, %v4750
    %v5736 = vsel %vm5714, %v5671, %v4752
    %v5737 = vsel %vm5714, %v5672, %v4754
    %v5738 = vsel %vm5714, %v5673, %v4756
    %v5739 = vsel %vm5714, %v5674, %v4758
    %v5740 = vsel %vm5714, %v5675, %v4760
    %v5741 = vsel %vm5714, %v5676, %v4762
    %v5742 = vsel %vm5714, %v5677, %v4764
    %v5743 = vsel %vm5714, %v5678, %v4766
    %v5744 = vsel %vm5714, %v5679, %v4768
    %v5745 = vsel %vm5714, %v5680, %v4770
    %v5746 = vsel %vm5714, %v5681, %v4772
    %v5747 = vsel %vm5714, %v5682, %v4774
    %v5748 = vsel %vm5714, %v5683, %v4776
    %v5749 = vsel %vm5714, %v5684, %v4778
    %v5750 = vsel %vm5714, %v5685, %v4780
    %v5751 = vsel %vm5714, %v5686, %v4782
    %v5752 = vsel %vm5714, %v5687, %v4784
    %v5753 = vsel %vm5714, %v5688, %v4786
    %v5754 = vsel %vm5714, %v5689, %v4788
    %v5755 = vsel %vm5714, %v5690, %v4790
    %v5756 = vsel %vm5714, %v5691, %v4792
    %v5757 = vsel %vm5714, %v5692, %v4794
    %v5758 = vsel %vm5714, %v5693, %v4796
    %v5759 = vsel %vm5714, %v5694, %v4798
    %v5760 = vsel %vm5714, %v5695, %v4800
    %v5761 = vsel %vm5714, %v5696, %v4802
    %v5762 = vsel %vm5714, %v5697, %v4804
    %v5763 = vsel %vm5714, %v5698, %v4806
    %v5764 = vsel %vm5714, %v5699, %v4808
    %v5765 = vsel %vm5714, %v5700, %v4810
    %v5766 = vsel %vm5714, %v5701, %v4812
    %v5767 = vsel %vm5714, %v5702, %v4814
    %v5768 = vsel %vm5714, %v5703, %v4816
    %v5769 = vsel %vm5714, %v5704, %v4818
    %v5770 = vsel %vm5714, %v5705, %v4820
    %v5771 = vsel %vm5714, %v5706, %v4822
    %v5772 = vsel %vm5714, %v5707, %v4824
    %v5773 = vsel %vm5714, %v5708, %v4826
    %v5774 = vsel %vm5714, %v5709, %v4828
    %v5775 = vsel %vm5714, %v5710, %v4830
    %v5776 = vsel %vm5714, %v5711, %v4832
    %v5777 = vsel %vm5714, %v5712, %v4834
    %v5778 = vsel %vm5714, %v5713, %v4836
    %vm5779 = vcmask 392192
    %v5780 = vsel %vm5779, %v5715, %v4902
    %v5781 = vsel %vm5779, %v5716, %v4904
    %v5782 = vsel %vm5779, %v5717, %v4906
    %v5783 = vsel %vm5779, %v5718, %v4908
    %v5784 = vsel %vm5779, %v5719, %v4910
    %v5785 = vsel %vm5779, %v5720, %v4912
    %v5786 = vsel %vm5779, %v5721, %v4914
    %v5787 = vsel %vm5779, %v5722, %v4916
    %v5788 = vsel %vm5779, %v5723, %v4918
    %v5789 = vsel %vm5779, %v5724, %v4920
    %v5790 = vsel %vm5779, %v5725, %v4922
    %v5791 = vsel %vm5779, %v5726, %v4924
    %v5792 = vsel %vm5779, %v5727, %v4926
    %v5793 = vsel %vm5779, %v5728, %v4928
    %v5794 = vsel %vm5779, %v5729, %v4930
    %v5795 = vsel %vm5779, %v5730, %v4932
    %v5796 = vsel %vm5779, %v5731, %v4934
    %v5797 = vsel %vm5779, %v5732, %v4936
    %v5798 = vsel %vm5779, %v5733, %v4938
    %v5799 = vsel %vm5779, %v5734, %v4940
    %v5800 = vsel %vm5779, %v5735, %v4942
    %v5801 = vsel %vm5779, %v5736, %v4944
    %v5802 = vsel %vm5779, %v5737, %v4946
    %v5803 = vsel %vm5779, %v5738, %v4948
    %v5804 = vsel %vm5779, %v5739, %v4950
    %v5805 = vsel %vm5779, %v5740, %v4952
    %v5806 = vsel %vm5779, %v5741, %v4954
    %v5807 = vsel %vm5779, %v5742, %v4956
    %v5808 = vsel %vm5779, %v5743, %v4958
    %v5809 = vsel %vm5779, %v5744, %v4960
    %v5810 = vsel %vm5779, %v5745, %v4962
    %v5811 = vsel %vm5779, %v5746, %v4964
    %v5812 = vsel %vm5779, %v5747, %v4966
    %v5813 = vsel %vm5779, %v5748, %v4968
    %v5814 = vsel %vm5779, %v5749, %v4970
    %v5815 = vsel %vm5779, %v5750, %v4972
    %v5816 = vsel %vm5779, %v5751, %v4974
    %v5817 = vsel %vm5779, %v5752, %v4976
    %v5818 = vsel %vm5779, %v5753, %v4978
    %v5819 = vsel %vm5779, %v5754, %v4980
    %v5820 = vsel %vm5779, %v5755, %v4982
    %v5821 = vsel %vm5779, %v5756, %v4984
    %v5822 = vsel %vm5779, %v5757, %v4986
    %v5823 = vsel %vm5779, %v5758, %v4988
    %v5824 = vsel %vm5779, %v5759, %v4990
    %v5825 = vsel %vm5779, %v5760, %v4992
    %v5826 = vsel %vm5779, %v5761, %v4994
    %v5827 = vsel %vm5779, %v5762, %v4996
    %v5828 = vsel %vm5779, %v5763, %v4998
    %v5829 = vsel %vm5779, %v5764, %v5000
    %v5830 = vsel %vm5779, %v5765, %v5002
    %v5831 = vsel %vm5779, %v5766, %v5004
    %v5832 = vsel %vm5779, %v5767, %v5006
    %v5833 = vsel %vm5779, %v5768, %v5008
    %v5834 = vsel %vm5779, %v5769, %v5010
    %v5835 = vsel %vm5779, %v5770, %v5012
    %v5836 = vsel %vm5779, %v5771, %v5014
    %v5837 = vsel %vm5779, %v5772, %v5016
    %v5838 = vsel %vm5779, %v5773, %v5018
    %v5839 = vsel %vm5779, %v5774, %v5020
    %v5840 = vsel %vm5779, %v5775, %v5022
    %v5841 = vsel %vm5779, %v5776, %v5024
    %v5842 = vsel %vm5779, %v5777, %v4962
    %v5843 = vsel %vm5779, %v5778, %v4964
    %vm5844 = vcmask 457728
    %v5845 = vsel %vm5844, %v5780, %v5088
    %v5846 = vsel %vm5844, %v5781, %v5090
    %v5847 = vsel %vm5844, %v5782, %v5092
    %v5848 = vsel %vm5844, %v5783, %v5094
    %v5849 = vsel %vm5844, %v5784, %v5096
    %v5850 = vsel %vm5844, %v5785, %v5098
    %v5851 = vsel %vm5844, %v5786, %v5100
    %v5852 = vsel %vm5844, %v5787, %v5102
    %v5853 = vsel %vm5844, %v5788, %v5104
    %v5854 = vsel %vm5844, %v5789, %v5106
    %v5855 = vsel %vm5844, %v5790, %v5108
    %v5856 = vsel %vm5844, %v5791, %v5110
    %v5857 = vsel %vm5844, %v5792, %v5112
    %v5858 = vsel %vm5844, %v5793, %v5114
    %v5859 = vsel %vm5844, %v5794, %v5116
    %v5860 = vsel %vm5844, %v5795, %v5118
    %v5861 = vsel %vm5844, %v5796, %v5120
    %v5862 = vsel %vm5844, %v5797, %v5122
    %v5863 = vsel %vm5844, %v5798, %v5124
    %v5864 = vsel %vm5844, %v5799, %v5126
    %v5865 = vsel %vm5844, %v5800, %v5128
    %v5866 = vsel %vm5844, %v5801, %v5130
    %v5867 = vsel %vm5844, %v5802, %v5132
    %v5868 = vsel %vm5844, %v5803, %v5134
    %v5869 = vsel %vm5844, %v5804, %v5136
    %v5870 = vsel %vm5844, %v5805, %v5138
    %v5871 = vsel %vm5844, %v5806, %v5140
    %v5872 = vsel %vm5844, %v5807, %v5142
    %v5873 = vsel %vm5844, %v5808, %v5144
    %v5874 = vsel %vm5844, %v5809, %v5146
    %v5875 = vsel %vm5844, %v5810, %v5148
    %v5876 = vsel %vm5844, %v5811, %v5150
    %v5877 = vsel %vm5844, %v5812, %v5152
    %v5878 = vsel %vm5844, %v5813, %v5154
    %v5879 = vsel %vm5844, %v5814, %v5156
    %v5880 = vsel %vm5844, %v5815, %v5158
    %v5881 = vsel %vm5844, %v5816, %v5160
    %v5882 = vsel %vm5844, %v5817, %v5162
    %v5883 = vsel %vm5844, %v5818, %v5164
    %v5884 = vsel %vm5844, %v5819, %v5166
    %v5885 = vsel %vm5844, %v5820, %v5168
    %v5886 = vsel %vm5844, %v5821, %v5170
    %v5887 = vsel %vm5844, %v5822, %v5172
    %v5888 = vsel %vm5844, %v5823, %v5174
    %v5889 = vsel %vm5844, %v5824, %v5176
    %v5890 = vsel %vm5844, %v5825, %v5178
    %v5891 = vsel %vm5844, %v5826, %v5180
    %v5892 = vsel %vm5844, %v5827, %v5182
    %v5893 = vsel %vm5844, %v5828, %v5184
    %v5894 = vsel %vm5844, %v5829, %v5186
    %v5895 = vsel %vm5844, %v5830, %v5188
    %v5896 = vsel %vm5844, %v5831, %v5190
    %v5897 = vsel %vm5844, %v5832, %v5192
    %v5898 = vsel %vm5844, %v5833, %v5194
    %v5899 = vsel %vm5844, %v5834, %v5196
    %v5900 = vsel %vm5844, %v5835, %v5198
    %v5901 = vsel %vm5844, %v5836, %v5200
    %v5902 = vsel %vm5844, %v5837, %v5202
    %v5903 = vsel %vm5844, %v5838, %v5204
    %v5904 = vsel %vm5844, %v5839, %v5206
    %v5905 = vsel %vm5844, %v5840, %v5208
    %v5906 = vsel %vm5844, %v5841, %v5210
    %v5907 = vsel %vm5844, %v5842, %v5148
    %v5908 = vsel %vm5844, %v5843, %v5150
    %vm5909 = vcmask 523264
    %v5910 = vsel %vm5909, %v5845, %v5274
    %v5911 = vsel %vm5909, %v5846, %v5276
    %v5912 = vsel %vm5909, %v5847, %v5278
    %v5913 = vsel %vm5909, %v5848, %v5280
    %v5914 = vsel %vm5909, %v5849, %v5282
    %v5915 = vsel %vm5909, %v5850, %v5284
    %v5916 = vsel %vm5909, %v5851, %v5286
    %v5917 = vsel %vm5909, %v5852, %v5288
    %v5918 = vsel %vm5909, %v5853, %v5290
    %v5919 = vsel %vm5909, %v5854, %v5292
    %v5920 = vsel %vm5909, %v5855, %v5294
    %v5921 = vsel %vm5909, %v5856, %v5296
    %v5922 = vsel %vm5909, %v5857, %v5298
    %v5923 = vsel %vm5909, %v5858, %v5300
    %v5924 = vsel %vm5909, %v5859, %v5302
    %v5925 = vsel %vm5909, %v5860, %v5304
    %v5926 = vsel %vm5909, %v5861, %v5306
    %v5927 = vsel %vm5909, %v5862, %v5308
    %v5928 = vsel %vm5909, %v5863, %v5310
    %v5929 = vsel %vm5909, %v5864, %v5312
    %v5930 = vsel %vm5909, %v5865, %v5314
    %v5931 = vsel %vm5909, %v5866, %v5316
    %v5932 = vsel %vm5909, %v5867, %v5318
    %v5933 = vsel %vm5909, %v5868, %v5320
    %v5934 = vsel %vm5909, %v5869, %v5322
    %v5935 = vsel %vm5909, %v5870, %v5324
    %v5936 = vsel %vm5909, %v5871, %v5326
    %v5937 = vsel %vm5909, %v5872, %v5328
    %v5938 = vsel %vm5909, %v5873, %v5330
    %v5939 = vsel %vm5909, %v5874, %v5332
    %v5940 = vsel %vm5909, %v5875, %v5334
    %v5941 = vsel %vm5909, %v5876, %v5336
    %v5942 = vsel %vm5909, %v5877, %v5338
    %v5943 = vsel %vm5909, %v5878, %v5340
    %v5944 = vsel %vm5909, %v5879, %v5342
    %v5945 = vsel %vm5909, %v5880, %v5344
    %v5946 = vsel %vm5909, %v5881, %v5346
    %v5947 = vsel %vm5909, %v5882, %v5348
    %v5948 = vsel %vm5909, %v5883, %v5350
    %v5949 = vsel %vm5909, %v5884, %v5352
    %v5950 = vsel %vm5909, %v5885, %v5354
    %v5951 = vsel %vm5909, %v5886, %v5356
    %v5952 = vsel %vm5909, %v5887, %v5358
    %v5953 = vsel %vm5909, %v5888, %v5360
    %v5954 = vsel %vm5909, %v5889, %v5362
    %v5955 = vsel %vm5909, %v5890, %v5364
    %v5956 = vsel %vm5909, %v5891, %v5366
    %v5957 = vsel %vm5909, %v5892, %v5368
    %v5958 = vsel %vm5909, %v5893, %v5370
    %v5959 = vsel %vm5909, %v5894, %v5372
    %v5960 = vsel %vm5909, %v5895, %v5374
    %v5961 = vsel %vm5909, %v5896, %v5376
    %v5962 = vsel %vm5909, %v5897, %v5378
    %v5963 = vsel %vm5909, %v5898, %v5380
    %v5964 = vsel %vm5909, %v5899, %v5382
    %v5965 = vsel %vm5909, %v5900, %v5384
    %v5966 = vsel %vm5909, %v5901, %v5386
    %v5967 = vsel %vm5909, %v5902, %v5388
    %v5968 = vsel %vm5909, %v5903, %v5390
    %v5969 = vsel %vm5909, %v5904, %v5392
    %v5970 = vsel %vm5909, %v5905, %v5394
    %v5971 = vsel %vm5909, %v5906, %v5396
    %v5972 = vsel %vm5909, %v5907, %v5334
    %v5973 = vsel %vm5909, %v5908, %v5336
    %v5974 = vpack.c.bf16 %v5911, %v5910
    %v5975 = vpack.c.bf16 %v5913, %v5912
    %v5976 = vpack.c.bf16 %v5915, %v5914
    %v5977 = vpack.c.bf16 %v5917, %v5916
    %v5978 = vpack.c.bf16 %v5919, %v5918
    %v5979 = vpack.c.bf16 %v5921, %v5920
    %v5980 = vpack.c.bf16 %v5923, %v5922
    %v5981 = vpack.c.bf16 %v5925, %v5924
    %v5982 = vpack.c.bf16 %v5927, %v5926
    %v5983 = vpack.c.bf16 %v5929, %v5928
    %v5984 = vpack.c.bf16 %v5931, %v5930
    %v5985 = vpack.c.bf16 %v5933, %v5932
    %v5986 = vpack.c.bf16 %v5935, %v5934
    %v5987 = vpack.c.bf16 %v5937, %v5936
    %v5988 = vpack.c.bf16 %v5939, %v5938
    %v5989 = vpack.c.bf16 %v5941, %v5940
    %v5990 = vpack.c.bf16 %v5943, %v5942
    %v5991 = vpack.c.bf16 %v5945, %v5944
    %v5992 = vpack.c.bf16 %v5947, %v5946
    %v5993 = vpack.c.bf16 %v5949, %v5948
    %v5994 = vpack.c.bf16 %v5951, %v5950
    %v5995 = vpack.c.bf16 %v5953, %v5952
    %v5996 = vpack.c.bf16 %v5955, %v5954
    %v5997 = vpack.c.bf16 %v5957, %v5956
    %v5998 = vpack.c.bf16 %v5959, %v5958
    %v5999 = vpack.c.bf16 %v5961, %v5960
    %v6000 = vpack.c.bf16 %v5963, %v5962
    %v6001 = vpack.c.bf16 %v5965, %v5964
    %v6002 = vpack.c.bf16 %v5967, %v5966
    %v6003 = vpack.c.bf16 %v5969, %v5968
    %v6004 = vpack.c.bf16 %v5971, %v5970
    %v6005 = vpack.c.bf16 %v5973, %v5972
    %v6006 = vld [vmem:[%s3] sm:$0xf]
    %v6007 = vld [vmem:[%s3 + $0x4] sm:$0xf]
    %v6008 = vld [vmem:[%s3 + $0x8] sm:$0xf]
    %v6009 = vld [vmem:[%s3 + $0xc] sm:$0xf]
    %v6010 = vld [vmem:[%s3 + $0x10] sm:$0xf]
    %v6011 = vld [vmem:[%s3 + $0x14] sm:$0xf]
    %v6012 = vld [vmem:[%s3 + $0x18] sm:$0xf]
    %v6013 = vld [vmem:[%s3 + $0x1c] sm:$0xf]
    %v6014 = vld [vmem:[%s3 + $0x20] sm:$0xf]
    %v6015 = vld [vmem:[%s4] sm:$0x1]
    %v6017 = vperm.slane %v6015, 0
    %v6028 = vunpack.c.l.b16 %v6006
    %v6029 = vunpack.c.l.b16 %v6007
    %v6030 = vunpack.c.l.b16 %v6008
    %v6031 = vunpack.c.l.b16 %v6009
    %v6032 = vunpack.c.l.b16 %v6010
    %v6033 = vunpack.c.l.b16 %v6011
    %v6034 = vunpack.c.l.b16 %v6012
    %v6035 = vunpack.c.l.b16 %v6013
    %v6036 = vunpack.c.l.b16 %v6014
    %v6037 = vpack.c.b16 %v6029, %v6028
    %v6038 = vpack.c.b16 %v6031, %v6030
    %v6039 = vpack.c.b16 %v6033, %v6032
    %v6040 = vpack.c.b16 %v6035, %v6034
    %v6041 = vpack.c.b16 %v6036, %v6036
    %vm6046 = vcmask 588800
    %v6048 = vsel %vm6046, %v5974, 0
    %v6051 = vsel %vm6046, %v5975, 0
    %v6054 = vsel %vm6046, %v5976, 0
    %v6057 = vsel %vm6046, %v5977, 0
    %v6060 = vsel %vm6046, %v5978, 0
    %v6063 = vsel %vm6046, %v5979, 0
    %v6066 = vsel %vm6046, %v5980, 0
    %v6069 = vsel %vm6046, %v5981, 0
    %v6072 = vsel %vm6046, %v5982, 0
    %v6075 = vsel %vm6046, %v5983, 0
    %v6078 = vsel %vm6046, %v5984, 0
    %v6081 = vsel %vm6046, %v5985, 0
    %v6084 = vsel %vm6046, %v5986, 0
    %v6087 = vsel %vm6046, %v5987, 0
    %v6090 = vsel %vm6046, %v5988, 0
    %v6093 = vsel %vm6046, %v5989, 0
    %v6096 = vsel %vm6046, %v5990, 0
    %v6099 = vsel %vm6046, %v5991, 0
    %v6102 = vsel %vm6046, %v5992, 0
    %v6105 = vsel %vm6046, %v5993, 0
    %v6108 = vsel %vm6046, %v5994, 0
    %v6111 = vsel %vm6046, %v5995, 0
    %v6114 = vsel %vm6046, %v5996, 0
    %v6117 = vsel %vm6046, %v5997, 0
    %v6120 = vsel %vm6046, %v5998, 0
    %v6123 = vsel %vm6046, %v5999, 0
    %v6126 = vsel %vm6046, %v6000, 0
    %v6129 = vsel %vm6046, %v6001, 0
    %v6132 = vsel %vm6046, %v6002, 0
    %v6135 = vsel %vm6046, %v6003, 0
    %v6138 = vsel %vm6046, %v6004, 0
    %v6141 = vsel %vm6046, %v6005, 0
    %v6144 = vsel %vm3011, %v6041, 0
    %6146 = vmatpush.bf16.msra.mxu0 0
    %6147 = vmatpush.bf16.msra.mxu0 0
    %6148 = vmatpush.bf16.msra.mxu0 0
    %6149 = vmatpush.bf16.msra.mxu0 %v6144
    %6150 = vmatpush.bf16.msra.mxu0 %v6040
    %6151 = vmatpush.bf16.msra.mxu0 %v6039
    %6152 = vmatpush.bf16.msra.mxu0 %v6038
    %6153 = vmatpush.bf16.msra.mxu0 %v6037
    %6154 = vmatmul.bf16.gmra.mxu0 %v6048
    %v6155 = vpop.f32.mrf.mxu0
    %v6156 = vadd.f32 %v6017, %v6155
    %v6157 = vpop.f32.mrf.mxu0
    %v6158 = vadd.f32 %v6017, %v6157
    %6159 = vmatmul.bf16.gmra.mxu0 %v6051
    %v6160 = vpop.f32.mrf.mxu0
    %v6161 = vadd.f32 %v6017, %v6160
    %v6162 = vpop.f32.mrf.mxu0
    %v6163 = vadd.f32 %v6017, %v6162
    %6164 = vmatmul.bf16.gmra.mxu0 %v6054
    %v6165 = vpop.f32.mrf.mxu0
    %v6166 = vadd.f32 %v6017, %v6165
    %v6167 = vpop.f32.mrf.mxu0
    %v6168 = vadd.f32 %v6017, %v6167
    %6169 = vmatmul.bf16.gmra.mxu0 %v6057
    %v6170 = vpop.f32.mrf.mxu0
    %v6171 = vadd.f32 %v6017, %v6170
    %v6172 = vpop.f32.mrf.mxu0
    %v6173 = vadd.f32 %v6017, %v6172
    %6174 = vmatmul.bf16.gmra.mxu0 %v6060
    %v6175 = vpop.f32.mrf.mxu0
    %v6176 = vadd.f32 %v6017, %v6175
    %v6177 = vpop.f32.mrf.mxu0
    %v6178 = vadd.f32 %v6017, %v6177
    %6179 = vmatmul.bf16.gmra.mxu0 %v6063
    %v6180 = vpop.f32.mrf.mxu0
    %v6181 = vadd.f32 %v6017, %v6180
    %v6182 = vpop.f32.mrf.mxu0
    %v6183 = vadd.f32 %v6017, %v6182
    %6184 = vmatmul.bf16.gmra.mxu0 %v6066
    %v6185 = vpop.f32.mrf.mxu0
    %v6186 = vadd.f32 %v6017, %v6185
    %v6187 = vpop.f32.mrf.mxu0
    %v6188 = vadd.f32 %v6017, %v6187
    %6189 = vmatmul.bf16.gmra.mxu0 %v6069
    %v6190 = vpop.f32.mrf.mxu0
    %v6191 = vadd.f32 %v6017, %v6190
    %v6192 = vpop.f32.mrf.mxu0
    %v6193 = vadd.f32 %v6017, %v6192
    %6194 = vmatmul.bf16.gmra.mxu0 %v6072
    %v6195 = vpop.f32.mrf.mxu0
    %v6196 = vadd.f32 %v6017, %v6195
    %v6197 = vpop.f32.mrf.mxu0
    %v6198 = vadd.f32 %v6017, %v6197
    %6199 = vmatmul.bf16.gmra.mxu0 %v6075
    %v6200 = vpop.f32.mrf.mxu0
    %v6201 = vadd.f32 %v6017, %v6200
    %v6202 = vpop.f32.mrf.mxu0
    %v6203 = vadd.f32 %v6017, %v6202
    %6204 = vmatmul.bf16.gmra.mxu0 %v6078
    %v6205 = vpop.f32.mrf.mxu0
    %v6206 = vadd.f32 %v6017, %v6205
    %v6207 = vpop.f32.mrf.mxu0
    %v6208 = vadd.f32 %v6017, %v6207
    %6209 = vmatmul.bf16.gmra.mxu0 %v6081
    %v6210 = vpop.f32.mrf.mxu0
    %v6211 = vadd.f32 %v6017, %v6210
    %v6212 = vpop.f32.mrf.mxu0
    %v6213 = vadd.f32 %v6017, %v6212
    %6214 = vmatmul.bf16.gmra.mxu0 %v6084
    %v6215 = vpop.f32.mrf.mxu0
    %v6216 = vadd.f32 %v6017, %v6215
    %v6217 = vpop.f32.mrf.mxu0
    %v6218 = vadd.f32 %v6017, %v6217
    %6219 = vmatmul.bf16.gmra.mxu0 %v6087
    %v6220 = vpop.f32.mrf.mxu0
    %v6221 = vadd.f32 %v6017, %v6220
    %v6222 = vpop.f32.mrf.mxu0
    %v6223 = vadd.f32 %v6017, %v6222
    %6224 = vmatmul.bf16.gmra.mxu0 %v6090
    %v6225 = vpop.f32.mrf.mxu0
    %v6226 = vadd.f32 %v6017, %v6225
    %v6227 = vpop.f32.mrf.mxu0
    %v6228 = vadd.f32 %v6017, %v6227
    %6229 = vmatmul.bf16.gmra.mxu0 %v6093
    %v6230 = vpop.f32.mrf.mxu0
    %v6231 = vadd.f32 %v6017, %v6230
    %v6232 = vpop.f32.mrf.mxu0
    %v6233 = vadd.f32 %v6017, %v6232
    %6234 = vmatmul.bf16.gmra.mxu0 %v6096
    %v6235 = vpop.f32.mrf.mxu0
    %v6236 = vadd.f32 %v6017, %v6235
    %v6237 = vpop.f32.mrf.mxu0
    %v6238 = vadd.f32 %v6017, %v6237
    %6239 = vmatmul.bf16.gmra.mxu0 %v6099
    %v6240 = vpop.f32.mrf.mxu0
    %v6241 = vadd.f32 %v6017, %v6240
    %v6242 = vpop.f32.mrf.mxu0
    %v6243 = vadd.f32 %v6017, %v6242
    %6244 = vmatmul.bf16.gmra.mxu0 %v6102
    %v6245 = vpop.f32.mrf.mxu0
    %v6246 = vadd.f32 %v6017, %v6245
    %v6247 = vpop.f32.mrf.mxu0
    %v6248 = vadd.f32 %v6017, %v6247
    %6249 = vmatmul.bf16.gmra.mxu0 %v6105
    %v6250 = vpop.f32.mrf.mxu0
    %v6251 = vadd.f32 %v6017, %v6250
    %v6252 = vpop.f32.mrf.mxu0
    %v6253 = vadd.f32 %v6017, %v6252
    %6254 = vmatmul.bf16.gmra.mxu0 %v6108
    %v6255 = vpop.f32.mrf.mxu0
    %v6256 = vadd.f32 %v6017, %v6255
    %v6257 = vpop.f32.mrf.mxu0
    %v6258 = vadd.f32 %v6017, %v6257
    %6259 = vmatmul.bf16.gmra.mxu0 %v6111
    %v6260 = vpop.f32.mrf.mxu0
    %v6261 = vadd.f32 %v6017, %v6260
    %v6262 = vpop.f32.mrf.mxu0
    %v6263 = vadd.f32 %v6017, %v6262
    %6264 = vmatmul.bf16.gmra.mxu0 %v6114
    %v6265 = vpop.f32.mrf.mxu0
    %v6266 = vadd.f32 %v6017, %v6265
    %v6267 = vpop.f32.mrf.mxu0
    %v6268 = vadd.f32 %v6017, %v6267
    %6269 = vmatmul.bf16.gmra.mxu0 %v6117
    %v6270 = vpop.f32.mrf.mxu0
    %v6271 = vadd.f32 %v6017, %v6270
    %v6272 = vpop.f32.mrf.mxu0
    %v6273 = vadd.f32 %v6017, %v6272
    %6274 = vmatmul.bf16.gmra.mxu0 %v6120
    %v6275 = vpop.f32.mrf.mxu0
    %v6276 = vadd.f32 %v6017, %v6275
    %v6277 = vpop.f32.mrf.mxu0
    %v6278 = vadd.f32 %v6017, %v6277
    %6279 = vmatmul.bf16.gmra.mxu0 %v6123
    %v6280 = vpop.f32.mrf.mxu0
    %v6281 = vadd.f32 %v6017, %v6280
    %v6282 = vpop.f32.mrf.mxu0
    %v6283 = vadd.f32 %v6017, %v6282
    %6284 = vmatmul.bf16.gmra.mxu0 %v6126
    %v6285 = vpop.f32.mrf.mxu0
    %v6286 = vadd.f32 %v6017, %v6285
    %v6287 = vpop.f32.mrf.mxu0
    %v6288 = vadd.f32 %v6017, %v6287
    %6289 = vmatmul.bf16.gmra.mxu0 %v6129
    %v6290 = vpop.f32.mrf.mxu0
    %v6291 = vadd.f32 %v6017, %v6290
    %v6292 = vpop.f32.mrf.mxu0
    %v6293 = vadd.f32 %v6017, %v6292
    %6294 = vmatmul.bf16.gmra.mxu0 %v6132
    %v6295 = vpop.f32.mrf.mxu0
    %v6296 = vadd.f32 %v6017, %v6295
    %v6297 = vpop.f32.mrf.mxu0
    %v6298 = vadd.f32 %v6017, %v6297
    %6299 = vmatmul.bf16.gmra.mxu0 %v6135
    %v6300 = vpop.f32.mrf.mxu0
    %v6301 = vadd.f32 %v6017, %v6300
    %v6302 = vpop.f32.mrf.mxu0
    %v6303 = vadd.f32 %v6017, %v6302
    %6304 = vmatmul.bf16.gmra.mxu0 %v6138
    %v6305 = vpop.f32.mrf.mxu0
    %v6306 = vadd.f32 %v6017, %v6305
    %v6307 = vpop.f32.mrf.mxu0
    %v6308 = vadd.f32 %v6017, %v6307
    %6309 = vmatmul.bf16.gmra.mxu0 %v6141
    %v6310 = vpop.f32.mrf.mxu0
    %v6311 = vadd.f32 %v6017, %v6310
    %v6312 = vpop.f32.mrf.mxu0
    %v6313 = vadd.f32 %v6017, %v6312
    %6314 = vdwg.mxu0
    %v6315 = vmax.f32 %v6156, 0.0
    %v6316 = vmax.f32 %v6158, 0.0
    %v6317 = vmax.f32 %v6161, 0.0
    %v6318 = vmax.f32 %v6163, 0.0
    %v6319 = vmax.f32 %v6166, 0.0
    %v6320 = vmax.f32 %v6168, 0.0
    %v6321 = vmax.f32 %v6171, 0.0
    %v6322 = vmax.f32 %v6173, 0.0
    %v6323 = vmax.f32 %v6176, 0.0
    %v6324 = vmax.f32 %v6178, 0.0
    %v6325 = vmax.f32 %v6181, 0.0
    %v6326 = vmax.f32 %v6183, 0.0
    %v6327 = vmax.f32 %v6186, 0.0
    %v6328 = vmax.f32 %v6188, 0.0
    %v6329 = vmax.f32 %v6191, 0.0
    %v6330 = vmax.f32 %v6193, 0.0
    %v6331 = vmax.f32 %v6196, 0.0
    %v6332 = vmax.f32 %v6198, 0.0
    %v6333 = vmax.f32 %v6201, 0.0
    %v6334 = vmax.f32 %v6203, 0.0
    %v6335 = vmax.f32 %v6206, 0.0
    %v6336 = vmax.f32 %v6208, 0.0
    %v6337 = vmax.f32 %v6211, 0.0
    %v6338 = vmax.f32 %v6213, 0.0
    %v6339 = vmax.f32 %v6216, 0.0
    %v6340 = vmax.f32 %v6218, 0.0
    %v6341 = vmax.f32 %v6221, 0.0
    %v6342 = vmax.f32 %v6223, 0.0
    %v6343 = vmax.f32 %v6226, 0.0
    %v6344 = vmax.f32 %v6228, 0.0
    %v6345 = vmax.f32 %v6231, 0.0
    %v6346 = vmax.f32 %v6233, 0.0
    %v6347 = vmax.f32 %v6236, 0.0
    %v6348 = vmax.f32 %v6238, 0.0
    %v6349 = vmax.f32 %v6241, 0.0
    %v6350 = vmax.f32 %v6243, 0.0
    %v6351 = vmax.f32 %v6246, 0.0
    %v6352 = vmax.f32 %v6248, 0.0
    %v6353 = vmax.f32 %v6251, 0.0
    %v6354 = vmax.f32 %v6253, 0.0
    %v6355 = vmax.f32 %v6256, 0.0
    %v6356 = vmax.f32 %v6258, 0.0
    %v6357 = vmax.f32 %v6261, 0.0
    %v6358 = vmax.f32 %v6263, 0.0
    %v6359 = vmax.f32 %v6266, 0.0
    %v6360 = vmax.f32 %v6268, 0.0
    %v6361 = vmax.f32 %v6271, 0.0
    %v6362 = vmax.f32 %v6273, 0.0
    %v6363 = vmax.f32 %v6276, 0.0
    %v6364 = vmax.f32 %v6278, 0.0
    %v6365 = vmax.f32 %v6281, 0.0
    %v6366 = vmax.f32 %v6283, 0.0
    %v6367 = vmax.f32 %v6286, 0.0
    %v6368 = vmax.f32 %v6288, 0.0
    %v6369 = vmax.f32 %v6291, 0.0
    %v6370 = vmax.f32 %v6293, 0.0
    %v6371 = vmax.f32 %v6296, 0.0
    %v6372 = vmax.f32 %v6298, 0.0
    %v6373 = vmax.f32 %v6301, 0.0
    %v6374 = vmax.f32 %v6303, 0.0
    %v6375 = vmax.f32 %v6306, 0.0
    %v6376 = vmax.f32 %v6308, 0.0
    %v6377 = vmax.f32 %v6311, 0.0
    %v6378 = vmax.f32 %v6313, 0.0
    %v6379 = vmax.f32 %v6315, %v6317
    %v6380 = vmax.f32 %v6316, %v6318
    %v6381 = vmax.f32 %v6319, %v6321
    %v6382 = vmax.f32 %v6320, %v6322
    %v6383 = vmax.f32 %v6323, %v6325
    %v6384 = vmax.f32 %v6324, %v6326
    %v6385 = vmax.f32 %v6327, %v6329
    %v6386 = vmax.f32 %v6328, %v6330
    %v6387 = vmax.f32 %v6331, %v6333
    %v6388 = vmax.f32 %v6332, %v6334
    %v6389 = vmax.f32 %v6335, %v6337
    %v6390 = vmax.f32 %v6336, %v6338
    %v6391 = vmax.f32 %v6339, %v6341
    %v6392 = vmax.f32 %v6340, %v6342
    %v6393 = vmax.f32 %v6343, %v6345
    %v6394 = vmax.f32 %v6344, %v6346
    %v6395 = vmax.f32 %v6347, %v6349
    %v6396 = vmax.f32 %v6348, %v6350
    %v6397 = vmax.f32 %v6351, %v6353
    %v6398 = vmax.f32 %v6352, %v6354
    %v6399 = vmax.f32 %v6355, %v6357
    %v6400 = vmax.f32 %v6356, %v6358
    %v6401 = vmax.f32 %v6359, %v6361
    %v6402 = vmax.f32 %v6360, %v6362
    %v6403 = vmax.f32 %v6363, %v6365
    %v6404 = vmax.f32 %v6364, %v6366
    %v6405 = vmax.f32 %v6367, %v6369
    %v6406 = vmax.f32 %v6368, %v6370
    %v6407 = vmax.f32 %v6371, %v6373
    %v6408 = vmax.f32 %v6372, %v6374
    %v6409 = vmax.f32 %v6375, %v6377
    %v6410 = vmax.f32 %v6376, %v6378
    %v6443 = vrot.slane %v6379, 2
    %v6444 = vrot.slane %v6379, 4
    %v6445 = vrot.slane %v6379, 6
    %v6446 = vrot.slane %v6380, 2
    %v6447 = vrot.slane %v6380, 4
    %v6448 = vrot.slane %v6380, 6
    %v6449 = vrot.slane %v6381, 2
    %v6450 = vrot.slane %v6381, 4
    %v6451 = vrot.slane %v6381, 6
    %v6452 = vrot.slane %v6382, 2
    %v6453 = vrot.slane %v6382, 4
    %v6454 = vrot.slane %v6382, 6
    %v6455 = vrot.slane %v6383, 2
    %v6456 = vrot.slane %v6383, 4
    %v6457 = vrot.slane %v6383, 6
    %v6458 = vrot.slane %v6384, 2
    %v6459 = vrot.slane %v6384, 4
    %v6460 = vrot.slane %v6384, 6
    %v6461 = vrot.slane %v6385, 2
    %v6462 = vrot.slane %v6385, 4
    %v6463 = vrot.slane %v6385, 6
    %v6464 = vrot.slane %v6386, 2
    %v6465 = vrot.slane %v6386, 4
    %v6466 = vrot.slane %v6386, 6
    %v6467 = vrot.slane %v6387, 2
    %v6468 = vrot.slane %v6387, 4
    %v6469 = vrot.slane %v6387, 6
    %v6470 = vrot.slane %v6388, 2
    %v6471 = vrot.slane %v6388, 4
    %v6472 = vrot.slane %v6388, 6
    %v6473 = vrot.slane %v6389, 2
    %v6474 = vrot.slane %v6389, 4
    %v6475 = vrot.slane %v6389, 6
    %v6476 = vrot.slane %v6390, 2
    %v6477 = vrot.slane %v6390, 4
    %v6478 = vrot.slane %v6390, 6
    %v6479 = vrot.slane %v6391, 2
    %v6480 = vrot.slane %v6391, 4
    %v6481 = vrot.slane %v6391, 6
    %v6482 = vrot.slane %v6392, 2
    %v6483 = vrot.slane %v6392, 4
    %v6484 = vrot.slane %v6392, 6
    %v6485 = vrot.slane %v6393, 2
    %v6486 = vrot.slane %v6393, 4
    %v6487 = vrot.slane %v6393, 6
    %v6488 = vrot.slane %v6394, 2
    %v6489 = vrot.slane %v6394, 4
    %v6490 = vrot.slane %v6394, 6
    %v6491 = vrot.slane %v6395, 2
    %v6492 = vrot.slane %v6395, 4
    %v6493 = vrot.slane %v6395, 6
    %v6494 = vrot.slane %v6396, 2
    %v6495 = vrot.slane %v6396, 4
    %v6496 = vrot.slane %v6396, 6
    %v6497 = vrot.slane %v6397, 2
    %v6498 = vrot.slane %v6397, 4
    %v6499 = vrot.slane %v6397, 6
    %v6500 = vrot.slane %v6398, 2
    %v6501 = vrot.slane %v6398, 4
    %v6502 = vrot.slane %v6398, 6
    %v6503 = vrot.slane %v6399, 2
    %v6504 = vrot.slane %v6399, 4
    %v6505 = vrot.slane %v6399, 6
    %v6506 = vrot.slane %v6400, 2
    %v6507 = vrot.slane %v6400, 4
    %v6508 = vrot.slane %v6400, 6
    %v6509 = vrot.slane %v6401, 2
    %v6510 = vrot.slane %v6401, 4
    %v6511 = vrot.slane %v6401, 6
    %v6512 = vrot.slane %v6402, 2
    %v6513 = vrot.slane %v6402, 4
    %v6514 = vrot.slane %v6402, 6
    %v6515 = vrot.slane %v6403, 2
    %v6516 = vrot.slane %v6403, 4
    %v6517 = vrot.slane %v6403, 6
    %v6518 = vrot.slane %v6404, 2
    %v6519 = vrot.slane %v6404, 4
    %v6520 = vrot.slane %v6404, 6
    %v6521 = vrot.slane %v6405, 2
    %v6522 = vrot.slane %v6405, 4
    %v6523 = vrot.slane %v6405, 6
    %v6524 = vrot.slane %v6406, 2
    %v6525 = vrot.slane %v6406, 4
    %v6526 = vrot.slane %v6406, 6
    %v6527 = vrot.slane %v6407, 2
    %v6528 = vrot.slane %v6407, 4
    %v6529 = vrot.slane %v6407, 6
    %v6530 = vrot.slane %v6408, 2
    %v6531 = vrot.slane %v6408, 4
    %v6532 = vrot.slane %v6408, 6
    %v6533 = vrot.slane %v6409, 2
    %v6534 = vrot.slane %v6409, 4
    %v6535 = vrot.slane %v6409, 6
    %v6536 = vrot.slane %v6410, 2
    %v6537 = vrot.slane %v6410, 4
    %v6538 = vrot.slane %v6410, 6
    %v6635 = vrot.slane %v6379, 7
    %v6636 = vrot.slane %v6635, 2
    %v6637 = vrot.slane %v6443, 7
    %v6638 = vrot.slane %v6637, 2
    %v6639 = vrot.slane %v6444, 7
    %v6640 = vrot.slane %v6639, 2
    %v6641 = vrot.slane %v6445, 7
    %v6642 = vrot.slane %v6641, 2
    %v6643 = vrot.slane %v6380, 7
    %v6644 = vrot.slane %v6643, 2
    %v6645 = vrot.slane %v6446, 7
    %v6646 = vrot.slane %v6645, 2
    %v6647 = vrot.slane %v6447, 7
    %v6648 = vrot.slane %v6647, 2
    %v6649 = vrot.slane %v6448, 7
    %v6650 = vrot.slane %v6649, 2
    %v6651 = vrot.slane %v6381, 7
    %v6652 = vrot.slane %v6651, 2
    %v6653 = vrot.slane %v6449, 7
    %v6654 = vrot.slane %v6653, 2
    %v6655 = vrot.slane %v6450, 7
    %v6656 = vrot.slane %v6655, 2
    %v6657 = vrot.slane %v6451, 7
    %v6658 = vrot.slane %v6657, 2
    %v6659 = vrot.slane %v6382, 7
    %v6660 = vrot.slane %v6659, 2
    %v6661 = vrot.slane %v6452, 7
    %v6662 = vrot.slane %v6661, 2
    %v6663 = vrot.slane %v6453, 7
    %v6664 = vrot.slane %v6663, 2
    %v6665 = vrot.slane %v6454, 7
    %v6666 = vrot.slane %v6665, 2
    %v6667 = vrot.slane %v6383, 7
    %v6668 = vrot.slane %v6667, 2
    %v6669 = vrot.slane %v6455, 7
    %v6670 = vrot.slane %v6669, 2
    %v6671 = vrot.slane %v6456, 7
    %v6672 = vrot.slane %v6671, 2
    %v6673 = vrot.slane %v6457, 7
    %v6674 = vrot.slane %v6673, 2
    %v6675 = vrot.slane %v6384, 7
    %v6676 = vrot.slane %v6675, 2
    %v6677 = vrot.slane %v6458, 7
    %v6678 = vrot.slane %v6677, 2
    %v6679 = vrot.slane %v6459, 7
    %v6680 = vrot.slane %v6679, 2
    %v6681 = vrot.slane %v6460, 7
    %v6682 = vrot.slane %v6681, 2
    %v6683 = vrot.slane %v6385, 7
    %v6684 = vrot.slane %v6683, 2
    %v6685 = vrot.slane %v6461, 7
    %v6686 = vrot.slane %v6685, 2
    %v6687 = vrot.slane %v6462, 7
    %v6688 = vrot.slane %v6687, 2
    %v6689 = vrot.slane %v6463, 7
    %v6690 = vrot.slane %v6689, 2
    %v6691 = vrot.slane %v6386, 7
    %v6692 = vrot.slane %v6691, 2
    %v6693 = vrot.slane %v6464, 7
    %v6694 = vrot.slane %v6693, 2
    %v6695 = vrot.slane %v6465, 7
    %v6696 = vrot.slane %v6695, 2
    %v6697 = vrot.slane %v6466, 7
    %v6698 = vrot.slane %v6697, 2
    %v6699 = vrot.slane %v6387, 7
    %v6700 = vrot.slane %v6699, 2
    %v6701 = vrot.slane %v6467, 7
    %v6702 = vrot.slane %v6701, 2
    %v6703 = vrot.slane %v6468, 7
    %v6704 = vrot.slane %v6703, 2
    %v6705 = vrot.slane %v6469, 7
    %v6706 = vrot.slane %v6705, 2
    %v6707 = vrot.slane %v6388, 7
    %v6708 = vrot.slane %v6707, 2
    %v6709 = vrot.slane %v6470, 7
    %v6710 = vrot.slane %v6709, 2
    %v6711 = vrot.slane %v6471, 7
    %v6712 = vrot.slane %v6711, 2
    %v6713 = vrot.slane %v6472, 7
    %v6714 = vrot.slane %v6713, 2
    %v6715 = vrot.slane %v6389, 7
    %v6716 = vrot.slane %v6715, 2
    %v6717 = vrot.slane %v6473, 7
    %v6718 = vrot.slane %v6717, 2
    %v6719 = vrot.slane %v6474, 7
    %v6720 = vrot.slane %v6719, 2
    %v6721 = vrot.slane %v6475, 7
    %v6722 = vrot.slane %v6721, 2
    %v6723 = vrot.slane %v6390, 7
    %v6724 = vrot.slane %v6723, 2
    %v6725 = vrot.slane %v6476, 7
    %v6726 = vrot.slane %v6725, 2
    %v6727 = vrot.slane %v6477, 7
    %v6728 = vrot.slane %v6727, 2
    %v6729 = vrot.slane %v6478, 7
    %v6730 = vrot.slane %v6729, 2
    %v6731 = vrot.slane %v6391, 7
    %v6732 = vrot.slane %v6731, 2
    %v6733 = vrot.slane %v6479, 7
    %v6734 = vrot.slane %v6733, 2
    %v6735 = vrot.slane %v6480, 7
    %v6736 = vrot.slane %v6735, 2
    %v6737 = vrot.slane %v6481, 7
    %v6738 = vrot.slane %v6737, 2
    %v6739 = vrot.slane %v6392, 7
    %v6740 = vrot.slane %v6739, 2
    %v6741 = vrot.slane %v6482, 7
    %v6742 = vrot.slane %v6741, 2
    %v6743 = vrot.slane %v6483, 7
    %v6744 = vrot.slane %v6743, 2
    %v6745 = vrot.slane %v6484, 7
    %v6746 = vrot.slane %v6745, 2
    %v6747 = vrot.slane %v6393, 7
    %v6748 = vrot.slane %v6747, 2
    %v6749 = vrot.slane %v6485, 7
    %v6750 = vrot.slane %v6749, 2
    %v6751 = vrot.slane %v6486, 7
    %v6752 = vrot.slane %v6751, 2
    %v6753 = vrot.slane %v6487, 7
    %v6754 = vrot.slane %v6753, 2
    %v6755 = vrot.slane %v6394, 7
    %v6756 = vrot.slane %v6755, 2
    %v6757 = vrot.slane %v6488, 7
    %v6758 = vrot.slane %v6757, 2
    %v6759 = vrot.slane %v6489, 7
    %v6760 = vrot.slane %v6759, 2
    %v6761 = vrot.slane %v6490, 7
    %v6762 = vrot.slane %v6761, 2
    %v6763 = vrot.slane %v6395, 7
    %v6764 = vrot.slane %v6763, 2
    %v6765 = vrot.slane %v6491, 7
    %v6766 = vrot.slane %v6765, 2
    %v6767 = vrot.slane %v6492, 7
    %v6768 = vrot.slane %v6767, 2
    %v6769 = vrot.slane %v6493, 7
    %v6770 = vrot.slane %v6769, 2
    %v6771 = vrot.slane %v6396, 7
    %v6772 = vrot.slane %v6771, 2
    %v6773 = vrot.slane %v6494, 7
    %v6774 = vrot.slane %v6773, 2
    %v6775 = vrot.slane %v6495, 7
    %v6776 = vrot.slane %v6775, 2
    %v6777 = vrot.slane %v6496, 7
    %v6778 = vrot.slane %v6777, 2
    %v6779 = vrot.slane %v6397, 7
    %v6780 = vrot.slane %v6779, 2
    %v6781 = vrot.slane %v6497, 7
    %v6782 = vrot.slane %v6781, 2
    %v6783 = vrot.slane %v6498, 7
    %v6784 = vrot.slane %v6783, 2
    %v6785 = vrot.slane %v6499, 7
    %v6786 = vrot.slane %v6785, 2
    %v6787 = vrot.slane %v6398, 7
    %v6788 = vrot.slane %v6787, 2
    %v6789 = vrot.slane %v6500, 7
    %v6790 = vrot.slane %v6789, 2
    %v6791 = vrot.slane %v6501, 7
    %v6792 = vrot.slane %v6791, 2
    %v6793 = vrot.slane %v6502, 7
    %v6794 = vrot.slane %v6793, 2
    %v6795 = vrot.slane %v6399, 7
    %v6796 = vrot.slane %v6795, 2
    %v6797 = vrot.slane %v6503, 7
    %v6798 = vrot.slane %v6797, 2
    %v6799 = vrot.slane %v6504, 7
    %v6800 = vrot.slane %v6799, 2
    %v6801 = vrot.slane %v6505, 7
    %v6802 = vrot.slane %v6801, 2
    %v6803 = vrot.slane %v6400, 7
    %v6804 = vrot.slane %v6803, 2
    %v6805 = vrot.slane %v6506, 7
    %v6806 = vrot.slane %v6805, 2
    %v6807 = vrot.slane %v6507, 7
    %v6808 = vrot.slane %v6807, 2
    %v6809 = vrot.slane %v6508, 7
    %v6810 = vrot.slane %v6809, 2
    %v6811 = vrot.slane %v6401, 7
    %v6812 = vrot.slane %v6811, 2
    %v6813 = vrot.slane %v6509, 7
    %v6814 = vrot.slane %v6813, 2
    %v6815 = vrot.slane %v6510, 7
    %v6816 = vrot.slane %v6815, 2
    %v6817 = vrot.slane %v6511, 7
    %v6818 = vrot.slane %v6817, 2
    %v6819 = vrot.slane %v6402, 7
    %v6820 = vrot.slane %v6819, 2
    %v6821 = vrot.slane %v6512, 7
    %v6822 = vrot.slane %v6821, 2
    %v6823 = vrot.slane %v6513, 7
    %v6824 = vrot.slane %v6823, 2
    %v6825 = vrot.slane %v6514, 7
    %v6826 = vrot.slane %v6825, 2
    %v6827 = vrot.slane %v6403, 7
    %v6828 = vrot.slane %v6827, 2
    %v6829 = vrot.slane %v6515, 7
    %v6830 = vrot.slane %v6829, 2
    %v6831 = vrot.slane %v6516, 7
    %v6832 = vrot.slane %v6831, 2
    %v6833 = vrot.slane %v6517, 7
    %v6834 = vrot.slane %v6833, 2
    %v6835 = vrot.slane %v6404, 7
    %v6836 = vrot.slane %v6835, 2
    %v6837 = vrot.slane %v6518, 7
    %v6838 = vrot.slane %v6837, 2
    %v6839 = vrot.slane %v6519, 7
    %v6840 = vrot.slane %v6839, 2
    %v6841 = vrot.slane %v6520, 7
    %v6842 = vrot.slane %v6841, 2
    %v6843 = vrot.slane %v6405, 7
    %v6844 = vrot.slane %v6843, 2
    %v6845 = vrot.slane %v6521, 7
    %v6846 = vrot.slane %v6845, 2
    %v6847 = vrot.slane %v6522, 7
    %v6848 = vrot.slane %v6847, 2
    %v6849 = vrot.slane %v6523, 7
    %v6850 = vrot.slane %v6849, 2
    %v6851 = vrot.slane %v6406, 7
    %v6852 = vrot.slane %v6851, 2
    %v6853 = vrot.slane %v6524, 7
    %v6854 = vrot.slane %v6853, 2
    %v6855 = vrot.slane %v6525, 7
    %v6856 = vrot.slane %v6855, 2
    %v6857 = vrot.slane %v6526, 7
    %v6858 = vrot.slane %v6857, 2
    %v6859 = vrot.slane %v6407, 7
    %v6860 = vrot.slane %v6859, 2
    %v6861 = vrot.slane %v6527, 7
    %v6862 = vrot.slane %v6861, 2
    %v6863 = vrot.slane %v6528, 7
    %v6864 = vrot.slane %v6863, 2
    %v6865 = vrot.slane %v6529, 7
    %v6866 = vrot.slane %v6865, 2
    %v6867 = vrot.slane %v6408, 7
    %v6868 = vrot.slane %v6867, 2
    %v6869 = vrot.slane %v6530, 7
    %v6870 = vrot.slane %v6869, 2
    %v6871 = vrot.slane %v6531, 7
    %v6872 = vrot.slane %v6871, 2
    %v6873 = vrot.slane %v6532, 7
    %v6874 = vrot.slane %v6873, 2
    %v6875 = vrot.slane %v6409, 7
    %v6876 = vrot.slane %v6875, 2
    %v6877 = vrot.slane %v6533, 7
    %v6878 = vrot.slane %v6877, 2
    %v6879 = vrot.slane %v6534, 7
    %v6880 = vrot.slane %v6879, 2
    %v6881 = vrot.slane %v6535, 7
    %v6882 = vrot.slane %v6881, 2
    %v6883 = vrot.slane %v6410, 7
    %v6884 = vrot.slane %v6883, 2
    %v6885 = vrot.slane %v6536, 7
    %v6886 = vrot.slane %v6885, 2
    %v6887 = vrot.slane %v6537, 7
    %v6888 = vrot.slane %v6887, 2
    %v6889 = vrot.slane %v6538, 7
    %v6890 = vrot.slane %v6889, 2
    %v7019 = vmax.f32 %v6379, %v6636
    %v7020 = vmax.f32 %v6443, %v6638
    %v7021 = vmax.f32 %v6444, %v6640
    %v7022 = vmax.f32 %v6445, %v6642
    %v7023 = vmax.f32 %v6380, %v6644
    %v7024 = vmax.f32 %v6446, %v6646
    %v7025 = vmax.f32 %v6447, %v6648
    %v7026 = vmax.f32 %v6448, %v6650
    %v7027 = vmax.f32 %v6381, %v6652
    %v7028 = vmax.f32 %v6449, %v6654
    %v7029 = vmax.f32 %v6450, %v6656
    %v7030 = vmax.f32 %v6451, %v6658
    %v7031 = vmax.f32 %v6382, %v6660
    %v7032 = vmax.f32 %v6452, %v6662
    %v7033 = vmax.f32 %v6453, %v6664
    %v7034 = vmax.f32 %v6454, %v6666
    %v7035 = vmax.f32 %v6383, %v6668
    %v7036 = vmax.f32 %v6455, %v6670
    %v7037 = vmax.f32 %v6456, %v6672
    %v7038 = vmax.f32 %v6457, %v6674
    %v7039 = vmax.f32 %v6384, %v6676
    %v7040 = vmax.f32 %v6458, %v6678
    %v7041 = vmax.f32 %v6459, %v6680
    %v7042 = vmax.f32 %v6460, %v6682
    %v7043 = vmax.f32 %v6385, %v6684
    %v7044 = vmax.f32 %v6461, %v6686
    %v7045 = vmax.f32 %v6462, %v6688
    %v7046 = vmax.f32 %v6463, %v6690
    %v7047 = vmax.f32 %v6386, %v6692
    %v7048 = vmax.f32 %v6464, %v6694
    %v7049 = vmax.f32 %v6465, %v6696
    %v7050 = vmax.f32 %v6466, %v6698
    %v7051 = vmax.f32 %v6387, %v6700
    %v7052 = vmax.f32 %v6467, %v6702
    %v7053 = vmax.f32 %v6468, %v6704
    %v7054 = vmax.f32 %v6469, %v6706
    %v7055 = vmax.f32 %v6388, %v6708
    %v7056 = vmax.f32 %v6470, %v6710
    %v7057 = vmax.f32 %v6471, %v6712
    %v7058 = vmax.f32 %v6472, %v6714
    %v7059 = vmax.f32 %v6389, %v6716
    %v7060 = vmax.f32 %v6473, %v6718
    %v7061 = vmax.f32 %v6474, %v6720
    %v7062 = vmax.f32 %v6475, %v6722
    %v7063 = vmax.f32 %v6390, %v6724
    %v7064 = vmax.f32 %v6476, %v6726
    %v7065 = vmax.f32 %v6477, %v6728
    %v7066 = vmax.f32 %v6478, %v6730
    %v7067 = vmax.f32 %v6391, %v6732
    %v7068 = vmax.f32 %v6479, %v6734
    %v7069 = vmax.f32 %v6480, %v6736
    %v7070 = vmax.f32 %v6481, %v6738
    %v7071 = vmax.f32 %v6392, %v6740
    %v7072 = vmax.f32 %v6482, %v6742
    %v7073 = vmax.f32 %v6483, %v6744
    %v7074 = vmax.f32 %v6484, %v6746
    %v7075 = vmax.f32 %v6393, %v6748
    %v7076 = vmax.f32 %v6485, %v6750
    %v7077 = vmax.f32 %v6486, %v6752
    %v7078 = vmax.f32 %v6487, %v6754
    %v7079 = vmax.f32 %v6394, %v6756
    %v7080 = vmax.f32 %v6488, %v6758
    %v7081 = vmax.f32 %v6489, %v6760
    %v7082 = vmax.f32 %v6490, %v6762
    %v7083 = vmax.f32 %v6395, %v6764
    %v7084 = vmax.f32 %v6491, %v6766
    %v7085 = vmax.f32 %v6492, %v6768
    %v7086 = vmax.f32 %v6493, %v6770
    %v7087 = vmax.f32 %v6396, %v6772
    %v7088 = vmax.f32 %v6494, %v6774
    %v7089 = vmax.f32 %v6495, %v6776
    %v7090 = vmax.f32 %v6496, %v6778
    %v7091 = vmax.f32 %v6397, %v6780
    %v7092 = vmax.f32 %v6497, %v6782
    %v7093 = vmax.f32 %v6498, %v6784
    %v7094 = vmax.f32 %v6499, %v6786
    %v7095 = vmax.f32 %v6398, %v6788
    %v7096 = vmax.f32 %v6500, %v6790
    %v7097 = vmax.f32 %v6501, %v6792
    %v7098 = vmax.f32 %v6502, %v6794
    %v7099 = vmax.f32 %v6399, %v6796
    %v7100 = vmax.f32 %v6503, %v6798
    %v7101 = vmax.f32 %v6504, %v6800
    %v7102 = vmax.f32 %v6505, %v6802
    %v7103 = vmax.f32 %v6400, %v6804
    %v7104 = vmax.f32 %v6506, %v6806
    %v7105 = vmax.f32 %v6507, %v6808
    %v7106 = vmax.f32 %v6508, %v6810
    %v7107 = vmax.f32 %v6401, %v6812
    %v7108 = vmax.f32 %v6509, %v6814
    %v7109 = vmax.f32 %v6510, %v6816
    %v7110 = vmax.f32 %v6511, %v6818
    %v7111 = vmax.f32 %v6402, %v6820
    %v7112 = vmax.f32 %v6512, %v6822
    %v7113 = vmax.f32 %v6513, %v6824
    %v7114 = vmax.f32 %v6514, %v6826
    %v7115 = vmax.f32 %v6403, %v6828
    %v7116 = vmax.f32 %v6515, %v6830
    %v7117 = vmax.f32 %v6516, %v6832
    %v7118 = vmax.f32 %v6517, %v6834
    %v7119 = vmax.f32 %v6404, %v6836
    %v7120 = vmax.f32 %v6518, %v6838
    %v7121 = vmax.f32 %v6519, %v6840
    %v7122 = vmax.f32 %v6520, %v6842
    %v7123 = vmax.f32 %v6405, %v6844
    %v7124 = vmax.f32 %v6521, %v6846
    %v7125 = vmax.f32 %v6522, %v6848
    %v7126 = vmax.f32 %v6523, %v6850
    %v7127 = vmax.f32 %v6406, %v6852
    %v7128 = vmax.f32 %v6524, %v6854
    %v7129 = vmax.f32 %v6525, %v6856
    %v7130 = vmax.f32 %v6526, %v6858
    %v7131 = vmax.f32 %v6407, %v6860
    %v7132 = vmax.f32 %v6527, %v6862
    %v7133 = vmax.f32 %v6528, %v6864
    %v7134 = vmax.f32 %v6529, %v6866
    %v7135 = vmax.f32 %v6408, %v6868
    %v7136 = vmax.f32 %v6530, %v6870
    %v7137 = vmax.f32 %v6531, %v6872
    %v7138 = vmax.f32 %v6532, %v6874
    %v7139 = vmax.f32 %v6409, %v6876
    %v7140 = vmax.f32 %v6533, %v6878
    %v7141 = vmax.f32 %v6534, %v6880
    %v7142 = vmax.f32 %v6535, %v6882
    %v7143 = vmax.f32 %v6410, %v6884
    %v7144 = vmax.f32 %v6536, %v6886
    %v7145 = vmax.f32 %v6537, %v6888
    %v7146 = vmax.f32 %v6538, %v6890
    %v7275 = vperm.slane %v7019, 0
    %v7276 = vperm.slane %v7020, 0
    %v7277 = vperm.slane %v7021, 0
    %v7278 = vperm.slane %v7022, 0
    %v7279 = vperm.slane %v7023, 0
    %v7280 = vperm.slane %v7024, 0
    %v7281 = vperm.slane %v7025, 0
    %v7282 = vperm.slane %v7026, 0
    %v7283 = vperm.slane %v7027, 0
    %v7284 = vperm.slane %v7028, 0
    %v7285 = vperm.slane %v7029, 0
    %v7286 = vperm.slane %v7030, 0
    %v7287 = vperm.slane %v7031, 0
    %v7288 = vperm.slane %v7032, 0
    %v7289 = vperm.slane %v7033, 0
    %v7290 = vperm.slane %v7034, 0
    %v7291 = vperm.slane %v7035, 0
    %v7292 = vperm.slane %v7036, 0
    %v7293 = vperm.slane %v7037, 0
    %v7294 = vperm.slane %v7038, 0
    %v7295 = vperm.slane %v7039, 0
    %v7296 = vperm.slane %v7040, 0
    %v7297 = vperm.slane %v7041, 0
    %v7298 = vperm.slane %v7042, 0
    %v7299 = vperm.slane %v7043, 0
    %v7300 = vperm.slane %v7044, 0
    %v7301 = vperm.slane %v7045, 0
    %v7302 = vperm.slane %v7046, 0
    %v7303 = vperm.slane %v7047, 0
    %v7304 = vperm.slane %v7048, 0
    %v7305 = vperm.slane %v7049, 0
    %v7306 = vperm.slane %v7050, 0
    %v7307 = vperm.slane %v7051, 0
    %v7308 = vperm.slane %v7052, 0
    %v7309 = vperm.slane %v7053, 0
    %v7310 = vperm.slane %v7054, 0
    %v7311 = vperm.slane %v7055, 0
    %v7312 = vperm.slane %v7056, 0
    %v7313 = vperm.slane %v7057, 0
    %v7314 = vperm.slane %v7058, 0
    %v7315 = vperm.slane %v7059, 0
    %v7316 = vperm.slane %v7060, 0
    %v7317 = vperm.slane %v7061, 0
    %v7318 = vperm.slane %v7062, 0
    %v7319 = vperm.slane %v7063, 0
    %v7320 = vperm.slane %v7064, 0
    %v7321 = vperm.slane %v7065, 0
    %v7322 = vperm.slane %v7066, 0
    %v7323 = vperm.slane %v7067, 0
    %v7324 = vperm.slane %v7068, 0
    %v7325 = vperm.slane %v7069, 0
    %v7326 = vperm.slane %v7070, 0
    %v7327 = vperm.slane %v7071, 0
    %v7328 = vperm.slane %v7072, 0
    %v7329 = vperm.slane %v7073, 0
    %v7330 = vperm.slane %v7074, 0
    %v7331 = vperm.slane %v7075, 0
    %v7332 = vperm.slane %v7076, 0
    %v7333 = vperm.slane %v7077, 0
    %v7334 = vperm.slane %v7078, 0
    %v7335 = vperm.slane %v7079, 0
    %v7336 = vperm.slane %v7080, 0
    %v7337 = vperm.slane %v7081, 0
    %v7338 = vperm.slane %v7082, 0
    %v7339 = vperm.slane %v7083, 0
    %v7340 = vperm.slane %v7084, 0
    %v7341 = vperm.slane %v7085, 0
    %v7342 = vperm.slane %v7086, 0
    %v7343 = vperm.slane %v7087, 0
    %v7344 = vperm.slane %v7088, 0
    %v7345 = vperm.slane %v7089, 0
    %v7346 = vperm.slane %v7090, 0
    %v7347 = vperm.slane %v7091, 0
    %v7348 = vperm.slane %v7092, 0
    %v7349 = vperm.slane %v7093, 0
    %v7350 = vperm.slane %v7094, 0
    %v7351 = vperm.slane %v7095, 0
    %v7352 = vperm.slane %v7096, 0
    %v7353 = vperm.slane %v7097, 0
    %v7354 = vperm.slane %v7098, 0
    %v7355 = vperm.slane %v7099, 0
    %v7356 = vperm.slane %v7100, 0
    %v7357 = vperm.slane %v7101, 0
    %v7358 = vperm.slane %v7102, 0
    %v7359 = vperm.slane %v7103, 0
    %v7360 = vperm.slane %v7104, 0
    %v7361 = vperm.slane %v7105, 0
    %v7362 = vperm.slane %v7106, 0
    %v7363 = vperm.slane %v7107, 0
    %v7364 = vperm.slane %v7108, 0
    %v7365 = vperm.slane %v7109, 0
    %v7366 = vperm.slane %v7110, 0
    %v7367 = vperm.slane %v7111, 0
    %v7368 = vperm.slane %v7112, 0
    %v7369 = vperm.slane %v7113, 0
    %v7370 = vperm.slane %v7114, 0
    %v7371 = vperm.slane %v7115, 0
    %v7372 = vperm.slane %v7116, 0
    %v7373 = vperm.slane %v7117, 0
    %v7374 = vperm.slane %v7118, 0
    %v7375 = vperm.slane %v7119, 0
    %v7376 = vperm.slane %v7120, 0
    %v7377 = vperm.slane %v7121, 0
    %v7378 = vperm.slane %v7122, 0
    %v7379 = vperm.slane %v7123, 0
    %v7380 = vperm.slane %v7124, 0
    %v7381 = vperm.slane %v7125, 0
    %v7382 = vperm.slane %v7126, 0
    %v7383 = vperm.slane %v7127, 0
    %v7384 = vperm.slane %v7128, 0
    %v7385 = vperm.slane %v7129, 0
    %v7386 = vperm.slane %v7130, 0
    %v7387 = vperm.slane %v7131, 0
    %v7388 = vperm.slane %v7132, 0
    %v7389 = vperm.slane %v7133, 0
    %v7390 = vperm.slane %v7134, 0
    %v7391 = vperm.slane %v7135, 0
    %v7392 = vperm.slane %v7136, 0
    %v7393 = vperm.slane %v7137, 0
    %v7394 = vperm.slane %v7138, 0
    %v7395 = vperm.slane %v7139, 0
    %v7396 = vperm.slane %v7140, 0
    %v7397 = vperm.slane %v7141, 0
    %v7398 = vperm.slane %v7142, 0
    %v7399 = vperm.slane %v7143, 0
    %v7400 = vperm.slane %v7144, 0
    %v7401 = vperm.slane %v7145, 0
    %v7402 = vperm.slane %v7146, 0
    %vm7403 = vcmask 1041409
    %v7404 = vsel %vm7403, %v7276, %v7275
    %vm7405 = vcmask 1042434
    %v7406 = vsel %vm7405, %v7277, %v7404
    %vm7407 = vcmask 1043459
    %v7408 = vsel %vm7407, %v7278, %v7406
    %vm7409 = vcmask 1044484
    %v7410 = vsel %vm7409, %v7279, %v7408
    %vm7411 = vcmask 1045509
    %v7412 = vsel %vm7411, %v7280, %v7410
    %vm7413 = vcmask 1046534
    %v7414 = vsel %vm7413, %v7281, %v7412
    %vm7415 = vcmask 1047559
    %v7416 = vsel %vm7415, %v7282, %v7414
    %v7417 = vsel %vm7403, %v7284, %v7283
    %v7418 = vsel %vm7405, %v7285, %v7417
    %v7419 = vsel %vm7407, %v7286, %v7418
    %v7420 = vsel %vm7409, %v7287, %v7419
    %v7421 = vsel %vm7411, %v7288, %v7420
    %v7422 = vsel %vm7413, %v7289, %v7421
    %v7423 = vsel %vm7415, %v7290, %v7422
    %v7424 = vsel %vm7403, %v7292, %v7291
    %v7425 = vsel %vm7405, %v7293, %v7424
    %v7426 = vsel %vm7407, %v7294, %v7425
    %v7427 = vsel %vm7409, %v7295, %v7426
    %v7428 = vsel %vm7411, %v7296, %v7427
    %v7429 = vsel %vm7413, %v7297, %v7428
    %v7430 = vsel %vm7415, %v7298, %v7429
    %v7431 = vsel %vm7403, %v7300, %v7299
    %v7432 = vsel %vm7405, %v7301, %v7431
    %v7433 = vsel %vm7407, %v7302, %v7432
    %v7434 = vsel %vm7409, %v7303, %v7433
    %v7435 = vsel %vm7411, %v7304, %v7434
    %v7436 = vsel %vm7413, %v7305, %v7435
    %v7437 = vsel %vm7415, %v7306, %v7436
    %v7438 = vsel %vm7403, %v7308, %v7307
    %v7439 = vsel %vm7405, %v7309, %v7438
    %v7440 = vsel %vm7407, %v7310, %v7439
    %v7441 = vsel %vm7409, %v7311, %v7440
    %v7442 = vsel %vm7411, %v7312, %v7441
    %v7443 = vsel %vm7413, %v7313, %v7442
    %v7444 = vsel %vm7415, %v7314, %v7443
    %v7445 = vsel %vm7403, %v7316, %v7315
    %v7446 = vsel %vm7405, %v7317, %v7445
    %v7447 = vsel %vm7407, %v7318, %v7446
    %v7448 = vsel %vm7409, %v7319, %v7447
    %v7449 = vsel %vm7411, %v7320, %v7448
    %v7450 = vsel %vm7413, %v7321, %v7449
    %v7451 = vsel %vm7415, %v7322, %v7450
    %v7452 = vsel %vm7403, %v7324, %v7323
    %v7453 = vsel %vm7405, %v7325, %v7452
    %v7454 = vsel %vm7407, %v7326, %v7453
    %v7455 = vsel %vm7409, %v7327, %v7454
    %v7456 = vsel %vm7411, %v7328, %v7455
    %v7457 = vsel %vm7413, %v7329, %v7456
    %v7458 = vsel %vm7415, %v7330, %v7457
    %v7459 = vsel %vm7403, %v7332, %v7331
    %v7460 = vsel %vm7405, %v7333, %v7459
    %v7461 = vsel %vm7407, %v7334, %v7460
    %v7462 = vsel %vm7409, %v7335, %v7461
    %v7463 = vsel %vm7411, %v7336, %v7462
    %v7464 = vsel %vm7413, %v7337, %v7463
    %v7465 = vsel %vm7415, %v7338, %v7464
    %v7466 = vsel %vm7403, %v7340, %v7339
    %v7467 = vsel %vm7405, %v7341, %v7466
    %v7468 = vsel %vm7407, %v7342, %v7467
    %v7469 = vsel %vm7409, %v7343, %v7468
    %v7470 = vsel %vm7411, %v7344, %v7469
    %v7471 = vsel %vm7413, %v7345, %v7470
    %v7472 = vsel %vm7415, %v7346, %v7471
    %v7473 = vsel %vm7403, %v7348, %v7347
    %v7474 = vsel %vm7405, %v7349, %v7473
    %v7475 = vsel %vm7407, %v7350, %v7474
    %v7476 = vsel %vm7409, %v7351, %v7475
    %v7477 = vsel %vm7411, %v7352, %v7476
    %v7478 = vsel %vm7413, %v7353, %v7477
    %v7479 = vsel %vm7415, %v7354, %v7478
    %v7480 = vsel %vm7403, %v7356, %v7355
    %v7481 = vsel %vm7405, %v7357, %v7480
    %v7482 = vsel %vm7407, %v7358, %v7481
    %v7483 = vsel %vm7409, %v7359, %v7482
    %v7484 = vsel %vm7411, %v7360, %v7483
    %v7485 = vsel %vm7413, %v7361, %v7484
    %v7486 = vsel %vm7415, %v7362, %v7485
    %v7487 = vsel %vm7403, %v7364, %v7363
    %v7488 = vsel %vm7405, %v7365, %v7487
    %v7489 = vsel %vm7407, %v7366, %v7488
    %v7490 = vsel %vm7409, %v7367, %v7489
    %v7491 = vsel %vm7411, %v7368, %v7490
    %v7492 = vsel %vm7413, %v7369, %v7491
    %v7493 = vsel %vm7415, %v7370, %v7492
    %v7494 = vsel %vm7403, %v7372, %v7371
    %v7495 = vsel %vm7405, %v7373, %v7494
    %v7496 = vsel %vm7407, %v7374, %v7495
    %v7497 = vsel %vm7409, %v7375, %v7496
    %v7498 = vsel %vm7411, %v7376, %v7497
    %v7499 = vsel %vm7413, %v7377, %v7498
    %v7500 = vsel %vm7415, %v7378, %v7499
    %v7501 = vsel %vm7403, %v7380, %v7379
    %v7502 = vsel %vm7405, %v7381, %v7501
    %v7503 = vsel %vm7407, %v7382, %v7502
    %v7504 = vsel %vm7409, %v7383, %v7503
    %v7505 = vsel %vm7411, %v7384, %v7504
    %v7506 = vsel %vm7413, %v7385, %v7505
    %v7507 = vsel %vm7415, %v7386, %v7506
    %v7508 = vsel %vm7403, %v7388, %v7387
    %v7509 = vsel %vm7405, %v7389, %v7508
    %v7510 = vsel %vm7407, %v7390, %v7509
    %v7511 = vsel %vm7409, %v7391, %v7510
    %v7512 = vsel %vm7411, %v7392, %v7511
    %v7513 = vsel %vm7413, %v7393, %v7512
    %v7514 = vsel %vm7415, %v7394, %v7513
    %v7515 = vsel %vm7403, %v7396, %v7395
    %v7516 = vsel %vm7405, %v7397, %v7515
    %v7517 = vsel %vm7407, %v7398, %v7516
    %v7518 = vsel %vm7409, %v7399, %v7517
    %v7519 = vsel %vm7411, %v7400, %v7518
    %v7520 = vsel %vm7413, %v7401, %v7519
    %v7521 = vsel %vm7415, %v7402, %v7520
    %v7522 = vrot.slane %v7416, 7
    %v7523 = vrot.slane %v7423, 7
    %v7524 = vrot.slane %v7430, 7
    %v7525 = vrot.slane %v7437, 7
    %v7526 = vrot.slane %v7444, 7
    %v7527 = vrot.slane %v7451, 7
    %v7528 = vrot.slane %v7458, 7
    %v7529 = vrot.slane %v7465, 7
    %v7530 = vrot.slane %v7472, 7
    %v7531 = vrot.slane %v7479, 7
    %v7532 = vrot.slane %v7486, 7
    %v7533 = vrot.slane %v7493, 7
    %v7534 = vrot.slane %v7500, 7
    %v7535 = vrot.slane %v7507, 7
    %v7536 = vrot.slane %v7514, 7
    %v7537 = vrot.slane %v7521, 7
    %v7554 = vsel %vm190, 0.0, %v7522
    %v7555 = vsel %vm190, 0.0, %v7523
    %v7556 = vsel %vm190, 0.0, %v7524
    %v7557 = vsel %vm190, 0.0, %v7525
    %v7558 = vsel %vm190, 0.0, %v7526
    %v7559 = vsel %vm190, 0.0, %v7527
    %v7560 = vsel %vm190, 0.0, %v7528
    %v7561 = vsel %vm190, 0.0, %v7529
    %v7562 = vsel %vm190, 0.0, %v7530
    %v7563 = vsel %vm190, 0.0, %v7531
    %v7564 = vsel %vm190, 0.0, %v7532
    %v7565 = vsel %vm190, 0.0, %v7533
    %v7566 = vsel %vm190, 0.0, %v7534
    %v7567 = vsel %vm190, 0.0, %v7535
    %v7568 = vsel %vm190, 0.0, %v7536
    %v7569 = vsel %vm190, 0.0, %v7537
    %v7570 = vsel %vm190, %v7522, 0.0
    %v7571 = vsel %vm190, %v7523, 0.0
    %v7572 = vsel %vm190, %v7524, 0.0
    %v7573 = vsel %vm190, %v7525, 0.0
    %v7574 = vsel %vm190, %v7526, 0.0
    %v7575 = vsel %vm190, %v7527, 0.0
    %v7576 = vsel %vm190, %v7528, 0.0
    %v7577 = vsel %vm190, %v7529, 0.0
    %v7578 = vsel %vm190, %v7530, 0.0
    %v7579 = vsel %vm190, %v7531, 0.0
    %v7580 = vsel %vm190, %v7532, 0.0
    %v7581 = vsel %vm190, %v7533, 0.0
    %v7582 = vsel %vm190, %v7534, 0.0
    %v7583 = vsel %vm190, %v7535, 0.0
    %v7584 = vsel %vm190, %v7536, 0.0
    %v7585 = vsel %vm190, %v7537, 0.0
    %v7614 = vsel %vm513, %v514, %v517
    %v7615 = vrot.slane %v7554, 1
    %v7616 = vrot.slane %v7570, 1
    %v7617 = vsel %vm513, %v7615, %v7616
    %v7618 = vrot.slane %v7555, 1
    %v7619 = vrot.slane %v7571, 1
    %v7620 = vsel %vm513, %v7618, %v7619
    %v7621 = vrot.slane %v7556, 1
    %v7622 = vrot.slane %v7572, 1
    %v7623 = vsel %vm513, %v7621, %v7622
    %v7624 = vrot.slane %v7557, 1
    %v7625 = vrot.slane %v7573, 1
    %v7626 = vsel %vm513, %v7624, %v7625
    %v7627 = vrot.slane %v7558, 1
    %v7628 = vrot.slane %v7574, 1
    %v7629 = vsel %vm513, %v7627, %v7628
    %v7630 = vrot.slane %v7559, 1
    %v7631 = vrot.slane %v7575, 1
    %v7632 = vsel %vm513, %v7630, %v7631
    %v7633 = vrot.slane %v7560, 1
    %v7634 = vrot.slane %v7576, 1
    %v7635 = vsel %vm513, %v7633, %v7634
    %v7636 = vrot.slane %v7562, 1
    %v7637 = vrot.slane %v7578, 1
    %v7638 = vsel %vm513, %v7636, %v7637
    %v7639 = vrot.slane %v7563, 1
    %v7640 = vrot.slane %v7579, 1
    %v7641 = vsel %vm513, %v7639, %v7640
    %v7642 = vrot.slane %v7564, 1
    %v7643 = vrot.slane %v7580, 1
    %v7644 = vsel %vm513, %v7642, %v7643
    %v7645 = vrot.slane %v7565, 1
    %v7646 = vrot.slane %v7581, 1
    %v7647 = vsel %vm513, %v7645, %v7646
    %v7648 = vrot.slane %v7566, 1
    %v7649 = vrot.slane %v7582, 1
    %v7650 = vsel %vm513, %v7648, %v7649
    %v7651 = vrot.slane %v7567, 1
    %v7652 = vrot.slane %v7583, 1
    %v7653 = vsel %vm513, %v7651, %v7652
    %v7654 = vrot.slane %v7568, 1
    %v7655 = vrot.slane %v7584, 1
    %v7656 = vsel %vm513, %v7654, %v7655
    %7657 = vrot.lane.b32.xlu0 %v7614, 8
    %v7658 = vpop.permute.xlu0 %7657
    %7659 = vrot.lane.b32.xlu0 %v7617, 8
    %v7660 = vpop.permute.xlu0 %7659
    %7661 = vrot.lane.b32.xlu0 %v7620, 8
    %v7662 = vpop.permute.xlu0 %7661
    %7663 = vrot.lane.b32.xlu0 %v7623, 8
    %v7664 = vpop.permute.xlu0 %7663
    %7665 = vrot.lane.b32.xlu0 %v7626, 8
    %v7666 = vpop.permute.xlu0 %7665
    %7667 = vrot.lane.b32.xlu0 %v7629, 8
    %v7668 = vpop.permute.xlu0 %7667
    %7669 = vrot.lane.b32.xlu0 %v7632, 8
    %v7670 = vpop.permute.xlu0 %7669
    %7671 = vrot.lane.b32.xlu0 %v7635, 8
    %v7672 = vpop.permute.xlu0 %7671
    %7673 = vrot.lane.b32.xlu0 %v7638, 8
    %v7674 = vpop.permute.xlu0 %7673
    %7675 = vrot.lane.b32.xlu0 %v7641, 8
    %v7676 = vpop.permute.xlu0 %7675
    %7677 = vrot.lane.b32.xlu0 %v7644, 8
    %v7678 = vpop.permute.xlu0 %7677
    %7679 = vrot.lane.b32.xlu0 %v7647, 8
    %v7680 = vpop.permute.xlu0 %7679
    %7681 = vrot.lane.b32.xlu0 %v7650, 8
    %v7682 = vpop.permute.xlu0 %7681
    %7683 = vrot.lane.b32.xlu0 %v7653, 8
    %v7684 = vpop.permute.xlu0 %7683
    %7685 = vrot.lane.b32.xlu0 %v7656, 8
    %v7686 = vpop.permute.xlu0 %7685
    %v7702 = vsel %vm855, %v856, %v859
    %v7703 = vrot.slane %v7554, 2
    %v7704 = vrot.slane %v7570, 2
    %v7705 = vsel %vm855, %v7703, %v7704
    %v7706 = vrot.slane %v7555, 2
    %v7707 = vrot.slane %v7571, 2
    %v7708 = vsel %vm855, %v7706, %v7707
    %v7709 = vrot.slane %v7556, 2
    %v7710 = vrot.slane %v7572, 2
    %v7711 = vsel %vm855, %v7709, %v7710
    %v7712 = vrot.slane %v7557, 2
    %v7713 = vrot.slane %v7573, 2
    %v7714 = vsel %vm855, %v7712, %v7713
    %v7715 = vrot.slane %v7558, 2
    %v7716 = vrot.slane %v7574, 2
    %v7717 = vsel %vm855, %v7715, %v7716
    %v7718 = vrot.slane %v7559, 2
    %v7719 = vrot.slane %v7575, 2
    %v7720 = vsel %vm855, %v7718, %v7719
    %v7721 = vrot.slane %v7560, 2
    %v7722 = vrot.slane %v7576, 2
    %v7723 = vsel %vm855, %v7721, %v7722
    %v7724 = vrot.slane %v7562, 2
    %v7725 = vrot.slane %v7578, 2
    %v7726 = vsel %vm855, %v7724, %v7725
    %v7727 = vrot.slane %v7563, 2
    %v7728 = vrot.slane %v7579, 2
    %v7729 = vsel %vm855, %v7727, %v7728
    %v7730 = vrot.slane %v7564, 2
    %v7731 = vrot.slane %v7580, 2
    %v7732 = vsel %vm855, %v7730, %v7731
    %v7733 = vrot.slane %v7565, 2
    %v7734 = vrot.slane %v7581, 2
    %v7735 = vsel %vm855, %v7733, %v7734
    %v7736 = vrot.slane %v7566, 2
    %v7737 = vrot.slane %v7582, 2
    %v7738 = vsel %vm855, %v7736, %v7737
    %v7739 = vrot.slane %v7567, 2
    %v7740 = vrot.slane %v7583, 2
    %v7741 = vsel %vm855, %v7739, %v7740
    %v7742 = vrot.slane %v7568, 2
    %v7743 = vrot.slane %v7584, 2
    %v7744 = vsel %vm855, %v7742, %v7743
    %7745 = vrot.lane.b32.xlu0 %v7702, 16
    %v7746 = vpop.permute.xlu0 %7745
    %7747 = vrot.lane.b32.xlu0 %v7705, 16
    %v7748 = vpop.permute.xlu0 %7747
    %7749 = vrot.lane.b32.xlu0 %v7708, 16
    %v7750 = vpop.permute.xlu0 %7749
    %7751 = vrot.lane.b32.xlu0 %v7711, 16
    %v7752 = vpop.permute.xlu0 %7751
    %7753 = vrot.lane.b32.xlu0 %v7714, 16
    %v7754 = vpop.permute.xlu0 %7753
    %7755 = vrot.lane.b32.xlu0 %v7717, 16
    %v7756 = vpop.permute.xlu0 %7755
    %7757 = vrot.lane.b32.xlu0 %v7720, 16
    %v7758 = vpop.permute.xlu0 %7757
    %7759 = vrot.lane.b32.xlu0 %v7723, 16
    %v7760 = vpop.permute.xlu0 %7759
    %7761 = vrot.lane.b32.xlu0 %v7726, 16
    %v7762 = vpop.permute.xlu0 %7761
    %7763 = vrot.lane.b32.xlu0 %v7729, 16
    %v7764 = vpop.permute.xlu0 %7763
    %7765 = vrot.lane.b32.xlu0 %v7732, 16
    %v7766 = vpop.permute.xlu0 %7765
    %7767 = vrot.lane.b32.xlu0 %v7735, 16
    %v7768 = vpop.permute.xlu0 %7767
    %7769 = vrot.lane.b32.xlu0 %v7738, 16
    %v7770 = vpop.permute.xlu0 %7769
    %7771 = vrot.lane.b32.xlu0 %v7741, 16
    %v7772 = vpop.permute.xlu0 %7771
    %7773 = vrot.lane.b32.xlu0 %v7744, 16
    %v7774 = vpop.permute.xlu0 %7773
    %7792 = vrot.lane.b32.xlu0 %v7554, 24
    %v7793 = vpop.permute.xlu0 %7792
    %7794 = vrot.lane.b32.xlu0 %v7555, 24
    %v7795 = vpop.permute.xlu0 %7794
    %7796 = vrot.lane.b32.xlu0 %v7556, 24
    %v7797 = vpop.permute.xlu0 %7796
    %7798 = vrot.lane.b32.xlu0 %v7557, 24
    %v7799 = vpop.permute.xlu0 %7798
    %7800 = vrot.lane.b32.xlu0 %v7558, 24
    %v7801 = vpop.permute.xlu0 %7800
    %7802 = vrot.lane.b32.xlu0 %v7559, 24
    %v7803 = vpop.permute.xlu0 %7802
    %7804 = vrot.lane.b32.xlu0 %v7560, 24
    %v7805 = vpop.permute.xlu0 %7804
    %7806 = vrot.lane.b32.xlu0 %v7561, 24
    %v7807 = vpop.permute.xlu0 %7806
    %7808 = vrot.lane.b32.xlu0 %v7562, 24
    %v7809 = vpop.permute.xlu0 %7808
    %7810 = vrot.lane.b32.xlu0 %v7563, 24
    %v7811 = vpop.permute.xlu0 %7810
    %7812 = vrot.lane.b32.xlu0 %v7564, 24
    %v7813 = vpop.permute.xlu0 %7812
    %7814 = vrot.lane.b32.xlu0 %v7565, 24
    %v7815 = vpop.permute.xlu0 %7814
    %7816 = vrot.lane.b32.xlu0 %v7566, 24
    %v7817 = vpop.permute.xlu0 %7816
    %7818 = vrot.lane.b32.xlu0 %v7567, 24
    %v7819 = vpop.permute.xlu0 %7818
    %7820 = vrot.lane.b32.xlu0 %v7568, 24
    %v7821 = vpop.permute.xlu0 %7820
    %7822 = vrot.lane.b32.xlu0 %v7569, 24
    %v7823 = vpop.permute.xlu0 %7822
    %v7842 = vrot.slane %v7561, 1
    %v7843 = vrot.slane %v7577, 1
    %v7844 = vsel %vm513, %v7842, %v7843
    %v7845 = vrot.slane %v7569, 1
    %v7846 = vrot.slane %v7585, 1
    %v7847 = vsel %vm513, %v7845, %v7846
    %7848 = vrot.lane.b32.xlu0 %v7617, 32
    %v7849 = vpop.permute.xlu0 %7848
    %7850 = vrot.lane.b32.xlu0 %v7620, 32
    %v7851 = vpop.permute.xlu0 %7850
    %7852 = vrot.lane.b32.xlu0 %v7623, 32
    %v7853 = vpop.permute.xlu0 %7852
    %7854 = vrot.lane.b32.xlu0 %v7626, 32
    %v7855 = vpop.permute.xlu0 %7854
    %7856 = vrot.lane.b32.xlu0 %v7629, 32
    %v7857 = vpop.permute.xlu0 %7856
    %7858 = vrot.lane.b32.xlu0 %v7632, 32
    %v7859 = vpop.permute.xlu0 %7858
    %7860 = vrot.lane.b32.xlu0 %v7635, 32
    %v7861 = vpop.permute.xlu0 %7860
    %7862 = vrot.lane.b32.xlu0 %v7844, 32
    %v7863 = vpop.permute.xlu0 %7862
    %7864 = vrot.lane.b32.xlu0 %v7638, 32
    %v7865 = vpop.permute.xlu0 %7864
    %7866 = vrot.lane.b32.xlu0 %v7641, 32
    %v7867 = vpop.permute.xlu0 %7866
    %7868 = vrot.lane.b32.xlu0 %v7644, 32
    %v7869 = vpop.permute.xlu0 %7868
    %7870 = vrot.lane.b32.xlu0 %v7647, 32
    %v7871 = vpop.permute.xlu0 %7870
    %7872 = vrot.lane.b32.xlu0 %v7650, 32
    %v7873 = vpop.permute.xlu0 %7872
    %7874 = vrot.lane.b32.xlu0 %v7653, 32
    %v7875 = vpop.permute.xlu0 %7874
    %7876 = vrot.lane.b32.xlu0 %v7656, 32
    %v7877 = vpop.permute.xlu0 %7876
    %7878 = vrot.lane.b32.xlu0 %v7847, 32
    %v7879 = vpop.permute.xlu0 %7878
    %v7896 = vrot.slane %v7561, 2
    %v7897 = vrot.slane %v7577, 2
    %v7898 = vsel %vm855, %v7896, %v7897
    %v7899 = vrot.slane %v7569, 2
    %v7900 = vrot.slane %v7585, 2
    %v7901 = vsel %vm855, %v7899, %v7900
    %7902 = vrot.lane.b32.xlu0 %v7705, 40
    %v7903 = vpop.permute.xlu0 %7902
    %7904 = vrot.lane.b32.xlu0 %v7708, 40
    %v7905 = vpop.permute.xlu0 %7904
    %7906 = vrot.lane.b32.xlu0 %v7711, 40
    %v7907 = vpop.permute.xlu0 %7906
    %7908 = vrot.lane.b32.xlu0 %v7714, 40
    %v7909 = vpop.permute.xlu0 %7908
    %7910 = vrot.lane.b32.xlu0 %v7717, 40
    %v7911 = vpop.permute.xlu0 %7910
    %7912 = vrot.lane.b32.xlu0 %v7720, 40
    %v7913 = vpop.permute.xlu0 %7912
    %7914 = vrot.lane.b32.xlu0 %v7723, 40
    %v7915 = vpop.permute.xlu0 %7914
    %7916 = vrot.lane.b32.xlu0 %v7898, 40
    %v7917 = vpop.permute.xlu0 %7916
    %7918 = vrot.lane.b32.xlu0 %v7726, 40
    %v7919 = vpop.permute.xlu0 %7918
    %7920 = vrot.lane.b32.xlu0 %v7729, 40
    %v7921 = vpop.permute.xlu0 %7920
    %7922 = vrot.lane.b32.xlu0 %v7732, 40
    %v7923 = vpop.permute.xlu0 %7922
    %7924 = vrot.lane.b32.xlu0 %v7735, 40
    %v7925 = vpop.permute.xlu0 %7924
    %7926 = vrot.lane.b32.xlu0 %v7738, 40
    %v7927 = vpop.permute.xlu0 %7926
    %7928 = vrot.lane.b32.xlu0 %v7741, 40
    %v7929 = vpop.permute.xlu0 %7928
    %7930 = vrot.lane.b32.xlu0 %v7744, 40
    %v7931 = vpop.permute.xlu0 %7930
    %7932 = vrot.lane.b32.xlu0 %v7901, 40
    %v7933 = vpop.permute.xlu0 %7932
    %7950 = vrot.lane.b32.xlu0 %v7555, 48
    %v7951 = vpop.permute.xlu0 %7950
    %7952 = vrot.lane.b32.xlu0 %v7556, 48
    %v7953 = vpop.permute.xlu0 %7952
    %7954 = vrot.lane.b32.xlu0 %v7557, 48
    %v7955 = vpop.permute.xlu0 %7954
    %7956 = vrot.lane.b32.xlu0 %v7558, 48
    %v7957 = vpop.permute.xlu0 %7956
    %7958 = vrot.lane.b32.xlu0 %v7559, 48
    %v7959 = vpop.permute.xlu0 %7958
    %7960 = vrot.lane.b32.xlu0 %v7560, 48
    %v7961 = vpop.permute.xlu0 %7960
    %7962 = vrot.lane.b32.xlu0 %v7561, 48
    %v7963 = vpop.permute.xlu0 %7962
    %7964 = vrot.lane.b32.xlu0 %v7563, 48
    %v7965 = vpop.permute.xlu0 %7964
    %7966 = vrot.lane.b32.xlu0 %v7564, 48
    %v7967 = vpop.permute.xlu0 %7966
    %7968 = vrot.lane.b32.xlu0 %v7565, 48
    %v7969 = vpop.permute.xlu0 %7968
    %7970 = vrot.lane.b32.xlu0 %v7566, 48
    %v7971 = vpop.permute.xlu0 %7970
    %7972 = vrot.lane.b32.xlu0 %v7567, 48
    %v7973 = vpop.permute.xlu0 %7972
    %7974 = vrot.lane.b32.xlu0 %v7568, 48
    %v7975 = vpop.permute.xlu0 %7974
    %7976 = vrot.lane.b32.xlu0 %v7569, 48
    %v7977 = vpop.permute.xlu0 %7976
    %7992 = vrot.lane.b32.xlu0 %v7620, 56
    %v7993 = vpop.permute.xlu0 %7992
    %7994 = vrot.lane.b32.xlu0 %v7623, 56
    %v7995 = vpop.permute.xlu0 %7994
    %7996 = vrot.lane.b32.xlu0 %v7626, 56
    %v7997 = vpop.permute.xlu0 %7996
    %7998 = vrot.lane.b32.xlu0 %v7629, 56
    %v7999 = vpop.permute.xlu0 %7998
    %8000 = vrot.lane.b32.xlu0 %v7632, 56
    %v8001 = vpop.permute.xlu0 %8000
    %8002 = vrot.lane.b32.xlu0 %v7635, 56
    %v8003 = vpop.permute.xlu0 %8002
    %8004 = vrot.lane.b32.xlu0 %v7844, 56
    %v8005 = vpop.permute.xlu0 %8004
    %8006 = vrot.lane.b32.xlu0 %v7614, 56
    %v8007 = vpop.permute.xlu0 %8006
    %8008 = vrot.lane.b32.xlu0 %v7641, 56
    %v8009 = vpop.permute.xlu0 %8008
    %8010 = vrot.lane.b32.xlu0 %v7644, 56
    %v8011 = vpop.permute.xlu0 %8010
    %8012 = vrot.lane.b32.xlu0 %v7647, 56
    %v8013 = vpop.permute.xlu0 %8012
    %8014 = vrot.lane.b32.xlu0 %v7650, 56
    %v8015 = vpop.permute.xlu0 %8014
    %8016 = vrot.lane.b32.xlu0 %v7653, 56
    %v8017 = vpop.permute.xlu0 %8016
    %8018 = vrot.lane.b32.xlu0 %v7656, 56
    %v8019 = vpop.permute.xlu0 %8018
    %8020 = vrot.lane.b32.xlu0 %v7847, 56
    %v8021 = vpop.permute.xlu0 %8020
    %8037 = vrot.lane.b32.xlu0 %v7708, 64
    %v8038 = vpop.permute.xlu0 %8037
    %8039 = vrot.lane.b32.xlu0 %v7711, 64
    %v8040 = vpop.permute.xlu0 %8039
    %8041 = vrot.lane.b32.xlu0 %v7714, 64
    %v8042 = vpop.permute.xlu0 %8041
    %8043 = vrot.lane.b32.xlu0 %v7717, 64
    %v8044 = vpop.permute.xlu0 %8043
    %8045 = vrot.lane.b32.xlu0 %v7720, 64
    %v8046 = vpop.permute.xlu0 %8045
    %8047 = vrot.lane.b32.xlu0 %v7723, 64
    %v8048 = vpop.permute.xlu0 %8047
    %8049 = vrot.lane.b32.xlu0 %v7898, 64
    %v8050 = vpop.permute.xlu0 %8049
    %8051 = vrot.lane.b32.xlu0 %v7702, 64
    %v8052 = vpop.permute.xlu0 %8051
    %8053 = vrot.lane.b32.xlu0 %v7729, 64
    %v8054 = vpop.permute.xlu0 %8053
    %8055 = vrot.lane.b32.xlu0 %v7732, 64
    %v8056 = vpop.permute.xlu0 %8055
    %8057 = vrot.lane.b32.xlu0 %v7735, 64
    %v8058 = vpop.permute.xlu0 %8057
    %8059 = vrot.lane.b32.xlu0 %v7738, 64
    %v8060 = vpop.permute.xlu0 %8059
    %8061 = vrot.lane.b32.xlu0 %v7741, 64
    %v8062 = vpop.permute.xlu0 %8061
    %8063 = vrot.lane.b32.xlu0 %v7744, 64
    %v8064 = vpop.permute.xlu0 %8063
    %8065 = vrot.lane.b32.xlu0 %v7901, 64
    %v8066 = vpop.permute.xlu0 %8065
    %v8082 = vsel %vm2806, %v385, %v7658
    %v8083 = vsel %vm2806, %v7554, %v7660
    %v8084 = vsel %vm2806, %v7555, %v7662
    %v8085 = vsel %vm2806, %v7556, %v7664
    %v8086 = vsel %vm2806, %v7557, %v7666
    %v8087 = vsel %vm2806, %v7558, %v7668
    %v8088 = vsel %vm2806, %v7559, %v7670
    %v8089 = vsel %vm2806, %v7560, %v7672
    %v8090 = vsel %vm2806, %v7562, %v7674
    %v8091 = vsel %vm2806, %v7563, %v7676
    %v8092 = vsel %vm2806, %v7564, %v7678
    %v8093 = vsel %vm2806, %v7565, %v7680
    %v8094 = vsel %vm2806, %v7566, %v7682
    %v8095 = vsel %vm2806, %v7567, %v7684
    %v8096 = vsel %vm2806, %v7568, %v7686
    %v8097 = vsel %vm5521, %v8082, %v7746
    %v8098 = vsel %vm5521, %v8083, %v7748
    %v8099 = vsel %vm5521, %v8084, %v7750
    %v8100 = vsel %vm5521, %v8085, %v7752
    %v8101 = vsel %vm5521, %v8086, %v7754
    %v8102 = vsel %vm5521, %v8087, %v7756
    %v8103 = vsel %vm5521, %v8088, %v7758
    %v8104 = vsel %vm5521, %v8089, %v7760
    %v8105 = vsel %vm5521, %v8090, %v7762
    %v8106 = vsel %vm5521, %v8091, %v7764
    %v8107 = vsel %vm5521, %v8092, %v7766
    %v8108 = vsel %vm5521, %v8093, %v7768
    %v8109 = vsel %vm5521, %v8094, %v7770
    %v8110 = vsel %vm5521, %v8095, %v7772
    %v8111 = vsel %vm5521, %v8096, %v7774
    %v8112 = vsel %vm5584, %v8097, %v7793
    %v8113 = vsel %vm5584, %v8098, %v7795
    %v8114 = vsel %vm5584, %v8099, %v7797
    %v8115 = vsel %vm5584, %v8100, %v7799
    %v8116 = vsel %vm5584, %v8101, %v7801
    %v8117 = vsel %vm5584, %v8102, %v7803
    %v8118 = vsel %vm5584, %v8103, %v7805
    %v8119 = vsel %vm5584, %v8104, %v7807
    %v8120 = vsel %vm5584, %v8097, %v7809
    %v8121 = vsel %vm5584, %v8105, %v7811
    %v8122 = vsel %vm5584, %v8106, %v7813
    %v8123 = vsel %vm5584, %v8107, %v7815
    %v8124 = vsel %vm5584, %v8108, %v7817
    %v8125 = vsel %vm5584, %v8109, %v7819
    %v8126 = vsel %vm5584, %v8110, %v7821
    %v8127 = vsel %vm5584, %v8111, %v7823
    %v8128 = vsel %vm5649, %v8112, %v7849
    %v8129 = vsel %vm5649, %v8113, %v7851
    %v8130 = vsel %vm5649, %v8114, %v7853
    %v8131 = vsel %vm5649, %v8115, %v7855
    %v8132 = vsel %vm5649, %v8116, %v7857
    %v8133 = vsel %vm5649, %v8117, %v7859
    %v8134 = vsel %vm5649, %v8118, %v7861
    %v8135 = vsel %vm5649, %v8119, %v7863
    %v8136 = vsel %vm5649, %v8120, %v7865
    %v8137 = vsel %vm5649, %v8121, %v7867
    %v8138 = vsel %vm5649, %v8122, %v7869
    %v8139 = vsel %vm5649, %v8123, %v7871
    %v8140 = vsel %vm5649, %v8124, %v7873
    %v8141 = vsel %vm5649, %v8125, %v7875
    %v8142 = vsel %vm5649, %v8126, %v7877
    %v8143 = vsel %vm5649, %v8127, %v7879
    %v8144 = vsel %vm5714, %v8128, %v7903
    %v8145 = vsel %vm5714, %v8129, %v7905
    %v8146 = vsel %vm5714, %v8130, %v7907
    %v8147 = vsel %vm5714, %v8131, %v7909
    %v8148 = vsel %vm5714, %v8132, %v7911
    %v8149 = vsel %vm5714, %v8133, %v7913
    %v8150 = vsel %vm5714, %v8134, %v7915
    %v8151 = vsel %vm5714, %v8135, %v7917
    %v8152 = vsel %vm5714, %v8136, %v7919
    %v8153 = vsel %vm5714, %v8137, %v7921
    %v8154 = vsel %vm5714, %v8138, %v7923
    %v8155 = vsel %vm5714, %v8139, %v7925
    %v8156 = vsel %vm5714, %v8140, %v7927
    %v8157 = vsel %vm5714, %v8141, %v7929
    %v8158 = vsel %vm5714, %v8142, %v7931
    %v8159 = vsel %vm5714, %v8143, %v7933
    %v8160 = vsel %vm5779, %v8144, %v7951
    %v8161 = vsel %vm5779, %v8145, %v7953
    %v8162 = vsel %vm5779, %v8146, %v7955
    %v8163 = vsel %vm5779, %v8147, %v7957
    %v8164 = vsel %vm5779, %v8148, %v7959
    %v8165 = vsel %vm5779, %v8149, %v7961
    %v8166 = vsel %vm5779, %v8150, %v7963
    %v8167 = vsel %vm5779, %v8151, %v4962
    %v8168 = vsel %vm5779, %v8152, %v7965
    %v8169 = vsel %vm5779, %v8153, %v7967
    %v8170 = vsel %vm5779, %v8154, %v7969
    %v8171 = vsel %vm5779, %v8155, %v7971
    %v8172 = vsel %vm5779, %v8156, %v7973
    %v8173 = vsel %vm5779, %v8157, %v7975
    %v8174 = vsel %vm5779, %v8158, %v7977
    %v8175 = vsel %vm5779, %v8159, %v4962
    %v8176 = vsel %vm5844, %v8160, %v7993
    %v8177 = vsel %vm5844, %v8161, %v7995
    %v8178 = vsel %vm5844, %v8162, %v7997
    %v8179 = vsel %vm5844, %v8163, %v7999
    %v8180 = vsel %vm5844, %v8164, %v8001
    %v8181 = vsel %vm5844, %v8165, %v8003
    %v8182 = vsel %vm5844, %v8166, %v8005
    %v8183 = vsel %vm5844, %v8167, %v8007
    %v8184 = vsel %vm5844, %v8168, %v8009
    %v8185 = vsel %vm5844, %v8169, %v8011
    %v8186 = vsel %vm5844, %v8170, %v8013
    %v8187 = vsel %vm5844, %v8171, %v8015
    %v8188 = vsel %vm5844, %v8172, %v8017
    %v8189 = vsel %vm5844, %v8173, %v8019
    %v8190 = vsel %vm5844, %v8174, %v8021
    %v8191 = vsel %vm5844, %v8175, %v8007
    %v8192 = vsel %vm5909, %v8176, %v8038
    %v8193 = vsel %vm5909, %v8177, %v8040
    %v8194 = vsel %vm5909, %v8178, %v8042
    %v8195 = vsel %vm5909, %v8179, %v8044
    %v8196 = vsel %vm5909, %v8180, %v8046
    %v8197 = vsel %vm5909, %v8181, %v8048
    %v8198 = vsel %vm5909, %v8182, %v8050
    %v8199 = vsel %vm5909, %v8183, %v8052
    %v8200 = vsel %vm5909, %v8184, %v8054
    %v8201 = vsel %vm5909, %v8185, %v8056
    %v8202 = vsel %vm5909, %v8186, %v8058
    %v8203 = vsel %vm5909, %v8187, %v8060
    %v8204 = vsel %vm5909, %v8188, %v8062
    %v8205 = vsel %vm5909, %v8189, %v8064
    %v8206 = vsel %vm5909, %v8190, %v8066
    %v8207 = vsel %vm5909, %v8191, %v8052
    %v8208 = vpack.c.bf16 %v8193, %v8192
    %v8209 = vpack.c.bf16 %v8195, %v8194
    %v8210 = vpack.c.bf16 %v8197, %v8196
    %v8211 = vpack.c.bf16 %v8199, %v8198
    %v8212 = vpack.c.bf16 %v8201, %v8200
    %v8213 = vpack.c.bf16 %v8203, %v8202
    %v8214 = vpack.c.bf16 %v8205, %v8204
    %v8215 = vpack.c.bf16 %v8207, %v8206
    %v8216 = vld [vmem:[%s5] sm:$0xf]
    %v8217 = vld [vmem:[%s5 + $0x4] sm:$0xf]
    %v8218 = vld [vmem:[%s5 + $0x8] sm:$0xf]
    %v8219 = vld [vmem:[%s5 + $0xc] sm:$0xf]
    %v8220 = vld [vmem:[%s5 + $0x10] sm:$0xf]
    %v8221 = vld [vmem:[%s5 + $0x14] sm:$0xf]
    %v8222 = vld [vmem:[%s5 + $0x18] sm:$0xf]
    %v8223 = vld [vmem:[%s5 + $0x1c] sm:$0xf]
    %v8224 = vld [vmem:[%s5 + $0x20] sm:$0xf]
    %v8225 = vld [vmem:[%s6] sm:$0x1]
    %v8227 = vperm.slane %v8225, 0
    %v8238 = vunpack.c.l.b16 %v8216
    %v8239 = vunpack.c.l.b16 %v8217
    %v8240 = vunpack.c.l.b16 %v8218
    %v8241 = vunpack.c.l.b16 %v8219
    %v8242 = vunpack.c.l.b16 %v8220
    %v8243 = vunpack.c.l.b16 %v8221
    %v8244 = vunpack.c.l.b16 %v8222
    %v8245 = vunpack.c.l.b16 %v8223
    %v8246 = vunpack.c.l.b16 %v8224
    %v8247 = vpack.c.b16 %v8239, %v8238
    %v8248 = vpack.c.b16 %v8241, %v8240
    %v8249 = vpack.c.b16 %v8243, %v8242
    %v8250 = vpack.c.b16 %v8245, %v8244
    %v8251 = vpack.c.b16 %v8246, %v8246
    %v8257 = vsel %vm6046, %v8208, 0
    %v8260 = vsel %vm6046, %v8209, 0
    %v8263 = vsel %vm6046, %v8210, 0
    %v8266 = vsel %vm6046, %v8211, 0
    %v8269 = vsel %vm6046, %v8212, 0
    %v8272 = vsel %vm6046, %v8213, 0
    %v8275 = vsel %vm6046, %v8214, 0
    %v8278 = vsel %vm6046, %v8215, 0
    %v8281 = vsel %vm3011, %v8251, 0
    %8283 = vmatpush.bf16.msra.mxu0 0
    %8284 = vmatpush.bf16.msra.mxu0 0
    %8285 = vmatpush.bf16.msra.mxu0 0
    %8286 = vmatpush.bf16.msra.mxu0 %v8281
    %8287 = vmatpush.bf16.msra.mxu0 %v8250
    %8288 = vmatpush.bf16.msra.mxu0 %v8249
    %8289 = vmatpush.bf16.msra.mxu0 %v8248
    %8290 = vmatpush.bf16.msra.mxu0 %v8247
    %8291 = vmatmul.bf16.gmra.mxu0 %v8257
    %v8292 = vpop.f32.mrf.mxu0
    %v8293 = vadd.f32 %v8227, %v8292
    %v8294 = vpop.f32.mrf.mxu0
    %v8295 = vadd.f32 %v8227, %v8294
    %8296 = vmatmul.bf16.gmra.mxu0 %v8260
    %v8297 = vpop.f32.mrf.mxu0
    %v8298 = vadd.f32 %v8227, %v8297
    %v8299 = vpop.f32.mrf.mxu0
    %v8300 = vadd.f32 %v8227, %v8299
    %8301 = vmatmul.bf16.gmra.mxu0 %v8263
    %v8302 = vpop.f32.mrf.mxu0
    %v8303 = vadd.f32 %v8227, %v8302
    %v8304 = vpop.f32.mrf.mxu0
    %v8305 = vadd.f32 %v8227, %v8304
    %8306 = vmatmul.bf16.gmra.mxu0 %v8266
    %v8307 = vpop.f32.mrf.mxu0
    %v8308 = vadd.f32 %v8227, %v8307
    %v8309 = vpop.f32.mrf.mxu0
    %v8310 = vadd.f32 %v8227, %v8309
    %8311 = vmatmul.bf16.gmra.mxu0 %v8269
    %v8312 = vpop.f32.mrf.mxu0
    %v8313 = vadd.f32 %v8227, %v8312
    %v8314 = vpop.f32.mrf.mxu0
    %v8315 = vadd.f32 %v8227, %v8314
    %8316 = vmatmul.bf16.gmra.mxu0 %v8272
    %v8317 = vpop.f32.mrf.mxu0
    %v8318 = vadd.f32 %v8227, %v8317
    %v8319 = vpop.f32.mrf.mxu0
    %v8320 = vadd.f32 %v8227, %v8319
    %8321 = vmatmul.bf16.gmra.mxu0 %v8275
    %v8322 = vpop.f32.mrf.mxu0
    %v8323 = vadd.f32 %v8227, %v8322
    %v8324 = vpop.f32.mrf.mxu0
    %v8325 = vadd.f32 %v8227, %v8324
    %8326 = vmatmul.bf16.gmra.mxu0 %v8278
    %v8327 = vpop.f32.mrf.mxu0
    %v8328 = vadd.f32 %v8227, %v8327
    %v8329 = vpop.f32.mrf.mxu0
    %v8330 = vadd.f32 %v8227, %v8329
    %8331 = vdwg.mxu0
    %v8332 = vmax.f32 %v8293, 0.0
    %v8333 = vmax.f32 %v8295, 0.0
    %v8334 = vmax.f32 %v8298, 0.0
    %v8335 = vmax.f32 %v8300, 0.0
    %v8336 = vmax.f32 %v8303, 0.0
    %v8337 = vmax.f32 %v8305, 0.0
    %v8338 = vmax.f32 %v8308, 0.0
    %v8339 = vmax.f32 %v8310, 0.0
    %v8340 = vmax.f32 %v8313, 0.0
    %v8341 = vmax.f32 %v8315, 0.0
    %v8342 = vmax.f32 %v8318, 0.0
    %v8343 = vmax.f32 %v8320, 0.0
    %v8344 = vmax.f32 %v8323, 0.0
    %v8345 = vmax.f32 %v8325, 0.0
    %v8346 = vmax.f32 %v8328, 0.0
    %v8347 = vmax.f32 %v8330, 0.0
    %v8364 = vrot.slane %v8332, 7
    %v8365 = vrot.slane %v8333, 7
    %v8366 = vrot.slane %v8334, 7
    %v8367 = vrot.slane %v8335, 7
    %v8368 = vrot.slane %v8336, 7
    %v8369 = vrot.slane %v8337, 7
    %v8370 = vrot.slane %v8338, 7
    %v8371 = vrot.slane %v8339, 7
    %v8372 = vrot.slane %v8340, 7
    %v8373 = vrot.slane %v8341, 7
    %v8374 = vrot.slane %v8342, 7
    %v8375 = vrot.slane %v8343, 7
    %v8376 = vrot.slane %v8344, 7
    %v8377 = vrot.slane %v8345, 7
    %v8378 = vrot.slane %v8346, 7
    %v8379 = vrot.slane %v8347, 7
    %v8396 = vsel %vm190, 0.0, %v8364
    %v8397 = vsel %vm190, 0.0, %v8365
    %v8398 = vsel %vm190, 0.0, %v8366
    %v8399 = vsel %vm190, 0.0, %v8367
    %v8400 = vsel %vm190, 0.0, %v8368
    %v8401 = vsel %vm190, 0.0, %v8369
    %v8402 = vsel %vm190, 0.0, %v8370
    %v8403 = vsel %vm190, 0.0, %v8371
    %v8404 = vsel %vm190, 0.0, %v8372
    %v8405 = vsel %vm190, 0.0, %v8373
    %v8406 = vsel %vm190, 0.0, %v8374
    %v8407 = vsel %vm190, 0.0, %v8375
    %v8408 = vsel %vm190, 0.0, %v8376
    %v8409 = vsel %vm190, 0.0, %v8377
    %v8410 = vsel %vm190, 0.0, %v8378
    %v8411 = vsel %vm190, 0.0, %v8379
    %v8412 = vsel %vm190, %v8364, 0.0
    %v8413 = vsel %vm190, %v8365, 0.0
    %v8414 = vsel %vm190, %v8366, 0.0
    %v8415 = vsel %vm190, %v8367, 0.0
    %v8416 = vsel %vm190, %v8368, 0.0
    %v8417 = vsel %vm190, %v8369, 0.0
    %v8418 = vsel %vm190, %v8370, 0.0
    %v8419 = vsel %vm190, %v8371, 0.0
    %v8420 = vsel %vm190, %v8372, 0.0
    %v8421 = vsel %vm190, %v8373, 0.0
    %v8422 = vsel %vm190, %v8374, 0.0
    %v8423 = vsel %vm190, %v8375, 0.0
    %v8424 = vsel %vm190, %v8376, 0.0
    %v8425 = vsel %vm190, %v8377, 0.0
    %v8426 = vsel %vm190, %v8378, 0.0
    %v8427 = vsel %vm190, %v8379, 0.0
    %v8456 = vrot.slane %v8396, 1
    %v8457 = vrot.slane %v8412, 1
    %v8458 = vsel %vm513, %v8456, %v8457
    %v8459 = vrot.slane %v8397, 1
    %v8460 = vrot.slane %v8413, 1
    %v8461 = vsel %vm513, %v8459, %v8460
    %v8462 = vrot.slane %v8398, 1
    %v8463 = vrot.slane %v8414, 1
    %v8464 = vsel %vm513, %v8462, %v8463
    %v8465 = vrot.slane %v8399, 1
    %v8466 = vrot.slane %v8415, 1
    %v8467 = vsel %vm513, %v8465, %v8466
    %v8468 = vrot.slane %v8400, 1
    %v8469 = vrot.slane %v8416, 1
    %v8470 = vsel %vm513, %v8468, %v8469
    %v8471 = vrot.slane %v8401, 1
    %v8472 = vrot.slane %v8417, 1
    %v8473 = vsel %vm513, %v8471, %v8472
    %v8474 = vrot.slane %v8402, 1
    %v8475 = vrot.slane %v8418, 1
    %v8476 = vsel %vm513, %v8474, %v8475
    %v8477 = vrot.slane %v8404, 1
    %v8478 = vrot.slane %v8420, 1
    %v8479 = vsel %vm513, %v8477, %v8478
    %v8480 = vrot.slane %v8405, 1
    %v8481 = vrot.slane %v8421, 1
    %v8482 = vsel %vm513, %v8480, %v8481
    %v8483 = vrot.slane %v8406, 1
    %v8484 = vrot.slane %v8422, 1
    %v8485 = vsel %vm513, %v8483, %v8484
    %v8486 = vrot.slane %v8407, 1
    %v8487 = vrot.slane %v8423, 1
    %v8488 = vsel %vm513, %v8486, %v8487
    %v8489 = vrot.slane %v8408, 1
    %v8490 = vrot.slane %v8424, 1
    %v8491 = vsel %vm513, %v8489, %v8490
    %v8492 = vrot.slane %v8409, 1
    %v8493 = vrot.slane %v8425, 1
    %v8494 = vsel %vm513, %v8492, %v8493
    %v8495 = vrot.slane %v8410, 1
    %v8496 = vrot.slane %v8426, 1
    %v8497 = vsel %vm513, %v8495, %v8496
    %8498 = vrot.lane.b32.xlu0 %v7614, 16
    %v8499 = vpop.permute.xlu0 %8498
    %8500 = vrot.lane.b32.xlu0 %v8458, 16
    %v8501 = vpop.permute.xlu0 %8500
    %8502 = vrot.lane.b32.xlu0 %v8461, 16
    %v8503 = vpop.permute.xlu0 %8502
    %8504 = vrot.lane.b32.xlu0 %v8464, 16
    %v8505 = vpop.permute.xlu0 %8504
    %8506 = vrot.lane.b32.xlu0 %v8467, 16
    %v8507 = vpop.permute.xlu0 %8506
    %8508 = vrot.lane.b32.xlu0 %v8470, 16
    %v8509 = vpop.permute.xlu0 %8508
    %8510 = vrot.lane.b32.xlu0 %v8473, 16
    %v8511 = vpop.permute.xlu0 %8510
    %8512 = vrot.lane.b32.xlu0 %v8476, 16
    %v8513 = vpop.permute.xlu0 %8512
    %8514 = vrot.lane.b32.xlu0 %v8479, 16
    %v8515 = vpop.permute.xlu0 %8514
    %8516 = vrot.lane.b32.xlu0 %v8482, 16
    %v8517 = vpop.permute.xlu0 %8516
    %8518 = vrot.lane.b32.xlu0 %v8485, 16
    %v8519 = vpop.permute.xlu0 %8518
    %8520 = vrot.lane.b32.xlu0 %v8488, 16
    %v8521 = vpop.permute.xlu0 %8520
    %8522 = vrot.lane.b32.xlu0 %v8491, 16
    %v8523 = vpop.permute.xlu0 %8522
    %8524 = vrot.lane.b32.xlu0 %v8494, 16
    %v8525 = vpop.permute.xlu0 %8524
    %8526 = vrot.lane.b32.xlu0 %v8497, 16
    %v8527 = vpop.permute.xlu0 %8526
    %v8543 = vrot.slane %v8396, 2
    %v8544 = vrot.slane %v8412, 2
    %v8545 = vsel %vm855, %v8543, %v8544
    %v8546 = vrot.slane %v8397, 2
    %v8547 = vrot.slane %v8413, 2
    %v8548 = vsel %vm855, %v8546, %v8547
    %v8549 = vrot.slane %v8398, 2
    %v8550 = vrot.slane %v8414, 2
    %v8551 = vsel %vm855, %v8549, %v8550
    %v8552 = vrot.slane %v8399, 2
    %v8553 = vrot.slane %v8415, 2
    %v8554 = vsel %vm855, %v8552, %v8553
    %v8555 = vrot.slane %v8400, 2
    %v8556 = vrot.slane %v8416, 2
    %v8557 = vsel %vm855, %v8555, %v8556
    %v8558 = vrot.slane %v8401, 2
    %v8559 = vrot.slane %v8417, 2
    %v8560 = vsel %vm855, %v8558, %v8559
    %v8561 = vrot.slane %v8402, 2
    %v8562 = vrot.slane %v8418, 2
    %v8563 = vsel %vm855, %v8561, %v8562
    %v8564 = vrot.slane %v8404, 2
    %v8565 = vrot.slane %v8420, 2
    %v8566 = vsel %vm855, %v8564, %v8565
    %v8567 = vrot.slane %v8405, 2
    %v8568 = vrot.slane %v8421, 2
    %v8569 = vsel %vm855, %v8567, %v8568
    %v8570 = vrot.slane %v8406, 2
    %v8571 = vrot.slane %v8422, 2
    %v8572 = vsel %vm855, %v8570, %v8571
    %v8573 = vrot.slane %v8407, 2
    %v8574 = vrot.slane %v8423, 2
    %v8575 = vsel %vm855, %v8573, %v8574
    %v8576 = vrot.slane %v8408, 2
    %v8577 = vrot.slane %v8424, 2
    %v8578 = vsel %vm855, %v8576, %v8577
    %v8579 = vrot.slane %v8409, 2
    %v8580 = vrot.slane %v8425, 2
    %v8581 = vsel %vm855, %v8579, %v8580
    %v8582 = vrot.slane %v8410, 2
    %v8583 = vrot.slane %v8426, 2
    %v8584 = vsel %vm855, %v8582, %v8583
    %8585 = vrot.lane.b32.xlu0 %v7702, 32
    %v8586 = vpop.permute.xlu0 %8585
    %8587 = vrot.lane.b32.xlu0 %v8545, 32
    %v8588 = vpop.permute.xlu0 %8587
    %8589 = vrot.lane.b32.xlu0 %v8548, 32
    %v8590 = vpop.permute.xlu0 %8589
    %8591 = vrot.lane.b32.xlu0 %v8551, 32
    %v8592 = vpop.permute.xlu0 %8591
    %8593 = vrot.lane.b32.xlu0 %v8554, 32
    %v8594 = vpop.permute.xlu0 %8593
    %8595 = vrot.lane.b32.xlu0 %v8557, 32
    %v8596 = vpop.permute.xlu0 %8595
    %8597 = vrot.lane.b32.xlu0 %v8560, 32
    %v8598 = vpop.permute.xlu0 %8597
    %8599 = vrot.lane.b32.xlu0 %v8563, 32
    %v8600 = vpop.permute.xlu0 %8599
    %8601 = vrot.lane.b32.xlu0 %v8566, 32
    %v8602 = vpop.permute.xlu0 %8601
    %8603 = vrot.lane.b32.xlu0 %v8569, 32
    %v8604 = vpop.permute.xlu0 %8603
    %8605 = vrot.lane.b32.xlu0 %v8572, 32
    %v8606 = vpop.permute.xlu0 %8605
    %8607 = vrot.lane.b32.xlu0 %v8575, 32
    %v8608 = vpop.permute.xlu0 %8607
    %8609 = vrot.lane.b32.xlu0 %v8578, 32
    %v8610 = vpop.permute.xlu0 %8609
    %8611 = vrot.lane.b32.xlu0 %v8581, 32
    %v8612 = vpop.permute.xlu0 %8611
    %8613 = vrot.lane.b32.xlu0 %v8584, 32
    %v8614 = vpop.permute.xlu0 %8613
    %8632 = vrot.lane.b32.xlu0 %v8396, 48
    %v8633 = vpop.permute.xlu0 %8632
    %8634 = vrot.lane.b32.xlu0 %v8397, 48
    %v8635 = vpop.permute.xlu0 %8634
    %8636 = vrot.lane.b32.xlu0 %v8398, 48
    %v8637 = vpop.permute.xlu0 %8636
    %8638 = vrot.lane.b32.xlu0 %v8399, 48
    %v8639 = vpop.permute.xlu0 %8638
    %8640 = vrot.lane.b32.xlu0 %v8400, 48
    %v8641 = vpop.permute.xlu0 %8640
    %8642 = vrot.lane.b32.xlu0 %v8401, 48
    %v8643 = vpop.permute.xlu0 %8642
    %8644 = vrot.lane.b32.xlu0 %v8402, 48
    %v8645 = vpop.permute.xlu0 %8644
    %8646 = vrot.lane.b32.xlu0 %v8403, 48
    %v8647 = vpop.permute.xlu0 %8646
    %8648 = vrot.lane.b32.xlu0 %v8404, 48
    %v8649 = vpop.permute.xlu0 %8648
    %8650 = vrot.lane.b32.xlu0 %v8405, 48
    %v8651 = vpop.permute.xlu0 %8650
    %8652 = vrot.lane.b32.xlu0 %v8406, 48
    %v8653 = vpop.permute.xlu0 %8652
    %8654 = vrot.lane.b32.xlu0 %v8407, 48
    %v8655 = vpop.permute.xlu0 %8654
    %8656 = vrot.lane.b32.xlu0 %v8408, 48
    %v8657 = vpop.permute.xlu0 %8656
    %8658 = vrot.lane.b32.xlu0 %v8409, 48
    %v8659 = vpop.permute.xlu0 %8658
    %8660 = vrot.lane.b32.xlu0 %v8410, 48
    %v8661 = vpop.permute.xlu0 %8660
    %8662 = vrot.lane.b32.xlu0 %v8411, 48
    %v8663 = vpop.permute.xlu0 %8662
    %v8682 = vrot.slane %v8403, 1
    %v8683 = vrot.slane %v8419, 1
    %v8684 = vsel %vm513, %v8682, %v8683
    %v8685 = vrot.slane %v8411, 1
    %v8686 = vrot.slane %v8427, 1
    %v8687 = vsel %vm513, %v8685, %v8686
    %8688 = vrot.lane.b32.xlu0 %v8458, 64
    %v8689 = vpop.permute.xlu0 %8688
    %8690 = vrot.lane.b32.xlu0 %v8461, 64
    %v8691 = vpop.permute.xlu0 %8690
    %8692 = vrot.lane.b32.xlu0 %v8464, 64
    %v8693 = vpop.permute.xlu0 %8692
    %8694 = vrot.lane.b32.xlu0 %v8467, 64
    %v8695 = vpop.permute.xlu0 %8694
    %8696 = vrot.lane.b32.xlu0 %v8470, 64
    %v8697 = vpop.permute.xlu0 %8696
    %8698 = vrot.lane.b32.xlu0 %v8473, 64
    %v8699 = vpop.permute.xlu0 %8698
    %8700 = vrot.lane.b32.xlu0 %v8476, 64
    %v8701 = vpop.permute.xlu0 %8700
    %8702 = vrot.lane.b32.xlu0 %v8684, 64
    %v8703 = vpop.permute.xlu0 %8702
    %8704 = vrot.lane.b32.xlu0 %v8479, 64
    %v8705 = vpop.permute.xlu0 %8704
    %8706 = vrot.lane.b32.xlu0 %v8482, 64
    %v8707 = vpop.permute.xlu0 %8706
    %8708 = vrot.lane.b32.xlu0 %v8485, 64
    %v8709 = vpop.permute.xlu0 %8708
    %8710 = vrot.lane.b32.xlu0 %v8488, 64
    %v8711 = vpop.permute.xlu0 %8710
    %8712 = vrot.lane.b32.xlu0 %v8491, 64
    %v8713 = vpop.permute.xlu0 %8712
    %8714 = vrot.lane.b32.xlu0 %v8494, 64
    %v8715 = vpop.permute.xlu0 %8714
    %8716 = vrot.lane.b32.xlu0 %v8497, 64
    %v8717 = vpop.permute.xlu0 %8716
    %8718 = vrot.lane.b32.xlu0 %v8687, 64
    %v8719 = vpop.permute.xlu0 %8718
    %v8736 = vrot.slane %v8403, 2
    %v8737 = vrot.slane %v8419, 2
    %v8738 = vsel %vm855, %v8736, %v8737
    %v8739 = vrot.slane %v8411, 2
    %v8740 = vrot.slane %v8427, 2
    %v8741 = vsel %vm855, %v8739, %v8740
    %8742 = vrot.lane.b32.xlu0 %v8545, 80
    %v8743 = vpop.permute.xlu0 %8742
    %8744 = vrot.lane.b32.xlu0 %v8548, 80
    %v8745 = vpop.permute.xlu0 %8744
    %8746 = vrot.lane.b32.xlu0 %v8551, 80
    %v8747 = vpop.permute.xlu0 %8746
    %8748 = vrot.lane.b32.xlu0 %v8554, 80
    %v8749 = vpop.permute.xlu0 %8748
    %8750 = vrot.lane.b32.xlu0 %v8557, 80
    %v8751 = vpop.permute.xlu0 %8750
    %8752 = vrot.lane.b32.xlu0 %v8560, 80
    %v8753 = vpop.permute.xlu0 %8752
    %8754 = vrot.lane.b32.xlu0 %v8563, 80
    %v8755 = vpop.permute.xlu0 %8754
    %8756 = vrot.lane.b32.xlu0 %v8738, 80
    %v8757 = vpop.permute.xlu0 %8756
    %8758 = vrot.lane.b32.xlu0 %v8566, 80
    %v8759 = vpop.permute.xlu0 %8758
    %8760 = vrot.lane.b32.xlu0 %v8569, 80
    %v8761 = vpop.permute.xlu0 %8760
    %8762 = vrot.lane.b32.xlu0 %v8572, 80
    %v8763 = vpop.permute.xlu0 %8762
    %8764 = vrot.lane.b32.xlu0 %v8575, 80
    %v8765 = vpop.permute.xlu0 %8764
    %8766 = vrot.lane.b32.xlu0 %v8578, 80
    %v8767 = vpop.permute.xlu0 %8766
    %8768 = vrot.lane.b32.xlu0 %v8581, 80
    %v8769 = vpop.permute.xlu0 %8768
    %8770 = vrot.lane.b32.xlu0 %v8584, 80
    %v8771 = vpop.permute.xlu0 %8770
    %8772 = vrot.lane.b32.xlu0 %v8741, 80
    %v8773 = vpop.permute.xlu0 %8772
    %8790 = vrot.lane.b32.xlu0 %v8397, 96
    %v8791 = vpop.permute.xlu0 %8790
    %8792 = vrot.lane.b32.xlu0 %v8398, 96
    %v8793 = vpop.permute.xlu0 %8792
    %8794 = vrot.lane.b32.xlu0 %v8399, 96
    %v8795 = vpop.permute.xlu0 %8794
    %8796 = vrot.lane.b32.xlu0 %v8400, 96
    %v8797 = vpop.permute.xlu0 %8796
    %8798 = vrot.lane.b32.xlu0 %v8401, 96
    %v8799 = vpop.permute.xlu0 %8798
    %8800 = vrot.lane.b32.xlu0 %v8402, 96
    %v8801 = vpop.permute.xlu0 %8800
    %8802 = vrot.lane.b32.xlu0 %v8403, 96
    %v8803 = vpop.permute.xlu0 %8802
    %8804 = vrot.lane.b32.xlu0 %v385, 96
    %v8805 = vpop.permute.xlu0 %8804
    %8806 = vrot.lane.b32.xlu0 %v8405, 96
    %v8807 = vpop.permute.xlu0 %8806
    %8808 = vrot.lane.b32.xlu0 %v8406, 96
    %v8809 = vpop.permute.xlu0 %8808
    %8810 = vrot.lane.b32.xlu0 %v8407, 96
    %v8811 = vpop.permute.xlu0 %8810
    %8812 = vrot.lane.b32.xlu0 %v8408, 96
    %v8813 = vpop.permute.xlu0 %8812
    %8814 = vrot.lane.b32.xlu0 %v8409, 96
    %v8815 = vpop.permute.xlu0 %8814
    %8816 = vrot.lane.b32.xlu0 %v8410, 96
    %v8817 = vpop.permute.xlu0 %8816
    %8818 = vrot.lane.b32.xlu0 %v8411, 96
    %v8819 = vpop.permute.xlu0 %8818
    %8835 = vrot.lane.b32.xlu0 %v8461, 112
    %v8836 = vpop.permute.xlu0 %8835
    %8837 = vrot.lane.b32.xlu0 %v8464, 112
    %v8838 = vpop.permute.xlu0 %8837
    %8839 = vrot.lane.b32.xlu0 %v8467, 112
    %v8840 = vpop.permute.xlu0 %8839
    %8841 = vrot.lane.b32.xlu0 %v8470, 112
    %v8842 = vpop.permute.xlu0 %8841
    %8843 = vrot.lane.b32.xlu0 %v8473, 112
    %v8844 = vpop.permute.xlu0 %8843
    %8845 = vrot.lane.b32.xlu0 %v8476, 112
    %v8846 = vpop.permute.xlu0 %8845
    %8847 = vrot.lane.b32.xlu0 %v8684, 112
    %v8848 = vpop.permute.xlu0 %8847
    %8849 = vrot.lane.b32.xlu0 %v7614, 112
    %v8850 = vpop.permute.xlu0 %8849
    %8851 = vrot.lane.b32.xlu0 %v8482, 112
    %v8852 = vpop.permute.xlu0 %8851
    %8853 = vrot.lane.b32.xlu0 %v8485, 112
    %v8854 = vpop.permute.xlu0 %8853
    %8855 = vrot.lane.b32.xlu0 %v8488, 112
    %v8856 = vpop.permute.xlu0 %8855
    %8857 = vrot.lane.b32.xlu0 %v8491, 112
    %v8858 = vpop.permute.xlu0 %8857
    %8859 = vrot.lane.b32.xlu0 %v8494, 112
    %v8860 = vpop.permute.xlu0 %8859
    %8861 = vrot.lane.b32.xlu0 %v8497, 112
    %v8862 = vpop.permute.xlu0 %8861
    %8863 = vrot.lane.b32.xlu0 %v8687, 112
    %v8864 = vpop.permute.xlu0 %8863
    %v8895 = vsel %vm5521, %v385, %v8499
    %v8896 = vsel %vm5521, %v8396, %v8501
    %v8897 = vsel %vm5521, %v8397, %v8503
    %v8898 = vsel %vm5521, %v8398, %v8505
    %v8899 = vsel %vm5521, %v8399, %v8507
    %v8900 = vsel %vm5521, %v8400, %v8509
    %v8901 = vsel %vm5521, %v8401, %v8511
    %v8902 = vsel %vm5521, %v8402, %v8513
    %v8903 = vsel %vm5521, %v8404, %v8515
    %v8904 = vsel %vm5521, %v8405, %v8517
    %v8905 = vsel %vm5521, %v8406, %v8519
    %v8906 = vsel %vm5521, %v8407, %v8521
    %v8907 = vsel %vm5521, %v8408, %v8523
    %v8908 = vsel %vm5521, %v8409, %v8525
    %v8909 = vsel %vm5521, %v8410, %v8527
    %v8910 = vsel %vm5649, %v8895, %v8586
    %v8911 = vsel %vm5649, %v8896, %v8588
    %v8912 = vsel %vm5649, %v8897, %v8590
    %v8913 = vsel %vm5649, %v8898, %v8592
    %v8914 = vsel %vm5649, %v8899, %v8594
    %v8915 = vsel %vm5649, %v8900, %v8596
    %v8916 = vsel %vm5649, %v8901, %v8598
    %v8917 = vsel %vm5649, %v8902, %v8600
    %v8918 = vsel %vm5649, %v8903, %v8602
    %v8919 = vsel %vm5649, %v8904, %v8604
    %v8920 = vsel %vm5649, %v8905, %v8606
    %v8921 = vsel %vm5649, %v8906, %v8608
    %v8922 = vsel %vm5649, %v8907, %v8610
    %v8923 = vsel %vm5649, %v8908, %v8612
    %v8924 = vsel %vm5649, %v8909, %v8614
    %v8925 = vsel %vm5779, %v8910, %v8633
    %v8926 = vsel %vm5779, %v8911, %v8635
    %v8927 = vsel %vm5779, %v8912, %v8637
    %v8928 = vsel %vm5779, %v8913, %v8639
    %v8929 = vsel %vm5779, %v8914, %v8641
    %v8930 = vsel %vm5779, %v8915, %v8643
    %v8931 = vsel %vm5779, %v8916, %v8645
    %v8932 = vsel %vm5779, %v8917, %v8647
    %v8933 = vsel %vm5779, %v8910, %v8649
    %v8934 = vsel %vm5779, %v8918, %v8651
    %v8935 = vsel %vm5779, %v8919, %v8653
    %v8936 = vsel %vm5779, %v8920, %v8655
    %v8937 = vsel %vm5779, %v8921, %v8657
    %v8938 = vsel %vm5779, %v8922, %v8659
    %v8939 = vsel %vm5779, %v8923, %v8661
    %v8940 = vsel %vm5779, %v8924, %v8663
    %v8941 = vsel %vm5909, %v8925, %v8689
    %v8942 = vsel %vm5909, %v8926, %v8691
    %v8943 = vsel %vm5909, %v8927, %v8693
    %v8944 = vsel %vm5909, %v8928, %v8695
    %v8945 = vsel %vm5909, %v8929, %v8697
    %v8946 = vsel %vm5909, %v8930, %v8699
    %v8947 = vsel %vm5909, %v8931, %v8701
    %v8948 = vsel %vm5909, %v8932, %v8703
    %v8949 = vsel %vm5909, %v8933, %v8705
    %v8950 = vsel %vm5909, %v8934, %v8707
    %v8951 = vsel %vm5909, %v8935, %v8709
    %v8952 = vsel %vm5909, %v8936, %v8711
    %v8953 = vsel %vm5909, %v8937, %v8713
    %v8954 = vsel %vm5909, %v8938, %v8715
    %v8955 = vsel %vm5909, %v8939, %v8717
    %v8956 = vsel %vm5909, %v8940, %v8719
    %vm8957 = vcmask 654336
    %v8958 = vsel %vm8957, %v8941, %v8743
    %v8959 = vsel %vm8957, %v8942, %v8745
    %v8960 = vsel %vm8957, %v8943, %v8747
    %v8961 = vsel %vm8957, %v8944, %v8749
    %v8962 = vsel %vm8957, %v8945, %v8751
    %v8963 = vsel %vm8957, %v8946, %v8753
    %v8964 = vsel %vm8957, %v8947, %v8755
    %v8965 = vsel %vm8957, %v8948, %v8757
    %v8966 = vsel %vm8957, %v8949, %v8759
    %v8967 = vsel %vm8957, %v8950, %v8761
    %v8968 = vsel %vm8957, %v8951, %v8763
    %v8969 = vsel %vm8957, %v8952, %v8765
    %v8970 = vsel %vm8957, %v8953, %v8767
    %v8971 = vsel %vm8957, %v8954, %v8769
    %v8972 = vsel %vm8957, %v8955, %v8771
    %v8973 = vsel %vm8957, %v8956, %v8773
    %vm8974 = vcmask 785408
    %v8975 = vsel %vm8974, %v8958, %v8791
    %v8976 = vsel %vm8974, %v8959, %v8793
    %v8977 = vsel %vm8974, %v8960, %v8795
    %v8978 = vsel %vm8974, %v8961, %v8797
    %v8979 = vsel %vm8974, %v8962, %v8799
    %v8980 = vsel %vm8974, %v8963, %v8801
    %v8981 = vsel %vm8974, %v8964, %v8803
    %v8982 = vsel %vm8974, %v8965, %v8805
    %v8983 = vsel %vm8974, %v8966, %v8807
    %v8984 = vsel %vm8974, %v8967, %v8809
    %v8985 = vsel %vm8974, %v8968, %v8811
    %v8986 = vsel %vm8974, %v8969, %v8813
    %v8987 = vsel %vm8974, %v8970, %v8815
    %v8988 = vsel %vm8974, %v8971, %v8817
    %v8989 = vsel %vm8974, %v8972, %v8819
    %v8990 = vsel %vm8974, %v8973, %v8805
    %vm8991 = vcmask 916480
    %v8992 = vsel %vm8991, %v8975, %v8836
    %v8993 = vsel %vm8991, %v8976, %v8838
    %v8994 = vsel %vm8991, %v8977, %v8840
    %v8995 = vsel %vm8991, %v8978, %v8842
    %v8996 = vsel %vm8991, %v8979, %v8844
    %v8997 = vsel %vm8991, %v8980, %v8846
    %v8998 = vsel %vm8991, %v8981, %v8848
    %v8999 = vsel %vm8991, %v8982, %v8850
    %v9000 = vsel %vm8991, %v8983, %v8852
    %v9001 = vsel %vm8991, %v8984, %v8854
    %v9002 = vsel %vm8991, %v8985, %v8856
    %v9003 = vsel %vm8991, %v8986, %v8858
    %v9004 = vsel %vm8991, %v8987, %v8860
    %v9005 = vsel %vm8991, %v8988, %v8862
    %v9006 = vsel %vm8991, %v8989, %v8864
    %v9007 = vsel %vm8991, %v8990, %v8850
    %v9008 = vpack.c.bf16 %v8993, %v8992
    %v9009 = vpack.c.bf16 %v8551, %v8548
    %v9010 = vpack.c.bf16 %v8995, %v8994
    %v9011 = vpack.c.bf16 %v8557, %v8554
    %v9012 = vpack.c.bf16 %v8997, %v8996
    %v9013 = vpack.c.bf16 %v8563, %v8560
    %v9014 = vpack.c.bf16 %v8999, %v8998
    %v9015 = vpack.c.bf16 %v7702, %v8738
    %v9016 = vpack.c.bf16 %v9001, %v9000
    %v9017 = vpack.c.bf16 %v8572, %v8569
    %v9018 = vpack.c.bf16 %v9003, %v9002
    %v9019 = vpack.c.bf16 %v8578, %v8575
    %v9020 = vpack.c.bf16 %v9005, %v9004
    %v9021 = vpack.c.bf16 %v8584, %v8581
    %v9022 = vpack.c.bf16 %v9007, %v9006
    %v9023 = vpack.c.bf16 %v7702, %v8741
    %v9024 = vld [vmem:[%s7] sm:$0xf]
    %v9025 = vld [vmem:[%s7 + $0x4] sm:$0xf]
    %v9026 = vld [vmem:[%s7 + $0x8] sm:$0xf]
    %v9027 = vld [vmem:[%s7 + $0xc] sm:$0xf]
    %v9028 = vld [vmem:[%s7 + $0x10] sm:$0xf]
    %v9029 = vld [vmem:[%s7 + $0x14] sm:$0xf]
    %v9030 = vld [vmem:[%s7 + $0x18] sm:$0xf]
    %v9031 = vld [vmem:[%s7 + $0x1c] sm:$0xf]
    %v9032 = vld [vmem:[%s7 + $0x20] sm:$0xf]
    %v9033 = vld [vmem:[%s7 + $0x24] sm:$0xf]
    %v9034 = vld [vmem:[%s7 + $0x28] sm:$0xf]
    %v9035 = vld [vmem:[%s7 + $0x2c] sm:$0xf]
    %v9036 = vld [vmem:[%s7 + $0x30] sm:$0xf]
    %v9037 = vld [vmem:[%s7 + $0x34] sm:$0xf]
    %v9038 = vld [vmem:[%s7 + $0x38] sm:$0xf]
    %v9039 = vld [vmem:[%s7 + $0x3c] sm:$0xf]
    %v9040 = vld [vmem:[%s7 + $0x40] sm:$0xf]
    %v9041 = vld [vmem:[%s7 + $0x44] sm:$0xf]
    %v9042 = vld [vmem:[%s8] sm:$0x1]
    %v9044 = vperm.slane %v9042, 0
    %v9064 = vunpack.c.l.b16 %v9024
    %v9065 = vunpack.c.l.b16 %v9025
    %v9066 = vunpack.c.l.b16 %v9026
    %v9067 = vunpack.c.l.b16 %v9027
    %v9068 = vunpack.c.l.b16 %v9028
    %v9069 = vunpack.c.l.b16 %v9029
    %v9070 = vunpack.c.l.b16 %v9030
    %v9071 = vunpack.c.l.b16 %v9031
    %v9072 = vunpack.c.l.b16 %v9032
    %v9073 = vunpack.c.l.b16 %v9033
    %v9074 = vunpack.c.l.b16 %v9034
    %v9075 = vunpack.c.l.b16 %v9035
    %v9076 = vunpack.c.l.b16 %v9036
    %v9077 = vunpack.c.l.b16 %v9037
    %v9078 = vunpack.c.l.b16 %v9038
    %v9079 = vunpack.c.l.b16 %v9039
    %v9080 = vunpack.c.l.b16 %v9040
    %v9081 = vunpack.c.l.b16 %v9041
    %v9082 = vpack.c.b16 %v9065, %v9064
    %v9083 = vpack.c.b16 %v9067, %v9066
    %v9084 = vpack.c.b16 %v9069, %v9068
    %v9085 = vpack.c.b16 %v9071, %v9070
    %v9086 = vpack.c.b16 %v9073, %v9072
    %v9087 = vpack.c.b16 %v9075, %v9074
    %v9088 = vpack.c.b16 %v9077, %v9076
    %v9089 = vpack.c.b16 %v9079, %v9078
    %v9090 = vpack.c.b16 %v9081, %v9080
    %v9101 = vsel %vm5521, %v9009, 0
    %v9104 = vsel %vm5521, %v9011, 0
    %v9107 = vsel %vm5521, %v9013, 0
    %v9110 = vsel %vm5521, %v9015, 0
    %v9113 = vsel %vm5521, %v9017, 0
    %v9116 = vsel %vm5521, %v9019, 0
    %v9119 = vsel %vm5521, %v9021, 0
    %v9122 = vsel %vm5521, %v9023, 0
    %9124 = vmatpush.bf16.msra.mxu0 %v9089
    %9125 = vmatpush.bf16.msra.mxu0 %v9088
    %9126 = vmatpush.bf16.msra.mxu0 %v9087
    %9127 = vmatpush.bf16.msra.mxu0 %v9086
    %9128 = vmatpush.bf16.msra.mxu0 %v9085
    %9129 = vmatpush.bf16.msra.mxu0 %v9084
    %9130 = vmatpush.bf16.msra.mxu0 %v9083
    %9131 = vmatpush.bf16.msra.mxu0 %v9082
    %9132 = vmatmul.bf16.gmra.mxu0 %v9008
    %v9133 = vpop.f32.mrf.mxu0
    %v9134 = vadd.f32 %v9044, %v9133
    %v9135 = vpop.f32.mrf.mxu0
    %v9136 = vadd.f32 %v9044, %v9135
    %9137 = vmatmul.bf16.gmra.mxu0 %v9010
    %v9138 = vpop.f32.mrf.mxu0
    %v9139 = vadd.f32 %v9044, %v9138
    %v9140 = vpop.f32.mrf.mxu0
    %v9141 = vadd.f32 %v9044, %v9140
    %9142 = vmatmul.bf16.gmra.mxu0 %v9012
    %v9143 = vpop.f32.mrf.mxu0
    %v9144 = vadd.f32 %v9044, %v9143
    %v9145 = vpop.f32.mrf.mxu0
    %v9146 = vadd.f32 %v9044, %v9145
    %9147 = vmatmul.bf16.gmra.mxu0 %v9014
    %v9148 = vpop.f32.mrf.mxu0
    %v9149 = vadd.f32 %v9044, %v9148
    %v9150 = vpop.f32.mrf.mxu0
    %v9151 = vadd.f32 %v9044, %v9150
    %9152 = vmatmul.bf16.gmra.mxu0 %v9016
    %v9153 = vpop.f32.mrf.mxu0
    %v9154 = vadd.f32 %v9044, %v9153
    %v9155 = vpop.f32.mrf.mxu0
    %v9156 = vadd.f32 %v9044, %v9155
    %9157 = vmatmul.bf16.gmra.mxu0 %v9018
    %v9158 = vpop.f32.mrf.mxu0
    %v9159 = vadd.f32 %v9044, %v9158
    %v9160 = vpop.f32.mrf.mxu0
    %v9161 = vadd.f32 %v9044, %v9160
    %9162 = vmatmul.bf16.gmra.mxu0 %v9020
    %v9163 = vpop.f32.mrf.mxu0
    %v9164 = vadd.f32 %v9044, %v9163
    %v9165 = vpop.f32.mrf.mxu0
    %v9166 = vadd.f32 %v9044, %v9165
    %9167 = vmatmul.bf16.gmra.mxu0 %v9022
    %v9168 = vpop.f32.mrf.mxu0
    %v9169 = vadd.f32 %v9044, %v9168
    %v9170 = vpop.f32.mrf.mxu0
    %v9171 = vadd.f32 %v9044, %v9170
    %9172 = vdwg.mxu0
    %9173 = vmatpush.bf16.msra.mxu0 0
    %9174 = vmatpush.bf16.msra.mxu0 0
    %9175 = vmatpush.bf16.msra.mxu0 0
    %9176 = vmatpush.bf16.msra.mxu0 0
    %9177 = vmatpush.bf16.msra.mxu0 0
    %9178 = vmatpush.bf16.msra.mxu0 0
    %9179 = vmatpush.bf16.msra.mxu0 0
    %9180 = vmatpush.bf16.msra.mxu0 %v9090
    %9181 = vmatmul.bf16.gmra.mxu0 %v9101
    %v9182 = vpop.f32.mrf.mxu0
    %v9183 = vadd.f32 %v9134, %v9182
    %v9184 = vpop.f32.mrf.mxu0
    %v9185 = vadd.f32 %v9136, %v9184
    %9186 = vmatmul.bf16.gmra.mxu0 %v9104
    %v9187 = vpop.f32.mrf.mxu0
    %v9188 = vadd.f32 %v9139, %v9187
    %v9189 = vpop.f32.mrf.mxu0
    %v9190 = vadd.f32 %v9141, %v9189
    %9191 = vmatmul.bf16.gmra.mxu0 %v9107
    %v9192 = vpop.f32.mrf.mxu0
    %v9193 = vadd.f32 %v9144, %v9192
    %v9194 = vpop.f32.mrf.mxu0
    %v9195 = vadd.f32 %v9146, %v9194
    %9196 = vmatmul.bf16.gmra.mxu0 %v9110
    %v9197 = vpop.f32.mrf.mxu0
    %v9198 = vadd.f32 %v9149, %v9197
    %v9199 = vpop.f32.mrf.mxu0
    %v9200 = vadd.f32 %v9151, %v9199
    %9201 = vmatmul.bf16.gmra.mxu0 %v9113
    %v9202 = vpop.f32.mrf.mxu0
    %v9203 = vadd.f32 %v9154, %v9202
    %v9204 = vpop.f32.mrf.mxu0
    %v9205 = vadd.f32 %v9156, %v9204
    %9206 = vmatmul.bf16.gmra.mxu0 %v9116
    %v9207 = vpop.f32.mrf.mxu0
    %v9208 = vadd.f32 %v9159, %v9207
    %v9209 = vpop.f32.mrf.mxu0
    %v9210 = vadd.f32 %v9161, %v9209
    %9211 = vmatmul.bf16.gmra.mxu0 %v9119
    %v9212 = vpop.f32.mrf.mxu0
    %v9213 = vadd.f32 %v9164, %v9212
    %v9214 = vpop.f32.mrf.mxu0
    %v9215 = vadd.f32 %v9166, %v9214
    %9216 = vmatmul.bf16.gmra.mxu0 %v9122
    %v9217 = vpop.f32.mrf.mxu0
    %v9218 = vadd.f32 %v9169, %v9217
    %v9219 = vpop.f32.mrf.mxu0
    %v9220 = vadd.f32 %v9171, %v9219
    %9221 = vdwg.mxu0
    %v9222 = vmax.f32 %v9183, 0.0
    %v9223 = vmax.f32 %v9185, 0.0
    %v9224 = vmax.f32 %v9188, 0.0
    %v9225 = vmax.f32 %v9190, 0.0
    %v9226 = vmax.f32 %v9193, 0.0
    %v9227 = vmax.f32 %v9195, 0.0
    %v9228 = vmax.f32 %v9198, 0.0
    %v9229 = vmax.f32 %v9200, 0.0
    %v9230 = vmax.f32 %v9203, 0.0
    %v9231 = vmax.f32 %v9205, 0.0
    %v9232 = vmax.f32 %v9208, 0.0
    %v9233 = vmax.f32 %v9210, 0.0
    %v9234 = vmax.f32 %v9213, 0.0
    %v9235 = vmax.f32 %v9215, 0.0
    %v9236 = vmax.f32 %v9218, 0.0
    %v9237 = vmax.f32 %v9220, 0.0
    %v9238 = vmax.f32 %v9222, %v9223
    %v9239 = vmax.f32 %v9224, %v9225
    %v9240 = vmax.f32 %v9226, %v9227
    %v9241 = vmax.f32 %v9228, %v9229
    %v9242 = vmax.f32 %v9230, %v9231
    %v9243 = vmax.f32 %v9232, %v9233
    %v9244 = vmax.f32 %v9234, %v9235
    %v9245 = vmax.f32 %v9236, %v9237
    %v9254 = vrot.slane %v9238, 2
    %v9255 = vrot.slane %v9238, 4
    %v9256 = vrot.slane %v9238, 6
    %v9257 = vrot.slane %v9239, 2
    %v9258 = vrot.slane %v9239, 4
    %v9259 = vrot.slane %v9239, 6
    %v9260 = vrot.slane %v9240, 2
    %v9261 = vrot.slane %v9240, 4
    %v9262 = vrot.slane %v9240, 6
    %v9263 = vrot.slane %v9241, 2
    %v9264 = vrot.slane %v9241, 4
    %v9265 = vrot.slane %v9241, 6
    %v9266 = vrot.slane %v9242, 2
    %v9267 = vrot.slane %v9242, 4
    %v9268 = vrot.slane %v9242, 6
    %v9269 = vrot.slane %v9243, 2
    %v9270 = vrot.slane %v9243, 4
    %v9271 = vrot.slane %v9243, 6
    %v9272 = vrot.slane %v9244, 2
    %v9273 = vrot.slane %v9244, 4
    %v9274 = vrot.slane %v9244, 6
    %v9275 = vrot.slane %v9245, 2
    %v9276 = vrot.slane %v9245, 4
    %v9277 = vrot.slane %v9245, 6
    %v9302 = vrot.slane %v9238, 7
    %v9303 = vrot.slane %v9302, 2
    %v9304 = vrot.slane %v9254, 7
    %v9305 = vrot.slane %v9304, 2
    %v9306 = vrot.slane %v9255, 7
    %v9307 = vrot.slane %v9306, 2
    %v9308 = vrot.slane %v9256, 7
    %v9309 = vrot.slane %v9308, 2
    %v9310 = vrot.slane %v9239, 7
    %v9311 = vrot.slane %v9310, 2
    %v9312 = vrot.slane %v9257, 7
    %v9313 = vrot.slane %v9312, 2
    %v9314 = vrot.slane %v9258, 7
    %v9315 = vrot.slane %v9314, 2
    %v9316 = vrot.slane %v9259, 7
    %v9317 = vrot.slane %v9316, 2
    %v9318 = vrot.slane %v9240, 7
    %v9319 = vrot.slane %v9318, 2
    %v9320 = vrot.slane %v9260, 7
    %v9321 = vrot.slane %v9320, 2
    %v9322 = vrot.slane %v9261, 7
    %v9323 = vrot.slane %v9322, 2
    %v9324 = vrot.slane %v9262, 7
    %v9325 = vrot.slane %v9324, 2
    %v9326 = vrot.slane %v9241, 7
    %v9327 = vrot.slane %v9326, 2
    %v9328 = vrot.slane %v9263, 7
    %v9329 = vrot.slane %v9328, 2
    %v9330 = vrot.slane %v9264, 7
    %v9331 = vrot.slane %v9330, 2
    %v9332 = vrot.slane %v9265, 7
    %v9333 = vrot.slane %v9332, 2
    %v9334 = vrot.slane %v9242, 7
    %v9335 = vrot.slane %v9334, 2
    %v9336 = vrot.slane %v9266, 7
    %v9337 = vrot.slane %v9336, 2
    %v9338 = vrot.slane %v9267, 7
    %v9339 = vrot.slane %v9338, 2
    %v9340 = vrot.slane %v9268, 7
    %v9341 = vrot.slane %v9340, 2
    %v9342 = vrot.slane %v9243, 7
    %v9343 = vrot.slane %v9342, 2
    %v9344 = vrot.slane %v9269, 7
    %v9345 = vrot.slane %v9344, 2
    %v9346 = vrot.slane %v9270, 7
    %v9347 = vrot.slane %v9346, 2
    %v9348 = vrot.slane %v9271, 7
    %v9349 = vrot.slane %v9348, 2
    %v9350 = vrot.slane %v9244, 7
    %v9351 = vrot.slane %v9350, 2
    %v9352 = vrot.slane %v9272, 7
    %v9353 = vrot.slane %v9352, 2
    %v9354 = vrot.slane %v9273, 7
    %v9355 = vrot.slane %v9354, 2
    %v9356 = vrot.slane %v9274, 7
    %v9357 = vrot.slane %v9356, 2
    %v9358 = vrot.slane %v9245, 7
    %v9359 = vrot.slane %v9358, 2
    %v9360 = vrot.slane %v9275, 7
    %v9361 = vrot.slane %v9360, 2
    %v9362 = vrot.slane %v9276, 7
    %v9363 = vrot.slane %v9362, 2
    %v9364 = vrot.slane %v9277, 7
    %v9365 = vrot.slane %v9364, 2
    %v9398 = vmax.f32 %v9238, %v9303
    %v9399 = vmax.f32 %v9254, %v9305
    %v9400 = vmax.f32 %v9255, %v9307
    %v9401 = vmax.f32 %v9256, %v9309
    %v9402 = vmax.f32 %v9239, %v9311
    %v9403 = vmax.f32 %v9257, %v9313
    %v9404 = vmax.f32 %v9258, %v9315
    %v9405 = vmax.f32 %v9259, %v9317
    %v9406 = vmax.f32 %v9240, %v9319
    %v9407 = vmax.f32 %v9260, %v9321
    %v9408 = vmax.f32 %v9261, %v9323
    %v9409 = vmax.f32 %v9262, %v9325
    %v9410 = vmax.f32 %v9241, %v9327
    %v9411 = vmax.f32 %v9263, %v9329
    %v9412 = vmax.f32 %v9264, %v9331
    %v9413 = vmax.f32 %v9265, %v9333
    %v9414 = vmax.f32 %v9242, %v9335
    %v9415 = vmax.f32 %v9266, %v9337
    %v9416 = vmax.f32 %v9267, %v9339
    %v9417 = vmax.f32 %v9268, %v9341
    %v9418 = vmax.f32 %v9243, %v9343
    %v9419 = vmax.f32 %v9269, %v9345
    %v9420 = vmax.f32 %v9270, %v9347
    %v9421 = vmax.f32 %v9271, %v9349
    %v9422 = vmax.f32 %v9244, %v9351
    %v9423 = vmax.f32 %v9272, %v9353
    %v9424 = vmax.f32 %v9273, %v9355
    %v9425 = vmax.f32 %v9274, %v9357
    %v9426 = vmax.f32 %v9245, %v9359
    %v9427 = vmax.f32 %v9275, %v9361
    %v9428 = vmax.f32 %v9276, %v9363
    %v9429 = vmax.f32 %v9277, %v9365
    %v9462 = vperm.slane %v9398, 0
    %v9463 = vperm.slane %v9399, 0
    %v9464 = vperm.slane %v9400, 0
    %v9465 = vperm.slane %v9401, 0
    %v9466 = vperm.slane %v9402, 0
    %v9467 = vperm.slane %v9403, 0
    %v9468 = vperm.slane %v9404, 0
    %v9469 = vperm.slane %v9405, 0
    %v9470 = vperm.slane %v9406, 0
    %v9471 = vperm.slane %v9407, 0
    %v9472 = vperm.slane %v9408, 0
    %v9473 = vperm.slane %v9409, 0
    %v9474 = vperm.slane %v9410, 0
    %v9475 = vperm.slane %v9411, 0
    %v9476 = vperm.slane %v9412, 0
    %v9477 = vperm.slane %v9413, 0
    %v9478 = vperm.slane %v9414, 0
    %v9479 = vperm.slane %v9415, 0
    %v9480 = vperm.slane %v9416, 0
    %v9481 = vperm.slane %v9417, 0
    %v9482 = vperm.slane %v9418, 0
    %v9483 = vperm.slane %v9419, 0
    %v9484 = vperm.slane %v9420, 0
    %v9485 = vperm.slane %v9421, 0
    %v9486 = vperm.slane %v9422, 0
    %v9487 = vperm.slane %v9423, 0
    %v9488 = vperm.slane %v9424, 0
    %v9489 = vperm.slane %v9425, 0
    %v9490 = vperm.slane %v9426, 0
    %v9491 = vperm.slane %v9427, 0
    %v9492 = vperm.slane %v9428, 0
    %v9493 = vperm.slane %v9429, 0
    %v9494 = vsel %vm7403, %v9463, %v9462
    %v9495 = vsel %vm7405, %v9464, %v9494
    %v9496 = vsel %vm7407, %v9465, %v9495
    %v9497 = vsel %vm7403, %v9467, %v9466
    %v9498 = vsel %vm7405, %v9468, %v9497
    %v9499 = vsel %vm7407, %v9469, %v9498
    %v9500 = vsel %vm7403, %v9471, %v9470
    %v9501 = vsel %vm7405, %v9472, %v9500
    %v9502 = vsel %vm7407, %v9473, %v9501
    %v9503 = vsel %vm7403, %v9475, %v9474
    %v9504 = vsel %vm7405, %v9476, %v9503
    %v9505 = vsel %vm7407, %v9477, %v9504
    %v9506 = vsel %vm7403, %v9479, %v9478
    %v9507 = vsel %vm7405, %v9480, %v9506
    %v9508 = vsel %vm7407, %v9481, %v9507
    %v9509 = vsel %vm7403, %v9483, %v9482
    %v9510 = vsel %vm7405, %v9484, %v9509
    %v9511 = vsel %vm7407, %v9485, %v9510
    %v9512 = vsel %vm7403, %v9487, %v9486
    %v9513 = vsel %vm7405, %v9488, %v9512
    %v9514 = vsel %vm7407, %v9489, %v9513
    %v9515 = vsel %vm7403, %v9491, %v9490
    %v9516 = vsel %vm7405, %v9492, %v9515
    %v9517 = vsel %vm7407, %v9493, %v9516
    %v9518 = vrot.slane %v9496, 7
    %v9519 = vrot.slane %v9499, 7
    %v9520 = vrot.slane %v9502, 7
    %v9521 = vrot.slane %v9505, 7
    %v9522 = vrot.slane %v9508, 7
    %v9523 = vrot.slane %v9511, 7
    %v9524 = vrot.slane %v9514, 7
    %v9525 = vrot.slane %v9517, 7
    %v9534 = vsel %vm190, 0.0, %v9518
    %v9535 = vsel %vm190, 0.0, %v9519
    %v9536 = vsel %vm190, 0.0, %v9520
    %v9537 = vsel %vm190, 0.0, %v9521
    %v9538 = vsel %vm190, 0.0, %v9522
    %v9539 = vsel %vm190, 0.0, %v9523
    %v9540 = vsel %vm190, 0.0, %v9524
    %v9541 = vsel %vm190, 0.0, %v9525
    %v9542 = vsel %vm3012, %v385, 0.0
    %v9543 = vsel %vm3012, %v9534, 0.0
    %v9544 = vsel %vm3012, %v9535, 0.0
    %v9545 = vsel %vm3012, %v9536, 0.0
    %v9546 = vsel %vm3012, %v9537, 0.0
    %v9547 = vsel %vm3012, %v9538, 0.0
    %v9548 = vsel %vm3012, %v9539, 0.0
    %v9549 = vsel %vm3012, %v9540, 0.0
    %v9550 = vsel %vm3012, %v9541, 0.0
    %v9558 = vrot.slane %v9542, 1
    %v9559 = vrot.slane %v9543, 1
    %v9560 = vrot.slane %v9544, 1
    %v9561 = vrot.slane %v9545, 1
    %v9562 = vrot.slane %v9547, 1
    %v9563 = vrot.slane %v9548, 1
    %v9564 = vrot.slane %v9549, 1
    %9565 = vrot.lane.b32.xlu0 %v9558, 16
    %v9566 = vpop.permute.xlu0 %9565
    %9567 = vrot.lane.b32.xlu0 %v9559, 16
    %v9568 = vpop.permute.xlu0 %9567
    %9569 = vrot.lane.b32.xlu0 %v9560, 16
    %v9570 = vpop.permute.xlu0 %9569
    %9571 = vrot.lane.b32.xlu0 %v9561, 16
    %v9572 = vpop.permute.xlu0 %9571
    %9573 = vrot.lane.b32.xlu0 %v9562, 16
    %v9574 = vpop.permute.xlu0 %9573
    %9575 = vrot.lane.b32.xlu0 %v9563, 16
    %v9576 = vpop.permute.xlu0 %9575
    %9577 = vrot.lane.b32.xlu0 %v9564, 16
    %v9578 = vpop.permute.xlu0 %9577
    %v9586 = vrot.slane %v9542, 2
    %v9587 = vrot.slane %v9543, 2
    %v9588 = vrot.slane %v9544, 2
    %v9589 = vrot.slane %v9545, 2
    %v9590 = vrot.slane %v9547, 2
    %v9591 = vrot.slane %v9548, 2
    %v9592 = vrot.slane %v9549, 2
    %9593 = vrot.lane.b32.xlu0 %v9586, 32
    %v9594 = vpop.permute.xlu0 %9593
    %9595 = vrot.lane.b32.xlu0 %v9587, 32
    %v9596 = vpop.permute.xlu0 %9595
    %9597 = vrot.lane.b32.xlu0 %v9588, 32
    %v9598 = vpop.permute.xlu0 %9597
    %9599 = vrot.lane.b32.xlu0 %v9589, 32
    %v9600 = vpop.permute.xlu0 %9599
    %9601 = vrot.lane.b32.xlu0 %v9590, 32
    %v9602 = vpop.permute.xlu0 %9601
    %9603 = vrot.lane.b32.xlu0 %v9591, 32
    %v9604 = vpop.permute.xlu0 %9603
    %9605 = vrot.lane.b32.xlu0 %v9592, 32
    %v9606 = vpop.permute.xlu0 %9605
    %9616 = vrot.lane.b32.xlu0 %v9543, 48
    %v9617 = vpop.permute.xlu0 %9616
    %9618 = vrot.lane.b32.xlu0 %v9544, 48
    %v9619 = vpop.permute.xlu0 %9618
    %9620 = vrot.lane.b32.xlu0 %v9545, 48
    %v9621 = vpop.permute.xlu0 %9620
    %9622 = vrot.lane.b32.xlu0 %v9546, 48
    %v9623 = vpop.permute.xlu0 %9622
    %9624 = vrot.lane.b32.xlu0 %v9547, 48
    %v9625 = vpop.permute.xlu0 %9624
    %9626 = vrot.lane.b32.xlu0 %v9548, 48
    %v9627 = vpop.permute.xlu0 %9626
    %9628 = vrot.lane.b32.xlu0 %v9549, 48
    %v9629 = vpop.permute.xlu0 %9628
    %9630 = vrot.lane.b32.xlu0 %v9550, 48
    %v9631 = vpop.permute.xlu0 %9630
    %v9640 = vrot.slane %v9546, 1
    %v9641 = vrot.slane %v9550, 1
    %9642 = vrot.lane.b32.xlu0 %v9559, 64
    %v9643 = vpop.permute.xlu0 %9642
    %9644 = vrot.lane.b32.xlu0 %v9560, 64
    %v9645 = vpop.permute.xlu0 %9644
    %9646 = vrot.lane.b32.xlu0 %v9561, 64
    %v9647 = vpop.permute.xlu0 %9646
    %9648 = vrot.lane.b32.xlu0 %v9640, 64
    %v9649 = vpop.permute.xlu0 %9648
    %9650 = vrot.lane.b32.xlu0 %v9562, 64
    %v9651 = vpop.permute.xlu0 %9650
    %9652 = vrot.lane.b32.xlu0 %v9563, 64
    %v9653 = vpop.permute.xlu0 %9652
    %9654 = vrot.lane.b32.xlu0 %v9564, 64
    %v9655 = vpop.permute.xlu0 %9654
    %9656 = vrot.lane.b32.xlu0 %v9641, 64
    %v9657 = vpop.permute.xlu0 %9656
    %v9666 = vrot.slane %v9546, 2
    %v9667 = vrot.slane %v9550, 2
    %9668 = vrot.lane.b32.xlu0 %v9587, 80
    %v9669 = vpop.permute.xlu0 %9668
    %9670 = vrot.lane.b32.xlu0 %v9588, 80
    %v9671 = vpop.permute.xlu0 %9670
    %9672 = vrot.lane.b32.xlu0 %v9589, 80
    %v9673 = vpop.permute.xlu0 %9672
    %9674 = vrot.lane.b32.xlu0 %v9666, 80
    %v9675 = vpop.permute.xlu0 %9674
    %9676 = vrot.lane.b32.xlu0 %v9590, 80
    %v9677 = vpop.permute.xlu0 %9676
    %9678 = vrot.lane.b32.xlu0 %v9591, 80
    %v9679 = vpop.permute.xlu0 %9678
    %9680 = vrot.lane.b32.xlu0 %v9592, 80
    %v9681 = vpop.permute.xlu0 %9680
    %9682 = vrot.lane.b32.xlu0 %v9667, 80
    %v9683 = vpop.permute.xlu0 %9682
    %9692 = vrot.lane.b32.xlu0 %v9544, 96
    %v9693 = vpop.permute.xlu0 %9692
    %9694 = vrot.lane.b32.xlu0 %v9545, 96
    %v9695 = vpop.permute.xlu0 %9694
    %9696 = vrot.lane.b32.xlu0 %v9546, 96
    %v9697 = vpop.permute.xlu0 %9696
    %9698 = vrot.lane.b32.xlu0 %v9542, 96
    %v9699 = vpop.permute.xlu0 %9698
    %9700 = vrot.lane.b32.xlu0 %v9548, 96
    %v9701 = vpop.permute.xlu0 %9700
    %9702 = vrot.lane.b32.xlu0 %v9549, 96
    %v9703 = vpop.permute.xlu0 %9702
    %9704 = vrot.lane.b32.xlu0 %v9550, 96
    %v9705 = vpop.permute.xlu0 %9704
    %9713 = vrot.lane.b32.xlu0 %v9560, 112
    %v9714 = vpop.permute.xlu0 %9713
    %9715 = vrot.lane.b32.xlu0 %v9561, 112
    %v9716 = vpop.permute.xlu0 %9715
    %9717 = vrot.lane.b32.xlu0 %v9640, 112
    %v9718 = vpop.permute.xlu0 %9717
    %9719 = vrot.lane.b32.xlu0 %v9558, 112
    %v9720 = vpop.permute.xlu0 %9719
    %9721 = vrot.lane.b32.xlu0 %v9563, 112
    %v9722 = vpop.permute.xlu0 %9721
    %9723 = vrot.lane.b32.xlu0 %v9564, 112
    %v9724 = vpop.permute.xlu0 %9723
    %9725 = vrot.lane.b32.xlu0 %v9641, 112
    %v9726 = vpop.permute.xlu0 %9725
    %v9734 = vsel %vm5521, %v9542, %v9566
    %v9735 = vsel %vm5521, %v9543, %v9568
    %v9736 = vsel %vm5521, %v9544, %v9570
    %v9737 = vsel %vm5521, %v9545, %v9572
    %v9738 = vsel %vm5521, %v9547, %v9574
    %v9739 = vsel %vm5521, %v9548, %v9576
    %v9740 = vsel %vm5521, %v9549, %v9578
    %v9741 = vsel %vm5649, %v9734, %v9594
    %v9742 = vsel %vm5649, %v9735, %v9596
    %v9743 = vsel %vm5649, %v9736, %v9598
    %v9744 = vsel %vm5649, %v9737, %v9600
    %v9745 = vsel %vm5649, %v9738, %v9602
    %v9746 = vsel %vm5649, %v9739, %v9604
    %v9747 = vsel %vm5649, %v9740, %v9606
    %v9748 = vsel %vm5779, %v9741, %v9617
    %v9749 = vsel %vm5779, %v9742, %v9619
    %v9750 = vsel %vm5779, %v9743, %v9621
    %v9751 = vsel %vm5779, %v9744, %v9623
    %v9752 = vsel %vm5779, %v9741, %v9625
    %v9753 = vsel %vm5779, %v9745, %v9627
    %v9754 = vsel %vm5779, %v9746, %v9629
    %v9755 = vsel %vm5779, %v9747, %v9631
    %v9756 = vsel %vm5909, %v9748, %v9643
    %v9757 = vsel %vm5909, %v9749, %v9645
    %v9758 = vsel %vm5909, %v9750, %v9647
    %v9759 = vsel %vm5909, %v9751, %v9649
    %v9760 = vsel %vm5909, %v9752, %v9651
    %v9761 = vsel %vm5909, %v9753, %v9653
    %v9762 = vsel %vm5909, %v9754, %v9655
    %v9763 = vsel %vm5909, %v9755, %v9657
    %v9764 = vsel %vm8957, %v9756, %v9669
    %v9765 = vsel %vm8957, %v9757, %v9671
    %v9766 = vsel %vm8957, %v9758, %v9673
    %v9767 = vsel %vm8957, %v9759, %v9675
    %v9768 = vsel %vm8957, %v9760, %v9677
    %v9769 = vsel %vm8957, %v9761, %v9679
    %v9770 = vsel %vm8957, %v9762, %v9681
    %v9771 = vsel %vm8957, %v9763, %v9683
    %v9772 = vsel %vm8974, %v9764, %v9693
    %v9773 = vsel %vm8974, %v9765, %v9695
    %v9774 = vsel %vm8974, %v9766, %v9697
    %v9775 = vsel %vm8974, %v9767, %v9699
    %v9776 = vsel %vm8974, %v9768, %v9701
    %v9777 = vsel %vm8974, %v9769, %v9703
    %v9778 = vsel %vm8974, %v9770, %v9705
    %v9779 = vsel %vm8974, %v9771, %v9699
    %v9780 = vsel %vm8991, %v9772, %v9714
    %v9781 = vsel %vm8991, %v9773, %v9716
    %v9782 = vsel %vm8991, %v9774, %v9718
    %v9783 = vsel %vm8991, %v9775, %v9720
    %v9784 = vsel %vm8991, %v9776, %v9722
    %v9785 = vsel %vm8991, %v9777, %v9724
    %v9786 = vsel %vm8991, %v9778, %v9726
    %v9787 = vsel %vm8991, %v9779, %v9720
    %v9796 = vrot.slane %v9588, 4
    %v9797 = vrot.slane %v9589, 4
    %v9798 = vrot.slane %v9666, 4
    %v9799 = vrot.slane %v9586, 4
    %v9800 = vrot.slane %v9591, 4
    %v9801 = vrot.slane %v9592, 4
    %v9802 = vrot.slane %v9667, 4
    %v9803 = vsel %vm3011, %v9780, %v9796
    %v9804 = vsel %vm3011, %v9781, %v9797
    %v9805 = vsel %vm3011, %v9782, %v9798
    %v9806 = vsel %vm3011, %v9783, %v9799
    %v9807 = vsel %vm3011, %v9784, %v9800
    %v9808 = vsel %vm3011, %v9785, %v9801
    %v9809 = vsel %vm3011, %v9786, %v9802
    %v9810 = vsel %vm3011, %v9787, %v9799
    %9811 = vst [vmem:[#allocation1] ss:$2 sm:$0xff] %v9803
    %s9812 = scalar_lea.vmem [#allocation1], 1
    %9813 = vst [vmem:[%s9812] ss:$2 sm:$0xff] %v9804
    %s9814 = scalar_lea.vmem [#allocation1], 16
    %9815 = vst [vmem:[%s9814] ss:$2 sm:$0xff] %v9805
    %s9816 = scalar_lea.vmem [#allocation1], 17
    %9817 = vst [vmem:[%s9816] ss:$2 sm:$0xff] %v9806
    %s9818 = scalar_lea.vmem [#allocation1], 32
    %9819 = vst [vmem:[%s9818] ss:$2 sm:$0xff] %v9807
    %s9820 = scalar_lea.vmem [#allocation1], 33
    %9821 = vst [vmem:[%s9820] ss:$2 sm:$0xff] %v9808
    %s9822 = scalar_lea.vmem [#allocation1], 48
    %9823 = vst [vmem:[%s9822] ss:$2 sm:$0xff] %v9809
    %s9824 = scalar_lea.vmem [#allocation1], 49
    %9825 = vst [vmem:[%s9824] ss:$2 sm:$0xff] %v9810
    %v9826 = vld.sshfl [vmem:[#allocation1] sm:$0xff pattern:$0x75316420]
    %v9827 = vld.sshfl [vmem:[#allocation1 + $0x8] sm:$0xff pattern:$0x75316420]
    %v9828 = vld.sshfl [vmem:[#allocation1 + $0x10] sm:$0xff pattern:$0x75316420]
    %v9829 = vld.sshfl [vmem:[#allocation1 + $0x18] sm:$0xff pattern:$0x75316420]
    %v9830 = vld.sshfl [vmem:[#allocation1 + $0x20] sm:$0xff pattern:$0x75316420]
    %v9831 = vld.sshfl [vmem:[#allocation1 + $0x28] sm:$0xff pattern:$0x75316420]
    %v9832 = vld.sshfl [vmem:[#allocation1 + $0x30] sm:$0xff pattern:$0x75316420]
    %v9833 = vld.sshfl [vmem:[#allocation1 + $0x38] sm:$0xff pattern:$0x75316420]
    %v9842 = vpack.c.bf16 %v9828, %v9826
    %v9843 = vpack.c.bf16 %v9829, %v9827
    %v9844 = vpack.c.bf16 %v9832, %v9830
    %v9845 = vpack.c.bf16 %v9833, %v9831
    %v9846 = vld [vmem:[%s9] sm:$0xf]
    %v9847 = vld [vmem:[%s9 + $0x4] sm:$0xf]
    %v9848 = vld [vmem:[%s9 + $0x8] sm:$0xf]
    %v9849 = vld [vmem:[%s9 + $0xc] sm:$0xf]
    %v9850 = vld [vmem:[%s9 + $0x10] sm:$0xf]
    %v9851 = vld [vmem:[%s9 + $0x14] sm:$0xf]
    %v9852 = vld [vmem:[%s9 + $0x18] sm:$0xf]
    %v9853 = vld [vmem:[%s9 + $0x1c] sm:$0xf]
    %v9854 = vld [vmem:[%s9 + $0x20] sm:$0xf]
    %v9855 = vld [vmem:[%s9 + $0x24] sm:$0xf]
    %v9856 = vld [vmem:[%s9 + $0x28] sm:$0xf]
    %v9857 = vld [vmem:[%s9 + $0x2c] sm:$0xf]
    %v9858 = vld [vmem:[%s9 + $0x30] sm:$0xf]
    %v9859 = vld [vmem:[%s9 + $0x34] sm:$0xf]
    %v9860 = vld [vmem:[%s9 + $0x38] sm:$0xf]
    %v9861 = vld [vmem:[%s9 + $0x3c] sm:$0xf]
    %v9862 = vld [vmem:[%s9 + $0x40] sm:$0xf]
    %v9863 = vld [vmem:[%s9 + $0x44] sm:$0xf]
    %v9864 = vld [vmem:[%s10] sm:$0x1]
    %v9866 = vperm.slane %v9864, 0
    %v9886 = vunpack.c.l.b16 %v9846
    %v9887 = vunpack.c.l.b16 %v9847
    %v9888 = vunpack.c.l.b16 %v9848
    %v9889 = vunpack.c.l.b16 %v9849
    %v9890 = vunpack.c.l.b16 %v9850
    %v9891 = vunpack.c.l.b16 %v9851
    %v9892 = vunpack.c.l.b16 %v9852
    %v9893 = vunpack.c.l.b16 %v9853
    %v9894 = vunpack.c.l.b16 %v9854
    %v9895 = vunpack.c.l.b16 %v9855
    %v9896 = vunpack.c.l.b16 %v9856
    %v9897 = vunpack.c.l.b16 %v9857
    %v9898 = vunpack.c.l.b16 %v9858
    %v9899 = vunpack.c.l.b16 %v9859
    %v9900 = vunpack.c.l.b16 %v9860
    %v9901 = vunpack.c.l.b16 %v9861
    %v9902 = vunpack.c.l.b16 %v9862
    %v9903 = vunpack.c.l.b16 %v9863
    %v9904 = vpack.c.b16 %v9887, %v9886
    %v9905 = vpack.c.b16 %v9889, %v9888
    %v9906 = vpack.c.b16 %v9891, %v9890
    %v9907 = vpack.c.b16 %v9893, %v9892
    %v9908 = vpack.c.b16 %v9895, %v9894
    %v9909 = vpack.c.b16 %v9897, %v9896
    %v9910 = vpack.c.b16 %v9899, %v9898
    %v9911 = vpack.c.b16 %v9901, %v9900
    %v9912 = vpack.c.b16 %v9903, %v9902
    %v9923 = vsel %vm5521, %v9843, 0
    %v9926 = vsel %vm5521, %v9845, 0
    %9928 = vmatpush.bf16.msra.mxu0 %v9911
    %9929 = vmatpush.bf16.msra.mxu0 %v9910
    %9930 = vmatpush.bf16.msra.mxu0 %v9909
    %9931 = vmatpush.bf16.msra.mxu0 %v9908
    %9932 = vmatpush.bf16.msra.mxu0 %v9907
    %9933 = vmatpush.bf16.msra.mxu0 %v9906
    %9934 = vmatpush.bf16.msra.mxu0 %v9905
    %9935 = vmatpush.bf16.msra.mxu0 %v9904
    %9936 = vmatmul.bf16.gmra.mxu0 %v9842
    %v9937 = vpop.f32.mrf.mxu0
    %v9938 = vadd.f32 %v9866, %v9937
    %v9939 = vpop.f32.mrf.mxu0
    %v9940 = vadd.f32 %v9866, %v9939
    %9941 = vmatmul.bf16.gmra.mxu0 %v9844
    %v9942 = vpop.f32.mrf.mxu0
    %v9943 = vadd.f32 %v9866, %v9942
    %v9944 = vpop.f32.mrf.mxu0
    %v9945 = vadd.f32 %v9866, %v9944
    %9946 = vdwg.mxu0
    %9947 = vmatpush.bf16.msra.mxu0 0
    %9948 = vmatpush.bf16.msra.mxu0 0
    %9949 = vmatpush.bf16.msra.mxu0 0
    %9950 = vmatpush.bf16.msra.mxu0 0
    %9951 = vmatpush.bf16.msra.mxu0 0
    %9952 = vmatpush.bf16.msra.mxu0 0
    %9953 = vmatpush.bf16.msra.mxu0 0
    %9954 = vmatpush.bf16.msra.mxu0 %v9912
    %9955 = vmatmul.bf16.gmra.mxu0 %v9923
    %v9956 = vpop.f32.mrf.mxu0
    %v9957 = vadd.f32 %v9938, %v9956
    %v9958 = vpop.f32.mrf.mxu0
    %v9959 = vadd.f32 %v9940, %v9958
    %9960 = vmatmul.bf16.gmra.mxu0 %v9926
    %v9961 = vpop.f32.mrf.mxu0
    %v9962 = vadd.f32 %v9943, %v9961
    %v9963 = vpop.f32.mrf.mxu0
    %v9964 = vadd.f32 %v9945, %v9963
    %9965 = vdwg.mxu0
    %v9966 = vmax.f32 %v9957, 0.0
    %v9967 = vmax.f32 %v9959, 0.0
    %v9968 = vmax.f32 %v9962, 0.0
    %v9969 = vmax.f32 %v9964, 0.0
    %v9974 = vrot.slane %v9966, 4
    %v9975 = vrot.slane %v9967, 4
    %v9976 = vrot.slane %v9968, 4
    %v9977 = vrot.slane %v9969, 4
    %v9978 = vrot.slane %v9966, 7
    %v9979 = vrot.slane %v9974, 7
    %v9980 = vrot.slane %v9967, 7
    %v9981 = vrot.slane %v9975, 7
    %v9982 = vrot.slane %v9968, 7
    %v9983 = vrot.slane %v9976, 7
    %v9984 = vrot.slane %v9969, 7
    %v9985 = vrot.slane %v9977, 7
    %v9994 = vsel %vm190, 0.0, %v9978
    %v9995 = vsel %vm190, 0.0, %v9979
    %v9996 = vsel %vm190, 0.0, %v9980
    %v9997 = vsel %vm190, 0.0, %v9981
    %v9998 = vsel %vm190, 0.0, %v9982
    %v9999 = vsel %vm190, 0.0, %v9983
    %v10000 = vsel %vm190, 0.0, %v9984
    %v10001 = vsel %vm190, 0.0, %v9985
    %v10002 = vsel %vm3012, %v9994, 0.0
    %v10003 = vsel %vm3012, %v9995, 0.0
    %v10004 = vsel %vm3012, %v9996, 0.0
    %v10005 = vsel %vm3012, %v9997, 0.0
    %v10006 = vsel %vm3012, %v9998, 0.0
    %v10007 = vsel %vm3012, %v9999, 0.0
    %v10008 = vsel %vm3012, %v10000, 0.0
    %v10009 = vsel %vm3012, %v10001, 0.0
    %v10016 = vrot.slane %v10002, 1
    %v10017 = vrot.slane %v10003, 1
    %v10018 = vrot.slane %v10004, 1
    %v10019 = vrot.slane %v10006, 1
    %v10020 = vrot.slane %v10007, 1
    %v10021 = vrot.slane %v10008, 1
    %10022 = vrot.lane.b32.xlu0 %v9558, 32
    %v10023 = vpop.permute.xlu0 %10022
    %10024 = vrot.lane.b32.xlu0 %v10016, 32
    %v10025 = vpop.permute.xlu0 %10024
    %10026 = vrot.lane.b32.xlu0 %v10017, 32
    %v10027 = vpop.permute.xlu0 %10026
    %10028 = vrot.lane.b32.xlu0 %v10018, 32
    %v10029 = vpop.permute.xlu0 %10028
    %10030 = vrot.lane.b32.xlu0 %v10019, 32
    %v10031 = vpop.permute.xlu0 %10030
    %10032 = vrot.lane.b32.xlu0 %v10020, 32
    %v10033 = vpop.permute.xlu0 %10032
    %10034 = vrot.lane.b32.xlu0 %v10021, 32
    %v10035 = vpop.permute.xlu0 %10034
    %v10043 = vrot.slane %v10002, 2
    %v10044 = vrot.slane %v10003, 2
    %v10045 = vrot.slane %v10004, 2
    %v10046 = vrot.slane %v10006, 2
    %v10047 = vrot.slane %v10007, 2
    %v10048 = vrot.slane %v10008, 2
    %10049 = vrot.lane.b32.xlu0 %v9586, 64
    %v10050 = vpop.permute.xlu0 %10049
    %10051 = vrot.lane.b32.xlu0 %v10043, 64
    %v10052 = vpop.permute.xlu0 %10051
    %10053 = vrot.lane.b32.xlu0 %v10044, 64
    %v10054 = vpop.permute.xlu0 %10053
    %10055 = vrot.lane.b32.xlu0 %v10045, 64
    %v10056 = vpop.permute.xlu0 %10055
    %10057 = vrot.lane.b32.xlu0 %v10046, 64
    %v10058 = vpop.permute.xlu0 %10057
    %10059 = vrot.lane.b32.xlu0 %v10047, 64
    %v10060 = vpop.permute.xlu0 %10059
    %10061 = vrot.lane.b32.xlu0 %v10048, 64
    %v10062 = vpop.permute.xlu0 %10061
    %10072 = vrot.lane.b32.xlu0 %v10002, 96
    %v10073 = vpop.permute.xlu0 %10072
    %10074 = vrot.lane.b32.xlu0 %v10003, 96
    %v10075 = vpop.permute.xlu0 %10074
    %10076 = vrot.lane.b32.xlu0 %v10004, 96
    %v10077 = vpop.permute.xlu0 %10076
    %10078 = vrot.lane.b32.xlu0 %v10005, 96
    %v10079 = vpop.permute.xlu0 %10078
    %10080 = vrot.lane.b32.xlu0 %v10006, 96
    %v10081 = vpop.permute.xlu0 %10080
    %10082 = vrot.lane.b32.xlu0 %v10007, 96
    %v10083 = vpop.permute.xlu0 %10082
    %10084 = vrot.lane.b32.xlu0 %v10008, 96
    %v10085 = vpop.permute.xlu0 %10084
    %10086 = vrot.lane.b32.xlu0 %v10009, 96
    %v10087 = vpop.permute.xlu0 %10086
    %v10096 = vrot.slane %v10005, 1
    %v10097 = vrot.slane %v10009, 1
    %v10106 = vrot.slane %v10005, 2
    %v10107 = vrot.slane %v10009, 2
    %10108 = vrot.lane.b32.xlu0 %v10043, 32
    %v10109 = vpop.permute.xlu0 %10108
    %10110 = vrot.lane.b32.xlu0 %v10044, 32
    %v10111 = vpop.permute.xlu0 %10110
    %10112 = vrot.lane.b32.xlu0 %v10045, 32
    %v10113 = vpop.permute.xlu0 %10112
    %10114 = vrot.lane.b32.xlu0 %v10106, 32
    %v10115 = vpop.permute.xlu0 %10114
    %10116 = vrot.lane.b32.xlu0 %v10046, 32
    %v10117 = vpop.permute.xlu0 %10116
    %10118 = vrot.lane.b32.xlu0 %v10047, 32
    %v10119 = vpop.permute.xlu0 %10118
    %10120 = vrot.lane.b32.xlu0 %v10048, 32
    %v10121 = vpop.permute.xlu0 %10120
    %10122 = vrot.lane.b32.xlu0 %v10107, 32
    %v10123 = vpop.permute.xlu0 %10122
    %10132 = vrot.lane.b32.xlu0 %v10003, 64
    %v10133 = vpop.permute.xlu0 %10132
    %10134 = vrot.lane.b32.xlu0 %v10004, 64
    %v10135 = vpop.permute.xlu0 %10134
    %10136 = vrot.lane.b32.xlu0 %v10005, 64
    %v10137 = vpop.permute.xlu0 %10136
    %10138 = vrot.lane.b32.xlu0 %v9542, 64
    %v10139 = vpop.permute.xlu0 %10138
    %10140 = vrot.lane.b32.xlu0 %v10007, 64
    %v10141 = vpop.permute.xlu0 %10140
    %10142 = vrot.lane.b32.xlu0 %v10008, 64
    %v10143 = vpop.permute.xlu0 %10142
    %10144 = vrot.lane.b32.xlu0 %v10009, 64
    %v10145 = vpop.permute.xlu0 %10144
    %10153 = vrot.lane.b32.xlu0 %v10017, 96
    %v10154 = vpop.permute.xlu0 %10153
    %10155 = vrot.lane.b32.xlu0 %v10018, 96
    %v10156 = vpop.permute.xlu0 %10155
    %10157 = vrot.lane.b32.xlu0 %v10096, 96
    %v10158 = vpop.permute.xlu0 %10157
    %10159 = vrot.lane.b32.xlu0 %v9558, 96
    %v10160 = vpop.permute.xlu0 %10159
    %10161 = vrot.lane.b32.xlu0 %v10020, 96
    %v10162 = vpop.permute.xlu0 %10161
    %10163 = vrot.lane.b32.xlu0 %v10021, 96
    %v10164 = vpop.permute.xlu0 %10163
    %10165 = vrot.lane.b32.xlu0 %v10097, 96
    %v10166 = vpop.permute.xlu0 %10165
    %v10174 = vsel %vm5649, %v9542, %v10023
    %v10175 = vsel %vm5649, %v10002, %v10025
    %v10176 = vsel %vm5649, %v10003, %v10027
    %v10177 = vsel %vm5649, %v10004, %v10029
    %v10178 = vsel %vm5649, %v10006, %v10031
    %v10179 = vsel %vm5649, %v10007, %v10033
    %v10180 = vsel %vm5649, %v10008, %v10035
    %v10181 = vsel %vm5909, %v10174, %v10050
    %v10182 = vsel %vm5909, %v10175, %v10052
    %v10183 = vsel %vm5909, %v10176, %v10054
    %v10184 = vsel %vm5909, %v10177, %v10056
    %v10185 = vsel %vm5909, %v10178, %v10058
    %v10186 = vsel %vm5909, %v10179, %v10060
    %v10187 = vsel %vm5909, %v10180, %v10062
    %v10188 = vsel %vm8974, %v10181, %v10073
    %v10189 = vsel %vm8974, %v10182, %v10075
    %v10190 = vsel %vm8974, %v10183, %v10077
    %v10191 = vsel %vm8974, %v10184, %v10079
    %v10192 = vsel %vm8974, %v10181, %v10081
    %v10193 = vsel %vm8974, %v10185, %v10083
    %v10194 = vsel %vm8974, %v10186, %v10085
    %v10195 = vsel %vm8974, %v10187, %v10087
    %v10196 = vsel %vm5649, %v10016, %v10109
    %v10197 = vsel %vm5649, %v10017, %v10111
    %v10198 = vsel %vm5649, %v10018, %v10113
    %v10199 = vsel %vm5649, %v10096, %v10115
    %v10200 = vsel %vm5649, %v10019, %v10117
    %v10201 = vsel %vm5649, %v10020, %v10119
    %v10202 = vsel %vm5649, %v10021, %v10121
    %v10203 = vsel %vm5649, %v10097, %v10123
    %v10204 = vsel %vm5909, %v10196, %v10133
    %v10205 = vsel %vm5909, %v10197, %v10135
    %v10206 = vsel %vm5909, %v10198, %v10137
    %v10207 = vsel %vm5909, %v10199, %v10139
    %v10208 = vsel %vm5909, %v10200, %v10141
    %v10209 = vsel %vm5909, %v10201, %v10143
    %v10210 = vsel %vm5909, %v10202, %v10145
    %v10211 = vsel %vm5909, %v10203, %v10139
    %v10212 = vsel %vm8974, %v10204, %v10154
    %v10213 = vsel %vm8974, %v10205, %v10156
    %v10214 = vsel %vm8974, %v10206, %v10158
    %v10215 = vsel %vm8974, %v10207, %v10160
    %v10216 = vsel %vm8974, %v10208, %v10162
    %v10217 = vsel %vm8974, %v10209, %v10164
    %v10218 = vsel %vm8974, %v10210, %v10166
    %v10219 = vsel %vm8974, %v10211, %v10160
    %v10236 = vrot.slane %v10212, 4
    %v10237 = vrot.slane %v10213, 4
    %v10238 = vrot.slane %v10214, 4
    %v10239 = vrot.slane %v10215, 4
    %v10240 = vrot.slane %v10216, 4
    %v10241 = vrot.slane %v10217, 4
    %v10242 = vrot.slane %v10218, 4
    %v10243 = vrot.slane %v10219, 4
    %v10244 = vsel %vm3011, %v10188, %v10236
    %v10245 = vsel %vm3011, %v10189, %v10237
    %v10246 = vsel %vm3011, %v10190, %v10238
    %v10247 = vsel %vm3011, %v10191, %v10239
    %v10248 = vsel %vm3011, %v10192, %v10240
    %v10249 = vsel %vm3011, %v10193, %v10241
    %v10250 = vsel %vm3011, %v10194, %v10242
    %v10251 = vsel %vm3011, %v10195, %v10243
    %10252 = vst [vmem:[#allocation1] ss:$2 sm:$0xff] %v10244
    %s10253 = scalar_lea.vmem [#allocation1], 1
    %10254 = vst [vmem:[%s10253] ss:$2 sm:$0xff] %v10245
    %s10255 = scalar_lea.vmem [#allocation1], 16
    %10256 = vst [vmem:[%s10255] ss:$2 sm:$0xff] %v10044
    %s10257 = scalar_lea.vmem [#allocation1], 17
    %10258 = vst [vmem:[%s10257] ss:$2 sm:$0xff] %v10045
    %s10259 = scalar_lea.vmem [#allocation1], 32
    %10260 = vst [vmem:[%s10259] ss:$2 sm:$0xff] %v10246
    %s10261 = scalar_lea.vmem [#allocation1], 33
    %10262 = vst [vmem:[%s10261] ss:$2 sm:$0xff] %v10247
    %s10263 = scalar_lea.vmem [#allocation1], 48
    %10264 = vst [vmem:[%s10263] ss:$2 sm:$0xff] %v10106
    %s10265 = scalar_lea.vmem [#allocation1], 49
    %10266 = vst [vmem:[%s10265] ss:$2 sm:$0xff] %v9586
    %v10267 = vld.sshfl [vmem:[#allocation1] sm:$0xff pattern:$0x75316420]
    %v10268 = vld.sshfl [vmem:[#allocation1 + $0x8] sm:$0xff pattern:$0x75316420]
    %v10269 = vld.sshfl [vmem:[#allocation1 + $0x10] sm:$0xff pattern:$0x75316420]
    %v10270 = vld.sshfl [vmem:[#allocation1 + $0x20] sm:$0xff pattern:$0x75316420]
    %v10271 = vld.sshfl [vmem:[#allocation1 + $0x28] sm:$0xff pattern:$0x75316420]
    %v10272 = vld.sshfl [vmem:[#allocation1 + $0x30] sm:$0xff pattern:$0x75316420]
    %10273 = vst [vmem:[#allocation1] ss:$2 sm:$0xff] %v10248
    %10274 = vst [vmem:[%s10253] ss:$2 sm:$0xff] %v10249
    %10275 = vst [vmem:[%s10255] ss:$2 sm:$0xff] %v10047
    %10276 = vst [vmem:[%s10257] ss:$2 sm:$0xff] %v10048
    %10277 = vst [vmem:[%s10259] ss:$2 sm:$0xff] %v10250
    %10278 = vst [vmem:[%s10261] ss:$2 sm:$0xff] %v10251
    %10279 = vst [vmem:[%s10263] ss:$2 sm:$0xff] %v10107
    %10280 = vst [vmem:[%s10265] ss:$2 sm:$0xff] %v9586
    %v10281 = vld.sshfl [vmem:[#allocation1] sm:$0xff pattern:$0x75316420]
    %v10282 = vld.sshfl [vmem:[#allocation1 + $0x8] sm:$0xff pattern:$0x75316420]
    %v10283 = vld.sshfl [vmem:[#allocation1 + $0x10] sm:$0xff pattern:$0x75316420]
    %v10284 = vld.sshfl [vmem:[#allocation1 + $0x20] sm:$0xff pattern:$0x75316420]
    %v10285 = vld.sshfl [vmem:[#allocation1 + $0x28] sm:$0xff pattern:$0x75316420]
    %v10286 = vld.sshfl [vmem:[#allocation1 + $0x30] sm:$0xff pattern:$0x75316420]
    %v10299 = vpack.c.bf16 %v10270, %v10267
    %v10300 = vpack.c.bf16 %v10271, %v10268
    %v10301 = vpack.c.bf16 %v10272, %v10269
    %v10302 = vpack.c.bf16 %v10284, %v10281
    %v10303 = vpack.c.bf16 %v10285, %v10282
    %v10304 = vpack.c.bf16 %v10286, %v10283
    %v10305 = vld [vmem:[%s11] sm:$0xf]
    %v10306 = vld [vmem:[%s11 + $0x4] sm:$0xf]
    %v10307 = vld [vmem:[%s11 + $0x8] sm:$0xf]
    %v10308 = vld [vmem:[%s11 + $0xc] sm:$0xf]
    %v10309 = vld [vmem:[%s11 + $0x10] sm:$0xf]
    %v10310 = vld [vmem:[%s11 + $0x14] sm:$0xf]
    %v10311 = vld [vmem:[%s11 + $0x18] sm:$0xf]
    %v10312 = vld [vmem:[%s11 + $0x1c] sm:$0xf]
    %v10313 = vld [vmem:[%s11 + $0x20] sm:$0xf]
    %v10314 = vld [vmem:[%s11 + $0x24] sm:$0xf]
    %v10315 = vld [vmem:[%s11 + $0x28] sm:$0xf]
    %v10316 = vld [vmem:[%s11 + $0x2c] sm:$0xf]
    %v10317 = vld [vmem:[%s11 + $0x30] sm:$0xf]
    %v10318 = vld [vmem:[%s11 + $0x34] sm:$0xf]
    %v10319 = vld [vmem:[%s11 + $0x38] sm:$0xf]
    %v10320 = vld [vmem:[%s11 + $0x3c] sm:$0xf]
    %v10321 = vld [vmem:[%s11 + $0x40] sm:$0xf]
    %v10322 = vld [vmem:[%s11 + $0x44] sm:$0xf]
    %v10323 = vld [vmem:[%s11 + $0x48] sm:$0xf]
    %v10324 = vld [vmem:[%s11 + $0x4c] sm:$0xf]
    %v10325 = vld [vmem:[%s11 + $0x50] sm:$0xf]
    %v10326 = vld [vmem:[%s11 + $0x54] sm:$0xf]
    %v10327 = vld [vmem:[%s11 + $0x58] sm:$0xf]
    %v10328 = vld [vmem:[%s11 + $0x5c] sm:$0xf]
    %v10329 = vld [vmem:[%s11 + $0x60] sm:$0xf]
    %v10330 = vld [vmem:[%s11 + $0x64] sm:$0xf]
    %v10331 = vld [vmem:[%s11 + $0x68] sm:$0xf]
    %v10332 = vld [vmem:[%s11 + $0x6c] sm:$0xf]
    %v10333 = vld [vmem:[%s11 + $0x70] sm:$0xf]
    %v10334 = vld [vmem:[%s11 + $0x74] sm:$0xf]
    %v10335 = vld [vmem:[%s11 + $0x78] sm:$0xf]
    %v10336 = vld [vmem:[%s11 + $0x7c] sm:$0xf]
    %v10337 = vld [vmem:[%s11 + $0x80] sm:$0xf]
    %v10338 = vld [vmem:[%s11 + $0x84] sm:$0xf]
    %v10339 = vld [vmem:[%s11 + $0x88] sm:$0xf]
    %v10340 = vld [vmem:[%s11 + $0x8c] sm:$0xf]
    %v10341 = vld [vmem:[%s12] sm:$0x1]
    %v10343 = vperm.slane %v10341, 0
    %v10381 = vunpack.c.l.b16 %v10305
    %v10382 = vunpack.c.l.b16 %v10306
    %v10383 = vunpack.c.l.b16 %v10307
    %v10384 = vunpack.c.l.b16 %v10308
    %v10385 = vunpack.c.l.b16 %v10309
    %v10386 = vunpack.c.l.b16 %v10310
    %v10387 = vunpack.c.l.b16 %v10311
    %v10388 = vunpack.c.l.b16 %v10312
    %v10389 = vunpack.c.l.b16 %v10313
    %v10390 = vunpack.c.l.b16 %v10314
    %v10391 = vunpack.c.l.b16 %v10315
    %v10392 = vunpack.c.l.b16 %v10316
    %v10393 = vunpack.c.l.b16 %v10317
    %v10394 = vunpack.c.l.b16 %v10318
    %v10395 = vunpack.c.l.b16 %v10319
    %v10396 = vunpack.c.l.b16 %v10320
    %v10397 = vunpack.c.l.b16 %v10321
    %v10398 = vunpack.c.l.b16 %v10322
    %v10399 = vunpack.c.l.b16 %v10323
    %v10400 = vunpack.c.l.b16 %v10324
    %v10401 = vunpack.c.l.b16 %v10325
    %v10402 = vunpack.c.l.b16 %v10326
    %v10403 = vunpack.c.l.b16 %v10327
    %v10404 = vunpack.c.l.b16 %v10328
    %v10405 = vunpack.c.l.b16 %v10329
    %v10406 = vunpack.c.l.b16 %v10330
    %v10407 = vunpack.c.l.b16 %v10331
    %v10408 = vunpack.c.l.b16 %v10332
    %v10409 = vunpack.c.l.b16 %v10333
    %v10410 = vunpack.c.l.b16 %v10334
    %v10411 = vunpack.c.l.b16 %v10335
    %v10412 = vunpack.c.l.b16 %v10336
    %v10413 = vunpack.c.l.b16 %v10337
    %v10414 = vunpack.c.l.b16 %v10338
    %v10415 = vunpack.c.l.b16 %v10339
    %v10416 = vunpack.c.l.b16 %v10340
    %v10417 = vpack.c.b16 %v10382, %v10381
    %v10418 = vpack.c.b16 %v10384, %v10383
    %v10419 = vpack.c.b16 %v10386, %v10385
    %v10420 = vpack.c.b16 %v10388, %v10387
    %v10421 = vpack.c.b16 %v10390, %v10389
    %v10422 = vpack.c.b16 %v10392, %v10391
    %v10423 = vpack.c.b16 %v10394, %v10393
    %v10424 = vpack.c.b16 %v10396, %v10395
    %v10425 = vpack.c.b16 %v10398, %v10397
    %v10426 = vpack.c.b16 %v10400, %v10399
    %v10427 = vpack.c.b16 %v10402, %v10401
    %v10428 = vpack.c.b16 %v10404, %v10403
    %v10429 = vpack.c.b16 %v10406, %v10405
    %v10430 = vpack.c.b16 %v10408, %v10407
    %v10431 = vpack.c.b16 %v10410, %v10409
    %v10432 = vpack.c.b16 %v10412, %v10411
    %v10433 = vpack.c.b16 %v10414, %v10413
    %v10434 = vpack.c.b16 %v10416, %v10415
    %v10454 = vsel %vm5649, %v10301, 0
    %v10457 = vsel %vm5649, %v10304, 0
    %10459 = vmatpush.bf16.msra.mxu0 %v10424
    %10460 = vmatpush.bf16.msra.mxu0 %v10423
    %10461 = vmatpush.bf16.msra.mxu0 %v10422
    %10462 = vmatpush.bf16.msra.mxu0 %v10421
    %10463 = vmatpush.bf16.msra.mxu0 %v10420
    %10464 = vmatpush.bf16.msra.mxu0 %v10419
    %10465 = vmatpush.bf16.msra.mxu0 %v10418
    %10466 = vmatpush.bf16.msra.mxu0 %v10417
    %10467 = vmatmul.bf16.gmra.mxu0 %v10299
    %v10468 = vpop.f32.mrf.mxu0
    %v10469 = vadd.f32 %v10343, %v10468
    %v10470 = vpop.f32.mrf.mxu0
    %v10471 = vadd.f32 %v10343, %v10470
    %10472 = vmatmul.bf16.gmra.mxu0 %v10302
    %v10473 = vpop.f32.mrf.mxu0
    %v10474 = vadd.f32 %v10343, %v10473
    %v10475 = vpop.f32.mrf.mxu0
    %v10476 = vadd.f32 %v10343, %v10475
    %10477 = vdwg.mxu0
    %10478 = vmatpush.bf16.msra.mxu0 %v10432
    %10479 = vmatpush.bf16.msra.mxu0 %v10431
    %10480 = vmatpush.bf16.msra.mxu0 %v10430
    %10481 = vmatpush.bf16.msra.mxu0 %v10429
    %10482 = vmatpush.bf16.msra.mxu0 %v10428
    %10483 = vmatpush.bf16.msra.mxu0 %v10427
    %10484 = vmatpush.bf16.msra.mxu0 %v10426
    %10485 = vmatpush.bf16.msra.mxu0 %v10425
    %10486 = vmatmul.bf16.gmra.mxu0 %v10300
    %v10487 = vpop.f32.mrf.mxu0
    %v10488 = vadd.f32 %v10469, %v10487
    %v10489 = vpop.f32.mrf.mxu0
    %v10490 = vadd.f32 %v10471, %v10489
    %10491 = vmatmul.bf16.gmra.mxu0 %v10303
    %v10492 = vpop.f32.mrf.mxu0
    %v10493 = vadd.f32 %v10474, %v10492
    %v10494 = vpop.f32.mrf.mxu0
    %v10495 = vadd.f32 %v10476, %v10494
    %10496 = vdwg.mxu0
    %10497 = vmatpush.bf16.msra.mxu0 0
    %10498 = vmatpush.bf16.msra.mxu0 0
    %10499 = vmatpush.bf16.msra.mxu0 0
    %10500 = vmatpush.bf16.msra.mxu0 0
    %10501 = vmatpush.bf16.msra.mxu0 0
    %10502 = vmatpush.bf16.msra.mxu0 0
    %10503 = vmatpush.bf16.msra.mxu0 %v10434
    %10504 = vmatpush.bf16.msra.mxu0 %v10433
    %10505 = vmatmul.bf16.gmra.mxu0 %v10454
    %v10506 = vpop.f32.mrf.mxu0
    %v10507 = vadd.f32 %v10488, %v10506
    %v10508 = vpop.f32.mrf.mxu0
    %v10509 = vadd.f32 %v10490, %v10508
    %10510 = vmatmul.bf16.gmra.mxu0 %v10457
    %v10511 = vpop.f32.mrf.mxu0
    %v10512 = vadd.f32 %v10493, %v10511
    %v10513 = vpop.f32.mrf.mxu0
    %v10514 = vadd.f32 %v10495, %v10513
    %10515 = vdwg.mxu0
    %v10516 = vmax.f32 %v10507, 0.0
    %v10517 = vmax.f32 %v10509, 0.0
    %v10518 = vmax.f32 %v10512, 0.0
    %v10519 = vmax.f32 %v10514, 0.0
    %v10524 = vrot.slane %v10516, 4
    %v10525 = vrot.slane %v10517, 4
    %v10526 = vrot.slane %v10518, 4
    %v10527 = vrot.slane %v10519, 4
    %10528 = vst [vmem:[#allocation1] ss:$2 sm:$0xff] %v10524
    %v10529 = vld.sshfl [vmem:[#allocation1] sm:$0xff pattern:$0x75316420]
    %10530 = vrot.lane.b32.xlu0 %v10529, 32
    %v10531 = vpop.permute.xlu0 %10530
    %10533 = vst [vmem:[#allocation1] ss:$2 sm:$0xff] %v10517
    %v10534 = vld.sshfl [vmem:[#allocation1] sm:$0xff pattern:$0x75316420]
    %10535 = vrot.lane.b32.xlu0 %v10534, 64
    %v10536 = vpop.permute.xlu0 %10535
    %10538 = vst [vmem:[#allocation1] ss:$2 sm:$0xff] %v10525
    %v10539 = vld.sshfl [vmem:[#allocation1] sm:$0xff pattern:$0x75316420]
    %10540 = vrot.lane.b32.xlu0 %v10539, 96
    %v10541 = vpop.permute.xlu0 %10540
    %v10543 = vsel %vm5649, %v10516, %v10531
    %v10544 = vsel %vm5909, %v10543, %v10536
    %v10545 = vsel %vm8974, %v10544, %v10541
    %v10547 = vrot.slane %v10545, 1
    %v10548 = vrot.slane %v10545, 2
    %v10549 = vrot.slane %v10545, 3
    %10553 = vst [vmem:[#allocation1] ss:$2 sm:$0xff] %v10526
    %v10554 = vld.sshfl [vmem:[#allocation1] sm:$0xff pattern:$0x75316420]
    %10555 = vrot.lane.b32.xlu0 %v10554, 32
    %v10556 = vpop.permute.xlu0 %10555
    %10558 = vst [vmem:[#allocation1] ss:$2 sm:$0xff] %v10519
    %v10559 = vld.sshfl [vmem:[#allocation1] sm:$0xff pattern:$0x75316420]
    %10560 = vrot.lane.b32.xlu0 %v10559, 64
    %v10561 = vpop.permute.xlu0 %10560
    %10563 = vst [vmem:[#allocation1] ss:$2 sm:$0xff] %v10527
    %v10564 = vld.sshfl [vmem:[#allocation1] sm:$0xff pattern:$0x75316420]
    %10565 = vrot.lane.b32.xlu0 %v10564, 96
    %v10566 = vpop.permute.xlu0 %10565
    %v10568 = vsel %vm5649, %v10518, %v10556
    %v10569 = vsel %vm5909, %v10568, %v10561
    %v10570 = vsel %vm8974, %v10569, %v10566
    %v10572 = vrot.slane %v10570, 1
    %v10573 = vrot.slane %v10570, 2
    %v10574 = vrot.slane %v10570, 3
    %v10575 = vperm.slane %v10570, 0
    %v10576 = vperm.slane %v10572, 0
    %v10577 = vperm.slane %v10573, 0
    %v10578 = vperm.slane %v10574, 0
    %v10583 = vsel %vm190, %v10545, %v10575
    %v10584 = vsel %vm190, %v10547, %v10576
    %v10585 = vsel %vm190, %v10548, %v10577
    %v10586 = vsel %vm190, %v10549, %v10578
    %10591 = vst [vmem:[#allocation1] ss:$4 sm:$0xff] %v10583
    %s10592 = scalar_lea.vmem [#allocation1], 1
    %10593 = vst [vmem:[%s10592] ss:$4 sm:$0xff] %v10584
    %s10594 = scalar_lea.vmem [#allocation1], 2
    %10595 = vst [vmem:[%s10594] ss:$4 sm:$0xff] %v10585
    %s10596 = scalar_lea.vmem [#allocation1], 3
    %10597 = vst [vmem:[%s10596] ss:$4 sm:$0xff] %v10586
    %v10598 = vld.sshfl [vmem:[#allocation1] sm:$0xff pattern:$0x73625140]
    %v10600 = vpack.c.bf16 %v10598, %v10598
    %v10601 = vld [vmem:[%s13] sm:$0xff]
    %v10602 = vld [vmem:[%s13 + $0x8] sm:$0xff]
    %v10603 = vld [vmem:[%s13 + $0x10] sm:$0xff]
    %v10604 = vld [vmem:[%s13 + $0x18] sm:$0xff]
    %v10605 = vld [vmem:[%s13 + $0x20] sm:$0xff]
    %v10606 = vld [vmem:[%s13 + $0x28] sm:$0xff]
    %v10607 = vld [vmem:[%s13 + $0x30] sm:$0xff]
    %v10608 = vld [vmem:[%s13 + $0x38] sm:$0xff]
    %v10609 = vld [vmem:[%s13 + $0x40] sm:$0xff]
    %v10610 = vld [vmem:[%s13 + $0x48] sm:$0xff]
    %v10611 = vld [vmem:[%s13 + $0x50] sm:$0xff]
    %v10612 = vld [vmem:[%s13 + $0x58] sm:$0xff]
    %v10613 = vld [vmem:[%s13 + $0x60] sm:$0xff]
    %v10614 = vld [vmem:[%s13 + $0x68] sm:$0xff]
    %v10615 = vld [vmem:[%s13 + $0x70] sm:$0xff]
    %v10616 = vld [vmem:[%s13 + $0x78] sm:$0xff]
    %v10617 = vld [vmem:[%s15] sm:$0x3]
    %v10619 = vperm.slane %v10617, 0
    %v10620 = vperm.slane %v10617, 1
    %v10639 = vunpack.c.l.b16 %v10601
    %v10640 = vunpack.c.h.b16 %v10601
    %v10641 = vunpack.c.l.b16 %v10602
    %v10642 = vunpack.c.h.b16 %v10602
    %v10643 = vunpack.c.l.b16 %v10603
    %v10644 = vunpack.c.h.b16 %v10603
    %v10645 = vunpack.c.l.b16 %v10604
    %v10646 = vunpack.c.h.b16 %v10604
    %v10647 = vunpack.c.l.b16 %v10605
    %v10648 = vunpack.c.h.b16 %v10605
    %v10649 = vunpack.c.l.b16 %v10606
    %v10650 = vunpack.c.h.b16 %v10606
    %v10651 = vunpack.c.l.b16 %v10607
    %v10652 = vunpack.c.h.b16 %v10607
    %v10653 = vunpack.c.l.b16 %v10608
    %v10654 = vunpack.c.h.b16 %v10608
    %v10655 = vunpack.c.l.b16 %v10609
    %v10656 = vunpack.c.h.b16 %v10609
    %v10657 = vunpack.c.l.b16 %v10610
    %v10658 = vunpack.c.h.b16 %v10610
    %v10659 = vunpack.c.l.b16 %v10611
    %v10660 = vunpack.c.h.b16 %v10611
    %v10661 = vunpack.c.l.b16 %v10612
    %v10662 = vunpack.c.h.b16 %v10612
    %v10663 = vunpack.c.l.b16 %v10613
    %v10664 = vunpack.c.h.b16 %v10613
    %v10665 = vunpack.c.l.b16 %v10614
    %v10666 = vunpack.c.h.b16 %v10614
    %v10667 = vunpack.c.l.b16 %v10615
    %v10668 = vunpack.c.h.b16 %v10615
    %v10669 = vunpack.c.l.b16 %v10616
    %v10670 = vunpack.c.h.b16 %v10616
    %v10671 = vpack.c.b16 %v10641, %v10639
    %v10672 = vpack.c.b16 %v10642, %v10640
    %v10673 = vpack.c.b16 %v10645, %v10643
    %v10674 = vpack.c.b16 %v10646, %v10644
    %v10675 = vpack.c.b16 %v10649, %v10647
    %v10676 = vpack.c.b16 %v10650, %v10648
    %v10677 = vpack.c.b16 %v10653, %v10651
    %v10678 = vpack.c.b16 %v10654, %v10652
    %v10679 = vpack.c.b16 %v10657, %v10655
    %v10680 = vpack.c.b16 %v10658, %v10656
    %v10681 = vpack.c.b16 %v10661, %v10659
    %v10682 = vpack.c.b16 %v10662, %v10660
    %v10683 = vpack.c.b16 %v10665, %v10663
    %v10684 = vpack.c.b16 %v10666, %v10664
    %v10685 = vpack.c.b16 %v10669, %v10667
    %v10686 = vpack.c.b16 %v10670, %v10668
    %10703 = vmatpush.bf16.msra.mxu0 %v10685
    %10704 = vmatpush.bf16.msra.mxu0 %v10683
    %10705 = vmatpush.bf16.msra.mxu0 %v10681
    %10706 = vmatpush.bf16.msra.mxu0 %v10679
    %10707 = vmatpush.bf16.msra.mxu0 %v10677
    %10708 = vmatpush.bf16.msra.mxu0 %v10675
    %10709 = vmatpush.bf16.msra.mxu0 %v10673
    %10710 = vmatpush.bf16.msra.mxu0 %v10671
    %10711 = vmatmul.bf16.gmra.mxu0 %v10600
    %v10712 = vpop.f32.mrf.mxu0
    %v10713 = vadd.f32 %v10619, %v10712
    %v10714 = vpop.f32.mrf.mxu0
    %10715 = vdwg.mxu0
    %10716 = vmatpush.bf16.msra.mxu0 %v10686
    %10717 = vmatpush.bf16.msra.mxu0 %v10684
    %10718 = vmatpush.bf16.msra.mxu0 %v10682
    %10719 = vmatpush.bf16.msra.mxu0 %v10680
    %10720 = vmatpush.bf16.msra.mxu0 %v10678
    %10721 = vmatpush.bf16.msra.mxu0 %v10676
    %10722 = vmatpush.bf16.msra.mxu0 %v10674
    %10723 = vmatpush.bf16.msra.mxu0 %v10672
    %10724 = vmatmul.bf16.gmra.mxu0 %v10600
    %v10725 = vpop.f32.mrf.mxu0
    %v10726 = vadd.f32 %v10620, %v10725
    %v10727 = vpop.f32.mrf.mxu0
    %10728 = vdwg.mxu0
    %10729 = vst [vmem:[#allocation2] sm:$0xff] %v10713
    %10730 = vst [vmem:[#allocation2 + $0x8] sm:$0xff] %v10726
    %v10731 = vld [vmem:[%s14] sm:$0xff]
    %v10732 = vld [vmem:[%s14 + $0x8] sm:$0xff]
    %v10733 = vld [vmem:[%s14 + $0x10] sm:$0xff]
    %v10734 = vld [vmem:[%s14 + $0x18] sm:$0xff]
    %v10735 = vld [vmem:[%s14 + $0x20] sm:$0xff]
    %v10736 = vld [vmem:[%s14 + $0x28] sm:$0xff]
    %v10737 = vld [vmem:[%s14 + $0x30] sm:$0xff]
    %v10738 = vld [vmem:[%s14 + $0x38] sm:$0xff]
    %v10747 = vunpack.c.l.b16 %v10731
    %v10748 = vunpack.c.h.b16 %v10731
    %v10749 = vunpack.c.l.b16 %v10732
    %v10750 = vunpack.c.h.b16 %v10732
    %v10751 = vunpack.c.l.b16 %v10733
    %v10752 = vunpack.c.h.b16 %v10733
    %v10753 = vunpack.c.l.b16 %v10734
    %v10754 = vunpack.c.h.b16 %v10734
    %v10755 = vunpack.c.l.b16 %v10735
    %v10756 = vunpack.c.h.b16 %v10735
    %v10757 = vunpack.c.l.b16 %v10736
    %v10758 = vunpack.c.h.b16 %v10736
    %v10759 = vunpack.c.l.b16 %v10737
    %v10760 = vunpack.c.h.b16 %v10737
    %v10761 = vunpack.c.l.b16 %v10738
    %v10762 = vunpack.c.h.b16 %v10738
    %v10763 = vpack.c.b16 %v10749, %v10747
    %v10764 = vpack.c.b16 %v10750, %v10748
    %v10765 = vpack.c.b16 %v10753, %v10751
    %v10766 = vpack.c.b16 %v10754, %v10752
    %v10767 = vpack.c.b16 %v10757, %v10755
    %v10768 = vpack.c.b16 %v10758, %v10756
    %v10769 = vpack.c.b16 %v10761, %v10759
    %v10770 = vpack.c.b16 %v10762, %v10760
    %v10780 = vsel %vm5909, 0, 0
    %10782 = vmatpush.bf16.msra.mxu0 0
    %10783 = vmatpush.bf16.msra.mxu0 0
    %10784 = vmatpush.bf16.msra.mxu0 0
    %10785 = vmatpush.bf16.msra.mxu0 0
    %10786 = vmatpush.bf16.msra.mxu0 %v10769
    %10787 = vmatpush.bf16.msra.mxu0 %v10767
    %10788 = vmatpush.bf16.msra.mxu0 %v10765
    %10789 = vmatpush.bf16.msra.mxu0 %v10763
    %10790 = vmatmul.bf16.gmra.mxu0 %v10780
    %v10791 = vpop.f32.mrf.mxu0
    %v10792 = vadd.f32 0.0, %v10791
    %v10793 = vpop.f32.mrf.mxu0
    %10794 = vdwg.mxu0
    %10795 = vmatpush.bf16.msra.mxu0 0
    %10796 = vmatpush.bf16.msra.mxu0 0
    %10797 = vmatpush.bf16.msra.mxu0 0
    %10798 = vmatpush.bf16.msra.mxu0 0
    %10799 = vmatpush.bf16.msra.mxu0 %v10770
    %10800 = vmatpush.bf16.msra.mxu0 %v10768
    %10801 = vmatpush.bf16.msra.mxu0 %v10766
    %10802 = vmatpush.bf16.msra.mxu0 %v10764
    %10803 = vmatmul.bf16.gmra.mxu0 %v10780
    %v10804 = vpop.f32.mrf.mxu0
    %v10805 = vadd.f32 0.0, %v10804
    %v10806 = vpop.f32.mrf.mxu0
    %10807 = vdwg.mxu0
    %v10808 = vld [vmem:[#allocation2] sm:$0x3]
    %v10809 = vld [vmem:[#allocation2 + $0x8] sm:$0xc0]
    %v10810 = vadd.f32 %v10808, %v10792
    %v10811 = vxor.u32 %v10810, 2147483648
    %v10812 = vmul.f32 %v10811, 1.442695
    %v10813 = vpow.pop %v10812
    %v10814 = vadd.f32 %v10813, 1.0
    %v10815 = vrcp.pop %v10814
    %v10816 = vmul.f32 %v10814, %v10815
    %v10817 = vsub.f32 1.0, %v10816
    %v10818 = vmul.f32 %v10815, %v10817
    %v10819 = vadd.f32 %v10815, %v10818
    %vm10820 = vweird.f32 %v10814
    %vm10821 = vweird.f32 %v10815
    %vm10822 = vmor %vm10820, %vm10821
    %v10823 = vsel %vm10822, %v10815, %v10819
    %v10824 = vand.u32 2147483647, %v10814
    %vm10825 = vcmp.eq.f32.partialorder %v10824, 8.507059e+37
    %v10826 = vand.u32 %v10814, 2147483648
    %v10827 = vor.u32 1.1754944e-38, %v10826
    %v10828 = vsel %vm10825, %v10827, %v10823
    %v10829 = vmul.f32 1.0, %v10828
    %v10830 = vtanh.pop %v10810
    %v10831 = vmul.f32 %v10829, 0.0
    %10833 = vrot.lane.b32.xlu0 %v10830, 64
    %v10834 = vpop.permute.xlu0 %10833
    %v10836 = vmul.f32 %v10829, %v10834
    %10838 = vrot.lane.b32.xlu0 %v10836, 32
    %v10839 = vpop.permute.xlu0 %10838
    %v10841 = vadd.f32 %v10831, %v10839
    %v10842 = vtanh.pop %v10841
    %10844 = vrot.lane.b32.xlu0 %v10842, 64
    %v10845 = vpop.permute.xlu0 %10844
    %v10847 = vmul.f32 %v10829, %v10845
    %v10849 = vrot.slane %v10805, 2
    %v10851 = vadd.f32 %v10809, %v10849
    %v10852 = vxor.u32 %v10851, 2147483648
    %v10853 = vmul.f32 %v10852, 1.442695
    %v10854 = vpow.pop %v10853
    %v10855 = vadd.f32 %v10854, 1.0
    %v10856 = vrcp.pop %v10855
    %v10857 = vmul.f32 %v10855, %v10856
    %v10858 = vsub.f32 1.0, %v10857
    %v10859 = vmul.f32 %v10856, %v10858
    %v10860 = vadd.f32 %v10856, %v10859
    %vm10861 = vweird.f32 %v10855
    %vm10862 = vweird.f32 %v10856
    %vm10863 = vmor %vm10861, %vm10862
    %v10864 = vsel %vm10863, %v10856, %v10860
    %v10865 = vand.u32 2147483647, %v10855
    %vm10866 = vcmp.eq.f32.partialorder %v10865, 8.507059e+37
    %v10867 = vand.u32 %v10855, 2147483648
    %v10868 = vor.u32 1.1754944e-38, %v10867
    %v10869 = vsel %vm10866, %v10868, %v10864
    %v10870 = vmul.f32 1.0, %v10869
    %v10871 = vtanh.pop %v10851
    %v10872 = vmul.f32 %v10870, 0.0
    %10874 = vrot.lane.b32.xlu0 %v10871, 64
    %v10875 = vpop.permute.xlu0 %10874
    %v10877 = vmul.f32 %v10870, %v10875
    %10879 = vrot.lane.b32.xlu0 %v10877, 32
    %v10880 = vpop.permute.xlu0 %10879
    %v10882 = vadd.f32 %v10872, %v10880
    %v10883 = vtanh.pop %v10882
    %10885 = vrot.lane.b32.xlu0 %v10883, 64
    %v10886 = vpop.permute.xlu0 %10885
    %v10888 = vmul.f32 %v10870, %v10886
    %10890 = vrot.lane.b32.xlu0 %v10847, 32
    %v10891 = vpop.permute.xlu0 %10890
    %vm10893 = vcmask 254976
    %10894 = vst.msk [vmem:[#allocation3] sm:$0x3] %vm10893, %v10891
    %10896 = vrot.lane.b32.xlu0 %v10888, 32
    %v10897 = vpop.permute.xlu0 %10896
    %vm10899 = vcmask 261126
    %10900 = vst.msk [vmem:[#allocation4] sm:$0xc0] %vm10899, %v10897
    %v10901 = vrot.slane %v10888, 6
    %10902 = vrot.lane.b32.xlu0 %v10901, 64
    %v10903 = vpop.permute.xlu0 %10902
    %v10905 = vsel %vm5649, %v10891, %v10903
    %v10906 = vpack.c.bf16 %v10905, %v10905
    %v10908 = vsel %vm5909, %v10906, 0
    %10910 = vmatpush.bf16.msra.mxu0 0
    %10911 = vmatpush.bf16.msra.mxu0 0
    %10912 = vmatpush.bf16.msra.mxu0 0
    %10913 = vmatpush.bf16.msra.mxu0 0
    %10914 = vmatpush.bf16.msra.mxu0 %v10769
    %10915 = vmatpush.bf16.msra.mxu0 %v10767
    %10916 = vmatpush.bf16.msra.mxu0 %v10765
    %10917 = vmatpush.bf16.msra.mxu0 %v10763
    %10918 = vmatmul.bf16.gmra.mxu0 %v10908
    %v10919 = vpop.f32.mrf.mxu0
    %v10920 = vadd.f32 0.0, %v10919
    %v10921 = vpop.f32.mrf.mxu0
    %10922 = vdwg.mxu0
    %10923 = vmatpush.bf16.msra.mxu0 0
    %10924 = vmatpush.bf16.msra.mxu0 0
    %10925 = vmatpush.bf16.msra.mxu0 0
    %10926 = vmatpush.bf16.msra.mxu0 0
    %10927 = vmatpush.bf16.msra.mxu0 %v10770
    %10928 = vmatpush.bf16.msra.mxu0 %v10768
    %10929 = vmatpush.bf16.msra.mxu0 %v10766
    %10930 = vmatpush.bf16.msra.mxu0 %v10764
    %10931 = vmatmul.bf16.gmra.mxu0 %v10908
    %v10932 = vpop.f32.mrf.mxu0
    %v10933 = vadd.f32 0.0, %v10932
    %v10934 = vpop.f32.mrf.mxu0
    %10935 = vdwg.mxu0
    %v10936 = vld [vmem:[#allocation2] sm:$0xc]
    %v10937 = vld [vmem:[#allocation2 + $0x8] sm:$0x30]
    %v10939 = vrot.slane %v10920, 6
    %v10941 = vadd.f32 %v10936, %v10939
    %v10942 = vxor.u32 %v10941, 2147483648
    %v10943 = vmul.f32 %v10942, 1.442695
    %v10944 = vpow.pop %v10943
    %v10945 = vadd.f32 %v10944, 1.0
    %v10946 = vrcp.pop %v10945
    %v10947 = vmul.f32 %v10945, %v10946
    %v10948 = vsub.f32 1.0, %v10947
    %v10949 = vmul.f32 %v10946, %v10948
    %v10950 = vadd.f32 %v10946, %v10949
    %vm10951 = vweird.f32 %v10945
    %vm10952 = vweird.f32 %v10946
    %vm10953 = vmor %vm10951, %vm10952
    %v10954 = vsel %vm10953, %v10946, %v10950
    %v10955 = vand.u32 2147483647, %v10945
    %vm10956 = vcmp.eq.f32.partialorder %v10955, 8.507059e+37
    %v10957 = vand.u32 %v10945, 2147483648
    %v10958 = vor.u32 1.1754944e-38, %v10957
    %v10959 = vsel %vm10956, %v10958, %v10954
    %v10960 = vmul.f32 1.0, %v10959
    %v10961 = vtanh.pop %v10941
    %v10963 = vrot.slane %v10841, 6
    %v10965 = vmul.f32 %v10960, %v10963
    %10967 = vrot.lane.b32.xlu0 %v10961, 64
    %v10968 = vpop.permute.xlu0 %10967
    %v10970 = vmul.f32 %v10960, %v10968
    %10972 = vrot.lane.b32.xlu0 %v10970, 32
    %v10973 = vpop.permute.xlu0 %10972
    %v10975 = vadd.f32 %v10965, %v10973
    %v10976 = vtanh.pop %v10975
    %10978 = vrot.lane.b32.xlu0 %v10976, 64
    %v10979 = vpop.permute.xlu0 %10978
    %v10981 = vmul.f32 %v10960, %v10979
    %v10983 = vrot.slane %v10933, 4
    %v10985 = vadd.f32 %v10937, %v10983
    %v10986 = vxor.u32 %v10985, 2147483648
    %v10987 = vmul.f32 %v10986, 1.442695
    %v10988 = vpow.pop %v10987
    %v10989 = vadd.f32 %v10988, 1.0
    %v10990 = vrcp.pop %v10989
    %v10991 = vmul.f32 %v10989, %v10990
    %v10992 = vsub.f32 1.0, %v10991
    %v10993 = vmul.f32 %v10990, %v10992
    %v10994 = vadd.f32 %v10990, %v10993
    %vm10995 = vweird.f32 %v10989
    %vm10996 = vweird.f32 %v10990
    %vm10997 = vmor %vm10995, %vm10996
    %v10998 = vsel %vm10997, %v10990, %v10994
    %v10999 = vand.u32 2147483647, %v10989
    %vm11000 = vcmp.eq.f32.partialorder %v10999, 8.507059e+37
    %v11001 = vand.u32 %v10989, 2147483648
    %v11002 = vor.u32 1.1754944e-38, %v11001
    %v11003 = vsel %vm11000, %v11002, %v10998
    %v11004 = vmul.f32 1.0, %v11003
    %v11005 = vtanh.pop %v10985
    %v11007 = vrot.slane %v10882, 2
    %v11009 = vmul.f32 %v11004, %v11007
    %11011 = vrot.lane.b32.xlu0 %v11005, 64
    %v11012 = vpop.permute.xlu0 %11011
    %v11014 = vmul.f32 %v11004, %v11012
    %11016 = vrot.lane.b32.xlu0 %v11014, 32
    %v11017 = vpop.permute.xlu0 %11016
    %v11019 = vadd.f32 %v11009, %v11017
    %v11020 = vtanh.pop %v11019
    %11022 = vrot.lane.b32.xlu0 %v11020, 64
    %v11023 = vpop.permute.xlu0 %11022
    %v11025 = vmul.f32 %v11004, %v11023
    %11027 = vrot.lane.b32.xlu0 %v10981, 32
    %v11028 = vpop.permute.xlu0 %11027
    %vm11030 = vcmask 257026
    %11031 = vst.msk [vmem:[#allocation3] sm:$0xc] %vm11030, %v11028
    %11033 = vrot.lane.b32.xlu0 %v11025, 32
    %v11034 = vpop.permute.xlu0 %11033
    %vm11036 = vcmask 259076
    %11037 = vst.msk [vmem:[#allocation4] sm:$0x30] %vm11036, %v11034
    %v11038 = vrot.slane %v11025, 2
    %11039 = vrot.lane.b32.xlu0 %v11038, 64
    %v11040 = vpop.permute.xlu0 %11039
    %v11042 = vsel %vm5649, %v11028, %v11040
    %v11043 = vpack.c.bf16 %v11042, %v11042
    %v11045 = vrot.slane %v11043, 1
    %v11047 = vsel %vm5909, %v11045, 0
    %11049 = vmatpush.bf16.msra.mxu0 0
    %11050 = vmatpush.bf16.msra.mxu0 0
    %11051 = vmatpush.bf16.msra.mxu0 0
    %11052 = vmatpush.bf16.msra.mxu0 0
    %11053 = vmatpush.bf16.msra.mxu0 %v10769
    %11054 = vmatpush.bf16.msra.mxu0 %v10767
    %11055 = vmatpush.bf16.msra.mxu0 %v10765
    %11056 = vmatpush.bf16.msra.mxu0 %v10763
    %11057 = vmatmul.bf16.gmra.mxu0 %v11047
    %v11058 = vpop.f32.mrf.mxu0
    %v11059 = vadd.f32 0.0, %v11058
    %v11060 = vpop.f32.mrf.mxu0
    %11061 = vdwg.mxu0
    %11062 = vmatpush.bf16.msra.mxu0 0
    %11063 = vmatpush.bf16.msra.mxu0 0
    %11064 = vmatpush.bf16.msra.mxu0 0
    %11065 = vmatpush.bf16.msra.mxu0 0
    %11066 = vmatpush.bf16.msra.mxu0 %v10770
    %11067 = vmatpush.bf16.msra.mxu0 %v10768
    %11068 = vmatpush.bf16.msra.mxu0 %v10766
    %11069 = vmatpush.bf16.msra.mxu0 %v10764
    %11070 = vmatmul.bf16.gmra.mxu0 %v11047
    %v11071 = vpop.f32.mrf.mxu0
    %v11072 = vadd.f32 0.0, %v11071
    %v11073 = vpop.f32.mrf.mxu0
    %11074 = vdwg.mxu0
    %v11075 = vld [vmem:[#allocation2] sm:$0x30]
    %v11076 = vld [vmem:[#allocation2 + $0x8] sm:$0xc]
    %v11078 = vrot.slane %v11059, 4
    %v11080 = vadd.f32 %v11075, %v11078
    %v11081 = vxor.u32 %v11080, 2147483648
    %v11082 = vmul.f32 %v11081, 1.442695
    %v11083 = vpow.pop %v11082
    %v11084 = vadd.f32 %v11083, 1.0
    %v11085 = vrcp.pop %v11084
    %v11086 = vmul.f32 %v11084, %v11085
    %v11087 = vsub.f32 1.0, %v11086
    %v11088 = vmul.f32 %v11085, %v11087
    %v11089 = vadd.f32 %v11085, %v11088
    %vm11090 = vweird.f32 %v11084
    %vm11091 = vweird.f32 %v11085
    %vm11092 = vmor %vm11090, %vm11091
    %v11093 = vsel %vm11092, %v11085, %v11089
    %v11094 = vand.u32 2147483647, %v11084
    %vm11095 = vcmp.eq.f32.partialorder %v11094, 8.507059e+37
    %v11096 = vand.u32 %v11084, 2147483648
    %v11097 = vor.u32 1.1754944e-38, %v11096
    %v11098 = vsel %vm11095, %v11097, %v11093
    %v11099 = vmul.f32 1.0, %v11098
    %v11100 = vtanh.pop %v11080
    %v11102 = vrot.slane %v10975, 6
    %v11104 = vmul.f32 %v11099, %v11102
    %11106 = vrot.lane.b32.xlu0 %v11100, 64
    %v11107 = vpop.permute.xlu0 %11106
    %v11109 = vmul.f32 %v11099, %v11107
    %11111 = vrot.lane.b32.xlu0 %v11109, 32
    %v11112 = vpop.permute.xlu0 %11111
    %v11114 = vadd.f32 %v11104, %v11112
    %v11115 = vtanh.pop %v11114
    %11117 = vrot.lane.b32.xlu0 %v11115, 64
    %v11118 = vpop.permute.xlu0 %11117
    %v11120 = vmul.f32 %v11099, %v11118
    %v11122 = vrot.slane %v11072, 6
    %v11124 = vadd.f32 %v11076, %v11122
    %v11125 = vxor.u32 %v11124, 2147483648
    %v11126 = vmul.f32 %v11125, 1.442695
    %v11127 = vpow.pop %v11126
    %v11128 = vadd.f32 %v11127, 1.0
    %v11129 = vrcp.pop %v11128
    %v11130 = vmul.f32 %v11128, %v11129
    %v11131 = vsub.f32 1.0, %v11130
    %v11132 = vmul.f32 %v11129, %v11131
    %v11133 = vadd.f32 %v11129, %v11132
    %vm11134 = vweird.f32 %v11128
    %vm11135 = vweird.f32 %v11129
    %vm11136 = vmor %vm11134, %vm11135
    %v11137 = vsel %vm11136, %v11129, %v11133
    %v11138 = vand.u32 2147483647, %v11128
    %vm11139 = vcmp.eq.f32.partialorder %v11138, 8.507059e+37
    %v11140 = vand.u32 %v11128, 2147483648
    %v11141 = vor.u32 1.1754944e-38, %v11140
    %v11142 = vsel %vm11139, %v11141, %v11137
    %v11143 = vmul.f32 1.0, %v11142
    %v11144 = vtanh.pop %v11124
    %v11146 = vrot.slane %v11019, 2
    %v11148 = vmul.f32 %v11143, %v11146
    %11150 = vrot.lane.b32.xlu0 %v11144, 64
    %v11151 = vpop.permute.xlu0 %11150
    %v11153 = vmul.f32 %v11143, %v11151
    %11155 = vrot.lane.b32.xlu0 %v11153, 32
    %v11156 = vpop.permute.xlu0 %11155
    %v11158 = vadd.f32 %v11148, %v11156
    %v11159 = vtanh.pop %v11158
    %11161 = vrot.lane.b32.xlu0 %v11159, 64
    %v11162 = vpop.permute.xlu0 %11161
    %v11164 = vmul.f32 %v11143, %v11162
    %11166 = vrot.lane.b32.xlu0 %v11120, 32
    %v11167 = vpop.permute.xlu0 %11166
    %11169 = vst.msk [vmem:[#allocation3] sm:$0x30] %vm11036, %v11167
    %11171 = vrot.lane.b32.xlu0 %v11164, 32
    %v11172 = vpop.permute.xlu0 %11171
    %11174 = vst.msk [vmem:[#allocation4] sm:$0xc] %vm11030, %v11172
    %v11175 = vrot.slane %v11164, 6
    %11176 = vrot.lane.b32.xlu0 %v11175, 64
    %v11177 = vpop.permute.xlu0 %11176
    %v11179 = vsel %vm5649, %v11167, %v11177
    %v11180 = vpack.c.bf16 %v11179, %v11179
    %v11182 = vrot.slane %v11180, 2
    %v11184 = vsel %vm5909, %v11182, 0
    %11186 = vmatpush.bf16.msra.mxu0 0
    %11187 = vmatpush.bf16.msra.mxu0 0
    %11188 = vmatpush.bf16.msra.mxu0 0
    %11189 = vmatpush.bf16.msra.mxu0 0
    %11190 = vmatpush.bf16.msra.mxu0 %v10769
    %11191 = vmatpush.bf16.msra.mxu0 %v10767
    %11192 = vmatpush.bf16.msra.mxu0 %v10765
    %11193 = vmatpush.bf16.msra.mxu0 %v10763
    %11194 = vmatmul.bf16.gmra.mxu0 %v11184
    %v11195 = vpop.f32.mrf.mxu0
    %v11196 = vadd.f32 0.0, %v11195
    %v11197 = vpop.f32.mrf.mxu0
    %11198 = vdwg.mxu0
    %11199 = vmatpush.bf16.msra.mxu0 0
    %11200 = vmatpush.bf16.msra.mxu0 0
    %11201 = vmatpush.bf16.msra.mxu0 0
    %11202 = vmatpush.bf16.msra.mxu0 0
    %11203 = vmatpush.bf16.msra.mxu0 %v10770
    %11204 = vmatpush.bf16.msra.mxu0 %v10768
    %11205 = vmatpush.bf16.msra.mxu0 %v10766
    %11206 = vmatpush.bf16.msra.mxu0 %v10764
    %11207 = vmatmul.bf16.gmra.mxu0 %v11184
    %v11208 = vpop.f32.mrf.mxu0
    %v11209 = vadd.f32 0.0, %v11208
    %v11210 = vpop.f32.mrf.mxu0
    %11211 = vdwg.mxu0
    %v11212 = vld [vmem:[#allocation2] sm:$0xc0]
    %v11213 = vld [vmem:[#allocation2 + $0x8] sm:$0x3]
    %v11215 = vrot.slane %v11196, 2
    %v11217 = vadd.f32 %v11212, %v11215
    %v11218 = vxor.u32 %v11217, 2147483648
    %v11219 = vmul.f32 %v11218, 1.442695
    %v11220 = vpow.pop %v11219
    %v11221 = vadd.f32 %v11220, 1.0
    %v11222 = vrcp.pop %v11221
    %v11223 = vmul.f32 %v11221, %v11222
    %v11224 = vsub.f32 1.0, %v11223
    %v11225 = vmul.f32 %v11222, %v11224
    %v11226 = vadd.f32 %v11222, %v11225
    %vm11227 = vweird.f32 %v11221
    %vm11228 = vweird.f32 %v11222
    %vm11229 = vmor %vm11227, %vm11228
    %v11230 = vsel %vm11229, %v11222, %v11226
    %v11231 = vand.u32 2147483647, %v11221
    %vm11232 = vcmp.eq.f32.partialorder %v11231, 8.507059e+37
    %v11233 = vand.u32 %v11221, 2147483648
    %v11234 = vor.u32 1.1754944e-38, %v11233
    %v11235 = vsel %vm11232, %v11234, %v11230
    %v11236 = vmul.f32 1.0, %v11235
    %v11237 = vtanh.pop %v11217
    %v11239 = vrot.slane %v11114, 6
    %v11241 = vmul.f32 %v11236, %v11239
    %11243 = vrot.lane.b32.xlu0 %v11237, 64
    %v11244 = vpop.permute.xlu0 %11243
    %v11246 = vmul.f32 %v11236, %v11244
    %11248 = vrot.lane.b32.xlu0 %v11246, 32
    %v11249 = vpop.permute.xlu0 %11248
    %v11251 = vadd.f32 %v11241, %v11249
    %v11252 = vtanh.pop %v11251
    %11254 = vrot.lane.b32.xlu0 %v11252, 64
    %v11255 = vpop.permute.xlu0 %11254
    %v11257 = vmul.f32 %v11236, %v11255
    %v11258 = vadd.f32 %v11213, %v11209
    %v11259 = vxor.u32 %v11258, 2147483648
    %v11260 = vmul.f32 %v11259, 1.442695
    %v11261 = vpow.pop %v11260
    %v11262 = vadd.f32 %v11261, 1.0
    %v11263 = vrcp.pop %v11262
    %v11264 = vmul.f32 %v11262, %v11263
    %v11265 = vsub.f32 1.0, %v11264
    %v11266 = vmul.f32 %v11263, %v11265
    %v11267 = vadd.f32 %v11263, %v11266
    %vm11268 = vweird.f32 %v11262
    %vm11269 = vweird.f32 %v11263
    %vm11270 = vmor %vm11268, %vm11269
    %v11271 = vsel %vm11270, %v11263, %v11267
    %v11272 = vand.u32 2147483647, %v11262
    %vm11273 = vcmp.eq.f32.partialorder %v11272, 8.507059e+37
    %v11274 = vand.u32 %v11262, 2147483648
    %v11275 = vor.u32 1.1754944e-38, %v11274
    %v11276 = vsel %vm11273, %v11275, %v11271
    %v11277 = vmul.f32 1.0, %v11276
    %v11278 = vtanh.pop %v11258
    %v11280 = vrot.slane %v11158, 2
    %v11282 = vmul.f32 %v11277, %v11280
    %11284 = vrot.lane.b32.xlu0 %v11278, 64
    %v11285 = vpop.permute.xlu0 %11284
    %v11287 = vmul.f32 %v11277, %v11285
    %11289 = vrot.lane.b32.xlu0 %v11287, 32
    %v11290 = vpop.permute.xlu0 %11289
    %v11292 = vadd.f32 %v11282, %v11290
    %v11293 = vtanh.pop %v11292
    %11295 = vrot.lane.b32.xlu0 %v11293, 64
    %v11296 = vpop.permute.xlu0 %11295
    %v11298 = vmul.f32 %v11277, %v11296
    %11300 = vrot.lane.b32.xlu0 %v11257, 32
    %v11301 = vpop.permute.xlu0 %11300
    %11303 = vst.msk [vmem:[#allocation3] sm:$0xc0] %vm10899, %v11301
    %11305 = vrot.lane.b32.xlu0 %v11298, 32
    %v11306 = vpop.permute.xlu0 %11305
    %11308 = vst.msk [vmem:[#allocation4] sm:$0x3] %vm10893, %v11306
    %v11309 = vld [vmem:[#allocation3] sm:$0xff]
    %v11310 = vpack.c.bf16 %v11309, %v11309
    %v11311 = vld [vmem:[%s16] sm:$0xf]
    %v11312 = vld [vmem:[%s16 + $0x4] sm:$0xf]
    %v11313 = vld [vmem:[%s16 + $0x8] sm:$0xf]
    %v11314 = vld [vmem:[%s16 + $0xc] sm:$0xf]
    %v11315 = vld [vmem:[#allocation4] sm:$0xff]
    %v11316 = vpack.c.bf16 %v11315, %v11315
    %v11317 = vld [vmem:[%s16 + $0x10] sm:$0xf]
    %v11318 = vld [vmem:[%s16 + $0x14] sm:$0xf]
    %v11319 = vld [vmem:[%s16 + $0x18] sm:$0xf]
    %v11320 = vld [vmem:[%s16 + $0x1c] sm:$0xf]
    %v11325 = vunpack.c.l.b16 %v11317
    %v11326 = vunpack.c.l.b16 %v11318
    %v11327 = vunpack.c.l.b16 %v11319
    %v11328 = vunpack.c.l.b16 %v11320
    %v11329 = vpack.c.b16 %v11326, %v11325
    %v11330 = vpack.c.b16 %v11328, %v11327
    %v11334 = vsel %vm5649, %v11316, 0
    %11336 = vmatpush.bf16.msra.mxu0 0
    %11337 = vmatpush.bf16.msra.mxu0 0
    %11338 = vmatpush.bf16.msra.mxu0 0
    %11339 = vmatpush.bf16.msra.mxu0 0
    %11340 = vmatpush.bf16.msra.mxu0 0
    %11341 = vmatpush.bf16.msra.mxu0 0
    %11342 = vmatpush.bf16.msra.mxu0 %v11330
    %11343 = vmatpush.bf16.msra.mxu0 %v11329
    %11344 = vmatmul.bf16.gmra.mxu0 %v11334
    %v11345 = vpop.f32.mrf.mxu0
    %v11346 = vadd.f32 0.0, %v11345
    %v11347 = vpop.f32.mrf.mxu0
    %11348 = vdwg.mxu0
    %v11353 = vunpack.c.l.b16 %v11311
    %v11354 = vunpack.c.l.b16 %v11312
    %v11355 = vunpack.c.l.b16 %v11313
    %v11356 = vunpack.c.l.b16 %v11314
    %v11357 = vpack.c.b16 %v11354, %v11353
    %v11358 = vpack.c.b16 %v11356, %v11355
    %v11362 = vsel %vm5649, %v11310, 0
    %11364 = vmatpush.bf16.msra.mxu0 0
    %11365 = vmatpush.bf16.msra.mxu0 0
    %11366 = vmatpush.bf16.msra.mxu0 0
    %11367 = vmatpush.bf16.msra.mxu0 0
    %11368 = vmatpush.bf16.msra.mxu0 0
    %11369 = vmatpush.bf16.msra.mxu0 0
    %11370 = vmatpush.bf16.msra.mxu0 %v11358
    %11371 = vmatpush.bf16.msra.mxu0 %v11357
    %11372 = vmatmul.bf16.gmra.mxu0 %v11362
    %v11373 = vpop.f32.mrf.mxu0
    %v11374 = vadd.f32 %v11346, %v11373
    %v11375 = vpop.f32.mrf.mxu0
    %11376 = vdwg.mxu0
    %v11377 = vld [vmem:[%s17] sm:$0x1]
    %v11379 = vperm.slane %v11377, 0
    %v11381 = vadd.f32 %v11374, %v11379
    %11382 = vst.msk [vmem:[#allocation5] sm:$0xff] %vm5521, %v11381
    // Predicated region
    $region74: #{crnn_forward.1} parent=1 // pred_check
      _
    $region75: #{crnn_forward.1} parent=1 // pred_check_branch
      %11384 = sbr.rel (0) target = $region77
    $region76: #{crnn_forward.1} parent=1 // pred_region
      %11386 = vsyncadd [#allocation6], 0
      %s11388 = sshll.u32 [#allocation5], 4
      %s11389 = int_to_ptr.vmem [resolvable:$true] %s11388
      %s11390 = sshll.u32 %s18, 4
      %s11391 = int_to_ptr.hbm [resolvable:$true] %s11390
      %11393 = dma.vmem_to_hbm [thread:$0]  %s11389, 128, %s11391, [#allocation6]
    $region77: #{crnn_forward.1} parent=1 // pred_fallthru
      _
    // Predicated region
    $region78: #{crnn_forward.1} parent=1 // pred_check
      _
    $region79: #{crnn_forward.1} parent=1 // pred_check_branch
      %11395 = sbr.rel (0) target = $region81
    $region80: #{crnn_forward.1} parent=1 // pred_region
      %11397 = dma.done [#allocation6], 128
    $region81: #{crnn_forward.1} parent=1 // pred_fallthru
      _
    %11398 = vsyncpa [#allocation6], 1

</llo_original>
